<compile_context>
chip_gen: v7x
topology: tpu7x:2x2x1
jax: 0.10.0
libtpu: 0.0.40
codegen_flags: <defaults>
</compile_context>

<pallas_src>
import jax
import jax.numpy as jnp
from jax import lax
from jax.experimental import pallas as pl
from jax.experimental.pallas import tpu as pltpu

# ----------------------------- configuration --------------------------------
BATCH = 2
IN_SIZE = 8           # input_size (Conv1d in_channels)
TIME = 16             # time_length
CLASSES = 4
HIDDEN = 256          # fixed by the module (conv1 out_channels / protos rows)
PROTOS = 4 if CLASSES < 4 else (10 if CLASSES > 10 else CLASSES)
GAMMA = 1.0           # SoftDTW gamma (folded at trace time when == 1.0)
BIG = 1e30            # finite stand-in for +inf (exp(-BIG) == 0 exactly in f32)
LANES = 128           # DP rows occupy one full vreg row (lane i == prototype index i)


def _lane_prev(x):
    # out[..., i] = x[..., i-1]; lane 0 gets a duplicate of lane 0 (callers mask it).
    return jnp.concatenate([x[..., :1], x[..., :-1]], axis=-1)


def _lane_next(x):
    # out[..., i] = x[..., i+1]; the last lane gets a duplicate (callers mask it).
    return jnp.concatenate([x[..., 1:], x[..., -1:]], axis=-1)


# ------------------------ fused per-batch kernel -----------------------------
def _somtp_batch_kernel(x_ref, w1t_ref, b1_ref, gvec_ref, segmat_ref, protos_ref,
                        wenc_ref, switch_ref, benc_ref,
                        h_ref, concat_ref, attn_ref, ens_ref,
                        R_ref, E_ref, D_ref):
    T = x_ref.shape[1]
    C = h_ref.shape[2]
    P = protos_ref.shape[1]
    lane = lax.broadcasted_iota(jnp.int32, (1, LANES), 1)

    # ---- conv1 (1x1 Conv1d) + ReLU, channel-last (rows = time, lanes = 256) ----
    h = jnp.dot(x_ref[0], w1t_ref[...], preferred_element_type=jnp.float32) + b1_ref[...]
    h = jnp.maximum(h, 0.0)                                               # (T, C)
    h_ref[0] = h

    # ---- GTP ('AVG') and STP ('AVG') as tiny matmuls ----
    gt = jnp.dot(gvec_ref[...], h, preferred_element_type=jnp.float32)    # (1, C)
    st = jnp.dot(segmat_ref[...], h, preferred_element_type=jnp.float32)  # (P, C)

    # ---- DTP squared-euclidean cost, time-major (T, P) ----
    pr = protos_ref[...]                                                  # (C, P)
    hp = jnp.dot(h, pr, preferred_element_type=jnp.float32)               # (T, P)
    hn = jnp.sum(h * h, axis=1, keepdims=True)                            # (T, 1)
    pn = jnp.sum(pr * pr, axis=0, keepdims=True)                          # (1, P)
    d_tp = jnp.maximum(hn + pn - 2.0 * hp, 0.0)                           # (T, P)

    # ---- skewed (diagonal-major) cost table: D_ref[d, lane i] = cost(proto i, time j=d-i).
    # Zero rows/lanes double as the zero-padded cost border of the backward pass.
    D_ref[...] = jnp.zeros_like(D_ref)
    for p in range(P):                      # P = 4 static (T,1) column stores
        D_ref[2 + p:2 + p + T, p + 1:p + 2] = d_tp[:, p:p + 1]

    # =========================== soft-DTW forward =============================
    # R[i][j] (i: prototype 1..P, j: time 1..T) stored diagonal-major:
    # R_ref[d, lane i] == R[i][d - i].  Each wavefront step computes a whole anti-diagonal,
    # so the serial softmin chain is T+P-1 steps instead of T*P.
    row_pp = jnp.where(lane == 0, 0.0, BIG)            # diagonal 0: R[0][0]=0, borders +inf
    row_p = jnp.full((1, LANES), BIG, jnp.float32)     # diagonal 1: all borders
    for d in range(2, P + T + 1):                      # fully unrolled (static indices)
        d_row = D_ref[d:d + 1, :]
        p1s = _lane_prev(row_p)                        # lane i <- R[i-1][j]
        p2s = _lane_prev(row_pp)                       # lane i <- R[i-1][j-1]
        if GAMMA == 1.0:                               # gamma folded at trace time
            r0, r1, r2 = -p2s, -row_p, -p1s
        else:
            r0, r1, r2 = -p2s / GAMMA, -row_p / GAMMA, -p1s / GAMMA
        rmax = jnp.maximum(jnp.maximum(r0, r1), r2)
        rsum = jnp.exp(r0 - rmax) + jnp.exp(r1 - rmax) + jnp.exp(r2 - rmax)
        sm = jnp.log(rsum) + rmax
        r_new = d_row - (sm if GAMMA == 1.0 else GAMMA * sm)
        lo, hi = max(1, d - T), min(P, d - 1)          # valid prototype lanes on this diagonal
        # borders: +inf for i==0 / j==0 (forward), -inf for j==T+1 and lane P+1 (backward)
        fill = jnp.where((lane == P + 1) | (lane <= d - T - 1), -BIG, BIG)
        row = jnp.where((lane >= lo) & (lane <= hi), r_new, fill)
        R_ref[d:d + 1, :] = row
        row_pp, row_p = row_p, row

    # backward-pass borders: R[i][T+1] = R[P+1][j] = -inf, R[P+1][T+1] = R[P][T]
    R_ref[P + T + 1:P + T + 2, :] = jnp.full((1, LANES), -BIG, jnp.float32)
    r_last = row_p[:, P:P + 1]                         # R[P][T]
    R_ref[P + T + 2:P + T + 3, :] = jnp.where(lane == P + 1, r_last, -BIG)

    # =========================== soft-DTW backward =============================
    # Precompute ALL exp weights as three (T+P-1, 128) tables so the serial E recursion
    # below is pure VPU multiply/add work (no EUP on the carried chain).
    r_mid = R_ref[2:P + T + 1, :]
    r_n1 = R_ref[3:P + T + 2, :]
    r_n2 = R_ref[4:P + T + 3, :]
    c_n1 = D_ref[3:P + T + 2, :]
    c_n2 = D_ref[4:P + T + 3, :]
    wa_arg = _lane_next(r_n1 - c_n1) - r_mid           # weight of E[i+1][j]
    wb_arg = r_n1 - c_n1 - r_mid                       # weight of E[i][j+1]
    wc_arg = _lane_next(r_n2 - c_n2) - r_mid           # weight of E[i+1][j+1]
    if GAMMA != 1.0:
        ig = 1.0 / GAMMA
        wa_arg, wb_arg, wc_arg = wa_arg * ig, wb_arg * ig, wc_arg * ig
    clamp = jnp.float32(30.0)                          # keep sentinel lanes finite (masked below)
    wa = jnp.exp(jnp.minimum(wa_arg, clamp))
    wb = jnp.exp(jnp.minimum(wb_arg, clamp))
    wc = jnp.exp(jnp.minimum(wc_arg, clamp))

    e1 = jnp.zeros((1, LANES), jnp.float32)            # E row of diagonal P+T+1 (all zero)
    e2 = jnp.where(lane == P + 1, 1.0, 0.0)            # diagonal P+T+2: E[P+1][T+1] = 1
    for d in range(P + T, 1, -1):                      # fully unrolled reverse wavefront
        k = d - 2
        e_new = (_lane_next(e1) * wa[k:k + 1, :]
                 + e1 * wb[k:k + 1, :]
                 + _lane_next(e2) * wc[k:k + 1, :])
        lo, hi = max(1, d - T), min(P, d - 1)
        e_row = jnp.where((lane >= lo) & (lane <= hi), e_new, 0.0)
        E_ref[d:d + 1, :] = e_row
        e2, e1 = e1, e_row

    # ---- un-skew the alignment matrix A and apply DTP 'AVG' with one MXU dot ----
    cols = [E_ref[2 + p:2 + p + T, p + 1:p + 2] for p in range(P)]   # A[p, t] columns
    At = jnp.concatenate(cols, axis=1)                               # (T, P), At[t, p] = A[p, t]
    num = lax.dot_general(At, h, (((0,), (0,)), ((), ())),
                          preferred_element_type=jnp.float32)        # (P, C) = A @ h
    den = lax.dot_general(At, jnp.ones((T, 1), jnp.float32),
                          (((0,), (0,)), ((), ())),
                          preferred_element_type=jnp.float32)        # (P, 1) = A.sum over t
    out3 = num * pl.reciprocal(den, approx=True)                     # DTP 'AVG'

    # ---- pooled outputs, channel-last (rows = prototypes, lanes = 256) ----
    out1 = jnp.broadcast_to(gt, (P, C))                 # GTP repeated over prototypes
    concat = jnp.concatenate([out1, st, out3], axis=0)  # (3P, C)
    concat_ref[0] = concat

    # ---- switch attention: outer-product encode + 1x1 Conv2d + softmax(dim=-1) ----
    # logits[k, j] = (sum_c wenc[c] * concat[k, c]) * switch[j] + benc
    s_col = jnp.sum(concat * wenc_ref[...], axis=1, keepdims=True)   # (3P, 1)
    logits = s_col * switch_ref[...] + benc_ref[...]                 # (3P, 3P)
    logits = logits - jnp.max(logits, axis=-1, keepdims=True)
    e = jnp.exp(logits)
    attn = e * pl.reciprocal(jnp.sum(e, axis=-1, keepdims=True), approx=True)
    attn_ref[0] = attn

    # ---- ensemble fused in-kernel: ens[j, c] = sum_k attn[k, j] * concat[k, c] ----
    ens_ref[0] = lax.dot_general(attn, concat, (((0,), (0,)), ((), ())),
                                 preferred_element_type=jnp.float32)


def switch_pool_fused(x_btc, p):
    b, t, cin = x_btc.shape
    c, pr = HIDDEN, PROTOS
    q = 3 * pr
    rows = t + pr + 3                      # skewed DP table rows (diagonal index 0 .. P+T+2)
    full2 = lambda a, d: pl.BlockSpec((a, d), lambda i: (0, 0))
    return pl.pallas_call(
        _somtp_batch_kernel,
        out_shape=(
            jax.ShapeDtypeStruct((b, t, c), jnp.float32),    # h  (channel-last)
            jax.ShapeDtypeStruct((b, q, c), jnp.float32),    # concat [GTP; STP; DTP]
            jax.ShapeDtypeStruct((b, q, q), jnp.float32),    # attn
            jax.ShapeDtypeStruct((b, q, c), jnp.float32),    # ensemble (channel-last)
        ),
        grid=(b,),
        in_specs=[
            pl.BlockSpec((1, t, cin), lambda i: (i, 0, 0)),  # x (channel-last)
            full2(cin, c),       # conv1 weight^T
            full2(1, c),         # conv1 bias
            full2(1, t),         # global AVG vector
            full2(pr, t),        # segment AVG matrix
            full2(c, pr),        # prototypes
            full2(1, c),         # encoding Conv2d(256,1,1) weight (row)
            full2(1, q),         # switch
            full2(1, 1),         # encoding bias
        ],
        out_specs=(
            pl.BlockSpec((1, t, c), lambda i: (i, 0, 0)),
            pl.BlockSpec((1, q, c), lambda i: (i, 0, 0)),
            pl.BlockSpec((1, q, q), lambda i: (i, 0, 0)),
            pl.BlockSpec((1, q, c), lambda i: (i, 0, 0)),
        ),
        scratch_shapes=[
            pltpu.VMEM((rows, LANES), jnp.float32),   # R (skewed soft-DTW forward table)
            pltpu.VMEM((rows, LANES), jnp.float32),   # E (skewed alignment/backward table)
            pltpu.VMEM((rows, LANES), jnp.float32),   # D (skewed, zero-bordered cost table)
        ],
        compiler_params=pltpu.CompilerParams(dimension_semantics=("parallel",)),
    )(x_btc, p["w1_t"], p["b1"], p["gvec"], p["segmat"], p["protos"],
      p["wenc_row"], p["switch"], p["benc"])


# ------------------------------ decoder MLP ----------------------------------
def _mlp_kernel(x_ref, w1_ref, b1_ref, w2_ref, b2_ref, w3_ref, b3_ref, o_ref):
    # decoder: Linear -> ReLU -> Linear -> ReLU -> Linear (fused; purely weight-DMA bound,
    # so weights are stored in bf16 and accumulated in f32 on the MXU).
    x = x_ref[...].astype(jnp.bfloat16)
    h = jnp.dot(x, w1_ref[...], preferred_element_type=jnp.float32) + b1_ref[...]
    h = jnp.maximum(h, 0.0).astype(jnp.bfloat16)
    h = jnp.dot(h, w2_ref[...], preferred_element_type=jnp.float32) + b2_ref[...]
    h = jnp.maximum(h, 0.0).astype(jnp.bfloat16)
    o_ref[...] = (jnp.dot(h, w3_ref[...], preferred_element_type=jnp.float32)
                  + b3_ref[...]).astype(o_ref.dtype)


def decoder_mlp(x, w1_t, b1, w2_t, b2, w3_t, b3):
    m, d0 = x.shape
    d1, d2, d3 = w1_t.shape[1], w2_t.shape[1], w3_t.shape[1]
    full2 = lambda a, d: pl.BlockSpec((a, d), lambda i: (0, 0))
    return pl.pallas_call(
        _mlp_kernel,
        out_shape=jax.ShapeDtypeStruct((m, d3), jnp.float32),
        grid=(1,),
        in_specs=[full2(m, d0), full2(d0, d1), full2(1, d1),
                  full2(d1, d2), full2(1, d2), full2(d2, d3), full2(1, d3)],
        out_specs=full2(m, d3),
    )(x, w1_t, b1, w2_t, b2, w3_t, b3)


# ----------------------------- parameters -------------------------------------
def init_params(key):
    ks = jax.random.split(key, 11)
    s = 0.1
    p = {}
    p["w1_t"] = s * jax.random.normal(ks[0], (IN_SIZE, HIDDEN), jnp.float32)     # Conv1d weight^T
    p["b1"] = s * jax.random.normal(ks[1], (1, HIDDEN), jnp.float32)
    p["protos"] = s * jax.random.normal(ks[2], (HIDDEN, PROTOS), jnp.float32)    # nn.Parameter(256,P)
    p["switch"] = jnp.ones((1, 3 * PROTOS), jnp.float32)                         # nn.Parameter ones
    p["wenc_row"] = s * jax.random.normal(ks[3], (1, HIDDEN), jnp.float32)       # Conv2d(256,1,1) weight
    p["benc"] = s * jax.random.normal(ks[4], (1, 1), jnp.float32)
    # decoder weights stored bf16 (DMA-bound kernel); biases stay f32
    p["wd1_t"] = (s * jax.random.normal(ks[5], (HIDDEN * PROTOS, 512), jnp.float32)).astype(jnp.bfloat16)
    p["bd1"] = s * jax.random.normal(ks[6], (1, 512), jnp.float32)
    p["wd2_t"] = (s * jax.random.normal(ks[7], (512, 1024), jnp.float32)).astype(jnp.bfloat16)
    p["bd2"] = s * jax.random.normal(ks[8], (1, 1024), jnp.float32)
    p["wd3_t"] = (s * jax.random.normal(ks[9], (1024, CLASSES), jnp.float32)).astype(jnp.bfloat16)
    p["bd3"] = s * jax.random.normal(ks[10], (1, CLASSES), jnp.float32)
    # static segment ('AVG') and global ('AVG') pooling matrices
    seg_sizes = [TIME // PROTOS] * PROTOS
    seg_sizes[-1] += TIME - sum(seg_sizes)
    rows, off = [], 0
    for sz in seg_sizes:
        rows.append(jnp.zeros((TIME,), jnp.float32).at[off:off + sz].set(1.0 / sz))
        off += sz
    p["segmat"] = jnp.stack(rows, axis=0)                                        # (P, T)
    p["gvec"] = jnp.full((1, TIME), 1.0 / TIME, jnp.float32)                     # (1, T)
    return p


# ------------------------------ forward ---------------------------------------
@jax.jit
def somtp_forward(x, p):
    b = x.shape[0]
    c, pr = HIDDEN, PROTOS

    x_btc = jnp.transpose(x, (0, 2, 1))                               # (B, T, Cin)
    h_btc, concat_cl, attn, ens_cl = switch_pool_fused(x_btc, p)      # fused Pallas kernel
    x_bct = jnp.transpose(h_btc, (0, 2, 1))                           # public (B, 256, T)

    # switch_pool 'MAX' branch, fully on device (no .item() host sync)
    idx = jnp.argmax(attn, axis=2).astype(jnp.float32)                # (B, 3P)
    ind = jnp.mean(idx)
    op = jnp.where(ind < pr + 1, 0,
                   jnp.where(ind <= 2 * pr + 1, 1, 2)).astype(jnp.int32)

    out1_cl = concat_cl[:, :pr]                                       # (B, P, 256)
    out2_cl = concat_cl[:, pr:2 * pr]
    out3_cl = concat_cl[:, 2 * pr:]
    one_cl = jnp.where(op == 0, out1_cl, jnp.where(op == 1, out2_cl, out3_cl))
    one = jnp.transpose(one_cl, (0, 2, 1))                            # public (B, 256, P)

    # ensemble[b, c, 0, j] (computed channel-last inside the kernel)
    ensemble = jnp.transpose(ens_cl, (0, 2, 1))[:, :, None, :]        # (B, 256, 1, 3P)

    # decoder on the selected pooling (channel-major flatten, as in PyTorch)
    flat = one.reshape(b, c * pr)
    out = decoder_mlp(flat, p["wd1_t"], p["bd1"], p["wd2_t"], p["bd2"],
                      p["wd3_t"], p["bd3"])

    return x_bct, out, ensemble, one, op, attn


if __name__ == "__main__":
    key = jax.random.PRNGKey(0)
    pkey, xkey = jax.random.split(key)
    params = init_params(pkey)
    x = jax.random.normal(xkey, (BATCH, IN_SIZE, TIME), dtype=jnp.float32)

    xh, out, ensem, one, op, attn = somtp_forward(x, params)
    jax.block_until_ready((xh, out, ensem, one, op, attn))

    assert xh.shape == (BATCH, HIDDEN, TIME)
    assert out.shape == (BATCH, CLASSES)
    assert ensem.shape == (BATCH, HIDDEN, 1, 3 * PROTOS)
    assert one.shape == (BATCH, HIDDEN, PROTOS)
    assert attn.shape == (BATCH, 3 * PROTOS, 3 * PROTOS)
    assert int(op) in (0, 1, 2)
    assert bool(jnp.all(jnp.isfinite(out))) and bool(jnp.all(jnp.isfinite(attn)))
    assert bool(jnp.all(jnp.isfinite(ensem))) and bool(jnp.all(jnp.isfinite(one)))
    print("KERNEL_OK")
</pallas_src>

<mosaic_0001>
module attributes {stable_mosaic.version = 11 : i64} {
  func.func @_somtp_batch_kernel(%arg0: i32, %arg1: memref<1x16x8xf32, #tpu.memory_space<vmem>>, %arg2: memref<8x256xf32, #tpu.memory_space<vmem>>, %arg3: memref<1x256xf32, #tpu.memory_space<vmem>>, %arg4: memref<1x16xf32, #tpu.memory_space<vmem>>, %arg5: memref<4x16xf32, #tpu.memory_space<vmem>>, %arg6: memref<256x4xf32, #tpu.memory_space<vmem>>, %arg7: memref<1x256xf32, #tpu.memory_space<vmem>>, %arg8: memref<1x12xf32, #tpu.memory_space<vmem>>, %arg9: memref<1x1xf32, #tpu.memory_space<vmem>>, %arg10: memref<1x16x256xf32, #tpu.memory_space<vmem>>, %arg11: memref<1x12x256xf32, #tpu.memory_space<vmem>>, %arg12: memref<1x12x12xf32, #tpu.memory_space<vmem>>, %arg13: memref<1x12x256xf32, #tpu.memory_space<vmem>>, %arg14: memref<23x128xf32, #tpu.memory_space<vmem>>, %arg15: memref<23x128xf32, #tpu.memory_space<vmem>>, %arg16: memref<23x128xf32, #tpu.memory_space<vmem>>) attributes {dimension_semantics = [#tpu.dimension_semantics<parallel>], iteration_bounds = array<i64: 2>, scalar_prefetch = 0 : i64, scratch_operands = 3 : i64, tpu.core_type = #tpu.core_type<tc>, window_params = [{transform_indices = @transform_0, window_bounds = array<i64: 1, 16, 8>}, {pipeline_mode = #tpu.pipeline_mode<synchronous>, transform_indices = @transform_1, window_bounds = array<i64: 8, 256>}, {pipeline_mode = #tpu.pipeline_mode<synchronous>, transform_indices = @transform_2, window_bounds = array<i64: 1, 256>}, {pipeline_mode = #tpu.pipeline_mode<synchronous>, transform_indices = @transform_3, window_bounds = array<i64: 1, 16>}, {pipeline_mode = #tpu.pipeline_mode<synchronous>, transform_indices = @transform_4, window_bounds = array<i64: 4, 16>}, {pipeline_mode = #tpu.pipeline_mode<synchronous>, transform_indices = @transform_5, window_bounds = array<i64: 256, 4>}, {pipeline_mode = #tpu.pipeline_mode<synchronous>, transform_indices = @transform_6, window_bounds = array<i64: 1, 256>}, {pipeline_mode = #tpu.pipeline_mode<synchronous>, transform_indices = @transform_7, window_bounds = array<i64: 1, 12>}, {pipeline_mode = #tpu.pipeline_mode<synchronous>, transform_indices = @transform_8, window_bounds = array<i64: 1, 1>}, {transform_indices = @transform_9, window_bounds = array<i64: 1, 16, 256>}, {transform_indices = @transform_10, window_bounds = array<i64: 1, 12, 256>}, {transform_indices = @transform_11, window_bounds = array<i64: 1, 12, 12>}, {transform_indices = @transform_12, window_bounds = array<i64: 1, 12, 256>}]} {
    %0 = tpu.iota {dimensions = array<i32: 1>} : vector<1x128xi32>
    %c0 = arith.constant 0 : index
    %c0_0 = arith.constant 0 : index
    %c0_1 = arith.constant 0 : index
    %1 = vector.load %arg1[%c0, %c0_0, %c0_1] : memref<1x16x8xf32, #tpu.memory_space<vmem>>, vector<1x16x8xf32>
    %2 = vector.shape_cast %1 : vector<1x16x8xf32> to vector<16x8xf32>
    %c0_2 = arith.constant 0 : index
    %c0_3 = arith.constant 0 : index
    %3 = vector.load %arg2[%c0_2, %c0_3] : memref<8x256xf32, #tpu.memory_space<vmem>>, vector<8x256xf32>
    %cst = arith.constant dense<0.000000e+00> : vector<16x256xf32>
    %4 = tpu.matmul %2, %3, %cst {dimension_numbers = #tpu.dot_dimension_numbers<[1], [0], [0], [1], [0, 0, 1, 1], [], []>} : vector<16x8xf32>, vector<8x256xf32>, vector<16x256xf32> -> vector<16x256xf32>
    %c0_4 = arith.constant 0 : index
    %c0_5 = arith.constant 0 : index
    %5 = vector.load %arg3[%c0_4, %c0_5] : memref<1x256xf32, #tpu.memory_space<vmem>>, vector<1x256xf32>
    %6 = vector.broadcast %5 : vector<1x256xf32> to vector<16x256xf32>
    %7 = arith.addf %4, %6 : vector<16x256xf32>
    %cst_6 = arith.constant 0.000000e+00 : f32
    %8 = vector.broadcast %cst_6 : f32 to vector<16x256xf32>
    %9 = arith.maximumf %7, %8 : vector<16x256xf32>
    %c0_7 = arith.constant 0 : index
    %c0_8 = arith.constant 0 : index
    %c0_9 = arith.constant 0 : index
    %10 = vector.load %arg10[%c0_7, %c0_8, %c0_9] : memref<1x16x256xf32, #tpu.memory_space<vmem>>, vector<1x16x256xf32>
    %11 = vector.shape_cast %10 : vector<1x16x256xf32> to vector<16x256xf32>
    %12 = vector.shape_cast %9 : vector<16x256xf32> to vector<1x16x256xf32>
    tpu.vector_store %arg10[%c0_7, %c0_8, %c0_9], %12 {strides = array<i32>} : memref<1x16x256xf32, #tpu.memory_space<vmem>>, vector<1x16x256xf32>,
    %c0_10 = arith.constant 0 : index
    %c0_11 = arith.constant 0 : index
    %13 = vector.load %arg4[%c0_10, %c0_11] : memref<1x16xf32, #tpu.memory_space<vmem>>, vector<1x16xf32>
    %cst_12 = arith.constant dense<0.000000e+00> : vector<1x256xf32>
    %14 = tpu.matmul %13, %9, %cst_12 {dimension_numbers = #tpu.dot_dimension_numbers<[1], [0], [0], [1], [0, 0, 1, 1], [], []>} : vector<1x16xf32>, vector<16x256xf32>, vector<1x256xf32> -> vector<1x256xf32>
    %c0_13 = arith.constant 0 : index
    %c0_14 = arith.constant 0 : index
    %15 = vector.load %arg5[%c0_13, %c0_14] : memref<4x16xf32, #tpu.memory_space<vmem>>, vector<4x16xf32>
    %cst_15 = arith.constant dense<0.000000e+00> : vector<4x256xf32>
    %16 = tpu.matmul %15, %9, %cst_15 {dimension_numbers = #tpu.dot_dimension_numbers<[1], [0], [0], [1], [0, 0, 1, 1], [], []>} : vector<4x16xf32>, vector<16x256xf32>, vector<4x256xf32> -> vector<4x256xf32>
    %c0_16 = arith.constant 0 : index
    %c0_17 = arith.constant 0 : index
    %17 = vector.load %arg6[%c0_16, %c0_17] : memref<256x4xf32, #tpu.memory_space<vmem>>, vector<256x4xf32>
    %cst_18 = arith.constant dense<0.000000e+00> : vector<16x4xf32>
    %18 = tpu.matmul %9, %17, %cst_18 {dimension_numbers = #tpu.dot_dimension_numbers<[1], [0], [0], [1], [0, 0, 1, 1], [], []>} : vector<16x256xf32>, vector<256x4xf32>, vector<16x4xf32> -> vector<16x4xf32>
    %19 = arith.mulf %9, %9 : vector<16x256xf32>
    %cst_19 = arith.constant dense<0.000000e+00> : vector<16xf32>
    %20 = vector.multi_reduction <add>, %19, %cst_19 [1] : vector<16x256xf32> to vector<16xf32>
    %21 = vector.shape_cast %20 : vector<16xf32> to vector<16x1xf32>
    %22 = arith.mulf %17, %17 : vector<256x4xf32>
    %cst_20 = arith.constant dense<0.000000e+00> : vector<4xf32>
    %23 = vector.multi_reduction <add>, %22, %cst_20 [0] : vector<256x4xf32> to vector<4xf32>
    %24 = vector.shape_cast %23 : vector<4xf32> to vector<1x4xf32>
    %25 = vector.broadcast %21 : vector<16x1xf32> to vector<16x4xf32>
    %26 = vector.broadcast %24 : vector<1x4xf32> to vector<16x4xf32>
    %27 = arith.addf %25, %26 : vector<16x4xf32>
    %cst_21 = arith.constant 2.000000e+00 : f32
    %28 = vector.broadcast %cst_21 : f32 to vector<16x4xf32>
    %29 = arith.mulf %28, %18 : vector<16x4xf32>
    %30 = arith.subf %27, %29 : vector<16x4xf32>
    %cst_22 = arith.constant 0.000000e+00 : f32
    %31 = vector.broadcast %cst_22 : f32 to vector<16x4xf32>
    %32 = arith.maximumf %30, %31 : vector<16x4xf32>
    %cst_23 = arith.constant 0.000000e+00 : f32
    %33 = vector.broadcast %cst_23 : f32 to vector<23x128xf32>
    %c0_24 = arith.constant 0 : index
    %c0_25 = arith.constant 0 : index
    %34 = vector.load %arg16[%c0_24, %c0_25] : memref<23x128xf32, #tpu.memory_space<vmem>>, vector<23x128xf32>
    tpu.vector_store %arg16[%c0_24, %c0_25], %33 {strides = array<i32>} : memref<23x128xf32, #tpu.memory_space<vmem>>, vector<23x128xf32>,
    %35 = vector.extract_strided_slice %32 {offsets = [0, 0], sizes = [16, 1], strides = [1, 1]} : vector<16x4xf32> to vector<16x1xf32>
    %c2 = arith.constant 2 : index
    %c1 = arith.constant 1 : index
    %36 = vector.load %arg16[%c2, %c1] : memref<23x128xf32, #tpu.memory_space<vmem>>, vector<16x1xf32>
    tpu.vector_store %arg16[%c2, %c1], %35 {strides = array<i32>} : memref<23x128xf32, #tpu.memory_space<vmem>>, vector<16x1xf32>,
    %37 = vector.extract_strided_slice %32 {offsets = [0, 1], sizes = [16, 1], strides = [1, 1]} : vector<16x4xf32> to vector<16x1xf32>
    %c3 = arith.constant 3 : index
    %c2_26 = arith.constant 2 : index
    %38 = vector.load %arg16[%c3, %c2_26] : memref<23x128xf32, #tpu.memory_space<vmem>>, vector<16x1xf32>
    tpu.vector_store %arg16[%c3, %c2_26], %37 {strides = array<i32>} : memref<23x128xf32, #tpu.memory_space<vmem>>, vector<16x1xf32>,
    %39 = vector.extract_strided_slice %32 {offsets = [0, 2], sizes = [16, 1], strides = [1, 1]} : vector<16x4xf32> to vector<16x1xf32>
    %c4 = arith.constant 4 : index
    %c3_27 = arith.constant 3 : index
    %40 = vector.load %arg16[%c4, %c3_27] : memref<23x128xf32, #tpu.memory_space<vmem>>, vector<16x1xf32>
    tpu.vector_store %arg16[%c4, %c3_27], %39 {strides = array<i32>} : memref<23x128xf32, #tpu.memory_space<vmem>>, vector<16x1xf32>,
    %41 = vector.extract_strided_slice %32 {offsets = [0, 3], sizes = [16, 1], strides = [1, 1]} : vector<16x4xf32> to vector<16x1xf32>
    %c5 = arith.constant 5 : index
    %c4_28 = arith.constant 4 : index
    %42 = vector.load %arg16[%c5, %c4_28] : memref<23x128xf32, #tpu.memory_space<vmem>>, vector<16x1xf32>
    tpu.vector_store %arg16[%c5, %c4_28], %41 {strides = array<i32>} : memref<23x128xf32, #tpu.memory_space<vmem>>, vector<16x1xf32>,
    %c0_i32 = arith.constant 0 : i32
    %43 = vector.broadcast %c0_i32 : i32 to vector<1x128xi32>
    %44 = arith.cmpi eq, %0, %43 : vector<1x128xi32>
    %cst_29 = arith.constant 0.000000e+00 : f32
    %cst_30 = arith.constant 1.000000e+30 : f32
    %45 = vector.broadcast %cst_29 : f32 to vector<1x128xf32>
    %46 = vector.broadcast %cst_30 : f32 to vector<1x128xf32>
    %47 = arith.select %44, %45, %46 : vector<1x128xi1>, vector<1x128xf32>
    %cst_31 = arith.constant 1.000000e+30 : f32
    %48 = vector.broadcast %cst_31 : f32 to vector<1x128xf32>
    %c2_32 = arith.constant 2 : index
    %c0_33 = arith.constant 0 : index
    %49 = vector.load %arg16[%c2_32, %c0_33] : memref<23x128xf32, #tpu.memory_space<vmem>>, vector<1x128xf32>
    %50 = vector.extract_strided_slice %48 {offsets = [0, 0], sizes = [1, 1], strides = [1, 1]} : vector<1x128xf32> to vector<1x1xf32>
    %51 = vector.extract_strided_slice %48 {offsets = [0, 0], sizes = [1, 127], strides = [1, 1]} : vector<1x128xf32> to vector<1x127xf32>
    %52 = tpu.concatenate %50, %51 in 1 : vector<1x1xf32>, vector<1x127xf32> -> vector<1x128xf32>
    %53 = vector.extract_strided_slice %47 {offsets = [0, 0], sizes = [1, 1], strides = [1, 1]} : vector<1x128xf32> to vector<1x1xf32>
    %54 = vector.extract_strided_slice %47 {offsets = [0, 0], sizes = [1, 127], strides = [1, 1]} : vector<1x128xf32> to vector<1x127xf32>
    %55 = tpu.concatenate %53, %54 in 1 : vector<1x1xf32>, vector<1x127xf32> -> vector<1x128xf32>
    %cst_34 = arith.constant 0.000000e+00 : f32
    %56 = vector.broadcast %cst_34 : f32 to vector<1x128xf32>
    %57 = arith.subf %56, %55 : vector<1x128xf32>
    %cst_35 = arith.constant 0.000000e+00 : f32
    %58 = vector.broadcast %cst_35 : f32 to vector<1x128xf32>
    %59 = arith.subf %58, %48 : vector<1x128xf32>
    %cst_36 = arith.constant 0.000000e+00 : f32
    %60 = vector.broadcast %cst_36 : f32 to vector<1x128xf32>
    %61 = arith.subf %60, %52 : vector<1x128xf32>
    %62 = arith.maximumf %57, %59 : vector<1x128xf32>
    %63 = arith.maximumf %62, %61 : vector<1x128xf32>
    %64 = arith.subf %57, %63 : vector<1x128xf32>
    %65 = math.exp %64 : vector<1x128xf32>
    %66 = arith.subf %59, %63 : vector<1x128xf32>
    %67 = math.exp %66 : vector<1x128xf32>
    %68 = arith.addf %65, %67 : vector<1x128xf32>
    %69 = arith.subf %61, %63 : vector<1x128xf32>
    %70 = math.exp %69 : vector<1x128xf32>
    %71 = arith.addf %68, %70 : vector<1x128xf32>
    %72 = math.log %71 : vector<1x128xf32>
    %73 = arith.addf %72, %63 : vector<1x128xf32>
    %74 = arith.subf %49, %73 : vector<1x128xf32>
    %c5_i32 = arith.constant 5 : i32
    %75 = vector.broadcast %c5_i32 : i32 to vector<1x128xi32>
    %76 = arith.cmpi eq, %0, %75 : vector<1x128xi32>
    %c-15_i32 = arith.constant -15 : i32
    %77 = vector.broadcast %c-15_i32 : i32 to vector<1x128xi32>
    %78 = arith.cmpi sle, %0, %77 : vector<1x128xi32>
    %79 = arith.ori %76, %78 : vector<1x128xi1>
    %cst_37 = arith.constant -1.000000e+30 : f32
    %cst_38 = arith.constant 1.000000e+30 : f32
    %80 = vector.broadcast %cst_37 : f32 to vector<1x128xf32>
    %81 = vector.broadcast %cst_38 : f32 to vector<1x128xf32>
    %82 = arith.select %79, %80, %81 : vector<1x128xi1>, vector<1x128xf32>
    %c1_i32 = arith.constant 1 : i32
    %83 = vector.broadcast %c1_i32 : i32 to vector<1x128xi32>
    %84 = arith.cmpi sge, %0, %83 : vector<1x128xi32>
    %c1_i32_39 = arith.constant 1 : i32
    %85 = vector.broadcast %c1_i32_39 : i32 to vector<1x128xi32>
    %86 = arith.cmpi sle, %0, %85 : vector<1x128xi32>
    %87 = arith.andi %84, %86 : vector<1x128xi1>
    %88 = arith.select %87, %74, %82 : vector<1x128xi1>, vector<1x128xf32>
    %c2_40 = arith.constant 2 : index
    %c0_41 = arith.constant 0 : index
    %89 = vector.load %arg14[%c2_40, %c0_41] : memref<23x128xf32, #tpu.memory_space<vmem>>, vector<1x128xf32>
    tpu.vector_store %arg14[%c2_40, %c0_41], %88 {strides = array<i32>} : memref<23x128xf32, #tpu.memory_space<vmem>>, vector<1x128xf32>,
    %c3_42 = arith.constant 3 : index
    %c0_43 = arith.constant 0 : index
    %90 = vector.load %arg16[%c3_42, %c0_43] : memref<23x128xf32, #tpu.memory_space<vmem>>, vector<1x128xf32>
    %91 = vector.extract_strided_slice %88 {offsets = [0, 0], sizes = [1, 1], strides = [1, 1]} : vector<1x128xf32> to vector<1x1xf32>
    %92 = vector.extract_strided_slice %88 {offsets = [0, 0], sizes = [1, 127], strides = [1, 1]} : vector<1x128xf32> to vector<1x127xf32>
    %93 = tpu.concatenate %91, %92 in 1 : vector<1x1xf32>, vector<1x127xf32> -> vector<1x128xf32>
    %94 = vector.extract_strided_slice %48 {offsets = [0, 0], sizes = [1, 1], strides = [1, 1]} : vector<1x128xf32> to vector<1x1xf32>
    %95 = vector.extract_strided_slice %48 {offsets = [0, 0], sizes = [1, 127], strides = [1, 1]} : vector<1x128xf32> to vector<1x127xf32>
    %96 = tpu.concatenate %94, %95 in 1 : vector<1x1xf32>, vector<1x127xf32> -> vector<1x128xf32>
    %cst_44 = arith.constant 0.000000e+00 : f32
    %97 = vector.broadcast %cst_44 : f32 to vector<1x128xf32>
    %98 = arith.subf %97, %96 : vector<1x128xf32>
    %cst_45 = arith.constant 0.000000e+00 : f32
    %99 = vector.broadcast %cst_45 : f32 to vector<1x128xf32>
    %100 = arith.subf %99, %88 : vector<1x128xf32>
    %cst_46 = arith.constant 0.000000e+00 : f32
    %101 = vector.broadcast %cst_46 : f32 to vector<1x128xf32>
    %102 = arith.subf %101, %93 : vector<1x128xf32>
    %103 = arith.maximumf %98, %100 : vector<1x128xf32>
    %104 = arith.maximumf %103, %102 : vector<1x128xf32>
    %105 = arith.subf %98, %104 : vector<1x128xf32>
    %106 = math.exp %105 : vector<1x128xf32>
    %107 = arith.subf %100, %104 : vector<1x128xf32>
    %108 = math.exp %107 : vector<1x128xf32>
    %109 = arith.addf %106, %108 : vector<1x128xf32>
    %110 = arith.subf %102, %104 : vector<1x128xf32>
    %111 = math.exp %110 : vector<1x128xf32>
    %112 = arith.addf %109, %111 : vector<1x128xf32>
    %113 = math.log %112 : vector<1x128xf32>
    %114 = arith.addf %113, %104 : vector<1x128xf32>
    %115 = arith.subf %90, %114 : vector<1x128xf32>
    %c5_i32_47 = arith.constant 5 : i32
    %116 = vector.broadcast %c5_i32_47 : i32 to vector<1x128xi32>
    %117 = arith.cmpi eq, %0, %116 : vector<1x128xi32>
    %c-14_i32 = arith.constant -14 : i32
    %118 = vector.broadcast %c-14_i32 : i32 to vector<1x128xi32>
    %119 = arith.cmpi sle, %0, %118 : vector<1x128xi32>
    %120 = arith.ori %117, %119 : vector<1x128xi1>
    %cst_48 = arith.constant -1.000000e+30 : f32
    %cst_49 = arith.constant 1.000000e+30 : f32
    %121 = vector.broadcast %cst_48 : f32 to vector<1x128xf32>
    %122 = vector.broadcast %cst_49 : f32 to vector<1x128xf32>
    %123 = arith.select %120, %121, %122 : vector<1x128xi1>, vector<1x128xf32>
    %c1_i32_50 = arith.constant 1 : i32
    %124 = vector.broadcast %c1_i32_50 : i32 to vector<1x128xi32>
    %125 = arith.cmpi sge, %0, %124 : vector<1x128xi32>
    %c2_i32 = arith.constant 2 : i32
    %126 = vector.broadcast %c2_i32 : i32 to vector<1x128xi32>
    %127 = arith.cmpi sle, %0, %126 : vector<1x128xi32>
    %128 = arith.andi %125, %127 : vector<1x128xi1>
    %129 = arith.select %128, %115, %123 : vector<1x128xi1>, vector<1x128xf32>
    %c3_51 = arith.constant 3 : index
    %c0_52 = arith.constant 0 : index
    %130 = vector.load %arg14[%c3_51, %c0_52] : memref<23x128xf32, #tpu.memory_space<vmem>>, vector<1x128xf32>
    tpu.vector_store %arg14[%c3_51, %c0_52], %129 {strides = array<i32>} : memref<23x128xf32, #tpu.memory_space<vmem>>, vector<1x128xf32>,
    %c4_53 = arith.constant 4 : index
    %c0_54 = arith.constant 0 : index
    %131 = vector.load %arg16[%c4_53, %c0_54] : memref<23x128xf32, #tpu.memory_space<vmem>>, vector<1x128xf32>
    %132 = vector.extract_strided_slice %129 {offsets = [0, 0], sizes = [1, 1], strides = [1, 1]} : vector<1x128xf32> to vector<1x1xf32>
    %133 = vector.extract_strided_slice %129 {offsets = [0, 0], sizes = [1, 127], strides = [1, 1]} : vector<1x128xf32> to vector<1x127xf32>
    %134 = tpu.concatenate %132, %133 in 1 : vector<1x1xf32>, vector<1x127xf32> -> vector<1x128xf32>
    %135 = vector.extract_strided_slice %88 {offsets = [0, 0], sizes = [1, 1], strides = [1, 1]} : vector<1x128xf32> to vector<1x1xf32>
    %136 = vector.extract_strided_slice %88 {offsets = [0, 0], sizes = [1, 127], strides = [1, 1]} : vector<1x128xf32> to vector<1x127xf32>
    %137 = tpu.concatenate %135, %136 in 1 : vector<1x1xf32>, vector<1x127xf32> -> vector<1x128xf32>
    %cst_55 = arith.constant 0.000000e+00 : f32
    %138 = vector.broadcast %cst_55 : f32 to vector<1x128xf32>
    %139 = arith.subf %138, %137 : vector<1x128xf32>
    %cst_56 = arith.constant 0.000000e+00 : f32
    %140 = vector.broadcast %cst_56 : f32 to vector<1x128xf32>
    %141 = arith.subf %140, %129 : vector<1x128xf32>
    %cst_57 = arith.constant 0.000000e+00 : f32
    %142 = vector.broadcast %cst_57 : f32 to vector<1x128xf32>
    %143 = arith.subf %142, %134 : vector<1x128xf32>
    %144 = arith.maximumf %139, %141 : vector<1x128xf32>
    %145 = arith.maximumf %144, %143 : vector<1x128xf32>
    %146 = arith.subf %139, %145 : vector<1x128xf32>
    %147 = math.exp %146 : vector<1x128xf32>
    %148 = arith.subf %141, %145 : vector<1x128xf32>
    %149 = math.exp %148 : vector<1x128xf32>
    %150 = arith.addf %147, %149 : vector<1x128xf32>
    %151 = arith.subf %143, %145 : vector<1x128xf32>
    %152 = math.exp %151 : vector<1x128xf32>
    %153 = arith.addf %150, %152 : vector<1x128xf32>
    %154 = math.log %153 : vector<1x128xf32>
    %155 = arith.addf %154, %145 : vector<1x128xf32>
    %156 = arith.subf %131, %155 : vector<1x128xf32>
    %c5_i32_58 = arith.constant 5 : i32
    %157 = vector.broadcast %c5_i32_58 : i32 to vector<1x128xi32>
    %158 = arith.cmpi eq, %0, %157 : vector<1x128xi32>
    %c-13_i32 = arith.constant -13 : i32
    %159 = vector.broadcast %c-13_i32 : i32 to vector<1x128xi32>
    %160 = arith.cmpi sle, %0, %159 : vector<1x128xi32>
    %161 = arith.ori %158, %160 : vector<1x128xi1>
    %cst_59 = arith.constant -1.000000e+30 : f32
    %cst_60 = arith.constant 1.000000e+30 : f32
    %162 = vector.broadcast %cst_59 : f32 to vector<1x128xf32>
    %163 = vector.broadcast %cst_60 : f32 to vector<1x128xf32>
    %164 = arith.select %161, %162, %163 : vector<1x128xi1>, vector<1x128xf32>
    %c1_i32_61 = arith.constant 1 : i32
    %165 = vector.broadcast %c1_i32_61 : i32 to vector<1x128xi32>
    %166 = arith.cmpi sge, %0, %165 : vector<1x128xi32>
    %c3_i32 = arith.constant 3 : i32
    %167 = vector.broadcast %c3_i32 : i32 to vector<1x128xi32>
    %168 = arith.cmpi sle, %0, %167 : vector<1x128xi32>
    %169 = arith.andi %166, %168 : vector<1x128xi1>
    %170 = arith.select %169, %156, %164 : vector<1x128xi1>, vector<1x128xf32>
    %c4_62 = arith.constant 4 : index
    %c0_63 = arith.constant 0 : index
    %171 = vector.load %arg14[%c4_62, %c0_63] : memref<23x128xf32, #tpu.memory_space<vmem>>, vector<1x128xf32>
    tpu.vector_store %arg14[%c4_62, %c0_63], %170 {strides = array<i32>} : memref<23x128xf32, #tpu.memory_space<vmem>>, vector<1x128xf32>,
    %c5_64 = arith.constant 5 : index
    %c0_65 = arith.constant 0 : index
    %172 = vector.load %arg16[%c5_64, %c0_65] : memref<23x128xf32, #tpu.memory_space<vmem>>, vector<1x128xf32>
    %173 = vector.extract_strided_slice %170 {offsets = [0, 0], sizes = [1, 1], strides = [1, 1]} : vector<1x128xf32> to vector<1x1xf32>
    %174 = vector.extract_strided_slice %170 {offsets = [0, 0], sizes = [1, 127], strides = [1, 1]} : vector<1x128xf32> to vector<1x127xf32>
    %175 = tpu.concatenate %173, %174 in 1 : vector<1x1xf32>, vector<1x127xf32> -> vector<1x128xf32>
    %176 = vector.extract_strided_slice %129 {offsets = [0, 0], sizes = [1, 1], strides = [1, 1]} : vector<1x128xf32> to vector<1x1xf32>
    %177 = vector.extract_strided_slice %129 {offsets = [0, 0], sizes = [1, 127], strides = [1, 1]} : vector<1x128xf32> to vector<1x127xf32>
    %178 = tpu.concatenate %176, %177 in 1 : vector<1x1xf32>, vector<1x127xf32> -> vector<1x128xf32>
    %cst_66 = arith.constant 0.000000e+00 : f32
    %179 = vector.broadcast %cst_66 : f32 to vector<1x128xf32>
    %180 = arith.subf %179, %178 : vector<1x128xf32>
    %cst_67 = arith.constant 0.000000e+00 : f32
    %181 = vector.broadcast %cst_67 : f32 to vector<1x128xf32>
    %182 = arith.subf %181, %170 : vector<1x128xf32>
    %cst_68 = arith.constant 0.000000e+00 : f32
    %183 = vector.broadcast %cst_68 : f32 to vector<1x128xf32>
    %184 = arith.subf %183, %175 : vector<1x128xf32>
    %185 = arith.maximumf %180, %182 : vector<1x128xf32>
    %186 = arith.maximumf %185, %184 : vector<1x128xf32>
    %187 = arith.subf %180, %186 : vector<1x128xf32>
    %188 = math.exp %187 : vector<1x128xf32>
    %189 = arith.subf %182, %186 : vector<1x128xf32>
    %190 = math.exp %189 : vector<1x128xf32>
    %191 = arith.addf %188, %190 : vector<1x128xf32>
    %192 = arith.subf %184, %186 : vector<1x128xf32>
    %193 = math.exp %192 : vector<1x128xf32>
    %194 = arith.addf %191, %193 : vector<1x128xf32>
    %195 = math.log %194 : vector<1x128xf32>
    %196 = arith.addf %195, %186 : vector<1x128xf32>
    %197 = arith.subf %172, %196 : vector<1x128xf32>
    %c5_i32_69 = arith.constant 5 : i32
    %198 = vector.broadcast %c5_i32_69 : i32 to vector<1x128xi32>
    %199 = arith.cmpi eq, %0, %198 : vector<1x128xi32>
    %c-12_i32 = arith.constant -12 : i32
    %200 = vector.broadcast %c-12_i32 : i32 to vector<1x128xi32>
    %201 = arith.cmpi sle, %0, %200 : vector<1x128xi32>
    %202 = arith.ori %199, %201 : vector<1x128xi1>
    %cst_70 = arith.constant -1.000000e+30 : f32
    %cst_71 = arith.constant 1.000000e+30 : f32
    %203 = vector.broadcast %cst_70 : f32 to vector<1x128xf32>
    %204 = vector.broadcast %cst_71 : f32 to vector<1x128xf32>
    %205 = arith.select %202, %203, %204 : vector<1x128xi1>, vector<1x128xf32>
    %c1_i32_72 = arith.constant 1 : i32
    %206 = vector.broadcast %c1_i32_72 : i32 to vector<1x128xi32>
    %207 = arith.cmpi sge, %0, %206 : vector<1x128xi32>
    %c4_i32 = arith.constant 4 : i32
    %208 = vector.broadcast %c4_i32 : i32 to vector<1x128xi32>
    %209 = arith.cmpi sle, %0, %208 : vector<1x128xi32>
    %210 = arith.andi %207, %209 : vector<1x128xi1>
    %211 = arith.select %210, %197, %205 : vector<1x128xi1>, vector<1x128xf32>
    %c5_73 = arith.constant 5 : index
    %c0_74 = arith.constant 0 : index
    %212 = vector.load %arg14[%c5_73, %c0_74] : memref<23x128xf32, #tpu.memory_space<vmem>>, vector<1x128xf32>
    tpu.vector_store %arg14[%c5_73, %c0_74], %211 {strides = array<i32>} : memref<23x128xf32, #tpu.memory_space<vmem>>, vector<1x128xf32>,
    %c6 = arith.constant 6 : index
    %c0_75 = arith.constant 0 : index
    %213 = vector.load %arg16[%c6, %c0_75] : memref<23x128xf32, #tpu.memory_space<vmem>>, vector<1x128xf32>
    %214 = vector.extract_strided_slice %211 {offsets = [0, 0], sizes = [1, 1], strides = [1, 1]} : vector<1x128xf32> to vector<1x1xf32>
    %215 = vector.extract_strided_slice %211 {offsets = [0, 0], sizes = [1, 127], strides = [1, 1]} : vector<1x128xf32> to vector<1x127xf32>
    %216 = tpu.concatenate %214, %215 in 1 : vector<1x1xf32>, vector<1x127xf32> -> vector<1x128xf32>
    %217 = vector.extract_strided_slice %170 {offsets = [0, 0], sizes = [1, 1], strides = [1, 1]} : vector<1x128xf32> to vector<1x1xf32>
    %218 = vector.extract_strided_slice %170 {offsets = [0, 0], sizes = [1, 127], strides = [1, 1]} : vector<1x128xf32> to vector<1x127xf32>
    %219 = tpu.concatenate %217, %218 in 1 : vector<1x1xf32>, vector<1x127xf32> -> vector<1x128xf32>
    %cst_76 = arith.constant 0.000000e+00 : f32
    %220 = vector.broadcast %cst_76 : f32 to vector<1x128xf32>
    %221 = arith.subf %220, %219 : vector<1x128xf32>
    %cst_77 = arith.constant 0.000000e+00 : f32
    %222 = vector.broadcast %cst_77 : f32 to vector<1x128xf32>
    %223 = arith.subf %222, %211 : vector<1x128xf32>
    %cst_78 = arith.constant 0.000000e+00 : f32
    %224 = vector.broadcast %cst_78 : f32 to vector<1x128xf32>
    %225 = arith.subf %224, %216 : vector<1x128xf32>
    %226 = arith.maximumf %221, %223 : vector<1x128xf32>
    %227 = arith.maximumf %226, %225 : vector<1x128xf32>
    %228 = arith.subf %221, %227 : vector<1x128xf32>
    %229 = math.exp %228 : vector<1x128xf32>
    %230 = arith.subf %223, %227 : vector<1x128xf32>
    %231 = math.exp %230 : vector<1x128xf32>
    %232 = arith.addf %229, %231 : vector<1x128xf32>
    %233 = arith.subf %225, %227 : vector<1x128xf32>
    %234 = math.exp %233 : vector<1x128xf32>
    %235 = arith.addf %232, %234 : vector<1x128xf32>
    %236 = math.log %235 : vector<1x128xf32>
    %237 = arith.addf %236, %227 : vector<1x128xf32>
    %238 = arith.subf %213, %237 : vector<1x128xf32>
    %c5_i32_79 = arith.constant 5 : i32
    %239 = vector.broadcast %c5_i32_79 : i32 to vector<1x128xi32>
    %240 = arith.cmpi eq, %0, %239 : vector<1x128xi32>
    %c-11_i32 = arith.constant -11 : i32
    %241 = vector.broadcast %c-11_i32 : i32 to vector<1x128xi32>
    %242 = arith.cmpi sle, %0, %241 : vector<1x128xi32>
    %243 = arith.ori %240, %242 : vector<1x128xi1>
    %cst_80 = arith.constant -1.000000e+30 : f32
    %cst_81 = arith.constant 1.000000e+30 : f32
    %244 = vector.broadcast %cst_80 : f32 to vector<1x128xf32>
    %245 = vector.broadcast %cst_81 : f32 to vector<1x128xf32>
    %246 = arith.select %243, %244, %245 : vector<1x128xi1>, vector<1x128xf32>
    %c1_i32_82 = arith.constant 1 : i32
    %247 = vector.broadcast %c1_i32_82 : i32 to vector<1x128xi32>
    %248 = arith.cmpi sge, %0, %247 : vector<1x128xi32>
    %c4_i32_83 = arith.constant 4 : i32
    %249 = vector.broadcast %c4_i32_83 : i32 to vector<1x128xi32>
    %250 = arith.cmpi sle, %0, %249 : vector<1x128xi32>
    %251 = arith.andi %248, %250 : vector<1x128xi1>
    %252 = arith.select %251, %238, %246 : vector<1x128xi1>, vector<1x128xf32>
    %c6_84 = arith.constant 6 : index
    %c0_85 = arith.constant 0 : index
    %253 = vector.load %arg14[%c6_84, %c0_85] : memref<23x128xf32, #tpu.memory_space<vmem>>, vector<1x128xf32>
    tpu.vector_store %arg14[%c6_84, %c0_85], %252 {strides = array<i32>} : memref<23x128xf32, #tpu.memory_space<vmem>>, vector<1x128xf32>,
    %c7 = arith.constant 7 : index
    %c0_86 = arith.constant 0 : index
    %254 = vector.load %arg16[%c7, %c0_86] : memref<23x128xf32, #tpu.memory_space<vmem>>, vector<1x128xf32>
    %255 = vector.extract_strided_slice %252 {offsets = [0, 0], sizes = [1, 1], strides = [1, 1]} : vector<1x128xf32> to vector<1x1xf32>
    %256 = vector.extract_strided_slice %252 {offsets = [0, 0], sizes = [1, 127], strides = [1, 1]} : vector<1x128xf32> to vector<1x127xf32>
    %257 = tpu.concatenate %255, %256 in 1 : vector<1x1xf32>, vector<1x127xf32> -> vector<1x128xf32>
    %258 = vector.extract_strided_slice %211 {offsets = [0, 0], sizes = [1, 1], strides = [1, 1]} : vector<1x128xf32> to vector<1x1xf32>
    %259 = vector.extract_strided_slice %211 {offsets = [0, 0], sizes = [1, 127], strides = [1, 1]} : vector<1x128xf32> to vector<1x127xf32>
    %260 = tpu.concatenate %258, %259 in 1 : vector<1x1xf32>, vector<1x127xf32> -> vector<1x128xf32>
    %cst_87 = arith.constant 0.000000e+00 : f32
    %261 = vector.broadcast %cst_87 : f32 to vector<1x128xf32>
    %262 = arith.subf %261, %260 : vector<1x128xf32>
    %cst_88 = arith.constant 0.000000e+00 : f32
    %263 = vector.broadcast %cst_88 : f32 to vector<1x128xf32>
    %264 = arith.subf %263, %252 : vector<1x128xf32>
    %cst_89 = arith.constant 0.000000e+00 : f32
    %265 = vector.broadcast %cst_89 : f32 to vector<1x128xf32>
    %266 = arith.subf %265, %257 : vector<1x128xf32>
    %267 = arith.maximumf %262, %264 : vector<1x128xf32>
    %268 = arith.maximumf %267, %266 : vector<1x128xf32>
    %269 = arith.subf %262, %268 : vector<1x128xf32>
    %270 = math.exp %269 : vector<1x128xf32>
    %271 = arith.subf %264, %268 : vector<1x128xf32>
    %272 = math.exp %271 : vector<1x128xf32>
    %273 = arith.addf %270, %272 : vector<1x128xf32>
    %274 = arith.subf %266, %268 : vector<1x128xf32>
    %275 = math.exp %274 : vector<1x128xf32>
    %276 = arith.addf %273, %275 : vector<1x128xf32>
    %277 = math.log %276 : vector<1x128xf32>
    %278 = arith.addf %277, %268 : vector<1x128xf32>
    %279 = arith.subf %254, %278 : vector<1x128xf32>
    %c5_i32_90 = arith.constant 5 : i32
    %280 = vector.broadcast %c5_i32_90 : i32 to vector<1x128xi32>
    %281 = arith.cmpi eq, %0, %280 : vector<1x128xi32>
    %c-10_i32 = arith.constant -10 : i32
    %282 = vector.broadcast %c-10_i32 : i32 to vector<1x128xi32>
    %283 = arith.cmpi sle, %0, %282 : vector<1x128xi32>
    %284 = arith.ori %281, %283 : vector<1x128xi1>
    %cst_91 = arith.constant -1.000000e+30 : f32
    %cst_92 = arith.constant 1.000000e+30 : f32
    %285 = vector.broadcast %cst_91 : f32 to vector<1x128xf32>
    %286 = vector.broadcast %cst_92 : f32 to vector<1x128xf32>
    %287 = arith.select %284, %285, %286 : vector<1x128xi1>, vector<1x128xf32>
    %c1_i32_93 = arith.constant 1 : i32
    %288 = vector.broadcast %c1_i32_93 : i32 to vector<1x128xi32>
    %289 = arith.cmpi sge, %0, %288 : vector<1x128xi32>
    %c4_i32_94 = arith.constant 4 : i32
    %290 = vector.broadcast %c4_i32_94 : i32 to vector<1x128xi32>
    %291 = arith.cmpi sle, %0, %290 : vector<1x128xi32>
    %292 = arith.andi %289, %291 : vector<1x128xi1>
    %293 = arith.select %292, %279, %287 : vector<1x128xi1>, vector<1x128xf32>
    %c7_95 = arith.constant 7 : index
    %c0_96 = arith.constant 0 : index
    %294 = vector.load %arg14[%c7_95, %c0_96] : memref<23x128xf32, #tpu.memory_space<vmem>>, vector<1x128xf32>
    tpu.vector_store %arg14[%c7_95, %c0_96], %293 {strides = array<i32>} : memref<23x128xf32, #tpu.memory_space<vmem>>, vector<1x128xf32>,
    %c8 = arith.constant 8 : index
    %c0_97 = arith.constant 0 : index
    %295 = vector.load %arg16[%c8, %c0_97] : memref<23x128xf32, #tpu.memory_space<vmem>>, vector<1x128xf32>
    %296 = vector.extract_strided_slice %293 {offsets = [0, 0], sizes = [1, 1], strides = [1, 1]} : vector<1x128xf32> to vector<1x1xf32>
    %297 = vector.extract_strided_slice %293 {offsets = [0, 0], sizes = [1, 127], strides = [1, 1]} : vector<1x128xf32> to vector<1x127xf32>
    %298 = tpu.concatenate %296, %297 in 1 : vector<1x1xf32>, vector<1x127xf32> -> vector<1x128xf32>
    %299 = vector.extract_strided_slice %252 {offsets = [0, 0], sizes = [1, 1], strides = [1, 1]} : vector<1x128xf32> to vector<1x1xf32>
    %300 = vector.extract_strided_slice %252 {offsets = [0, 0], sizes = [1, 127], strides = [1, 1]} : vector<1x128xf32> to vector<1x127xf32>
    %301 = tpu.concatenate %299, %300 in 1 : vector<1x1xf32>, vector<1x127xf32> -> vector<1x128xf32>
    %cst_98 = arith.constant 0.000000e+00 : f32
    %302 = vector.broadcast %cst_98 : f32 to vector<1x128xf32>
    %303 = arith.subf %302, %301 : vector<1x128xf32>
    %cst_99 = arith.constant 0.000000e+00 : f32
    %304 = vector.broadcast %cst_99 : f32 to vector<1x128xf32>
    %305 = arith.subf %304, %293 : vector<1x128xf32>
    %cst_100 = arith.constant 0.000000e+00 : f32
    %306 = vector.broadcast %cst_100 : f32 to vector<1x128xf32>
    %307 = arith.subf %306, %298 : vector<1x128xf32>
    %308 = arith.maximumf %303, %305 : vector<1x128xf32>
    %309 = arith.maximumf %308, %307 : vector<1x128xf32>
    %310 = arith.subf %303, %309 : vector<1x128xf32>
    %311 = math.exp %310 : vector<1x128xf32>
    %312 = arith.subf %305, %309 : vector<1x128xf32>
    %313 = math.exp %312 : vector<1x128xf32>
    %314 = arith.addf %311, %313 : vector<1x128xf32>
    %315 = arith.subf %307, %309 : vector<1x128xf32>
    %316 = math.exp %315 : vector<1x128xf32>
    %317 = arith.addf %314, %316 : vector<1x128xf32>
    %318 = math.log %317 : vector<1x128xf32>
    %319 = arith.addf %318, %309 : vector<1x128xf32>
    %320 = arith.subf %295, %319 : vector<1x128xf32>
    %c5_i32_101 = arith.constant 5 : i32
    %321 = vector.broadcast %c5_i32_101 : i32 to vector<1x128xi32>
    %322 = arith.cmpi eq, %0, %321 : vector<1x128xi32>
    %c-9_i32 = arith.constant -9 : i32
    %323 = vector.broadcast %c-9_i32 : i32 to vector<1x128xi32>
    %324 = arith.cmpi sle, %0, %323 : vector<1x128xi32>
    %325 = arith.ori %322, %324 : vector<1x128xi1>
    %cst_102 = arith.constant -1.000000e+30 : f32
    %cst_103 = arith.constant 1.000000e+30 : f32
    %326 = vector.broadcast %cst_102 : f32 to vector<1x128xf32>
    %327 = vector.broadcast %cst_103 : f32 to vector<1x128xf32>
    %328 = arith.select %325, %326, %327 : vector<1x128xi1>, vector<1x128xf32>
    %c1_i32_104 = arith.constant 1 : i32
    %329 = vector.broadcast %c1_i32_104 : i32 to vector<1x128xi32>
    %330 = arith.cmpi sge, %0, %329 : vector<1x128xi32>
    %c4_i32_105 = arith.constant 4 : i32
    %331 = vector.broadcast %c4_i32_105 : i32 to vector<1x128xi32>
    %332 = arith.cmpi sle, %0, %331 : vector<1x128xi32>
    %333 = arith.andi %330, %332 : vector<1x128xi1>
    %334 = arith.select %333, %320, %328 : vector<1x128xi1>, vector<1x128xf32>
    %c8_106 = arith.constant 8 : index
    %c0_107 = arith.constant 0 : index
    %335 = vector.load %arg14[%c8_106, %c0_107] : memref<23x128xf32, #tpu.memory_space<vmem>>, vector<1x128xf32>
    tpu.vector_store %arg14[%c8_106, %c0_107], %334 {strides = array<i32>} : memref<23x128xf32, #tpu.memory_space<vmem>>, vector<1x128xf32>,
    %c9 = arith.constant 9 : index
    %c0_108 = arith.constant 0 : index
    %336 = vector.load %arg16[%c9, %c0_108] : memref<23x128xf32, #tpu.memory_space<vmem>>, vector<1x128xf32>
    %337 = vector.extract_strided_slice %334 {offsets = [0, 0], sizes = [1, 1], strides = [1, 1]} : vector<1x128xf32> to vector<1x1xf32>
    %338 = vector.extract_strided_slice %334 {offsets = [0, 0], sizes = [1, 127], strides = [1, 1]} : vector<1x128xf32> to vector<1x127xf32>
    %339 = tpu.concatenate %337, %338 in 1 : vector<1x1xf32>, vector<1x127xf32> -> vector<1x128xf32>
    %340 = vector.extract_strided_slice %293 {offsets = [0, 0], sizes = [1, 1], strides = [1, 1]} : vector<1x128xf32> to vector<1x1xf32>
    %341 = vector.extract_strided_slice %293 {offsets = [0, 0], sizes = [1, 127], strides = [1, 1]} : vector<1x128xf32> to vector<1x127xf32>
    %342 = tpu.concatenate %340, %341 in 1 : vector<1x1xf32>, vector<1x127xf32> -> vector<1x128xf32>
    %cst_109 = arith.constant 0.000000e+00 : f32
    %343 = vector.broadcast %cst_109 : f32 to vector<1x128xf32>
    %344 = arith.subf %343, %342 : vector<1x128xf32>
    %cst_110 = arith.constant 0.000000e+00 : f32
    %345 = vector.broadcast %cst_110 : f32 to vector<1x128xf32>
    %346 = arith.subf %345, %334 : vector<1x128xf32>
    %cst_111 = arith.constant 0.000000e+00 : f32
    %347 = vector.broadcast %cst_111 : f32 to vector<1x128xf32>
    %348 = arith.subf %347, %339 : vector<1x128xf32>
    %349 = arith.maximumf %344, %346 : vector<1x128xf32>
    %350 = arith.maximumf %349, %348 : vector<1x128xf32>
    %351 = arith.subf %344, %350 : vector<1x128xf32>
    %352 = math.exp %351 : vector<1x128xf32>
    %353 = arith.subf %346, %350 : vector<1x128xf32>
    %354 = math.exp %353 : vector<1x128xf32>
    %355 = arith.addf %352, %354 : vector<1x128xf32>
    %356 = arith.subf %348, %350 : vector<1x128xf32>
    %357 = math.exp %356 : vector<1x128xf32>
    %358 = arith.addf %355, %357 : vector<1x128xf32>
    %359 = math.log %358 : vector<1x128xf32>
    %360 = arith.addf %359, %350 : vector<1x128xf32>
    %361 = arith.subf %336, %360 : vector<1x128xf32>
    %c5_i32_112 = arith.constant 5 : i32
    %362 = vector.broadcast %c5_i32_112 : i32 to vector<1x128xi32>
    %363 = arith.cmpi eq, %0, %362 : vector<1x128xi32>
    %c-8_i32 = arith.constant -8 : i32
    %364 = vector.broadcast %c-8_i32 : i32 to vector<1x128xi32>
    %365 = arith.cmpi sle, %0, %364 : vector<1x128xi32>
    %366 = arith.ori %363, %365 : vector<1x128xi1>
    %cst_113 = arith.constant -1.000000e+30 : f32
    %cst_114 = arith.constant 1.000000e+30 : f32
    %367 = vector.broadcast %cst_113 : f32 to vector<1x128xf32>
    %368 = vector.broadcast %cst_114 : f32 to vector<1x128xf32>
    %369 = arith.select %366, %367, %368 : vector<1x128xi1>, vector<1x128xf32>
    %c1_i32_115 = arith.constant 1 : i32
    %370 = vector.broadcast %c1_i32_115 : i32 to vector<1x128xi32>
    %371 = arith.cmpi sge, %0, %370 : vector<1x128xi32>
    %c4_i32_116 = arith.constant 4 : i32
    %372 = vector.broadcast %c4_i32_116 : i32 to vector<1x128xi32>
    %373 = arith.cmpi sle, %0, %372 : vector<1x128xi32>
    %374 = arith.andi %371, %373 : vector<1x128xi1>
    %375 = arith.select %374, %361, %369 : vector<1x128xi1>, vector<1x128xf32>
    %c9_117 = arith.constant 9 : index
    %c0_118 = arith.constant 0 : index
    %376 = vector.load %arg14[%c9_117, %c0_118] : memref<23x128xf32, #tpu.memory_space<vmem>>, vector<1x128xf32>
    tpu.vector_store %arg14[%c9_117, %c0_118], %375 {strides = array<i32>} : memref<23x128xf32, #tpu.memory_space<vmem>>, vector<1x128xf32>,
    %c10 = arith.constant 10 : index
    %c0_119 = arith.constant 0 : index
    %377 = vector.load %arg16[%c10, %c0_119] : memref<23x128xf32, #tpu.memory_space<vmem>>, vector<1x128xf32>
    %378 = vector.extract_strided_slice %375 {offsets = [0, 0], sizes = [1, 1], strides = [1, 1]} : vector<1x128xf32> to vector<1x1xf32>
    %379 = vector.extract_strided_slice %375 {offsets = [0, 0], sizes = [1, 127], strides = [1, 1]} : vector<1x128xf32> to vector<1x127xf32>
    %380 = tpu.concatenate %378, %379 in 1 : vector<1x1xf32>, vector<1x127xf32> -> vector<1x128xf32>
    %381 = vector.extract_strided_slice %334 {offsets = [0, 0], sizes = [1, 1], strides = [1, 1]} : vector<1x128xf32> to vector<1x1xf32>
    %382 = vector.extract_strided_slice %334 {offsets = [0, 0], sizes = [1, 127], strides = [1, 1]} : vector<1x128xf32> to vector<1x127xf32>
    %383 = tpu.concatenate %381, %382 in 1 : vector<1x1xf32>, vector<1x127xf32> -> vector<1x128xf32>
    %cst_120 = arith.constant 0.000000e+00 : f32
    %384 = vector.broadcast %cst_120 : f32 to vector<1x128xf32>
    %385 = arith.subf %384, %383 : vector<1x128xf32>
    %cst_121 = arith.constant 0.000000e+00 : f32
    %386 = vector.broadcast %cst_121 : f32 to vector<1x128xf32>
    %387 = arith.subf %386, %375 : vector<1x128xf32>
    %cst_122 = arith.constant 0.000000e+00 : f32
    %388 = vector.broadcast %cst_122 : f32 to vector<1x128xf32>
    %389 = arith.subf %388, %380 : vector<1x128xf32>
    %390 = arith.maximumf %385, %387 : vector<1x128xf32>
    %391 = arith.maximumf %390, %389 : vector<1x128xf32>
    %392 = arith.subf %385, %391 : vector<1x128xf32>
    %393 = math.exp %392 : vector<1x128xf32>
    %394 = arith.subf %387, %391 : vector<1x128xf32>
    %395 = math.exp %394 : vector<1x128xf32>
    %396 = arith.addf %393, %395 : vector<1x128xf32>
    %397 = arith.subf %389, %391 : vector<1x128xf32>
    %398 = math.exp %397 : vector<1x128xf32>
    %399 = arith.addf %396, %398 : vector<1x128xf32>
    %400 = math.log %399 : vector<1x128xf32>
    %401 = arith.addf %400, %391 : vector<1x128xf32>
    %402 = arith.subf %377, %401 : vector<1x128xf32>
    %c5_i32_123 = arith.constant 5 : i32
    %403 = vector.broadcast %c5_i32_123 : i32 to vector<1x128xi32>
    %404 = arith.cmpi eq, %0, %403 : vector<1x128xi32>
    %c-7_i32 = arith.constant -7 : i32
    %405 = vector.broadcast %c-7_i32 : i32 to vector<1x128xi32>
    %406 = arith.cmpi sle, %0, %405 : vector<1x128xi32>
    %407 = arith.ori %404, %406 : vector<1x128xi1>
    %cst_124 = arith.constant -1.000000e+30 : f32
    %cst_125 = arith.constant 1.000000e+30 : f32
    %408 = vector.broadcast %cst_124 : f32 to vector<1x128xf32>
    %409 = vector.broadcast %cst_125 : f32 to vector<1x128xf32>
    %410 = arith.select %407, %408, %409 : vector<1x128xi1>, vector<1x128xf32>
    %c1_i32_126 = arith.constant 1 : i32
    %411 = vector.broadcast %c1_i32_126 : i32 to vector<1x128xi32>
    %412 = arith.cmpi sge, %0, %411 : vector<1x128xi32>
    %c4_i32_127 = arith.constant 4 : i32
    %413 = vector.broadcast %c4_i32_127 : i32 to vector<1x128xi32>
    %414 = arith.cmpi sle, %0, %413 : vector<1x128xi32>
    %415 = arith.andi %412, %414 : vector<1x128xi1>
    %416 = arith.select %415, %402, %410 : vector<1x128xi1>, vector<1x128xf32>
    %c10_128 = arith.constant 10 : index
    %c0_129 = arith.constant 0 : index
    %417 = vector.load %arg14[%c10_128, %c0_129] : memref<23x128xf32, #tpu.memory_space<vmem>>, vector<1x128xf32>
    tpu.vector_store %arg14[%c10_128, %c0_129], %416 {strides = array<i32>} : memref<23x128xf32, #tpu.memory_space<vmem>>, vector<1x128xf32>,
    %c11 = arith.constant 11 : index
    %c0_130 = arith.constant 0 : index
    %418 = vector.load %arg16[%c11, %c0_130] : memref<23x128xf32, #tpu.memory_space<vmem>>, vector<1x128xf32>
    %419 = vector.extract_strided_slice %416 {offsets = [0, 0], sizes = [1, 1], strides = [1, 1]} : vector<1x128xf32> to vector<1x1xf32>
    %420 = vector.extract_strided_slice %416 {offsets = [0, 0], sizes = [1, 127], strides = [1, 1]} : vector<1x128xf32> to vector<1x127xf32>
    %421 = tpu.concatenate %419, %420 in 1 : vector<1x1xf32>, vector<1x127xf32> -> vector<1x128xf32>
    %422 = vector.extract_strided_slice %375 {offsets = [0, 0], sizes = [1, 1], strides = [1, 1]} : vector<1x128xf32> to vector<1x1xf32>
    %423 = vector.extract_strided_slice %375 {offsets = [0, 0], sizes = [1, 127], strides = [1, 1]} : vector<1x128xf32> to vector<1x127xf32>
    %424 = tpu.concatenate %422, %423 in 1 : vector<1x1xf32>, vector<1x127xf32> -> vector<1x128xf32>
    %cst_131 = arith.constant 0.000000e+00 : f32
    %425 = vector.broadcast %cst_131 : f32 to vector<1x128xf32>
    %426 = arith.subf %425, %424 : vector<1x128xf32>
    %cst_132 = arith.constant 0.000000e+00 : f32
    %427 = vector.broadcast %cst_132 : f32 to vector<1x128xf32>
    %428 = arith.subf %427, %416 : vector<1x128xf32>
    %cst_133 = arith.constant 0.000000e+00 : f32
    %429 = vector.broadcast %cst_133 : f32 to vector<1x128xf32>
    %430 = arith.subf %429, %421 : vector<1x128xf32>
    %431 = arith.maximumf %426, %428 : vector<1x128xf32>
    %432 = arith.maximumf %431, %430 : vector<1x128xf32>
    %433 = arith.subf %426, %432 : vector<1x128xf32>
    %434 = math.exp %433 : vector<1x128xf32>
    %435 = arith.subf %428, %432 : vector<1x128xf32>
    %436 = math.exp %435 : vector<1x128xf32>
    %437 = arith.addf %434, %436 : vector<1x128xf32>
    %438 = arith.subf %430, %432 : vector<1x128xf32>
    %439 = math.exp %438 : vector<1x128xf32>
    %440 = arith.addf %437, %439 : vector<1x128xf32>
    %441 = math.log %440 : vector<1x128xf32>
    %442 = arith.addf %441, %432 : vector<1x128xf32>
    %443 = arith.subf %418, %442 : vector<1x128xf32>
    %c5_i32_134 = arith.constant 5 : i32
    %444 = vector.broadcast %c5_i32_134 : i32 to vector<1x128xi32>
    %445 = arith.cmpi eq, %0, %444 : vector<1x128xi32>
    %c-6_i32 = arith.constant -6 : i32
    %446 = vector.broadcast %c-6_i32 : i32 to vector<1x128xi32>
    %447 = arith.cmpi sle, %0, %446 : vector<1x128xi32>
    %448 = arith.ori %445, %447 : vector<1x128xi1>
    %cst_135 = arith.constant -1.000000e+30 : f32
    %cst_136 = arith.constant 1.000000e+30 : f32
    %449 = vector.broadcast %cst_135 : f32 to vector<1x128xf32>
    %450 = vector.broadcast %cst_136 : f32 to vector<1x128xf32>
    %451 = arith.select %448, %449, %450 : vector<1x128xi1>, vector<1x128xf32>
    %c1_i32_137 = arith.constant 1 : i32
    %452 = vector.broadcast %c1_i32_137 : i32 to vector<1x128xi32>
    %453 = arith.cmpi sge, %0, %452 : vector<1x128xi32>
    %c4_i32_138 = arith.constant 4 : i32
    %454 = vector.broadcast %c4_i32_138 : i32 to vector<1x128xi32>
    %455 = arith.cmpi sle, %0, %454 : vector<1x128xi32>
    %456 = arith.andi %453, %455 : vector<1x128xi1>
    %457 = arith.select %456, %443, %451 : vector<1x128xi1>, vector<1x128xf32>
    %c11_139 = arith.constant 11 : index
    %c0_140 = arith.constant 0 : index
    %458 = vector.load %arg14[%c11_139, %c0_140] : memref<23x128xf32, #tpu.memory_space<vmem>>, vector<1x128xf32>
    tpu.vector_store %arg14[%c11_139, %c0_140], %457 {strides = array<i32>} : memref<23x128xf32, #tpu.memory_space<vmem>>, vector<1x128xf32>,
    %c12 = arith.constant 12 : index
    %c0_141 = arith.constant 0 : index
    %459 = vector.load %arg16[%c12, %c0_141] : memref<23x128xf32, #tpu.memory_space<vmem>>, vector<1x128xf32>
    %460 = vector.extract_strided_slice %457 {offsets = [0, 0], sizes = [1, 1], strides = [1, 1]} : vector<1x128xf32> to vector<1x1xf32>
    %461 = vector.extract_strided_slice %457 {offsets = [0, 0], sizes = [1, 127], strides = [1, 1]} : vector<1x128xf32> to vector<1x127xf32>
    %462 = tpu.concatenate %460, %461 in 1 : vector<1x1xf32>, vector<1x127xf32> -> vector<1x128xf32>
    %463 = vector.extract_strided_slice %416 {offsets = [0, 0], sizes = [1, 1], strides = [1, 1]} : vector<1x128xf32> to vector<1x1xf32>
    %464 = vector.extract_strided_slice %416 {offsets = [0, 0], sizes = [1, 127], strides = [1, 1]} : vector<1x128xf32> to vector<1x127xf32>
    %465 = tpu.concatenate %463, %464 in 1 : vector<1x1xf32>, vector<1x127xf32> -> vector<1x128xf32>
    %cst_142 = arith.constant 0.000000e+00 : f32
    %466 = vector.broadcast %cst_142 : f32 to vector<1x128xf32>
    %467 = arith.subf %466, %465 : vector<1x128xf32>
    %cst_143 = arith.constant 0.000000e+00 : f32
    %468 = vector.broadcast %cst_143 : f32 to vector<1x128xf32>
    %469 = arith.subf %468, %457 : vector<1x128xf32>
    %cst_144 = arith.constant 0.000000e+00 : f32
    %470 = vector.broadcast %cst_144 : f32 to vector<1x128xf32>
    %471 = arith.subf %470, %462 : vector<1x128xf32>
    %472 = arith.maximumf %467, %469 : vector<1x128xf32>
    %473 = arith.maximumf %472, %471 : vector<1x128xf32>
    %474 = arith.subf %467, %473 : vector<1x128xf32>
    %475 = math.exp %474 : vector<1x128xf32>
    %476 = arith.subf %469, %473 : vector<1x128xf32>
    %477 = math.exp %476 : vector<1x128xf32>
    %478 = arith.addf %475, %477 : vector<1x128xf32>
    %479 = arith.subf %471, %473 : vector<1x128xf32>
    %480 = math.exp %479 : vector<1x128xf32>
    %481 = arith.addf %478, %480 : vector<1x128xf32>
    %482 = math.log %481 : vector<1x128xf32>
    %483 = arith.addf %482, %473 : vector<1x128xf32>
    %484 = arith.subf %459, %483 : vector<1x128xf32>
    %c5_i32_145 = arith.constant 5 : i32
    %485 = vector.broadcast %c5_i32_145 : i32 to vector<1x128xi32>
    %486 = arith.cmpi eq, %0, %485 : vector<1x128xi32>
    %c-5_i32 = arith.constant -5 : i32
    %487 = vector.broadcast %c-5_i32 : i32 to vector<1x128xi32>
    %488 = arith.cmpi sle, %0, %487 : vector<1x128xi32>
    %489 = arith.ori %486, %488 : vector<1x128xi1>
    %cst_146 = arith.constant -1.000000e+30 : f32
    %cst_147 = arith.constant 1.000000e+30 : f32
    %490 = vector.broadcast %cst_146 : f32 to vector<1x128xf32>
    %491 = vector.broadcast %cst_147 : f32 to vector<1x128xf32>
    %492 = arith.select %489, %490, %491 : vector<1x128xi1>, vector<1x128xf32>
    %c1_i32_148 = arith.constant 1 : i32
    %493 = vector.broadcast %c1_i32_148 : i32 to vector<1x128xi32>
    %494 = arith.cmpi sge, %0, %493 : vector<1x128xi32>
    %c4_i32_149 = arith.constant 4 : i32
    %495 = vector.broadcast %c4_i32_149 : i32 to vector<1x128xi32>
    %496 = arith.cmpi sle, %0, %495 : vector<1x128xi32>
    %497 = arith.andi %494, %496 : vector<1x128xi1>
    %498 = arith.select %497, %484, %492 : vector<1x128xi1>, vector<1x128xf32>
    %c12_150 = arith.constant 12 : index
    %c0_151 = arith.constant 0 : index
    %499 = vector.load %arg14[%c12_150, %c0_151] : memref<23x128xf32, #tpu.memory_space<vmem>>, vector<1x128xf32>
    tpu.vector_store %arg14[%c12_150, %c0_151], %498 {strides = array<i32>} : memref<23x128xf32, #tpu.memory_space<vmem>>, vector<1x128xf32>,
    %c13 = arith.constant 13 : index
    %c0_152 = arith.constant 0 : index
    %500 = vector.load %arg16[%c13, %c0_152] : memref<23x128xf32, #tpu.memory_space<vmem>>, vector<1x128xf32>
    %501 = vector.extract_strided_slice %498 {offsets = [0, 0], sizes = [1, 1], strides = [1, 1]} : vector<1x128xf32> to vector<1x1xf32>
    %502 = vector.extract_strided_slice %498 {offsets = [0, 0], sizes = [1, 127], strides = [1, 1]} : vector<1x128xf32> to vector<1x127xf32>
    %503 = tpu.concatenate %501, %502 in 1 : vector<1x1xf32>, vector<1x127xf32> -> vector<1x128xf32>
    %504 = vector.extract_strided_slice %457 {offsets = [0, 0], sizes = [1, 1], strides = [1, 1]} : vector<1x128xf32> to vector<1x1xf32>
    %505 = vector.extract_strided_slice %457 {offsets = [0, 0], sizes = [1, 127], strides = [1, 1]} : vector<1x128xf32> to vector<1x127xf32>
    %506 = tpu.concatenate %504, %505 in 1 : vector<1x1xf32>, vector<1x127xf32> -> vector<1x128xf32>
    %cst_153 = arith.constant 0.000000e+00 : f32
    %507 = vector.broadcast %cst_153 : f32 to vector<1x128xf32>
    %508 = arith.subf %507, %506 : vector<1x128xf32>
    %cst_154 = arith.constant 0.000000e+00 : f32
    %509 = vector.broadcast %cst_154 : f32 to vector<1x128xf32>
    %510 = arith.subf %509, %498 : vector<1x128xf32>
    %cst_155 = arith.constant 0.000000e+00 : f32
    %511 = vector.broadcast %cst_155 : f32 to vector<1x128xf32>
    %512 = arith.subf %511, %503 : vector<1x128xf32>
    %513 = arith.maximumf %508, %510 : vector<1x128xf32>
    %514 = arith.maximumf %513, %512 : vector<1x128xf32>
    %515 = arith.subf %508, %514 : vector<1x128xf32>
    %516 = math.exp %515 : vector<1x128xf32>
    %517 = arith.subf %510, %514 : vector<1x128xf32>
    %518 = math.exp %517 : vector<1x128xf32>
    %519 = arith.addf %516, %518 : vector<1x128xf32>
    %520 = arith.subf %512, %514 : vector<1x128xf32>
    %521 = math.exp %520 : vector<1x128xf32>
    %522 = arith.addf %519, %521 : vector<1x128xf32>
    %523 = math.log %522 : vector<1x128xf32>
    %524 = arith.addf %523, %514 : vector<1x128xf32>
    %525 = arith.subf %500, %524 : vector<1x128xf32>
    %c5_i32_156 = arith.constant 5 : i32
    %526 = vector.broadcast %c5_i32_156 : i32 to vector<1x128xi32>
    %527 = arith.cmpi eq, %0, %526 : vector<1x128xi32>
    %c-4_i32 = arith.constant -4 : i32
    %528 = vector.broadcast %c-4_i32 : i32 to vector<1x128xi32>
    %529 = arith.cmpi sle, %0, %528 : vector<1x128xi32>
    %530 = arith.ori %527, %529 : vector<1x128xi1>
    %cst_157 = arith.constant -1.000000e+30 : f32
    %cst_158 = arith.constant 1.000000e+30 : f32
    %531 = vector.broadcast %cst_157 : f32 to vector<1x128xf32>
    %532 = vector.broadcast %cst_158 : f32 to vector<1x128xf32>
    %533 = arith.select %530, %531, %532 : vector<1x128xi1>, vector<1x128xf32>
    %c1_i32_159 = arith.constant 1 : i32
    %534 = vector.broadcast %c1_i32_159 : i32 to vector<1x128xi32>
    %535 = arith.cmpi sge, %0, %534 : vector<1x128xi32>
    %c4_i32_160 = arith.constant 4 : i32
    %536 = vector.broadcast %c4_i32_160 : i32 to vector<1x128xi32>
    %537 = arith.cmpi sle, %0, %536 : vector<1x128xi32>
    %538 = arith.andi %535, %537 : vector<1x128xi1>
    %539 = arith.select %538, %525, %533 : vector<1x128xi1>, vector<1x128xf32>
    %c13_161 = arith.constant 13 : index
    %c0_162 = arith.constant 0 : index
    %540 = vector.load %arg14[%c13_161, %c0_162] : memref<23x128xf32, #tpu.memory_space<vmem>>, vector<1x128xf32>
    tpu.vector_store %arg14[%c13_161, %c0_162], %539 {strides = array<i32>} : memref<23x128xf32, #tpu.memory_space<vmem>>, vector<1x128xf32>,
    %c14 = arith.constant 14 : index
    %c0_163 = arith.constant 0 : index
    %541 = vector.load %arg16[%c14, %c0_163] : memref<23x128xf32, #tpu.memory_space<vmem>>, vector<1x128xf32>
    %542 = vector.extract_strided_slice %539 {offsets = [0, 0], sizes = [1, 1], strides = [1, 1]} : vector<1x128xf32> to vector<1x1xf32>
    %543 = vector.extract_strided_slice %539 {offsets = [0, 0], sizes = [1, 127], strides = [1, 1]} : vector<1x128xf32> to vector<1x127xf32>
    %544 = tpu.concatenate %542, %543 in 1 : vector<1x1xf32>, vector<1x127xf32> -> vector<1x128xf32>
    %545 = vector.extract_strided_slice %498 {offsets = [0, 0], sizes = [1, 1], strides = [1, 1]} : vector<1x128xf32> to vector<1x1xf32>
    %546 = vector.extract_strided_slice %498 {offsets = [0, 0], sizes = [1, 127], strides = [1, 1]} : vector<1x128xf32> to vector<1x127xf32>
    %547 = tpu.concatenate %545, %546 in 1 : vector<1x1xf32>, vector<1x127xf32> -> vector<1x128xf32>
    %cst_164 = arith.constant 0.000000e+00 : f32
    %548 = vector.broadcast %cst_164 : f32 to vector<1x128xf32>
    %549 = arith.subf %548, %547 : vector<1x128xf32>
    %cst_165 = arith.constant 0.000000e+00 : f32
    %550 = vector.broadcast %cst_165 : f32 to vector<1x128xf32>
    %551 = arith.subf %550, %539 : vector<1x128xf32>
    %cst_166 = arith.constant 0.000000e+00 : f32
    %552 = vector.broadcast %cst_166 : f32 to vector<1x128xf32>
    %553 = arith.subf %552, %544 : vector<1x128xf32>
    %554 = arith.maximumf %549, %551 : vector<1x128xf32>
    %555 = arith.maximumf %554, %553 : vector<1x128xf32>
    %556 = arith.subf %549, %555 : vector<1x128xf32>
    %557 = math.exp %556 : vector<1x128xf32>
    %558 = arith.subf %551, %555 : vector<1x128xf32>
    %559 = math.exp %558 : vector<1x128xf32>
    %560 = arith.addf %557, %559 : vector<1x128xf32>
    %561 = arith.subf %553, %555 : vector<1x128xf32>
    %562 = math.exp %561 : vector<1x128xf32>
    %563 = arith.addf %560, %562 : vector<1x128xf32>
    %564 = math.log %563 : vector<1x128xf32>
    %565 = arith.addf %564, %555 : vector<1x128xf32>
    %566 = arith.subf %541, %565 : vector<1x128xf32>
    %c5_i32_167 = arith.constant 5 : i32
    %567 = vector.broadcast %c5_i32_167 : i32 to vector<1x128xi32>
    %568 = arith.cmpi eq, %0, %567 : vector<1x128xi32>
    %c-3_i32 = arith.constant -3 : i32
    %569 = vector.broadcast %c-3_i32 : i32 to vector<1x128xi32>
    %570 = arith.cmpi sle, %0, %569 : vector<1x128xi32>
    %571 = arith.ori %568, %570 : vector<1x128xi1>
    %cst_168 = arith.constant -1.000000e+30 : f32
    %cst_169 = arith.constant 1.000000e+30 : f32
    %572 = vector.broadcast %cst_168 : f32 to vector<1x128xf32>
    %573 = vector.broadcast %cst_169 : f32 to vector<1x128xf32>
    %574 = arith.select %571, %572, %573 : vector<1x128xi1>, vector<1x128xf32>
    %c1_i32_170 = arith.constant 1 : i32
    %575 = vector.broadcast %c1_i32_170 : i32 to vector<1x128xi32>
    %576 = arith.cmpi sge, %0, %575 : vector<1x128xi32>
    %c4_i32_171 = arith.constant 4 : i32
    %577 = vector.broadcast %c4_i32_171 : i32 to vector<1x128xi32>
    %578 = arith.cmpi sle, %0, %577 : vector<1x128xi32>
    %579 = arith.andi %576, %578 : vector<1x128xi1>
    %580 = arith.select %579, %566, %574 : vector<1x128xi1>, vector<1x128xf32>
    %c14_172 = arith.constant 14 : index
    %c0_173 = arith.constant 0 : index
    %581 = vector.load %arg14[%c14_172, %c0_173] : memref<23x128xf32, #tpu.memory_space<vmem>>, vector<1x128xf32>
    tpu.vector_store %arg14[%c14_172, %c0_173], %580 {strides = array<i32>} : memref<23x128xf32, #tpu.memory_space<vmem>>, vector<1x128xf32>,
    %c15 = arith.constant 15 : index
    %c0_174 = arith.constant 0 : index
    %582 = vector.load %arg16[%c15, %c0_174] : memref<23x128xf32, #tpu.memory_space<vmem>>, vector<1x128xf32>
    %583 = vector.extract_strided_slice %580 {offsets = [0, 0], sizes = [1, 1], strides = [1, 1]} : vector<1x128xf32> to vector<1x1xf32>
    %584 = vector.extract_strided_slice %580 {offsets = [0, 0], sizes = [1, 127], strides = [1, 1]} : vector<1x128xf32> to vector<1x127xf32>
    %585 = tpu.concatenate %583, %584 in 1 : vector<1x1xf32>, vector<1x127xf32> -> vector<1x128xf32>
    %586 = vector.extract_strided_slice %539 {offsets = [0, 0], sizes = [1, 1], strides = [1, 1]} : vector<1x128xf32> to vector<1x1xf32>
    %587 = vector.extract_strided_slice %539 {offsets = [0, 0], sizes = [1, 127], strides = [1, 1]} : vector<1x128xf32> to vector<1x127xf32>
    %588 = tpu.concatenate %586, %587 in 1 : vector<1x1xf32>, vector<1x127xf32> -> vector<1x128xf32>
    %cst_175 = arith.constant 0.000000e+00 : f32
    %589 = vector.broadcast %cst_175 : f32 to vector<1x128xf32>
    %590 = arith.subf %589, %588 : vector<1x128xf32>
    %cst_176 = arith.constant 0.000000e+00 : f32
    %591 = vector.broadcast %cst_176 : f32 to vector<1x128xf32>
    %592 = arith.subf %591, %580 : vector<1x128xf32>
    %cst_177 = arith.constant 0.000000e+00 : f32
    %593 = vector.broadcast %cst_177 : f32 to vector<1x128xf32>
    %594 = arith.subf %593, %585 : vector<1x128xf32>
    %595 = arith.maximumf %590, %592 : vector<1x128xf32>
    %596 = arith.maximumf %595, %594 : vector<1x128xf32>
    %597 = arith.subf %590, %596 : vector<1x128xf32>
    %598 = math.exp %597 : vector<1x128xf32>
    %599 = arith.subf %592, %596 : vector<1x128xf32>
    %600 = math.exp %599 : vector<1x128xf32>
    %601 = arith.addf %598, %600 : vector<1x128xf32>
    %602 = arith.subf %594, %596 : vector<1x128xf32>
    %603 = math.exp %602 : vector<1x128xf32>
    %604 = arith.addf %601, %603 : vector<1x128xf32>
    %605 = math.log %604 : vector<1x128xf32>
    %606 = arith.addf %605, %596 : vector<1x128xf32>
    %607 = arith.subf %582, %606 : vector<1x128xf32>
    %c5_i32_178 = arith.constant 5 : i32
    %608 = vector.broadcast %c5_i32_178 : i32 to vector<1x128xi32>
    %609 = arith.cmpi eq, %0, %608 : vector<1x128xi32>
    %c-2_i32 = arith.constant -2 : i32
    %610 = vector.broadcast %c-2_i32 : i32 to vector<1x128xi32>
    %611 = arith.cmpi sle, %0, %610 : vector<1x128xi32>
    %612 = arith.ori %609, %611 : vector<1x128xi1>
    %cst_179 = arith.constant -1.000000e+30 : f32
    %cst_180 = arith.constant 1.000000e+30 : f32
    %613 = vector.broadcast %cst_179 : f32 to vector<1x128xf32>
    %614 = vector.broadcast %cst_180 : f32 to vector<1x128xf32>
    %615 = arith.select %612, %613, %614 : vector<1x128xi1>, vector<1x128xf32>
    %c1_i32_181 = arith.constant 1 : i32
    %616 = vector.broadcast %c1_i32_181 : i32 to vector<1x128xi32>
    %617 = arith.cmpi sge, %0, %616 : vector<1x128xi32>
    %c4_i32_182 = arith.constant 4 : i32
    %618 = vector.broadcast %c4_i32_182 : i32 to vector<1x128xi32>
    %619 = arith.cmpi sle, %0, %618 : vector<1x128xi32>
    %620 = arith.andi %617, %619 : vector<1x128xi1>
    %621 = arith.select %620, %607, %615 : vector<1x128xi1>, vector<1x128xf32>
    %c15_183 = arith.constant 15 : index
    %c0_184 = arith.constant 0 : index
    %622 = vector.load %arg14[%c15_183, %c0_184] : memref<23x128xf32, #tpu.memory_space<vmem>>, vector<1x128xf32>
    tpu.vector_store %arg14[%c15_183, %c0_184], %621 {strides = array<i32>} : memref<23x128xf32, #tpu.memory_space<vmem>>, vector<1x128xf32>,
    %c16 = arith.constant 16 : index
    %c0_185 = arith.constant 0 : index
    %623 = vector.load %arg16[%c16, %c0_185] : memref<23x128xf32, #tpu.memory_space<vmem>>, vector<1x128xf32>
    %624 = vector.extract_strided_slice %621 {offsets = [0, 0], sizes = [1, 1], strides = [1, 1]} : vector<1x128xf32> to vector<1x1xf32>
    %625 = vector.extract_strided_slice %621 {offsets = [0, 0], sizes = [1, 127], strides = [1, 1]} : vector<1x128xf32> to vector<1x127xf32>
    %626 = tpu.concatenate %624, %625 in 1 : vector<1x1xf32>, vector<1x127xf32> -> vector<1x128xf32>
    %627 = vector.extract_strided_slice %580 {offsets = [0, 0], sizes = [1, 1], strides = [1, 1]} : vector<1x128xf32> to vector<1x1xf32>
    %628 = vector.extract_strided_slice %580 {offsets = [0, 0], sizes = [1, 127], strides = [1, 1]} : vector<1x128xf32> to vector<1x127xf32>
    %629 = tpu.concatenate %627, %628 in 1 : vector<1x1xf32>, vector<1x127xf32> -> vector<1x128xf32>
    %cst_186 = arith.constant 0.000000e+00 : f32
    %630 = vector.broadcast %cst_186 : f32 to vector<1x128xf32>
    %631 = arith.subf %630, %629 : vector<1x128xf32>
    %cst_187 = arith.constant 0.000000e+00 : f32
    %632 = vector.broadcast %cst_187 : f32 to vector<1x128xf32>
    %633 = arith.subf %632, %621 : vector<1x128xf32>
    %cst_188 = arith.constant 0.000000e+00 : f32
    %634 = vector.broadcast %cst_188 : f32 to vector<1x128xf32>
    %635 = arith.subf %634, %626 : vector<1x128xf32>
    %636 = arith.maximumf %631, %633 : vector<1x128xf32>
    %637 = arith.maximumf %636, %635 : vector<1x128xf32>
    %638 = arith.subf %631, %637 : vector<1x128xf32>
    %639 = math.exp %638 : vector<1x128xf32>
    %640 = arith.subf %633, %637 : vector<1x128xf32>
    %641 = math.exp %640 : vector<1x128xf32>
    %642 = arith.addf %639, %641 : vector<1x128xf32>
    %643 = arith.subf %635, %637 : vector<1x128xf32>
    %644 = math.exp %643 : vector<1x128xf32>
    %645 = arith.addf %642, %644 : vector<1x128xf32>
    %646 = math.log %645 : vector<1x128xf32>
    %647 = arith.addf %646, %637 : vector<1x128xf32>
    %648 = arith.subf %623, %647 : vector<1x128xf32>
    %c5_i32_189 = arith.constant 5 : i32
    %649 = vector.broadcast %c5_i32_189 : i32 to vector<1x128xi32>
    %650 = arith.cmpi eq, %0, %649 : vector<1x128xi32>
    %c-1_i32 = arith.constant -1 : i32
    %651 = vector.broadcast %c-1_i32 : i32 to vector<1x128xi32>
    %652 = arith.cmpi sle, %0, %651 : vector<1x128xi32>
    %653 = arith.ori %650, %652 : vector<1x128xi1>
    %cst_190 = arith.constant -1.000000e+30 : f32
    %cst_191 = arith.constant 1.000000e+30 : f32
    %654 = vector.broadcast %cst_190 : f32 to vector<1x128xf32>
    %655 = vector.broadcast %cst_191 : f32 to vector<1x128xf32>
    %656 = arith.select %653, %654, %655 : vector<1x128xi1>, vector<1x128xf32>
    %c1_i32_192 = arith.constant 1 : i32
    %657 = vector.broadcast %c1_i32_192 : i32 to vector<1x128xi32>
    %658 = arith.cmpi sge, %0, %657 : vector<1x128xi32>
    %c4_i32_193 = arith.constant 4 : i32
    %659 = vector.broadcast %c4_i32_193 : i32 to vector<1x128xi32>
    %660 = arith.cmpi sle, %0, %659 : vector<1x128xi32>
    %661 = arith.andi %658, %660 : vector<1x128xi1>
    %662 = arith.select %661, %648, %656 : vector<1x128xi1>, vector<1x128xf32>
    %c16_194 = arith.constant 16 : index
    %c0_195 = arith.constant 0 : index
    %663 = vector.load %arg14[%c16_194, %c0_195] : memref<23x128xf32, #tpu.memory_space<vmem>>, vector<1x128xf32>
    tpu.vector_store %arg14[%c16_194, %c0_195], %662 {strides = array<i32>} : memref<23x128xf32, #tpu.memory_space<vmem>>, vector<1x128xf32>,
    %c17 = arith.constant 17 : index
    %c0_196 = arith.constant 0 : index
    %664 = vector.load %arg16[%c17, %c0_196] : memref<23x128xf32, #tpu.memory_space<vmem>>, vector<1x128xf32>
    %665 = vector.extract_strided_slice %662 {offsets = [0, 0], sizes = [1, 1], strides = [1, 1]} : vector<1x128xf32> to vector<1x1xf32>
    %666 = vector.extract_strided_slice %662 {offsets = [0, 0], sizes = [1, 127], strides = [1, 1]} : vector<1x128xf32> to vector<1x127xf32>
    %667 = tpu.concatenate %665, %666 in 1 : vector<1x1xf32>, vector<1x127xf32> -> vector<1x128xf32>
    %668 = vector.extract_strided_slice %621 {offsets = [0, 0], sizes = [1, 1], strides = [1, 1]} : vector<1x128xf32> to vector<1x1xf32>
    %669 = vector.extract_strided_slice %621 {offsets = [0, 0], sizes = [1, 127], strides = [1, 1]} : vector<1x128xf32> to vector<1x127xf32>
    %670 = tpu.concatenate %668, %669 in 1 : vector<1x1xf32>, vector<1x127xf32> -> vector<1x128xf32>
    %cst_197 = arith.constant 0.000000e+00 : f32
    %671 = vector.broadcast %cst_197 : f32 to vector<1x128xf32>
    %672 = arith.subf %671, %670 : vector<1x128xf32>
    %cst_198 = arith.constant 0.000000e+00 : f32
    %673 = vector.broadcast %cst_198 : f32 to vector<1x128xf32>
    %674 = arith.subf %673, %662 : vector<1x128xf32>
    %cst_199 = arith.constant 0.000000e+00 : f32
    %675 = vector.broadcast %cst_199 : f32 to vector<1x128xf32>
    %676 = arith.subf %675, %667 : vector<1x128xf32>
    %677 = arith.maximumf %672, %674 : vector<1x128xf32>
    %678 = arith.maximumf %677, %676 : vector<1x128xf32>
    %679 = arith.subf %672, %678 : vector<1x128xf32>
    %680 = math.exp %679 : vector<1x128xf32>
    %681 = arith.subf %674, %678 : vector<1x128xf32>
    %682 = math.exp %681 : vector<1x128xf32>
    %683 = arith.addf %680, %682 : vector<1x128xf32>
    %684 = arith.subf %676, %678 : vector<1x128xf32>
    %685 = math.exp %684 : vector<1x128xf32>
    %686 = arith.addf %683, %685 : vector<1x128xf32>
    %687 = math.log %686 : vector<1x128xf32>
    %688 = arith.addf %687, %678 : vector<1x128xf32>
    %689 = arith.subf %664, %688 : vector<1x128xf32>
    %c5_i32_200 = arith.constant 5 : i32
    %690 = vector.broadcast %c5_i32_200 : i32 to vector<1x128xi32>
    %691 = arith.cmpi eq, %0, %690 : vector<1x128xi32>
    %c0_i32_201 = arith.constant 0 : i32
    %692 = vector.broadcast %c0_i32_201 : i32 to vector<1x128xi32>
    %693 = arith.cmpi sle, %0, %692 : vector<1x128xi32>
    %694 = arith.ori %691, %693 : vector<1x128xi1>
    %cst_202 = arith.constant -1.000000e+30 : f32
    %cst_203 = arith.constant 1.000000e+30 : f32
    %695 = vector.broadcast %cst_202 : f32 to vector<1x128xf32>
    %696 = vector.broadcast %cst_203 : f32 to vector<1x128xf32>
    %697 = arith.select %694, %695, %696 : vector<1x128xi1>, vector<1x128xf32>
    %c1_i32_204 = arith.constant 1 : i32
    %698 = vector.broadcast %c1_i32_204 : i32 to vector<1x128xi32>
    %699 = arith.cmpi sge, %0, %698 : vector<1x128xi32>
    %c4_i32_205 = arith.constant 4 : i32
    %700 = vector.broadcast %c4_i32_205 : i32 to vector<1x128xi32>
    %701 = arith.cmpi sle, %0, %700 : vector<1x128xi32>
    %702 = arith.andi %699, %701 : vector<1x128xi1>
    %703 = arith.select %702, %689, %697 : vector<1x128xi1>, vector<1x128xf32>
    %c17_206 = arith.constant 17 : index
    %c0_207 = arith.constant 0 : index
    %704 = vector.load %arg14[%c17_206, %c0_207] : memref<23x128xf32, #tpu.memory_space<vmem>>, vector<1x128xf32>
    tpu.vector_store %arg14[%c17_206, %c0_207], %703 {strides = array<i32>} : memref<23x128xf32, #tpu.memory_space<vmem>>, vector<1x128xf32>,
    %c18 = arith.constant 18 : index
    %c0_208 = arith.constant 0 : index
    %705 = vector.load %arg16[%c18, %c0_208] : memref<23x128xf32, #tpu.memory_space<vmem>>, vector<1x128xf32>
    %706 = vector.extract_strided_slice %703 {offsets = [0, 0], sizes = [1, 1], strides = [1, 1]} : vector<1x128xf32> to vector<1x1xf32>
    %707 = vector.extract_strided_slice %703 {offsets = [0, 0], sizes = [1, 127], strides = [1, 1]} : vector<1x128xf32> to vector<1x127xf32>
    %708 = tpu.concatenate %706, %707 in 1 : vector<1x1xf32>, vector<1x127xf32> -> vector<1x128xf32>
    %709 = vector.extract_strided_slice %662 {offsets = [0, 0], sizes = [1, 1], strides = [1, 1]} : vector<1x128xf32> to vector<1x1xf32>
    %710 = vector.extract_strided_slice %662 {offsets = [0, 0], sizes = [1, 127], strides = [1, 1]} : vector<1x128xf32> to vector<1x127xf32>
    %711 = tpu.concatenate %709, %710 in 1 : vector<1x1xf32>, vector<1x127xf32> -> vector<1x128xf32>
    %cst_209 = arith.constant 0.000000e+00 : f32
    %712 = vector.broadcast %cst_209 : f32 to vector<1x128xf32>
    %713 = arith.subf %712, %711 : vector<1x128xf32>
    %cst_210 = arith.constant 0.000000e+00 : f32
    %714 = vector.broadcast %cst_210 : f32 to vector<1x128xf32>
    %715 = arith.subf %714, %703 : vector<1x128xf32>
    %cst_211 = arith.constant 0.000000e+00 : f32
    %716 = vector.broadcast %cst_211 : f32 to vector<1x128xf32>
    %717 = arith.subf %716, %708 : vector<1x128xf32>
    %718 = arith.maximumf %713, %715 : vector<1x128xf32>
    %719 = arith.maximumf %718, %717 : vector<1x128xf32>
    %720 = arith.subf %713, %719 : vector<1x128xf32>
    %721 = math.exp %720 : vector<1x128xf32>
    %722 = arith.subf %715, %719 : vector<1x128xf32>
    %723 = math.exp %722 : vector<1x128xf32>
    %724 = arith.addf %721, %723 : vector<1x128xf32>
    %725 = arith.subf %717, %719 : vector<1x128xf32>
    %726 = math.exp %725 : vector<1x128xf32>
    %727 = arith.addf %724, %726 : vector<1x128xf32>
    %728 = math.log %727 : vector<1x128xf32>
    %729 = arith.addf %728, %719 : vector<1x128xf32>
    %730 = arith.subf %705, %729 : vector<1x128xf32>
    %c5_i32_212 = arith.constant 5 : i32
    %731 = vector.broadcast %c5_i32_212 : i32 to vector<1x128xi32>
    %732 = arith.cmpi eq, %0, %731 : vector<1x128xi32>
    %c1_i32_213 = arith.constant 1 : i32
    %733 = vector.broadcast %c1_i32_213 : i32 to vector<1x128xi32>
    %734 = arith.cmpi sle, %0, %733 : vector<1x128xi32>
    %735 = arith.ori %732, %734 : vector<1x128xi1>
    %cst_214 = arith.constant -1.000000e+30 : f32
    %cst_215 = arith.constant 1.000000e+30 : f32
    %736 = vector.broadcast %cst_214 : f32 to vector<1x128xf32>
    %737 = vector.broadcast %cst_215 : f32 to vector<1x128xf32>
    %738 = arith.select %735, %736, %737 : vector<1x128xi1>, vector<1x128xf32>
    %c2_i32_216 = arith.constant 2 : i32
    %739 = vector.broadcast %c2_i32_216 : i32 to vector<1x128xi32>
    %740 = arith.cmpi sge, %0, %739 : vector<1x128xi32>
    %c4_i32_217 = arith.constant 4 : i32
    %741 = vector.broadcast %c4_i32_217 : i32 to vector<1x128xi32>
    %742 = arith.cmpi sle, %0, %741 : vector<1x128xi32>
    %743 = arith.andi %740, %742 : vector<1x128xi1>
    %744 = arith.select %743, %730, %738 : vector<1x128xi1>, vector<1x128xf32>
    %c18_218 = arith.constant 18 : index
    %c0_219 = arith.constant 0 : index
    %745 = vector.load %arg14[%c18_218, %c0_219] : memref<23x128xf32, #tpu.memory_space<vmem>>, vector<1x128xf32>
    tpu.vector_store %arg14[%c18_218, %c0_219], %744 {strides = array<i32>} : memref<23x128xf32, #tpu.memory_space<vmem>>, vector<1x128xf32>,
    %c19 = arith.constant 19 : index
    %c0_220 = arith.constant 0 : index
    %746 = vector.load %arg16[%c19, %c0_220] : memref<23x128xf32, #tpu.memory_space<vmem>>, vector<1x128xf32>
    %747 = vector.extract_strided_slice %744 {offsets = [0, 0], sizes = [1, 1], strides = [1, 1]} : vector<1x128xf32> to vector<1x1xf32>
    %748 = vector.extract_strided_slice %744 {offsets = [0, 0], sizes = [1, 127], strides = [1, 1]} : vector<1x128xf32> to vector<1x127xf32>
    %749 = tpu.concatenate %747, %748 in 1 : vector<1x1xf32>, vector<1x127xf32> -> vector<1x128xf32>
    %750 = vector.extract_strided_slice %703 {offsets = [0, 0], sizes = [1, 1], strides = [1, 1]} : vector<1x128xf32> to vector<1x1xf32>
    %751 = vector.extract_strided_slice %703 {offsets = [0, 0], sizes = [1, 127], strides = [1, 1]} : vector<1x128xf32> to vector<1x127xf32>
    %752 = tpu.concatenate %750, %751 in 1 : vector<1x1xf32>, vector<1x127xf32> -> vector<1x128xf32>
    %cst_221 = arith.constant 0.000000e+00 : f32
    %753 = vector.broadcast %cst_221 : f32 to vector<1x128xf32>
    %754 = arith.subf %753, %752 : vector<1x128xf32>
    %cst_222 = arith.constant 0.000000e+00 : f32
    %755 = vector.broadcast %cst_222 : f32 to vector<1x128xf32>
    %756 = arith.subf %755, %744 : vector<1x128xf32>
    %cst_223 = arith.constant 0.000000e+00 : f32
    %757 = vector.broadcast %cst_223 : f32 to vector<1x128xf32>
    %758 = arith.subf %757, %749 : vector<1x128xf32>
    %759 = arith.maximumf %754, %756 : vector<1x128xf32>
    %760 = arith.maximumf %759, %758 : vector<1x128xf32>
    %761 = arith.subf %754, %760 : vector<1x128xf32>
    %762 = math.exp %761 : vector<1x128xf32>
    %763 = arith.subf %756, %760 : vector<1x128xf32>
    %764 = math.exp %763 : vector<1x128xf32>
    %765 = arith.addf %762, %764 : vector<1x128xf32>
    %766 = arith.subf %758, %760 : vector<1x128xf32>
    %767 = math.exp %766 : vector<1x128xf32>
    %768 = arith.addf %765, %767 : vector<1x128xf32>
    %769 = math.log %768 : vector<1x128xf32>
    %770 = arith.addf %769, %760 : vector<1x128xf32>
    %771 = arith.subf %746, %770 : vector<1x128xf32>
    %c5_i32_224 = arith.constant 5 : i32
    %772 = vector.broadcast %c5_i32_224 : i32 to vector<1x128xi32>
    %773 = arith.cmpi eq, %0, %772 : vector<1x128xi32>
    %c2_i32_225 = arith.constant 2 : i32
    %774 = vector.broadcast %c2_i32_225 : i32 to vector<1x128xi32>
    %775 = arith.cmpi sle, %0, %774 : vector<1x128xi32>
    %776 = arith.ori %773, %775 : vector<1x128xi1>
    %cst_226 = arith.constant -1.000000e+30 : f32
    %cst_227 = arith.constant 1.000000e+30 : f32
    %777 = vector.broadcast %cst_226 : f32 to vector<1x128xf32>
    %778 = vector.broadcast %cst_227 : f32 to vector<1x128xf32>
    %779 = arith.select %776, %777, %778 : vector<1x128xi1>, vector<1x128xf32>
    %c3_i32_228 = arith.constant 3 : i32
    %780 = vector.broadcast %c3_i32_228 : i32 to vector<1x128xi32>
    %781 = arith.cmpi sge, %0, %780 : vector<1x128xi32>
    %c4_i32_229 = arith.constant 4 : i32
    %782 = vector.broadcast %c4_i32_229 : i32 to vector<1x128xi32>
    %783 = arith.cmpi sle, %0, %782 : vector<1x128xi32>
    %784 = arith.andi %781, %783 : vector<1x128xi1>
    %785 = arith.select %784, %771, %779 : vector<1x128xi1>, vector<1x128xf32>
    %c19_230 = arith.constant 19 : index
    %c0_231 = arith.constant 0 : index
    %786 = vector.load %arg14[%c19_230, %c0_231] : memref<23x128xf32, #tpu.memory_space<vmem>>, vector<1x128xf32>
    tpu.vector_store %arg14[%c19_230, %c0_231], %785 {strides = array<i32>} : memref<23x128xf32, #tpu.memory_space<vmem>>, vector<1x128xf32>,
    %c20 = arith.constant 20 : index
    %c0_232 = arith.constant 0 : index
    %787 = vector.load %arg16[%c20, %c0_232] : memref<23x128xf32, #tpu.memory_space<vmem>>, vector<1x128xf32>
    %788 = vector.extract_strided_slice %785 {offsets = [0, 0], sizes = [1, 1], strides = [1, 1]} : vector<1x128xf32> to vector<1x1xf32>
    %789 = vector.extract_strided_slice %785 {offsets = [0, 0], sizes = [1, 127], strides = [1, 1]} : vector<1x128xf32> to vector<1x127xf32>
    %790 = tpu.concatenate %788, %789 in 1 : vector<1x1xf32>, vector<1x127xf32> -> vector<1x128xf32>
    %791 = vector.extract_strided_slice %744 {offsets = [0, 0], sizes = [1, 1], strides = [1, 1]} : vector<1x128xf32> to vector<1x1xf32>
    %792 = vector.extract_strided_slice %744 {offsets = [0, 0], sizes = [1, 127], strides = [1, 1]} : vector<1x128xf32> to vector<1x127xf32>
    %793 = tpu.concatenate %791, %792 in 1 : vector<1x1xf32>, vector<1x127xf32> -> vector<1x128xf32>
    %cst_233 = arith.constant 0.000000e+00 : f32
    %794 = vector.broadcast %cst_233 : f32 to vector<1x128xf32>
    %795 = arith.subf %794, %793 : vector<1x128xf32>
    %cst_234 = arith.constant 0.000000e+00 : f32
    %796 = vector.broadcast %cst_234 : f32 to vector<1x128xf32>
    %797 = arith.subf %796, %785 : vector<1x128xf32>
    %cst_235 = arith.constant 0.000000e+00 : f32
    %798 = vector.broadcast %cst_235 : f32 to vector<1x128xf32>
    %799 = arith.subf %798, %790 : vector<1x128xf32>
    %800 = arith.maximumf %795, %797 : vector<1x128xf32>
    %801 = arith.maximumf %800, %799 : vector<1x128xf32>
    %802 = arith.subf %795, %801 : vector<1x128xf32>
    %803 = math.exp %802 : vector<1x128xf32>
    %804 = arith.subf %797, %801 : vector<1x128xf32>
    %805 = math.exp %804 : vector<1x128xf32>
    %806 = arith.addf %803, %805 : vector<1x128xf32>
    %807 = arith.subf %799, %801 : vector<1x128xf32>
    %808 = math.exp %807 : vector<1x128xf32>
    %809 = arith.addf %806, %808 : vector<1x128xf32>
    %810 = math.log %809 : vector<1x128xf32>
    %811 = arith.addf %810, %801 : vector<1x128xf32>
    %812 = arith.subf %787, %811 : vector<1x128xf32>
    %c5_i32_236 = arith.constant 5 : i32
    %813 = vector.broadcast %c5_i32_236 : i32 to vector<1x128xi32>
    %814 = arith.cmpi eq, %0, %813 : vector<1x128xi32>
    %c3_i32_237 = arith.constant 3 : i32
    %815 = vector.broadcast %c3_i32_237 : i32 to vector<1x128xi32>
    %816 = arith.cmpi sle, %0, %815 : vector<1x128xi32>
    %817 = arith.ori %814, %816 : vector<1x128xi1>
    %cst_238 = arith.constant -1.000000e+30 : f32
    %cst_239 = arith.constant 1.000000e+30 : f32
    %818 = vector.broadcast %cst_238 : f32 to vector<1x128xf32>
    %819 = vector.broadcast %cst_239 : f32 to vector<1x128xf32>
    %820 = arith.select %817, %818, %819 : vector<1x128xi1>, vector<1x128xf32>
    %c4_i32_240 = arith.constant 4 : i32
    %821 = vector.broadcast %c4_i32_240 : i32 to vector<1x128xi32>
    %822 = arith.cmpi sge, %0, %821 : vector<1x128xi32>
    %c4_i32_241 = arith.constant 4 : i32
    %823 = vector.broadcast %c4_i32_241 : i32 to vector<1x128xi32>
    %824 = arith.cmpi sle, %0, %823 : vector<1x128xi32>
    %825 = arith.andi %822, %824 : vector<1x128xi1>
    %826 = arith.select %825, %812, %820 : vector<1x128xi1>, vector<1x128xf32>
    %c20_242 = arith.constant 20 : index
    %c0_243 = arith.constant 0 : index
    %827 = vector.load %arg14[%c20_242, %c0_243] : memref<23x128xf32, #tpu.memory_space<vmem>>, vector<1x128xf32>
    tpu.vector_store %arg14[%c20_242, %c0_243], %826 {strides = array<i32>} : memref<23x128xf32, #tpu.memory_space<vmem>>, vector<1x128xf32>,
    %cst_244 = arith.constant -1.000000e+30 : f32
    %828 = vector.broadcast %cst_244 : f32 to vector<1x128xf32>
    %c21 = arith.constant 21 : index
    %c0_245 = arith.constant 0 : index
    %829 = vector.load %arg14[%c21, %c0_245] : memref<23x128xf32, #tpu.memory_space<vmem>>, vector<1x128xf32>
    tpu.vector_store %arg14[%c21, %c0_245], %828 {strides = array<i32>} : memref<23x128xf32, #tpu.memory_space<vmem>>, vector<1x128xf32>,
    %830 = vector.extract_strided_slice %826 {offsets = [0, 4], sizes = [1, 1], strides = [1, 1]} : vector<1x128xf32> to vector<1x1xf32>
    %c5_i32_246 = arith.constant 5 : i32
    %831 = vector.broadcast %c5_i32_246 : i32 to vector<1x128xi32>
    %832 = arith.cmpi eq, %0, %831 : vector<1x128xi32>
    %cst_247 = arith.constant -1.000000e+30 : f32
    %833 = vector.shape_cast %830 : vector<1x1xf32> to vector<1x1xf32>
    %834 = vector.broadcast %833 : vector<1x1xf32> to vector<1x128xf32>
    %835 = vector.broadcast %cst_247 : f32 to vector<1x128xf32>
    %836 = arith.select %832, %834, %835 : vector<1x128xi1>, vector<1x128xf32>
    %c22 = arith.constant 22 : index
    %c0_248 = arith.constant 0 : index
    %837 = vector.load %arg14[%c22, %c0_248] : memref<23x128xf32, #tpu.memory_space<vmem>>, vector<1x128xf32>
    tpu.vector_store %arg14[%c22, %c0_248], %836 {strides = array<i32>} : memref<23x128xf32, #tpu.memory_space<vmem>>, vector<1x128xf32>,
    %c2_249 = arith.constant 2 : index
    %c0_250 = arith.constant 0 : index
    %838 = vector.load %arg14[%c2_249, %c0_250] : memref<23x128xf32, #tpu.memory_space<vmem>>, vector<19x128xf32>
    %c3_251 = arith.constant 3 : index
    %c0_252 = arith.constant 0 : index
    %839 = vector.load %arg14[%c3_251, %c0_252] : memref<23x128xf32, #tpu.memory_space<vmem>>, vector<19x128xf32>
    %c4_253 = arith.constant 4 : index
    %c0_254 = arith.constant 0 : index
    %840 = vector.load %arg14[%c4_253, %c0_254] : memref<23x128xf32, #tpu.memory_space<vmem>>, vector<19x128xf32>
    %c3_255 = arith.constant 3 : index
    %c0_256 = arith.constant 0 : index
    %841 = vector.load %arg16[%c3_255, %c0_256] : memref<23x128xf32, #tpu.memory_space<vmem>>, vector<19x128xf32>
    %c4_257 = arith.constant 4 : index
    %c0_258 = arith.constant 0 : index
    %842 = vector.load %arg16[%c4_257, %c0_258] : memref<23x128xf32, #tpu.memory_space<vmem>>, vector<19x128xf32>
    %843 = arith.subf %839, %841 : vector<19x128xf32>
    %844 = vector.extract_strided_slice %843 {offsets = [0, 1], sizes = [19, 127], strides = [1, 1]} : vector<19x128xf32> to vector<19x127xf32>
    %845 = vector.extract_strided_slice %843 {offsets = [0, 127], sizes = [19, 1], strides = [1, 1]} : vector<19x128xf32> to vector<19x1xf32>
    %846 = tpu.concatenate %844, %845 in 1 : vector<19x127xf32>, vector<19x1xf32> -> vector<19x128xf32>
    %847 = arith.subf %846, %838 : vector<19x128xf32>
    %848 = arith.subf %839, %841 : vector<19x128xf32>
    %849 = arith.subf %848, %838 : vector<19x128xf32>
    %850 = arith.subf %840, %842 : vector<19x128xf32>
    %851 = vector.extract_strided_slice %850 {offsets = [0, 1], sizes = [19, 127], strides = [1, 1]} : vector<19x128xf32> to vector<19x127xf32>
    %852 = vector.extract_strided_slice %850 {offsets = [0, 127], sizes = [19, 1], strides = [1, 1]} : vector<19x128xf32> to vector<19x1xf32>
    %853 = tpu.concatenate %851, %852 in 1 : vector<19x127xf32>, vector<19x1xf32> -> vector<19x128xf32>
    %854 = arith.subf %853, %838 : vector<19x128xf32>
    %cst_259 = arith.constant 3.000000e+01 : f32
    %855 = vector.broadcast %cst_259 : f32 to vector<19x128xf32>
    %856 = arith.minimumf %847, %855 : vector<19x128xf32>
    %857 = math.exp %856 : vector<19x128xf32>
    %cst_260 = arith.constant 3.000000e+01 : f32
    %858 = vector.broadcast %cst_260 : f32 to vector<19x128xf32>
    %859 = arith.minimumf %849, %858 : vector<19x128xf32>
    %860 = math.exp %859 : vector<19x128xf32>
    %cst_261 = arith.constant 3.000000e+01 : f32
    %861 = vector.broadcast %cst_261 : f32 to vector<19x128xf32>
    %862 = arith.minimumf %854, %861 : vector<19x128xf32>
    %863 = math.exp %862 : vector<19x128xf32>
    %cst_262 = arith.constant 0.000000e+00 : f32
    %864 = vector.broadcast %cst_262 : f32 to vector<1x128xf32>
    %c5_i32_263 = arith.constant 5 : i32
    %865 = vector.broadcast %c5_i32_263 : i32 to vector<1x128xi32>
    %866 = arith.cmpi eq, %0, %865 : vector<1x128xi32>
    %cst_264 = arith.constant 1.000000e+00 : f32
    %cst_265 = arith.constant 0.000000e+00 : f32
    %867 = vector.broadcast %cst_264 : f32 to vector<1x128xf32>
    %868 = vector.broadcast %cst_265 : f32 to vector<1x128xf32>
    %869 = arith.select %866, %867, %868 : vector<1x128xi1>, vector<1x128xf32>
    %870 = vector.extract_strided_slice %864 {offsets = [0, 1], sizes = [1, 127], strides = [1, 1]} : vector<1x128xf32> to vector<1x127xf32>
    %871 = vector.extract_strided_slice %864 {offsets = [0, 127], sizes = [1, 1], strides = [1, 1]} : vector<1x128xf32> to vector<1x1xf32>
    %872 = tpu.concatenate %870, %871 in 1 : vector<1x127xf32>, vector<1x1xf32> -> vector<1x128xf32>
    %873 = vector.extract_strided_slice %857 {offsets = [18, 0], sizes = [1, 128], strides = [1, 1]} : vector<19x128xf32> to vector<1x128xf32>
    %874 = arith.mulf %872, %873 : vector<1x128xf32>
    %875 = vector.extract_strided_slice %860 {offsets = [18, 0], sizes = [1, 128], strides = [1, 1]} : vector<19x128xf32> to vector<1x128xf32>
    %876 = arith.mulf %864, %875 : vector<1x128xf32>
    %877 = arith.addf %874, %876 : vector<1x128xf32>
    %878 = vector.extract_strided_slice %869 {offsets = [0, 1], sizes = [1, 127], strides = [1, 1]} : vector<1x128xf32> to vector<1x127xf32>
    %879 = vector.extract_strided_slice %869 {offsets = [0, 127], sizes = [1, 1], strides = [1, 1]} : vector<1x128xf32> to vector<1x1xf32>
    %880 = tpu.concatenate %878, %879 in 1 : vector<1x127xf32>, vector<1x1xf32> -> vector<1x128xf32>
    %881 = vector.extract_strided_slice %863 {offsets = [18, 0], sizes = [1, 128], strides = [1, 1]} : vector<19x128xf32> to vector<1x128xf32>
    %882 = arith.mulf %880, %881 : vector<1x128xf32>
    %883 = arith.addf %877, %882 : vector<1x128xf32>
    %c4_i32_266 = arith.constant 4 : i32
    %884 = vector.broadcast %c4_i32_266 : i32 to vector<1x128xi32>
    %885 = arith.cmpi sge, %0, %884 : vector<1x128xi32>
    %c4_i32_267 = arith.constant 4 : i32
    %886 = vector.broadcast %c4_i32_267 : i32 to vector<1x128xi32>
    %887 = arith.cmpi sle, %0, %886 : vector<1x128xi32>
    %888 = arith.andi %885, %887 : vector<1x128xi1>
    %cst_268 = arith.constant 0.000000e+00 : f32
    %889 = vector.broadcast %cst_268 : f32 to vector<1x128xf32>
    %890 = arith.select %888, %883, %889 : vector<1x128xi1>, vector<1x128xf32>
    %c20_269 = arith.constant 20 : index
    %c0_270 = arith.constant 0 : index
    %891 = vector.load %arg15[%c20_269, %c0_270] : memref<23x128xf32, #tpu.memory_space<vmem>>, vector<1x128xf32>
    tpu.vector_store %arg15[%c20_269, %c0_270], %890 {strides = array<i32>} : memref<23x128xf32, #tpu.memory_space<vmem>>, vector<1x128xf32>,
    %892 = vector.extract_strided_slice %890 {offsets = [0, 1], sizes = [1, 127], strides = [1, 1]} : vector<1x128xf32> to vector<1x127xf32>
    %893 = vector.extract_strided_slice %890 {offsets = [0, 127], sizes = [1, 1], strides = [1, 1]} : vector<1x128xf32> to vector<1x1xf32>
    %894 = tpu.concatenate %892, %893 in 1 : vector<1x127xf32>, vector<1x1xf32> -> vector<1x128xf32>
    %895 = vector.extract_strided_slice %857 {offsets = [17, 0], sizes = [1, 128], strides = [1, 1]} : vector<19x128xf32> to vector<1x128xf32>
    %896 = arith.mulf %894, %895 : vector<1x128xf32>
    %897 = vector.extract_strided_slice %860 {offsets = [17, 0], sizes = [1, 128], strides = [1, 1]} : vector<19x128xf32> to vector<1x128xf32>
    %898 = arith.mulf %890, %897 : vector<1x128xf32>
    %899 = arith.addf %896, %898 : vector<1x128xf32>
    %900 = vector.extract_strided_slice %864 {offsets = [0, 1], sizes = [1, 127], strides = [1, 1]} : vector<1x128xf32> to vector<1x127xf32>
    %901 = vector.extract_strided_slice %864 {offsets = [0, 127], sizes = [1, 1], strides = [1, 1]} : vector<1x128xf32> to vector<1x1xf32>
    %902 = tpu.concatenate %900, %901 in 1 : vector<1x127xf32>, vector<1x1xf32> -> vector<1x128xf32>
    %903 = vector.extract_strided_slice %863 {offsets = [17, 0], sizes = [1, 128], strides = [1, 1]} : vector<19x128xf32> to vector<1x128xf32>
    %904 = arith.mulf %902, %903 : vector<1x128xf32>
    %905 = arith.addf %899, %904 : vector<1x128xf32>
    %c3_i32_271 = arith.constant 3 : i32
    %906 = vector.broadcast %c3_i32_271 : i32 to vector<1x128xi32>
    %907 = arith.cmpi sge, %0, %906 : vector<1x128xi32>
    %c4_i32_272 = arith.constant 4 : i32
    %908 = vector.broadcast %c4_i32_272 : i32 to vector<1x128xi32>
    %909 = arith.cmpi sle, %0, %908 : vector<1x128xi32>
    %910 = arith.andi %907, %909 : vector<1x128xi1>
    %cst_273 = arith.constant 0.000000e+00 : f32
    %911 = vector.broadcast %cst_273 : f32 to vector<1x128xf32>
    %912 = arith.select %910, %905, %911 : vector<1x128xi1>, vector<1x128xf32>
    %c19_274 = arith.constant 19 : index
    %c0_275 = arith.constant 0 : index
    %913 = vector.load %arg15[%c19_274, %c0_275] : memref<23x128xf32, #tpu.memory_space<vmem>>, vector<1x128xf32>
    tpu.vector_store %arg15[%c19_274, %c0_275], %912 {strides = array<i32>} : memref<23x128xf32, #tpu.memory_space<vmem>>, vector<1x128xf32>,
    %914 = vector.extract_strided_slice %912 {offsets = [0, 1], sizes = [1, 127], strides = [1, 1]} : vector<1x128xf32> to vector<1x127xf32>
    %915 = vector.extract_strided_slice %912 {offsets = [0, 127], sizes = [1, 1], strides = [1, 1]} : vector<1x128xf32> to vector<1x1xf32>
    %916 = tpu.concatenate %914, %915 in 1 : vector<1x127xf32>, vector<1x1xf32> -> vector<1x128xf32>
    %917 = vector.extract_strided_slice %857 {offsets = [16, 0], sizes = [1, 128], strides = [1, 1]} : vector<19x128xf32> to vector<1x128xf32>
    %918 = arith.mulf %916, %917 : vector<1x128xf32>
    %919 = vector.extract_strided_slice %860 {offsets = [16, 0], sizes = [1, 128], strides = [1, 1]} : vector<19x128xf32> to vector<1x128xf32>
    %920 = arith.mulf %912, %919 : vector<1x128xf32>
    %921 = arith.addf %918, %920 : vector<1x128xf32>
    %922 = vector.extract_strided_slice %890 {offsets = [0, 1], sizes = [1, 127], strides = [1, 1]} : vector<1x128xf32> to vector<1x127xf32>
    %923 = vector.extract_strided_slice %890 {offsets = [0, 127], sizes = [1, 1], strides = [1, 1]} : vector<1x128xf32> to vector<1x1xf32>
    %924 = tpu.concatenate %922, %923 in 1 : vector<1x127xf32>, vector<1x1xf32> -> vector<1x128xf32>
    %925 = vector.extract_strided_slice %863 {offsets = [16, 0], sizes = [1, 128], strides = [1, 1]} : vector<19x128xf32> to vector<1x128xf32>
    %926 = arith.mulf %924, %925 : vector<1x128xf32>
    %927 = arith.addf %921, %926 : vector<1x128xf32>
    %c2_i32_276 = arith.constant 2 : i32
    %928 = vector.broadcast %c2_i32_276 : i32 to vector<1x128xi32>
    %929 = arith.cmpi sge, %0, %928 : vector<1x128xi32>
    %c4_i32_277 = arith.constant 4 : i32
    %930 = vector.broadcast %c4_i32_277 : i32 to vector<1x128xi32>
    %931 = arith.cmpi sle, %0, %930 : vector<1x128xi32>
    %932 = arith.andi %929, %931 : vector<1x128xi1>
    %cst_278 = arith.constant 0.000000e+00 : f32
    %933 = vector.broadcast %cst_278 : f32 to vector<1x128xf32>
    %934 = arith.select %932, %927, %933 : vector<1x128xi1>, vector<1x128xf32>
    %c18_279 = arith.constant 18 : index
    %c0_280 = arith.constant 0 : index
    %935 = vector.load %arg15[%c18_279, %c0_280] : memref<23x128xf32, #tpu.memory_space<vmem>>, vector<1x128xf32>
    tpu.vector_store %arg15[%c18_279, %c0_280], %934 {strides = array<i32>} : memref<23x128xf32, #tpu.memory_space<vmem>>, vector<1x128xf32>,
    %936 = vector.extract_strided_slice %934 {offsets = [0, 1], sizes = [1, 127], strides = [1, 1]} : vector<1x128xf32> to vector<1x127xf32>
    %937 = vector.extract_strided_slice %934 {offsets = [0, 127], sizes = [1, 1], strides = [1, 1]} : vector<1x128xf32> to vector<1x1xf32>
    %938 = tpu.concatenate %936, %937 in 1 : vector<1x127xf32>, vector<1x1xf32> -> vector<1x128xf32>
    %939 = vector.extract_strided_slice %857 {offsets = [15, 0], sizes = [1, 128], strides = [1, 1]} : vector<19x128xf32> to vector<1x128xf32>
    %940 = arith.mulf %938, %939 : vector<1x128xf32>
    %941 = vector.extract_strided_slice %860 {offsets = [15, 0], sizes = [1, 128], strides = [1, 1]} : vector<19x128xf32> to vector<1x128xf32>
    %942 = arith.mulf %934, %941 : vector<1x128xf32>
    %943 = arith.addf %940, %942 : vector<1x128xf32>
    %944 = vector.extract_strided_slice %912 {offsets = [0, 1], sizes = [1, 127], strides = [1, 1]} : vector<1x128xf32> to vector<1x127xf32>
    %945 = vector.extract_strided_slice %912 {offsets = [0, 127], sizes = [1, 1], strides = [1, 1]} : vector<1x128xf32> to vector<1x1xf32>
    %946 = tpu.concatenate %944, %945 in 1 : vector<1x127xf32>, vector<1x1xf32> -> vector<1x128xf32>
    %947 = vector.extract_strided_slice %863 {offsets = [15, 0], sizes = [1, 128], strides = [1, 1]} : vector<19x128xf32> to vector<1x128xf32>
    %948 = arith.mulf %946, %947 : vector<1x128xf32>
    %949 = arith.addf %943, %948 : vector<1x128xf32>
    %c1_i32_281 = arith.constant 1 : i32
    %950 = vector.broadcast %c1_i32_281 : i32 to vector<1x128xi32>
    %951 = arith.cmpi sge, %0, %950 : vector<1x128xi32>
    %c4_i32_282 = arith.constant 4 : i32
    %952 = vector.broadcast %c4_i32_282 : i32 to vector<1x128xi32>
    %953 = arith.cmpi sle, %0, %952 : vector<1x128xi32>
    %954 = arith.andi %951, %953 : vector<1x128xi1>
    %cst_283 = arith.constant 0.000000e+00 : f32
    %955 = vector.broadcast %cst_283 : f32 to vector<1x128xf32>
    %956 = arith.select %954, %949, %955 : vector<1x128xi1>, vector<1x128xf32>
    %c17_284 = arith.constant 17 : index
    %c0_285 = arith.constant 0 : index
    %957 = vector.load %arg15[%c17_284, %c0_285] : memref<23x128xf32, #tpu.memory_space<vmem>>, vector<1x128xf32>
    tpu.vector_store %arg15[%c17_284, %c0_285], %956 {strides = array<i32>} : memref<23x128xf32, #tpu.memory_space<vmem>>, vector<1x128xf32>,
    %958 = vector.extract_strided_slice %956 {offsets = [0, 1], sizes = [1, 127], strides = [1, 1]} : vector<1x128xf32> to vector<1x127xf32>
    %959 = vector.extract_strided_slice %956 {offsets = [0, 127], sizes = [1, 1], strides = [1, 1]} : vector<1x128xf32> to vector<1x1xf32>
    %960 = tpu.concatenate %958, %959 in 1 : vector<1x127xf32>, vector<1x1xf32> -> vector<1x128xf32>
    %961 = vector.extract_strided_slice %857 {offsets = [14, 0], sizes = [1, 128], strides = [1, 1]} : vector<19x128xf32> to vector<1x128xf32>
    %962 = arith.mulf %960, %961 : vector<1x128xf32>
    %963 = vector.extract_strided_slice %860 {offsets = [14, 0], sizes = [1, 128], strides = [1, 1]} : vector<19x128xf32> to vector<1x128xf32>
    %964 = arith.mulf %956, %963 : vector<1x128xf32>
    %965 = arith.addf %962, %964 : vector<1x128xf32>
    %966 = vector.extract_strided_slice %934 {offsets = [0, 1], sizes = [1, 127], strides = [1, 1]} : vector<1x128xf32> to vector<1x127xf32>
    %967 = vector.extract_strided_slice %934 {offsets = [0, 127], sizes = [1, 1], strides = [1, 1]} : vector<1x128xf32> to vector<1x1xf32>
    %968 = tpu.concatenate %966, %967 in 1 : vector<1x127xf32>, vector<1x1xf32> -> vector<1x128xf32>
    %969 = vector.extract_strided_slice %863 {offsets = [14, 0], sizes = [1, 128], strides = [1, 1]} : vector<19x128xf32> to vector<1x128xf32>
    %970 = arith.mulf %968, %969 : vector<1x128xf32>
    %971 = arith.addf %965, %970 : vector<1x128xf32>
    %c1_i32_286 = arith.constant 1 : i32
    %972 = vector.broadcast %c1_i32_286 : i32 to vector<1x128xi32>
    %973 = arith.cmpi sge, %0, %972 : vector<1x128xi32>
    %c4_i32_287 = arith.constant 4 : i32
    %974 = vector.broadcast %c4_i32_287 : i32 to vector<1x128xi32>
    %975 = arith.cmpi sle, %0, %974 : vector<1x128xi32>
    %976 = arith.andi %973, %975 : vector<1x128xi1>
    %cst_288 = arith.constant 0.000000e+00 : f32
    %977 = vector.broadcast %cst_288 : f32 to vector<1x128xf32>
    %978 = arith.select %976, %971, %977 : vector<1x128xi1>, vector<1x128xf32>
    %c16_289 = arith.constant 16 : index
    %c0_290 = arith.constant 0 : index
    %979 = vector.load %arg15[%c16_289, %c0_290] : memref<23x128xf32, #tpu.memory_space<vmem>>, vector<1x128xf32>
    tpu.vector_store %arg15[%c16_289, %c0_290], %978 {strides = array<i32>} : memref<23x128xf32, #tpu.memory_space<vmem>>, vector<1x128xf32>,
    %980 = vector.extract_strided_slice %978 {offsets = [0, 1], sizes = [1, 127], strides = [1, 1]} : vector<1x128xf32> to vector<1x127xf32>
    %981 = vector.extract_strided_slice %978 {offsets = [0, 127], sizes = [1, 1], strides = [1, 1]} : vector<1x128xf32> to vector<1x1xf32>
    %982 = tpu.concatenate %980, %981 in 1 : vector<1x127xf32>, vector<1x1xf32> -> vector<1x128xf32>
    %983 = vector.extract_strided_slice %857 {offsets = [13, 0], sizes = [1, 128], strides = [1, 1]} : vector<19x128xf32> to vector<1x128xf32>
    %984 = arith.mulf %982, %983 : vector<1x128xf32>
    %985 = vector.extract_strided_slice %860 {offsets = [13, 0], sizes = [1, 128], strides = [1, 1]} : vector<19x128xf32> to vector<1x128xf32>
    %986 = arith.mulf %978, %985 : vector<1x128xf32>
    %987 = arith.addf %984, %986 : vector<1x128xf32>
    %988 = vector.extract_strided_slice %956 {offsets = [0, 1], sizes = [1, 127], strides = [1, 1]} : vector<1x128xf32> to vector<1x127xf32>
    %989 = vector.extract_strided_slice %956 {offsets = [0, 127], sizes = [1, 1], strides = [1, 1]} : vector<1x128xf32> to vector<1x1xf32>
    %990 = tpu.concatenate %988, %989 in 1 : vector<1x127xf32>, vector<1x1xf32> -> vector<1x128xf32>
    %991 = vector.extract_strided_slice %863 {offsets = [13, 0], sizes = [1, 128], strides = [1, 1]} : vector<19x128xf32> to vector<1x128xf32>
    %992 = arith.mulf %990, %991 : vector<1x128xf32>
    %993 = arith.addf %987, %992 : vector<1x128xf32>
    %c1_i32_291 = arith.constant 1 : i32
    %994 = vector.broadcast %c1_i32_291 : i32 to vector<1x128xi32>
    %995 = arith.cmpi sge, %0, %994 : vector<1x128xi32>
    %c4_i32_292 = arith.constant 4 : i32
    %996 = vector.broadcast %c4_i32_292 : i32 to vector<1x128xi32>
    %997 = arith.cmpi sle, %0, %996 : vector<1x128xi32>
    %998 = arith.andi %995, %997 : vector<1x128xi1>
    %cst_293 = arith.constant 0.000000e+00 : f32
    %999 = vector.broadcast %cst_293 : f32 to vector<1x128xf32>
    %1000 = arith.select %998, %993, %999 : vector<1x128xi1>, vector<1x128xf32>
    %c15_294 = arith.constant 15 : index
    %c0_295 = arith.constant 0 : index
    %1001 = vector.load %arg15[%c15_294, %c0_295] : memref<23x128xf32, #tpu.memory_space<vmem>>, vector<1x128xf32>
    tpu.vector_store %arg15[%c15_294, %c0_295], %1000 {strides = array<i32>} : memref<23x128xf32, #tpu.memory_space<vmem>>, vector<1x128xf32>,
    %1002 = vector.extract_strided_slice %1000 {offsets = [0, 1], sizes = [1, 127], strides = [1, 1]} : vector<1x128xf32> to vector<1x127xf32>
    %1003 = vector.extract_strided_slice %1000 {offsets = [0, 127], sizes = [1, 1], strides = [1, 1]} : vector<1x128xf32> to vector<1x1xf32>
    %1004 = tpu.concatenate %1002, %1003 in 1 : vector<1x127xf32>, vector<1x1xf32> -> vector<1x128xf32>
    %1005 = vector.extract_strided_slice %857 {offsets = [12, 0], sizes = [1, 128], strides = [1, 1]} : vector<19x128xf32> to vector<1x128xf32>
    %1006 = arith.mulf %1004, %1005 : vector<1x128xf32>
    %1007 = vector.extract_strided_slice %860 {offsets = [12, 0], sizes = [1, 128], strides = [1, 1]} : vector<19x128xf32> to vector<1x128xf32>
    %1008 = arith.mulf %1000, %1007 : vector<1x128xf32>
    %1009 = arith.addf %1006, %1008 : vector<1x128xf32>
    %1010 = vector.extract_strided_slice %978 {offsets = [0, 1], sizes = [1, 127], strides = [1, 1]} : vector<1x128xf32> to vector<1x127xf32>
    %1011 = vector.extract_strided_slice %978 {offsets = [0, 127], sizes = [1, 1], strides = [1, 1]} : vector<1x128xf32> to vector<1x1xf32>
    %1012 = tpu.concatenate %1010, %1011 in 1 : vector<1x127xf32>, vector<1x1xf32> -> vector<1x128xf32>
    %1013 = vector.extract_strided_slice %863 {offsets = [12, 0], sizes = [1, 128], strides = [1, 1]} : vector<19x128xf32> to vector<1x128xf32>
    %1014 = arith.mulf %1012, %1013 : vector<1x128xf32>
    %1015 = arith.addf %1009, %1014 : vector<1x128xf32>
    %c1_i32_296 = arith.constant 1 : i32
    %1016 = vector.broadcast %c1_i32_296 : i32 to vector<1x128xi32>
    %1017 = arith.cmpi sge, %0, %1016 : vector<1x128xi32>
    %c4_i32_297 = arith.constant 4 : i32
    %1018 = vector.broadcast %c4_i32_297 : i32 to vector<1x128xi32>
    %1019 = arith.cmpi sle, %0, %1018 : vector<1x128xi32>
    %1020 = arith.andi %1017, %1019 : vector<1x128xi1>
    %cst_298 = arith.constant 0.000000e+00 : f32
    %1021 = vector.broadcast %cst_298 : f32 to vector<1x128xf32>
    %1022 = arith.select %1020, %1015, %1021 : vector<1x128xi1>, vector<1x128xf32>
    %c14_299 = arith.constant 14 : index
    %c0_300 = arith.constant 0 : index
    %1023 = vector.load %arg15[%c14_299, %c0_300] : memref<23x128xf32, #tpu.memory_space<vmem>>, vector<1x128xf32>
    tpu.vector_store %arg15[%c14_299, %c0_300], %1022 {strides = array<i32>} : memref<23x128xf32, #tpu.memory_space<vmem>>, vector<1x128xf32>,
    %1024 = vector.extract_strided_slice %1022 {offsets = [0, 1], sizes = [1, 127], strides = [1, 1]} : vector<1x128xf32> to vector<1x127xf32>
    %1025 = vector.extract_strided_slice %1022 {offsets = [0, 127], sizes = [1, 1], strides = [1, 1]} : vector<1x128xf32> to vector<1x1xf32>
    %1026 = tpu.concatenate %1024, %1025 in 1 : vector<1x127xf32>, vector<1x1xf32> -> vector<1x128xf32>
    %1027 = vector.extract_strided_slice %857 {offsets = [11, 0], sizes = [1, 128], strides = [1, 1]} : vector<19x128xf32> to vector<1x128xf32>
    %1028 = arith.mulf %1026, %1027 : vector<1x128xf32>
    %1029 = vector.extract_strided_slice %860 {offsets = [11, 0], sizes = [1, 128], strides = [1, 1]} : vector<19x128xf32> to vector<1x128xf32>
    %1030 = arith.mulf %1022, %1029 : vector<1x128xf32>
    %1031 = arith.addf %1028, %1030 : vector<1x128xf32>
    %1032 = vector.extract_strided_slice %1000 {offsets = [0, 1], sizes = [1, 127], strides = [1, 1]} : vector<1x128xf32> to vector<1x127xf32>
    %1033 = vector.extract_strided_slice %1000 {offsets = [0, 127], sizes = [1, 1], strides = [1, 1]} : vector<1x128xf32> to vector<1x1xf32>
    %1034 = tpu.concatenate %1032, %1033 in 1 : vector<1x127xf32>, vector<1x1xf32> -> vector<1x128xf32>
    %1035 = vector.extract_strided_slice %863 {offsets = [11, 0], sizes = [1, 128], strides = [1, 1]} : vector<19x128xf32> to vector<1x128xf32>
    %1036 = arith.mulf %1034, %1035 : vector<1x128xf32>
    %1037 = arith.addf %1031, %1036 : vector<1x128xf32>
    %c1_i32_301 = arith.constant 1 : i32
    %1038 = vector.broadcast %c1_i32_301 : i32 to vector<1x128xi32>
    %1039 = arith.cmpi sge, %0, %1038 : vector<1x128xi32>
    %c4_i32_302 = arith.constant 4 : i32
    %1040 = vector.broadcast %c4_i32_302 : i32 to vector<1x128xi32>
    %1041 = arith.cmpi sle, %0, %1040 : vector<1x128xi32>
    %1042 = arith.andi %1039, %1041 : vector<1x128xi1>
    %cst_303 = arith.constant 0.000000e+00 : f32
    %1043 = vector.broadcast %cst_303 : f32 to vector<1x128xf32>
    %1044 = arith.select %1042, %1037, %1043 : vector<1x128xi1>, vector<1x128xf32>
    %c13_304 = arith.constant 13 : index
    %c0_305 = arith.constant 0 : index
    %1045 = vector.load %arg15[%c13_304, %c0_305] : memref<23x128xf32, #tpu.memory_space<vmem>>, vector<1x128xf32>
    tpu.vector_store %arg15[%c13_304, %c0_305], %1044 {strides = array<i32>} : memref<23x128xf32, #tpu.memory_space<vmem>>, vector<1x128xf32>,
    %1046 = vector.extract_strided_slice %1044 {offsets = [0, 1], sizes = [1, 127], strides = [1, 1]} : vector<1x128xf32> to vector<1x127xf32>
    %1047 = vector.extract_strided_slice %1044 {offsets = [0, 127], sizes = [1, 1], strides = [1, 1]} : vector<1x128xf32> to vector<1x1xf32>
    %1048 = tpu.concatenate %1046, %1047 in 1 : vector<1x127xf32>, vector<1x1xf32> -> vector<1x128xf32>
    %1049 = vector.extract_strided_slice %857 {offsets = [10, 0], sizes = [1, 128], strides = [1, 1]} : vector<19x128xf32> to vector<1x128xf32>
    %1050 = arith.mulf %1048, %1049 : vector<1x128xf32>
    %1051 = vector.extract_strided_slice %860 {offsets = [10, 0], sizes = [1, 128], strides = [1, 1]} : vector<19x128xf32> to vector<1x128xf32>
    %1052 = arith.mulf %1044, %1051 : vector<1x128xf32>
    %1053 = arith.addf %1050, %1052 : vector<1x128xf32>
    %1054 = vector.extract_strided_slice %1022 {offsets = [0, 1], sizes = [1, 127], strides = [1, 1]} : vector<1x128xf32> to vector<1x127xf32>
    %1055 = vector.extract_strided_slice %1022 {offsets = [0, 127], sizes = [1, 1], strides = [1, 1]} : vector<1x128xf32> to vector<1x1xf32>
    %1056 = tpu.concatenate %1054, %1055 in 1 : vector<1x127xf32>, vector<1x1xf32> -> vector<1x128xf32>
    %1057 = vector.extract_strided_slice %863 {offsets = [10, 0], sizes = [1, 128], strides = [1, 1]} : vector<19x128xf32> to vector<1x128xf32>
    %1058 = arith.mulf %1056, %1057 : vector<1x128xf32>
    %1059 = arith.addf %1053, %1058 : vector<1x128xf32>
    %c1_i32_306 = arith.constant 1 : i32
    %1060 = vector.broadcast %c1_i32_306 : i32 to vector<1x128xi32>
    %1061 = arith.cmpi sge, %0, %1060 : vector<1x128xi32>
    %c4_i32_307 = arith.constant 4 : i32
    %1062 = vector.broadcast %c4_i32_307 : i32 to vector<1x128xi32>
    %1063 = arith.cmpi sle, %0, %1062 : vector<1x128xi32>
    %1064 = arith.andi %1061, %1063 : vector<1x128xi1>
    %cst_308 = arith.constant 0.000000e+00 : f32
    %1065 = vector.broadcast %cst_308 : f32 to vector<1x128xf32>
    %1066 = arith.select %1064, %1059, %1065 : vector<1x128xi1>, vector<1x128xf32>
    %c12_309 = arith.constant 12 : index
    %c0_310 = arith.constant 0 : index
    %1067 = vector.load %arg15[%c12_309, %c0_310] : memref<23x128xf32, #tpu.memory_space<vmem>>, vector<1x128xf32>
    tpu.vector_store %arg15[%c12_309, %c0_310], %1066 {strides = array<i32>} : memref<23x128xf32, #tpu.memory_space<vmem>>, vector<1x128xf32>,
    %1068 = vector.extract_strided_slice %1066 {offsets = [0, 1], sizes = [1, 127], strides = [1, 1]} : vector<1x128xf32> to vector<1x127xf32>
    %1069 = vector.extract_strided_slice %1066 {offsets = [0, 127], sizes = [1, 1], strides = [1, 1]} : vector<1x128xf32> to vector<1x1xf32>
    %1070 = tpu.concatenate %1068, %1069 in 1 : vector<1x127xf32>, vector<1x1xf32> -> vector<1x128xf32>
    %1071 = vector.extract_strided_slice %857 {offsets = [9, 0], sizes = [1, 128], strides = [1, 1]} : vector<19x128xf32> to vector<1x128xf32>
    %1072 = arith.mulf %1070, %1071 : vector<1x128xf32>
    %1073 = vector.extract_strided_slice %860 {offsets = [9, 0], sizes = [1, 128], strides = [1, 1]} : vector<19x128xf32> to vector<1x128xf32>
    %1074 = arith.mulf %1066, %1073 : vector<1x128xf32>
    %1075 = arith.addf %1072, %1074 : vector<1x128xf32>
    %1076 = vector.extract_strided_slice %1044 {offsets = [0, 1], sizes = [1, 127], strides = [1, 1]} : vector<1x128xf32> to vector<1x127xf32>
    %1077 = vector.extract_strided_slice %1044 {offsets = [0, 127], sizes = [1, 1], strides = [1, 1]} : vector<1x128xf32> to vector<1x1xf32>
    %1078 = tpu.concatenate %1076, %1077 in 1 : vector<1x127xf32>, vector<1x1xf32> -> vector<1x128xf32>
    %1079 = vector.extract_strided_slice %863 {offsets = [9, 0], sizes = [1, 128], strides = [1, 1]} : vector<19x128xf32> to vector<1x128xf32>
    %1080 = arith.mulf %1078, %1079 : vector<1x128xf32>
    %1081 = arith.addf %1075, %1080 : vector<1x128xf32>
    %c1_i32_311 = arith.constant 1 : i32
    %1082 = vector.broadcast %c1_i32_311 : i32 to vector<1x128xi32>
    %1083 = arith.cmpi sge, %0, %1082 : vector<1x128xi32>
    %c4_i32_312 = arith.constant 4 : i32
    %1084 = vector.broadcast %c4_i32_312 : i32 to vector<1x128xi32>
    %1085 = arith.cmpi sle, %0, %1084 : vector<1x128xi32>
    %1086 = arith.andi %1083, %1085 : vector<1x128xi1>
    %cst_313 = arith.constant 0.000000e+00 : f32
    %1087 = vector.broadcast %cst_313 : f32 to vector<1x128xf32>
    %1088 = arith.select %1086, %1081, %1087 : vector<1x128xi1>, vector<1x128xf32>
    %c11_314 = arith.constant 11 : index
    %c0_315 = arith.constant 0 : index
    %1089 = vector.load %arg15[%c11_314, %c0_315] : memref<23x128xf32, #tpu.memory_space<vmem>>, vector<1x128xf32>
    tpu.vector_store %arg15[%c11_314, %c0_315], %1088 {strides = array<i32>} : memref<23x128xf32, #tpu.memory_space<vmem>>, vector<1x128xf32>,
    %1090 = vector.extract_strided_slice %1088 {offsets = [0, 1], sizes = [1, 127], strides = [1, 1]} : vector<1x128xf32> to vector<1x127xf32>
    %1091 = vector.extract_strided_slice %1088 {offsets = [0, 127], sizes = [1, 1], strides = [1, 1]} : vector<1x128xf32> to vector<1x1xf32>
    %1092 = tpu.concatenate %1090, %1091 in 1 : vector<1x127xf32>, vector<1x1xf32> -> vector<1x128xf32>
    %1093 = vector.extract_strided_slice %857 {offsets = [8, 0], sizes = [1, 128], strides = [1, 1]} : vector<19x128xf32> to vector<1x128xf32>
    %1094 = arith.mulf %1092, %1093 : vector<1x128xf32>
    %1095 = vector.extract_strided_slice %860 {offsets = [8, 0], sizes = [1, 128], strides = [1, 1]} : vector<19x128xf32> to vector<1x128xf32>
    %1096 = arith.mulf %1088, %1095 : vector<1x128xf32>
    %1097 = arith.addf %1094, %1096 : vector<1x128xf32>
    %1098 = vector.extract_strided_slice %1066 {offsets = [0, 1], sizes = [1, 127], strides = [1, 1]} : vector<1x128xf32> to vector<1x127xf32>
    %1099 = vector.extract_strided_slice %1066 {offsets = [0, 127], sizes = [1, 1], strides = [1, 1]} : vector<1x128xf32> to vector<1x1xf32>
    %1100 = tpu.concatenate %1098, %1099 in 1 : vector<1x127xf32>, vector<1x1xf32> -> vector<1x128xf32>
    %1101 = vector.extract_strided_slice %863 {offsets = [8, 0], sizes = [1, 128], strides = [1, 1]} : vector<19x128xf32> to vector<1x128xf32>
    %1102 = arith.mulf %1100, %1101 : vector<1x128xf32>
    %1103 = arith.addf %1097, %1102 : vector<1x128xf32>
    %c1_i32_316 = arith.constant 1 : i32
    %1104 = vector.broadcast %c1_i32_316 : i32 to vector<1x128xi32>
    %1105 = arith.cmpi sge, %0, %1104 : vector<1x128xi32>
    %c4_i32_317 = arith.constant 4 : i32
    %1106 = vector.broadcast %c4_i32_317 : i32 to vector<1x128xi32>
    %1107 = arith.cmpi sle, %0, %1106 : vector<1x128xi32>
    %1108 = arith.andi %1105, %1107 : vector<1x128xi1>
    %cst_318 = arith.constant 0.000000e+00 : f32
    %1109 = vector.broadcast %cst_318 : f32 to vector<1x128xf32>
    %1110 = arith.select %1108, %1103, %1109 : vector<1x128xi1>, vector<1x128xf32>
    %c10_319 = arith.constant 10 : index
    %c0_320 = arith.constant 0 : index
    %1111 = vector.load %arg15[%c10_319, %c0_320] : memref<23x128xf32, #tpu.memory_space<vmem>>, vector<1x128xf32>
    tpu.vector_store %arg15[%c10_319, %c0_320], %1110 {strides = array<i32>} : memref<23x128xf32, #tpu.memory_space<vmem>>, vector<1x128xf32>,
    %1112 = vector.extract_strided_slice %1110 {offsets = [0, 1], sizes = [1, 127], strides = [1, 1]} : vector<1x128xf32> to vector<1x127xf32>
    %1113 = vector.extract_strided_slice %1110 {offsets = [0, 127], sizes = [1, 1], strides = [1, 1]} : vector<1x128xf32> to vector<1x1xf32>
    %1114 = tpu.concatenate %1112, %1113 in 1 : vector<1x127xf32>, vector<1x1xf32> -> vector<1x128xf32>
    %1115 = vector.extract_strided_slice %857 {offsets = [7, 0], sizes = [1, 128], strides = [1, 1]} : vector<19x128xf32> to vector<1x128xf32>
    %1116 = arith.mulf %1114, %1115 : vector<1x128xf32>
    %1117 = vector.extract_strided_slice %860 {offsets = [7, 0], sizes = [1, 128], strides = [1, 1]} : vector<19x128xf32> to vector<1x128xf32>
    %1118 = arith.mulf %1110, %1117 : vector<1x128xf32>
    %1119 = arith.addf %1116, %1118 : vector<1x128xf32>
    %1120 = vector.extract_strided_slice %1088 {offsets = [0, 1], sizes = [1, 127], strides = [1, 1]} : vector<1x128xf32> to vector<1x127xf32>
    %1121 = vector.extract_strided_slice %1088 {offsets = [0, 127], sizes = [1, 1], strides = [1, 1]} : vector<1x128xf32> to vector<1x1xf32>
    %1122 = tpu.concatenate %1120, %1121 in 1 : vector<1x127xf32>, vector<1x1xf32> -> vector<1x128xf32>
    %1123 = vector.extract_strided_slice %863 {offsets = [7, 0], sizes = [1, 128], strides = [1, 1]} : vector<19x128xf32> to vector<1x128xf32>
    %1124 = arith.mulf %1122, %1123 : vector<1x128xf32>
    %1125 = arith.addf %1119, %1124 : vector<1x128xf32>
    %c1_i32_321 = arith.constant 1 : i32
    %1126 = vector.broadcast %c1_i32_321 : i32 to vector<1x128xi32>
    %1127 = arith.cmpi sge, %0, %1126 : vector<1x128xi32>
    %c4_i32_322 = arith.constant 4 : i32
    %1128 = vector.broadcast %c4_i32_322 : i32 to vector<1x128xi32>
    %1129 = arith.cmpi sle, %0, %1128 : vector<1x128xi32>
    %1130 = arith.andi %1127, %1129 : vector<1x128xi1>
    %cst_323 = arith.constant 0.000000e+00 : f32
    %1131 = vector.broadcast %cst_323 : f32 to vector<1x128xf32>
    %1132 = arith.select %1130, %1125, %1131 : vector<1x128xi1>, vector<1x128xf32>
    %c9_324 = arith.constant 9 : index
    %c0_325 = arith.constant 0 : index
    %1133 = vector.load %arg15[%c9_324, %c0_325] : memref<23x128xf32, #tpu.memory_space<vmem>>, vector<1x128xf32>
    tpu.vector_store %arg15[%c9_324, %c0_325], %1132 {strides = array<i32>} : memref<23x128xf32, #tpu.memory_space<vmem>>, vector<1x128xf32>,
    %1134 = vector.extract_strided_slice %1132 {offsets = [0, 1], sizes = [1, 127], strides = [1, 1]} : vector<1x128xf32> to vector<1x127xf32>
    %1135 = vector.extract_strided_slice %1132 {offsets = [0, 127], sizes = [1, 1], strides = [1, 1]} : vector<1x128xf32> to vector<1x1xf32>
    %1136 = tpu.concatenate %1134, %1135 in 1 : vector<1x127xf32>, vector<1x1xf32> -> vector<1x128xf32>
    %1137 = vector.extract_strided_slice %857 {offsets = [6, 0], sizes = [1, 128], strides = [1, 1]} : vector<19x128xf32> to vector<1x128xf32>
    %1138 = arith.mulf %1136, %1137 : vector<1x128xf32>
    %1139 = vector.extract_strided_slice %860 {offsets = [6, 0], sizes = [1, 128], strides = [1, 1]} : vector<19x128xf32> to vector<1x128xf32>
    %1140 = arith.mulf %1132, %1139 : vector<1x128xf32>
    %1141 = arith.addf %1138, %1140 : vector<1x128xf32>
    %1142 = vector.extract_strided_slice %1110 {offsets = [0, 1], sizes = [1, 127], strides = [1, 1]} : vector<1x128xf32> to vector<1x127xf32>
    %1143 = vector.extract_strided_slice %1110 {offsets = [0, 127], sizes = [1, 1], strides = [1, 1]} : vector<1x128xf32> to vector<1x1xf32>
    %1144 = tpu.concatenate %1142, %1143 in 1 : vector<1x127xf32>, vector<1x1xf32> -> vector<1x128xf32>
    %1145 = vector.extract_strided_slice %863 {offsets = [6, 0], sizes = [1, 128], strides = [1, 1]} : vector<19x128xf32> to vector<1x128xf32>
    %1146 = arith.mulf %1144, %1145 : vector<1x128xf32>
    %1147 = arith.addf %1141, %1146 : vector<1x128xf32>
    %c1_i32_326 = arith.constant 1 : i32
    %1148 = vector.broadcast %c1_i32_326 : i32 to vector<1x128xi32>
    %1149 = arith.cmpi sge, %0, %1148 : vector<1x128xi32>
    %c4_i32_327 = arith.constant 4 : i32
    %1150 = vector.broadcast %c4_i32_327 : i32 to vector<1x128xi32>
    %1151 = arith.cmpi sle, %0, %1150 : vector<1x128xi32>
    %1152 = arith.andi %1149, %1151 : vector<1x128xi1>
    %cst_328 = arith.constant 0.000000e+00 : f32
    %1153 = vector.broadcast %cst_328 : f32 to vector<1x128xf32>
    %1154 = arith.select %1152, %1147, %1153 : vector<1x128xi1>, vector<1x128xf32>
    %c8_329 = arith.constant 8 : index
    %c0_330 = arith.constant 0 : index
    %1155 = vector.load %arg15[%c8_329, %c0_330] : memref<23x128xf32, #tpu.memory_space<vmem>>, vector<1x128xf32>
    tpu.vector_store %arg15[%c8_329, %c0_330], %1154 {strides = array<i32>} : memref<23x128xf32, #tpu.memory_space<vmem>>, vector<1x128xf32>,
    %1156 = vector.extract_strided_slice %1154 {offsets = [0, 1], sizes = [1, 127], strides = [1, 1]} : vector<1x128xf32> to vector<1x127xf32>
    %1157 = vector.extract_strided_slice %1154 {offsets = [0, 127], sizes = [1, 1], strides = [1, 1]} : vector<1x128xf32> to vector<1x1xf32>
    %1158 = tpu.concatenate %1156, %1157 in 1 : vector<1x127xf32>, vector<1x1xf32> -> vector<1x128xf32>
    %1159 = vector.extract_strided_slice %857 {offsets = [5, 0], sizes = [1, 128], strides = [1, 1]} : vector<19x128xf32> to vector<1x128xf32>
    %1160 = arith.mulf %1158, %1159 : vector<1x128xf32>
    %1161 = vector.extract_strided_slice %860 {offsets = [5, 0], sizes = [1, 128], strides = [1, 1]} : vector<19x128xf32> to vector<1x128xf32>
    %1162 = arith.mulf %1154, %1161 : vector<1x128xf32>
    %1163 = arith.addf %1160, %1162 : vector<1x128xf32>
    %1164 = vector.extract_strided_slice %1132 {offsets = [0, 1], sizes = [1, 127], strides = [1, 1]} : vector<1x128xf32> to vector<1x127xf32>
    %1165 = vector.extract_strided_slice %1132 {offsets = [0, 127], sizes = [1, 1], strides = [1, 1]} : vector<1x128xf32> to vector<1x1xf32>
    %1166 = tpu.concatenate %1164, %1165 in 1 : vector<1x127xf32>, vector<1x1xf32> -> vector<1x128xf32>
    %1167 = vector.extract_strided_slice %863 {offsets = [5, 0], sizes = [1, 128], strides = [1, 1]} : vector<19x128xf32> to vector<1x128xf32>
    %1168 = arith.mulf %1166, %1167 : vector<1x128xf32>
    %1169 = arith.addf %1163, %1168 : vector<1x128xf32>
    %c1_i32_331 = arith.constant 1 : i32
    %1170 = vector.broadcast %c1_i32_331 : i32 to vector<1x128xi32>
    %1171 = arith.cmpi sge, %0, %1170 : vector<1x128xi32>
    %c4_i32_332 = arith.constant 4 : i32
    %1172 = vector.broadcast %c4_i32_332 : i32 to vector<1x128xi32>
    %1173 = arith.cmpi sle, %0, %1172 : vector<1x128xi32>
    %1174 = arith.andi %1171, %1173 : vector<1x128xi1>
    %cst_333 = arith.constant 0.000000e+00 : f32
    %1175 = vector.broadcast %cst_333 : f32 to vector<1x128xf32>
    %1176 = arith.select %1174, %1169, %1175 : vector<1x128xi1>, vector<1x128xf32>
    %c7_334 = arith.constant 7 : index
    %c0_335 = arith.constant 0 : index
    %1177 = vector.load %arg15[%c7_334, %c0_335] : memref<23x128xf32, #tpu.memory_space<vmem>>, vector<1x128xf32>
    tpu.vector_store %arg15[%c7_334, %c0_335], %1176 {strides = array<i32>} : memref<23x128xf32, #tpu.memory_space<vmem>>, vector<1x128xf32>,
    %1178 = vector.extract_strided_slice %1176 {offsets = [0, 1], sizes = [1, 127], strides = [1, 1]} : vector<1x128xf32> to vector<1x127xf32>
    %1179 = vector.extract_strided_slice %1176 {offsets = [0, 127], sizes = [1, 1], strides = [1, 1]} : vector<1x128xf32> to vector<1x1xf32>
    %1180 = tpu.concatenate %1178, %1179 in 1 : vector<1x127xf32>, vector<1x1xf32> -> vector<1x128xf32>
    %1181 = vector.extract_strided_slice %857 {offsets = [4, 0], sizes = [1, 128], strides = [1, 1]} : vector<19x128xf32> to vector<1x128xf32>
    %1182 = arith.mulf %1180, %1181 : vector<1x128xf32>
    %1183 = vector.extract_strided_slice %860 {offsets = [4, 0], sizes = [1, 128], strides = [1, 1]} : vector<19x128xf32> to vector<1x128xf32>
    %1184 = arith.mulf %1176, %1183 : vector<1x128xf32>
    %1185 = arith.addf %1182, %1184 : vector<1x128xf32>
    %1186 = vector.extract_strided_slice %1154 {offsets = [0, 1], sizes = [1, 127], strides = [1, 1]} : vector<1x128xf32> to vector<1x127xf32>
    %1187 = vector.extract_strided_slice %1154 {offsets = [0, 127], sizes = [1, 1], strides = [1, 1]} : vector<1x128xf32> to vector<1x1xf32>
    %1188 = tpu.concatenate %1186, %1187 in 1 : vector<1x127xf32>, vector<1x1xf32> -> vector<1x128xf32>
    %1189 = vector.extract_strided_slice %863 {offsets = [4, 0], sizes = [1, 128], strides = [1, 1]} : vector<19x128xf32> to vector<1x128xf32>
    %1190 = arith.mulf %1188, %1189 : vector<1x128xf32>
    %1191 = arith.addf %1185, %1190 : vector<1x128xf32>
    %c1_i32_336 = arith.constant 1 : i32
    %1192 = vector.broadcast %c1_i32_336 : i32 to vector<1x128xi32>
    %1193 = arith.cmpi sge, %0, %1192 : vector<1x128xi32>
    %c4_i32_337 = arith.constant 4 : i32
    %1194 = vector.broadcast %c4_i32_337 : i32 to vector<1x128xi32>
    %1195 = arith.cmpi sle, %0, %1194 : vector<1x128xi32>
    %1196 = arith.andi %1193, %1195 : vector<1x128xi1>
    %cst_338 = arith.constant 0.000000e+00 : f32
    %1197 = vector.broadcast %cst_338 : f32 to vector<1x128xf32>
    %1198 = arith.select %1196, %1191, %1197 : vector<1x128xi1>, vector<1x128xf32>
    %c6_339 = arith.constant 6 : index
    %c0_340 = arith.constant 0 : index
    %1199 = vector.load %arg15[%c6_339, %c0_340] : memref<23x128xf32, #tpu.memory_space<vmem>>, vector<1x128xf32>
    tpu.vector_store %arg15[%c6_339, %c0_340], %1198 {strides = array<i32>} : memref<23x128xf32, #tpu.memory_space<vmem>>, vector<1x128xf32>,
    %1200 = vector.extract_strided_slice %1198 {offsets = [0, 1], sizes = [1, 127], strides = [1, 1]} : vector<1x128xf32> to vector<1x127xf32>
    %1201 = vector.extract_strided_slice %1198 {offsets = [0, 127], sizes = [1, 1], strides = [1, 1]} : vector<1x128xf32> to vector<1x1xf32>
    %1202 = tpu.concatenate %1200, %1201 in 1 : vector<1x127xf32>, vector<1x1xf32> -> vector<1x128xf32>
    %1203 = vector.extract_strided_slice %857 {offsets = [3, 0], sizes = [1, 128], strides = [1, 1]} : vector<19x128xf32> to vector<1x128xf32>
    %1204 = arith.mulf %1202, %1203 : vector<1x128xf32>
    %1205 = vector.extract_strided_slice %860 {offsets = [3, 0], sizes = [1, 128], strides = [1, 1]} : vector<19x128xf32> to vector<1x128xf32>
    %1206 = arith.mulf %1198, %1205 : vector<1x128xf32>
    %1207 = arith.addf %1204, %1206 : vector<1x128xf32>
    %1208 = vector.extract_strided_slice %1176 {offsets = [0, 1], sizes = [1, 127], strides = [1, 1]} : vector<1x128xf32> to vector<1x127xf32>
    %1209 = vector.extract_strided_slice %1176 {offsets = [0, 127], sizes = [1, 1], strides = [1, 1]} : vector<1x128xf32> to vector<1x1xf32>
    %1210 = tpu.concatenate %1208, %1209 in 1 : vector<1x127xf32>, vector<1x1xf32> -> vector<1x128xf32>
    %1211 = vector.extract_strided_slice %863 {offsets = [3, 0], sizes = [1, 128], strides = [1, 1]} : vector<19x128xf32> to vector<1x128xf32>
    %1212 = arith.mulf %1210, %1211 : vector<1x128xf32>
    %1213 = arith.addf %1207, %1212 : vector<1x128xf32>
    %c1_i32_341 = arith.constant 1 : i32
    %1214 = vector.broadcast %c1_i32_341 : i32 to vector<1x128xi32>
    %1215 = arith.cmpi sge, %0, %1214 : vector<1x128xi32>
    %c4_i32_342 = arith.constant 4 : i32
    %1216 = vector.broadcast %c4_i32_342 : i32 to vector<1x128xi32>
    %1217 = arith.cmpi sle, %0, %1216 : vector<1x128xi32>
    %1218 = arith.andi %1215, %1217 : vector<1x128xi1>
    %cst_343 = arith.constant 0.000000e+00 : f32
    %1219 = vector.broadcast %cst_343 : f32 to vector<1x128xf32>
    %1220 = arith.select %1218, %1213, %1219 : vector<1x128xi1>, vector<1x128xf32>
    %c5_344 = arith.constant 5 : index
    %c0_345 = arith.constant 0 : index
    %1221 = vector.load %arg15[%c5_344, %c0_345] : memref<23x128xf32, #tpu.memory_space<vmem>>, vector<1x128xf32>
    tpu.vector_store %arg15[%c5_344, %c0_345], %1220 {strides = array<i32>} : memref<23x128xf32, #tpu.memory_space<vmem>>, vector<1x128xf32>,
    %1222 = vector.extract_strided_slice %1220 {offsets = [0, 1], sizes = [1, 127], strides = [1, 1]} : vector<1x128xf32> to vector<1x127xf32>
    %1223 = vector.extract_strided_slice %1220 {offsets = [0, 127], sizes = [1, 1], strides = [1, 1]} : vector<1x128xf32> to vector<1x1xf32>
    %1224 = tpu.concatenate %1222, %1223 in 1 : vector<1x127xf32>, vector<1x1xf32> -> vector<1x128xf32>
    %1225 = vector.extract_strided_slice %857 {offsets = [2, 0], sizes = [1, 128], strides = [1, 1]} : vector<19x128xf32> to vector<1x128xf32>
    %1226 = arith.mulf %1224, %1225 : vector<1x128xf32>
    %1227 = vector.extract_strided_slice %860 {offsets = [2, 0], sizes = [1, 128], strides = [1, 1]} : vector<19x128xf32> to vector<1x128xf32>
    %1228 = arith.mulf %1220, %1227 : vector<1x128xf32>
    %1229 = arith.addf %1226, %1228 : vector<1x128xf32>
    %1230 = vector.extract_strided_slice %1198 {offsets = [0, 1], sizes = [1, 127], strides = [1, 1]} : vector<1x128xf32> to vector<1x127xf32>
    %1231 = vector.extract_strided_slice %1198 {offsets = [0, 127], sizes = [1, 1], strides = [1, 1]} : vector<1x128xf32> to vector<1x1xf32>
    %1232 = tpu.concatenate %1230, %1231 in 1 : vector<1x127xf32>, vector<1x1xf32> -> vector<1x128xf32>
    %1233 = vector.extract_strided_slice %863 {offsets = [2, 0], sizes = [1, 128], strides = [1, 1]} : vector<19x128xf32> to vector<1x128xf32>
    %1234 = arith.mulf %1232, %1233 : vector<1x128xf32>
    %1235 = arith.addf %1229, %1234 : vector<1x128xf32>
    %c1_i32_346 = arith.constant 1 : i32
    %1236 = vector.broadcast %c1_i32_346 : i32 to vector<1x128xi32>
    %1237 = arith.cmpi sge, %0, %1236 : vector<1x128xi32>
    %c3_i32_347 = arith.constant 3 : i32
    %1238 = vector.broadcast %c3_i32_347 : i32 to vector<1x128xi32>
    %1239 = arith.cmpi sle, %0, %1238 : vector<1x128xi32>
    %1240 = arith.andi %1237, %1239 : vector<1x128xi1>
    %cst_348 = arith.constant 0.000000e+00 : f32
    %1241 = vector.broadcast %cst_348 : f32 to vector<1x128xf32>
    %1242 = arith.select %1240, %1235, %1241 : vector<1x128xi1>, vector<1x128xf32>
    %c4_349 = arith.constant 4 : index
    %c0_350 = arith.constant 0 : index
    %1243 = vector.load %arg15[%c4_349, %c0_350] : memref<23x128xf32, #tpu.memory_space<vmem>>, vector<1x128xf32>
    tpu.vector_store %arg15[%c4_349, %c0_350], %1242 {strides = array<i32>} : memref<23x128xf32, #tpu.memory_space<vmem>>, vector<1x128xf32>,
    %1244 = vector.extract_strided_slice %1242 {offsets = [0, 1], sizes = [1, 127], strides = [1, 1]} : vector<1x128xf32> to vector<1x127xf32>
    %1245 = vector.extract_strided_slice %1242 {offsets = [0, 127], sizes = [1, 1], strides = [1, 1]} : vector<1x128xf32> to vector<1x1xf32>
    %1246 = tpu.concatenate %1244, %1245 in 1 : vector<1x127xf32>, vector<1x1xf32> -> vector<1x128xf32>
    %1247 = vector.extract_strided_slice %857 {offsets = [1, 0], sizes = [1, 128], strides = [1, 1]} : vector<19x128xf32> to vector<1x128xf32>
    %1248 = arith.mulf %1246, %1247 : vector<1x128xf32>
    %1249 = vector.extract_strided_slice %860 {offsets = [1, 0], sizes = [1, 128], strides = [1, 1]} : vector<19x128xf32> to vector<1x128xf32>
    %1250 = arith.mulf %1242, %1249 : vector<1x128xf32>
    %1251 = arith.addf %1248, %1250 : vector<1x128xf32>
    %1252 = vector.extract_strided_slice %1220 {offsets = [0, 1], sizes = [1, 127], strides = [1, 1]} : vector<1x128xf32> to vector<1x127xf32>
    %1253 = vector.extract_strided_slice %1220 {offsets = [0, 127], sizes = [1, 1], strides = [1, 1]} : vector<1x128xf32> to vector<1x1xf32>
    %1254 = tpu.concatenate %1252, %1253 in 1 : vector<1x127xf32>, vector<1x1xf32> -> vector<1x128xf32>
    %1255 = vector.extract_strided_slice %863 {offsets = [1, 0], sizes = [1, 128], strides = [1, 1]} : vector<19x128xf32> to vector<1x128xf32>
    %1256 = arith.mulf %1254, %1255 : vector<1x128xf32>
    %1257 = arith.addf %1251, %1256 : vector<1x128xf32>
    %c1_i32_351 = arith.constant 1 : i32
    %1258 = vector.broadcast %c1_i32_351 : i32 to vector<1x128xi32>
    %1259 = arith.cmpi sge, %0, %1258 : vector<1x128xi32>
    %c2_i32_352 = arith.constant 2 : i32
    %1260 = vector.broadcast %c2_i32_352 : i32 to vector<1x128xi32>
    %1261 = arith.cmpi sle, %0, %1260 : vector<1x128xi32>
    %1262 = arith.andi %1259, %1261 : vector<1x128xi1>
    %cst_353 = arith.constant 0.000000e+00 : f32
    %1263 = vector.broadcast %cst_353 : f32 to vector<1x128xf32>
    %1264 = arith.select %1262, %1257, %1263 : vector<1x128xi1>, vector<1x128xf32>
    %c3_354 = arith.constant 3 : index
    %c0_355 = arith.constant 0 : index
    %1265 = vector.load %arg15[%c3_354, %c0_355] : memref<23x128xf32, #tpu.memory_space<vmem>>, vector<1x128xf32>
    tpu.vector_store %arg15[%c3_354, %c0_355], %1264 {strides = array<i32>} : memref<23x128xf32, #tpu.memory_space<vmem>>, vector<1x128xf32>,
    %1266 = vector.extract_strided_slice %1264 {offsets = [0, 1], sizes = [1, 127], strides = [1, 1]} : vector<1x128xf32> to vector<1x127xf32>
    %1267 = vector.extract_strided_slice %1264 {offsets = [0, 127], sizes = [1, 1], strides = [1, 1]} : vector<1x128xf32> to vector<1x1xf32>
    %1268 = tpu.concatenate %1266, %1267 in 1 : vector<1x127xf32>, vector<1x1xf32> -> vector<1x128xf32>
    %1269 = vector.extract_strided_slice %857 {offsets = [0, 0], sizes = [1, 128], strides = [1, 1]} : vector<19x128xf32> to vector<1x128xf32>
    %1270 = arith.mulf %1268, %1269 : vector<1x128xf32>
    %1271 = vector.extract_strided_slice %860 {offsets = [0, 0], sizes = [1, 128], strides = [1, 1]} : vector<19x128xf32> to vector<1x128xf32>
    %1272 = arith.mulf %1264, %1271 : vector<1x128xf32>
    %1273 = arith.addf %1270, %1272 : vector<1x128xf32>
    %1274 = vector.extract_strided_slice %1242 {offsets = [0, 1], sizes = [1, 127], strides = [1, 1]} : vector<1x128xf32> to vector<1x127xf32>
    %1275 = vector.extract_strided_slice %1242 {offsets = [0, 127], sizes = [1, 1], strides = [1, 1]} : vector<1x128xf32> to vector<1x1xf32>
    %1276 = tpu.concatenate %1274, %1275 in 1 : vector<1x127xf32>, vector<1x1xf32> -> vector<1x128xf32>
    %1277 = vector.extract_strided_slice %863 {offsets = [0, 0], sizes = [1, 128], strides = [1, 1]} : vector<19x128xf32> to vector<1x128xf32>
    %1278 = arith.mulf %1276, %1277 : vector<1x128xf32>
    %1279 = arith.addf %1273, %1278 : vector<1x128xf32>
    %c1_i32_356 = arith.constant 1 : i32
    %1280 = vector.broadcast %c1_i32_356 : i32 to vector<1x128xi32>
    %1281 = arith.cmpi sge, %0, %1280 : vector<1x128xi32>
    %c1_i32_357 = arith.constant 1 : i32
    %1282 = vector.broadcast %c1_i32_357 : i32 to vector<1x128xi32>
    %1283 = arith.cmpi sle, %0, %1282 : vector<1x128xi32>
    %1284 = arith.andi %1281, %1283 : vector<1x128xi1>
    %cst_358 = arith.constant 0.000000e+00 : f32
    %1285 = vector.broadcast %cst_358 : f32 to vector<1x128xf32>
    %1286 = arith.select %1284, %1279, %1285 : vector<1x128xi1>, vector<1x128xf32>
    %c2_359 = arith.constant 2 : index
    %c0_360 = arith.constant 0 : index
    %1287 = vector.load %arg15[%c2_359, %c0_360] : memref<23x128xf32, #tpu.memory_space<vmem>>, vector<1x128xf32>
    tpu.vector_store %arg15[%c2_359, %c0_360], %1286 {strides = array<i32>} : memref<23x128xf32, #tpu.memory_space<vmem>>, vector<1x128xf32>,
    %c2_361 = arith.constant 2 : index
    %c1_362 = arith.constant 1 : index
    %1288 = vector.load %arg15[%c2_361, %c1_362] : memref<23x128xf32, #tpu.memory_space<vmem>>, vector<16x1xf32>
    %c3_363 = arith.constant 3 : index
    %c2_364 = arith.constant 2 : index
    %1289 = vector.load %arg15[%c3_363, %c2_364] : memref<23x128xf32, #tpu.memory_space<vmem>>, vector<16x1xf32>
    %c4_365 = arith.constant 4 : index
    %c3_366 = arith.constant 3 : index
    %1290 = vector.load %arg15[%c4_365, %c3_366] : memref<23x128xf32, #tpu.memory_space<vmem>>, vector<16x1xf32>
    %c5_367 = arith.constant 5 : index
    %c4_368 = arith.constant 4 : index
    %1291 = vector.load %arg15[%c5_367, %c4_368] : memref<23x128xf32, #tpu.memory_space<vmem>>, vector<16x1xf32>
    %1292 = tpu.concatenate %1288, %1289, %1290, %1291 in 1 : vector<16x1xf32>, vector<16x1xf32>, vector<16x1xf32>, vector<16x1xf32> -> vector<16x4xf32>
    %cst_369 = arith.constant dense<0.000000e+00> : vector<4x256xf32>
    %1293 = tpu.matmul %1292, %9, %cst_369 {dimension_numbers = #tpu.dot_dimension_numbers<[0], [0], [1], [1], [0, 1, 1, 1], [], []>} : vector<16x4xf32>, vector<16x256xf32>, vector<4x256xf32> -> vector<4x256xf32>
    %cst_370 = arith.constant 1.000000e+00 : f32
    %1294 = vector.broadcast %cst_370 : f32 to vector<16x1xf32>
    %cst_371 = arith.constant dense<0.000000e+00> : vector<4x1xf32>
    %1295 = tpu.matmul %1292, %1294, %cst_371 {dimension_numbers = #tpu.dot_dimension_numbers<[0], [0], [1], [1], [0, 1, 1, 1], [], []>} : vector<16x4xf32>, vector<16x1xf32>, vector<4x1xf32> -> vector<4x1xf32>
    %1296 = tpu.reciprocal %1295 {approx = true} : vector<4x1xf32> -> vector<4x1xf32>
    %1297 = vector.broadcast %1296 : vector<4x1xf32> to vector<4x256xf32>
    %1298 = arith.mulf %1293, %1297 : vector<4x256xf32>
    %1299 = vector.shape_cast %14 : vector<1x256xf32> to vector<1x256xf32>
    %1300 = vector.broadcast %1299 : vector<1x256xf32> to vector<4x256xf32>
    %1301 = tpu.concatenate %1300, %16, %1298 in 0 : vector<4x256xf32>, vector<4x256xf32>, vector<4x256xf32> -> vector<12x256xf32>
    %c0_372 = arith.constant 0 : index
    %c0_373 = arith.constant 0 : index
    %c0_374 = arith.constant 0 : index
    %1302 = vector.load %arg11[%c0_372, %c0_373, %c0_374] : memref<1x12x256xf32, #tpu.memory_space<vmem>>, vector<1x12x256xf32>
    %1303 = vector.shape_cast %1302 : vector<1x12x256xf32> to vector<12x256xf32>
    %1304 = vector.shape_cast %1301 : vector<12x256xf32> to vector<1x12x256xf32>
    tpu.vector_store %arg11[%c0_372, %c0_373, %c0_374], %1304 {strides = array<i32>} : memref<1x12x256xf32, #tpu.memory_space<vmem>>, vector<1x12x256xf32>,
    %c0_375 = arith.constant 0 : index
    %c0_376 = arith.constant 0 : index
    %1305 = vector.load %arg7[%c0_375, %c0_376] : memref<1x256xf32, #tpu.memory_space<vmem>>, vector<1x256xf32>
    %1306 = vector.broadcast %1305 : vector<1x256xf32> to vector<12x256xf32>
    %1307 = arith.mulf %1301, %1306 : vector<12x256xf32>
    %cst_377 = arith.constant dense<0.000000e+00> : vector<12xf32>
    %1308 = vector.multi_reduction <add>, %1307, %cst_377 [1] : vector<12x256xf32> to vector<12xf32>
    %1309 = vector.shape_cast %1308 : vector<12xf32> to vector<12x1xf32>
    %c0_378 = arith.constant 0 : index
    %c0_379 = arith.constant 0 : index
    %1310 = vector.load %arg8[%c0_378, %c0_379] : memref<1x12xf32, #tpu.memory_space<vmem>>, vector<1x12xf32>
    %1311 = vector.broadcast %1309 : vector<12x1xf32> to vector<12x12xf32>
    %1312 = vector.broadcast %1310 : vector<1x12xf32> to vector<12x12xf32>
    %1313 = arith.mulf %1311, %1312 : vector<12x12xf32>
    %c0_380 = arith.constant 0 : index
    %c0_381 = arith.constant 0 : index
    %1314 = vector.load %arg9[%c0_380, %c0_381] : memref<1x1xf32, #tpu.memory_space<vmem>>, vector<1x1xf32>
    %1315 = vector.broadcast %1314 : vector<1x1xf32> to vector<12x12xf32>
    %1316 = arith.addf %1313, %1315 : vector<12x12xf32>
    %cst_382 = arith.constant dense<0xFF800000> : vector<12xf32>
    %1317 = vector.multi_reduction <maximumf>, %1316, %cst_382 [1] : vector<12x12xf32> to vector<12xf32>
    %1318 = vector.shape_cast %1317 : vector<12xf32> to vector<12x1xf32>
    %1319 = vector.broadcast %1318 : vector<12x1xf32> to vector<12x12xf32>
    %1320 = arith.subf %1316, %1319 : vector<12x12xf32>
    %1321 = math.exp %1320 : vector<12x12xf32>
    %cst_383 = arith.constant dense<0.000000e+00> : vector<12xf32>
    %1322 = vector.multi_reduction <add>, %1321, %cst_383 [1] : vector<12x12xf32> to vector<12xf32>
    %1323 = vector.shape_cast %1322 : vector<12xf32> to vector<12x1xf32>
    %1324 = tpu.reciprocal %1323 {approx = true} : vector<12x1xf32> -> vector<12x1xf32>
    %1325 = vector.broadcast %1324 : vector<12x1xf32> to vector<12x12xf32>
    %1326 = arith.mulf %1321, %1325 : vector<12x12xf32>
    %c0_384 = arith.constant 0 : index
    %c0_385 = arith.constant 0 : index
    %c0_386 = arith.constant 0 : index
    %1327 = vector.load %arg12[%c0_384, %c0_385, %c0_386] : memref<1x12x12xf32, #tpu.memory_space<vmem>>, vector<1x12x12xf32>
    %1328 = vector.shape_cast %1327 : vector<1x12x12xf32> to vector<12x12xf32>
    %1329 = vector.shape_cast %1326 : vector<12x12xf32> to vector<1x12x12xf32>
    tpu.vector_store %arg12[%c0_384, %c0_385, %c0_386], %1329 {strides = array<i32>} : memref<1x12x12xf32, #tpu.memory_space<vmem>>, vector<1x12x12xf32>,
    %cst_387 = arith.constant dense<0.000000e+00> : vector<12x256xf32>
    %1330 = tpu.matmul %1326, %1301, %cst_387 {dimension_numbers = #tpu.dot_dimension_numbers<[0], [0], [1], [1], [0, 1, 1, 1], [], []>} : vector<12x12xf32>, vector<12x256xf32>, vector<12x256xf32> -> vector<12x256xf32>
    %c0_388 = arith.constant 0 : index
    %c0_389 = arith.constant 0 : index
    %c0_390 = arith.constant 0 : index
    %1331 = vector.load %arg13[%c0_388, %c0_389, %c0_390] : memref<1x12x256xf32, #tpu.memory_space<vmem>>, vector<1x12x256xf32>
    %1332 = vector.shape_cast %1331 : vector<1x12x256xf32> to vector<12x256xf32>
    %1333 = vector.shape_cast %1330 : vector<12x256xf32> to vector<1x12x256xf32>
    tpu.vector_store %arg13[%c0_388, %c0_389, %c0_390], %1333 {strides = array<i32>} : memref<1x12x256xf32, #tpu.memory_space<vmem>>, vector<1x12x256xf32>,
    return
  }
  func.func @transform_0(%arg0: i32) -> (i32, i32, i32) {
    %c0_i32 = arith.constant 0 : i32
    %c0_i32_0 = arith.constant 0 : i32
    %c0_i32_1 = arith.constant 0 : i32
    return %arg0, %c0_i32, %c0_i32_0 : i32, i32, i32
  }
  func.func @transform_1(%arg0: i32) -> (i32, i32) {
    %c0_i32 = arith.constant 0 : i32
    %c0_i32_0 = arith.constant 0 : i32
    %c0_i32_1 = arith.constant 0 : i32
    return %c0_i32, %c0_i32_0 : i32, i32
  }
  func.func @transform_2(%arg0: i32) -> (i32, i32) {
    %c0_i32 = arith.constant 0 : i32
    %c0_i32_0 = arith.constant 0 : i32
    %c0_i32_1 = arith.constant 0 : i32
    return %c0_i32, %c0_i32_0 : i32, i32
  }
  func.func @transform_3(%arg0: i32) -> (i32, i32) {
    %c0_i32 = arith.constant 0 : i32
    %c0_i32_0 = arith.constant 0 : i32
    %c0_i32_1 = arith.constant 0 : i32
    return %c0_i32, %c0_i32_0 : i32, i32
  }
  func.func @transform_4(%arg0: i32) -> (i32, i32) {
    %c0_i32 = arith.constant 0 : i32
    %c0_i32_0 = arith.constant 0 : i32
    %c0_i32_1 = arith.constant 0 : i32
    return %c0_i32, %c0_i32_0 : i32, i32
  }
  func.func @transform_5(%arg0: i32) -> (i32, i32) {
    %c0_i32 = arith.constant 0 : i32
    %c0_i32_0 = arith.constant 0 : i32
    %c0_i32_1 = arith.constant 0 : i32
    return %c0_i32, %c0_i32_0 : i32, i32
  }
  func.func @transform_6(%arg0: i32) -> (i32, i32) {
    %c0_i32 = arith.constant 0 : i32
    %c0_i32_0 = arith.constant 0 : i32
    %c0_i32_1 = arith.constant 0 : i32
    return %c0_i32, %c0_i32_0 : i32, i32
  }
  func.func @transform_7(%arg0: i32) -> (i32, i32) {
    %c0_i32 = arith.constant 0 : i32
    %c0_i32_0 = arith.constant 0 : i32
    %c0_i32_1 = arith.constant 0 : i32
    return %c0_i32, %c0_i32_0 : i32, i32
  }
  func.func @transform_8(%arg0: i32) -> (i32, i32) {
    %c0_i32 = arith.constant 0 : i32
    %c0_i32_0 = arith.constant 0 : i32
    %c0_i32_1 = arith.constant 0 : i32
    return %c0_i32, %c0_i32_0 : i32, i32
  }
  func.func @transform_9(%arg0: i32) -> (i32, i32, i32) {
    %c0_i32 = arith.constant 0 : i32
    %c0_i32_0 = arith.constant 0 : i32
    %c0_i32_1 = arith.constant 0 : i32
    return %arg0, %c0_i32, %c0_i32_0 : i32, i32, i32
  }
  func.func @transform_10(%arg0: i32) -> (i32, i32, i32) {
    %c0_i32 = arith.constant 0 : i32
    %c0_i32_0 = arith.constant 0 : i32
    %c0_i32_1 = arith.constant 0 : i32
    return %arg0, %c0_i32, %c0_i32_0 : i32, i32, i32
  }
  func.func @transform_11(%arg0: i32) -> (i32, i32, i32) {
    %c0_i32 = arith.constant 0 : i32
    %c0_i32_0 = arith.constant 0 : i32
    %c0_i32_1 = arith.constant 0 : i32
    return %arg0, %c0_i32, %c0_i32_0 : i32, i32, i32
  }
  func.func @transform_12(%arg0: i32) -> (i32, i32, i32) {
    %c0_i32 = arith.constant 0 : i32
    %c0_i32_0 = arith.constant 0 : i32
    %c0_i32_1 = arith.constant 0 : i32
    return %arg0, %c0_i32, %c0_i32_0 : i32, i32, i32
  }
}

module attributes {stable_mosaic.version = 11 : i64} {
  func.func @_mlp_kernel(%arg0: i32, %arg1: memref<2x1024xf32, #tpu.memory_space<vmem>>, %arg2: memref<1024x512xbf16, #tpu.memory_space<vmem>>, %arg3: memref<1x512xf32, #tpu.memory_space<vmem>>, %arg4: memref<512x1024xbf16, #tpu.memory_space<vmem>>, %arg5: memref<1x1024xf32, #tpu.memory_space<vmem>>, %arg6: memref<1024x4xbf16, #tpu.memory_space<vmem>>, %arg7: memref<1x4xf32, #tpu.memory_space<vmem>>, %arg8: memref<2x4xf32, #tpu.memory_space<vmem>>) attributes {dimension_semantics = [#tpu.dimension_semantics<arbitrary>], iteration_bounds = array<i64: 1>, scalar_prefetch = 0 : i64, scratch_operands = 0 : i64, tpu.core_type = #tpu.core_type<tc>, window_params = [{pipeline_mode = #tpu.pipeline_mode<synchronous>, transform_indices = @transform_0, window_bounds = array<i64: 2, 1024>}, {pipeline_mode = #tpu.pipeline_mode<synchronous>, transform_indices = @transform_1, window_bounds = array<i64: 1024, 512>}, {pipeline_mode = #tpu.pipeline_mode<synchronous>, transform_indices = @transform_2, window_bounds = array<i64: 1, 512>}, {pipeline_mode = #tpu.pipeline_mode<synchronous>, transform_indices = @transform_3, window_bounds = array<i64: 512, 1024>}, {pipeline_mode = #tpu.pipeline_mode<synchronous>, transform_indices = @transform_4, window_bounds = array<i64: 1, 1024>}, {pipeline_mode = #tpu.pipeline_mode<synchronous>, transform_indices = @transform_5, window_bounds = array<i64: 1024, 4>}, {pipeline_mode = #tpu.pipeline_mode<synchronous>, transform_indices = @transform_6, window_bounds = array<i64: 1, 4>}, {pipeline_mode = #tpu.pipeline_mode<synchronous>, transform_indices = @transform_7, window_bounds = array<i64: 2, 4>}]} {
    %c0 = arith.constant 0 : index
    %c0_0 = arith.constant 0 : index
    %0 = vector.load %arg1[%c0, %c0_0] : memref<2x1024xf32, #tpu.memory_space<vmem>>, vector<2x1024xf32>
    %1 = arith.truncf %0 : vector<2x1024xf32> to vector<2x1024xbf16>
    %c0_1 = arith.constant 0 : index
    %c0_2 = arith.constant 0 : index
    %2 = vector.load %arg2[%c0_1, %c0_2] : memref<1024x512xbf16, #tpu.memory_space<vmem>>, vector<1024x512xbf16>
    %cst = arith.constant dense<0.000000e+00> : vector<2x512xf32>
    %3 = tpu.matmul %1, %2, %cst {dimension_numbers = #tpu.dot_dimension_numbers<[1], [0], [0], [1], [0, 0, 1, 1], [], []>} : vector<2x1024xbf16>, vector<1024x512xbf16>, vector<2x512xf32> -> vector<2x512xf32>
    %c0_3 = arith.constant 0 : index
    %c0_4 = arith.constant 0 : index
    %4 = vector.load %arg3[%c0_3, %c0_4] : memref<1x512xf32, #tpu.memory_space<vmem>>, vector<1x512xf32>
    %5 = vector.broadcast %4 : vector<1x512xf32> to vector<2x512xf32>
    %6 = arith.addf %3, %5 : vector<2x512xf32>
    %cst_5 = arith.constant 0.000000e+00 : f32
    %7 = vector.broadcast %cst_5 : f32 to vector<2x512xf32>
    %8 = arith.maximumf %6, %7 : vector<2x512xf32>
    %9 = arith.truncf %8 : vector<2x512xf32> to vector<2x512xbf16>
    %c0_6 = arith.constant 0 : index
    %c0_7 = arith.constant 0 : index
    %10 = vector.load %arg4[%c0_6, %c0_7] : memref<512x1024xbf16, #tpu.memory_space<vmem>>, vector<512x1024xbf16>
    %cst_8 = arith.constant dense<0.000000e+00> : vector<2x1024xf32>
    %11 = tpu.matmul %9, %10, %cst_8 {dimension_numbers = #tpu.dot_dimension_numbers<[1], [0], [0], [1], [0, 0, 1, 1], [], []>} : vector<2x512xbf16>, vector<512x1024xbf16>, vector<2x1024xf32> -> vector<2x1024xf32>
    %c0_9 = arith.constant 0 : index
    %c0_10 = arith.constant 0 : index
    %12 = vector.load %arg5[%c0_9, %c0_10] : memref<1x1024xf32, #tpu.memory_space<vmem>>, vector<1x1024xf32>
    %13 = vector.broadcast %12 : vector<1x1024xf32> to vector<2x1024xf32>
    %14 = arith.addf %11, %13 : vector<2x1024xf32>
    %cst_11 = arith.constant 0.000000e+00 : f32
    %15 = vector.broadcast %cst_11 : f32 to vector<2x1024xf32>
    %16 = arith.maximumf %14, %15 : vector<2x1024xf32>
    %17 = arith.truncf %16 : vector<2x1024xf32> to vector<2x1024xbf16>
    %c0_12 = arith.constant 0 : index
    %c0_13 = arith.constant 0 : index
    %18 = vector.load %arg6[%c0_12, %c0_13] : memref<1024x4xbf16, #tpu.memory_space<vmem>>, vector<1024x4xbf16>
    %cst_14 = arith.constant dense<0.000000e+00> : vector<2x4xf32>
    %19 = tpu.matmul %17, %18, %cst_14 {dimension_numbers = #tpu.dot_dimension_numbers<[1], [0], [0], [1], [0, 0, 1, 1], [], []>} : vector<2x1024xbf16>, vector<1024x4xbf16>, vector<2x4xf32> -> vector<2x4xf32>
    %c0_15 = arith.constant 0 : index
    %c0_16 = arith.constant 0 : index
    %20 = vector.load %arg7[%c0_15, %c0_16] : memref<1x4xf32, #tpu.memory_space<vmem>>, vector<1x4xf32>
    %21 = vector.broadcast %20 : vector<1x4xf32> to vector<2x4xf32>
    %22 = arith.addf %19, %21 : vector<2x4xf32>
    %c0_17 = arith.constant 0 : index
    %c0_18 = arith.constant 0 : index
    %23 = vector.load %arg8[%c0_17, %c0_18] : memref<2x4xf32, #tpu.memory_space<vmem>>, vector<2x4xf32>
    tpu.vector_store %arg8[%c0_17, %c0_18], %22 {strides = array<i32>} : memref<2x4xf32, #tpu.memory_space<vmem>>, vector<2x4xf32>,
    return
  }
  func.func @transform_0(%arg0: i32) -> (i32, i32) {
    %c0_i32 = arith.constant 0 : i32
    %c0_i32_0 = arith.constant 0 : i32
    %c0_i32_1 = arith.constant 0 : i32
    return %c0_i32, %c0_i32_0 : i32, i32
  }
  func.func @transform_1(%arg0: i32) -> (i32, i32) {
    %c0_i32 = arith.constant 0 : i32
    %c0_i32_0 = arith.constant 0 : i32
    %c0_i32_1 = arith.constant 0 : i32
    return %c0_i32, %c0_i32_0 : i32, i32
  }
  func.func @transform_2(%arg0: i32) -> (i32, i32) {
    %c0_i32 = arith.constant 0 : i32
    %c0_i32_0 = arith.constant 0 : i32
    %c0_i32_1 = arith.constant 0 : i32
    return %c0_i32, %c0_i32_0 : i32, i32
  }
  func.func @transform_3(%arg0: i32) -> (i32, i32) {
    %c0_i32 = arith.constant 0 : i32
    %c0_i32_0 = arith.constant 0 : i32
    %c0_i32_1 = arith.constant 0 : i32
    return %c0_i32, %c0_i32_0 : i32, i32
  }
  func.func @transform_4(%arg0: i32) -> (i32, i32) {
    %c0_i32 = arith.constant 0 : i32
    %c0_i32_0 = arith.constant 0 : i32
    %c0_i32_1 = arith.constant 0 : i32
    return %c0_i32, %c0_i32_0 : i32, i32
  }
  func.func @transform_5(%arg0: i32) -> (i32, i32) {
    %c0_i32 = arith.constant 0 : i32
    %c0_i32_0 = arith.constant 0 : i32
    %c0_i32_1 = arith.constant 0 : i32
    return %c0_i32, %c0_i32_0 : i32, i32
  }
  func.func @transform_6(%arg0: i32) -> (i32, i32) {
    %c0_i32 = arith.constant 0 : i32
    %c0_i32_0 = arith.constant 0 : i32
    %c0_i32_1 = arith.constant 0 : i32
    return %c0_i32, %c0_i32_0 : i32, i32
  }
  func.func @transform_7(%arg0: i32) -> (i32, i32) {
    %c0_i32 = arith.constant 0 : i32
    %c0_i32_0 = arith.constant 0 : i32
    %c0_i32_1 = arith.constant 0 : i32
    return %c0_i32, %c0_i32_0 : i32, i32
  }
}

</mosaic_0001>

<llo_original>
// kernel: somtp_forward.2
$region0: #{somtp_forward.2}
  #allocation0 [shape = 'u32[]', space=smem, size = 0x4, offset = 0x4, fixed_abs, tag = 'smem constant byte address 0x4 - core index']
  #allocation1 [shape = 'u32[144,128]{1,0:T(1,128)}', space=vmem, size = 0x12000, scoped, tag = 'internal scratch']
  #allocation2 [shape = 'f32[23,128]{1,0:T(8,128)}', space=vmem, size = 0x3000, scoped, tag = 'scratch operand']
  #allocation3 [shape = 'f32[23,128]{1,0:T(8,128)}', space=vmem, size = 0x3000, scoped, tag = 'scratch operand']
  #allocation4 [shape = 'f32[23,128]{1,0:T(8,128)}', space=vmem, size = 0x3000, scoped, tag = 'scratch operand']
  #allocation5 [shape = 'f32[1,1]{1,0:T(1,128)S(1)}', space=vmem, size = 0x200, scoped, tag = 'scoped memory for somtp_forward.2']
  %s0 = inlined_call_operand.vmem [shape: f32[2,16,8], index: 0, kind: input, shape index: {}]
  %s1 = inlined_call_operand.hbm [shape: f32[8,256], index: 1, kind: input, shape index: {}]
  %s2 = inlined_call_operand.hbm [shape: f32[1,256], index: 2, kind: input, shape index: {}]
  %s3 = inlined_call_operand.hbm [shape: f32[1,16], index: 3, kind: input, shape index: {}]
  %s4 = inlined_call_operand.hbm [shape: f32[4,16], index: 4, kind: input, shape index: {}]
  %s5 = inlined_call_operand.vmem [shape: f32[256,4], index: 5, kind: input, shape index: {}]
  %s6 = inlined_call_operand.vmem [shape: f32[1,256], index: 6, kind: input, shape index: {}]
  %s7 = inlined_call_operand.hbm [shape: f32[1,12], index: 7, kind: input, shape index: {}]
  %s8 = inlined_call_operand.<no memory space> [shape: f32[1,1], index: 8, kind: input, shape index: {}]
  %s9 = inlined_call_operand.hbm [shape: f32[2,16,256], index: 9, kind: output, shape index: {0}]
  %s10 = inlined_call_operand.vmem [shape: f32[2,12,256], index: 10, kind: output, shape index: {1}]
  %s11 = inlined_call_operand.vmem [shape: f32[2,12,12], index: 11, kind: output, shape index: {2}]
  %s12 = inlined_call_operand.vmem [shape: f32[2,12,256], index: 12, kind: output, shape index: {3}]
  %13 = xla_tuple %s9, %s10, %s11, %s12
  %s14 = sld [smem:[#allocation0]]
  $region113: #{somtp_forward.2} parent=0
    _
  %s16 = ssub.s32 1, %s14
  %s17 = scalar_select 0, %s16, %s14
  %v18 = vstv %s8
  %19 = vst [vmem:[#allocation5] sm:$0x1] %v18
  $region1: #{somtp_forward.2} parent=0
    #allocation6 [shape = 'u8[8192]{0}', space=vmem, size = 0x2000, scoped, tag = 'input window, operand 1, single buffered']
    #allocation7 [shape = 's32[2]{0}', space=sflag, size = 0x8, scoped, tag = 'scoped memory for somtp_forward.2']
    #allocation8 [shape = 's32[2]{0}', space=sflag, size = 0x8, scoped, tag = 'scoped memory for somtp_forward.2']
    #allocation9 [shape = 'u8[1024]{0}', space=vmem, size = 0x400, scoped, tag = 'input window, operand 2, single buffered']
    #allocation10 [shape = 's32[1]{0}', space=sflag, size = 0x4, scoped, tag = 'scoped memory for somtp_forward.2']
    #allocation11 [shape = 'u8[512]{0}', space=vmem, size = 0x400, scoped, tag = 'input window, operand 3, single buffered']
    #allocation12 [shape = 'u8[2048]{0}', space=vmem, size = 0x800, scoped, tag = 'input window, operand 4, single buffered']
    #allocation13 [shape = 's32[1]{0}', space=sflag, size = 0x4, scoped, tag = 'scoped memory for somtp_forward.2']
    #allocation14 [shape = 'u8[512]{0}', space=vmem, size = 0x400, scoped, tag = 'input window, operand 7, single buffered']
    #allocation15 [shape = 'u8[32768]{0}', space=vmem, size = 0x8000, scoped, tag = 'output window, operand 0']
    %20 = vsyncpa [#allocation7], 0
    %21 = vsyncpa [#allocation10], 0
    %22 = vsyncpa [#allocation13], 0
    %23 = vsyncpa [#allocation8], 0
    %s24 = scalar_lea.sflag [#allocation8], 1
    %25 = vsyncpa %s24, 0
    loop: start=0, step=1, limit=4
    $region2: #{somtp_forward.2} parent=1 // loop_pre_header
      _
    $region3: #{somtp_forward.2} parent=1 // loop_header
      %s27 = sphi 0, %s31
      %p28 = scmp.ge.s32.totalorder %s27, 4
      %s37 = sphi 0, %s39
      %s40 = sphi 0, %s37
      %s41 = sphi 0, %s40
      %s57 = sphi 0, %s41
      %s61 = sphi 0, %s61
      %s63 = sphi 0, %s61
      %s64 = sphi 0, %s63
      %s78 = sphi 0, %s64
      %s82 = sphi 0, %s82
      %s84 = sphi 0, %s82
      %s85 = sphi 0, %s84
      %s99 = sphi 0, %s85
      %s103 = sphi 0, %s103
      %s105 = sphi 0, %s103
      %s106 = sphi 0, %s105
      %s120 = sphi 0, %s106
      %s124 = sphi 0, %s124
      %s126 = sphi 0, %s124
      %s127 = sphi 0, %s126
      %s141 = sphi 0, %s127
      %s145 = sphi 0, %s145
      %s147 = sphi 0, %s145
      %s148 = sphi 0, %s147
      %s162 = sphi 0, %s148
      %s166 = sphi 0, %s166
      %s168 = sphi 0, %s166
      %s169 = sphi 0, %s168
      %s183 = sphi 0, %s169
      %s187 = sphi 0, %s187
      %s189 = sphi 0, %s187
      %s190 = sphi 0, %s189
      %s204 = sphi 0, %s190
      %s208 = sphi 0, %s208
      %s210 = sphi 0, %s208
      %s211 = sphi 0, %s210
      %s225 = sphi 0, %s211
      %s231 = sphi 0, %s233
      %s234 = sphi 0, %s231
      %s235 = sphi 0, %s234
      %s251 = sphi 0, %s235
      %s257 = sphi 0, %s259
      %s260 = sphi 0, %s257
      %s261 = sphi 0, %s260
      %s277 = sphi 0, %s261
      %s283 = sphi 0, %s285
      %s286 = sphi 0, %s283
      %s287 = sphi 0, %s286
      %s303 = sphi 0, %s287
      %s309 = sphi 0, %s311
      %s312 = sphi 0, %s309
      %s313 = sphi 0, %s312
      %s329 = sphi 0, %s313
    $region4: #{somtp_forward.2} parent=1 // loop_header_branch
      %30 = sbr.rel (%p28) target = $region8
    $region5: #{somtp_forward.2} parent=1 // loop_body
      %s32 = ssub.s32 %s27, 1
      %s33 = ssub.s32 %s27, 2
      %s34 = sadd.s32 %s27, 1
      %s35 = ssub.s32 %s27, %s34
      %p36 = scmp.eq.s32.totalorder %s35, 0
      %s38 = sadd.s32 %s37, 1
      %s39 = scalar_select %p36, %s37, %s38
      %p42 = pneg %p36
      %p43 = scmp.eq.s32.totalorder %s27, 1
      %p44 = por %p42, %p43
      %p45 = scmp.ne.s32.totalorder %s37, %s40
      %p46 = scmp.eq.s32.totalorder %s27, 0
      %p47 = por %p45, %p46
      %p48 = scmp.ne.s32.totalorder %s37, %s40
      %p49 = scmp.eq.s32.totalorder %s32, 1
      %p50 = por %p48, %p49
      %p51 = scmp.ne.s32.totalorder %s40, %s41
      %p52 = scmp.eq.s32.totalorder %s32, 0
      %p53 = por %p51, %p52
      %p54 = scmp.ne.s32.totalorder %s40, %s41
      %p55 = scmp.eq.s32.totalorder %s33, 1
      %p56 = por %p54, %p55
      %p58 = scmp.ne.s32.totalorder %s41, %s57
      %p59 = scmp.eq.s32.totalorder %s33, 0
      %p60 = por %p58, %p59
      %s62 = sadd.s32 %s61, 1
      %p65 = scmp.eq.s32.totalorder %s27, 1
      %p66 = scmp.ne.s32.totalorder %s61, %s63
      %p67 = scmp.eq.s32.totalorder %s27, 0
      %p68 = por %p66, %p67
      %p69 = scmp.ne.s32.totalorder %s61, %s63
      %p70 = scmp.eq.s32.totalorder %s32, 1
      %p71 = por %p69, %p70
      %p72 = scmp.ne.s32.totalorder %s63, %s64
      %p73 = scmp.eq.s32.totalorder %s32, 0
      %p74 = por %p72, %p73
      %p75 = scmp.ne.s32.totalorder %s63, %s64
      %p76 = scmp.eq.s32.totalorder %s33, 1
      %p77 = por %p75, %p76
      %p79 = scmp.ne.s32.totalorder %s64, %s78
      %p80 = scmp.eq.s32.totalorder %s33, 0
      %p81 = por %p79, %p80
      %s83 = sadd.s32 %s82, 1
      %p86 = scmp.eq.s32.totalorder %s27, 1
      %p87 = scmp.ne.s32.totalorder %s82, %s84
      %p88 = scmp.eq.s32.totalorder %s27, 0
      %p89 = por %p87, %p88
      %p90 = scmp.ne.s32.totalorder %s82, %s84
      %p91 = scmp.eq.s32.totalorder %s32, 1
      %p92 = por %p90, %p91
      %p93 = scmp.ne.s32.totalorder %s84, %s85
      %p94 = scmp.eq.s32.totalorder %s32, 0
      %p95 = por %p93, %p94
      %p96 = scmp.ne.s32.totalorder %s84, %s85
      %p97 = scmp.eq.s32.totalorder %s33, 1
      %p98 = por %p96, %p97
      %p100 = scmp.ne.s32.totalorder %s85, %s99
      %p101 = scmp.eq.s32.totalorder %s33, 0
      %p102 = por %p100, %p101
      %s104 = sadd.s32 %s103, 1
      %p107 = scmp.eq.s32.totalorder %s27, 1
      %p108 = scmp.ne.s32.totalorder %s103, %s105
      %p109 = scmp.eq.s32.totalorder %s27, 0
      %p110 = por %p108, %p109
      %p111 = scmp.ne.s32.totalorder %s103, %s105
      %p112 = scmp.eq.s32.totalorder %s32, 1
      %p113 = por %p111, %p112
      %p114 = scmp.ne.s32.totalorder %s105, %s106
      %p115 = scmp.eq.s32.totalorder %s32, 0
      %p116 = por %p114, %p115
      %p117 = scmp.ne.s32.totalorder %s105, %s106
      %p118 = scmp.eq.s32.totalorder %s33, 1
      %p119 = por %p117, %p118
      %p121 = scmp.ne.s32.totalorder %s106, %s120
      %p122 = scmp.eq.s32.totalorder %s33, 0
      %p123 = por %p121, %p122
      %s125 = sadd.s32 %s124, 1
      %p128 = scmp.eq.s32.totalorder %s27, 1
      %p129 = scmp.ne.s32.totalorder %s124, %s126
      %p130 = scmp.eq.s32.totalorder %s27, 0
      %p131 = por %p129, %p130
      %p132 = scmp.ne.s32.totalorder %s124, %s126
      %p133 = scmp.eq.s32.totalorder %s32, 1
      %p134 = por %p132, %p133
      %p135 = scmp.ne.s32.totalorder %s126, %s127
      %p136 = scmp.eq.s32.totalorder %s32, 0
      %p137 = por %p135, %p136
      %p138 = scmp.ne.s32.totalorder %s126, %s127
      %p139 = scmp.eq.s32.totalorder %s33, 1
      %p140 = por %p138, %p139
      %p142 = scmp.ne.s32.totalorder %s127, %s141
      %p143 = scmp.eq.s32.totalorder %s33, 0
      %p144 = por %p142, %p143
      %s146 = sadd.s32 %s145, 1
      %p149 = scmp.eq.s32.totalorder %s27, 1
      %p150 = scmp.ne.s32.totalorder %s145, %s147
      %p151 = scmp.eq.s32.totalorder %s27, 0
      %p152 = por %p150, %p151
      %p153 = scmp.ne.s32.totalorder %s145, %s147
      %p154 = scmp.eq.s32.totalorder %s32, 1
      %p155 = por %p153, %p154
      %p156 = scmp.ne.s32.totalorder %s147, %s148
      %p157 = scmp.eq.s32.totalorder %s32, 0
      %p158 = por %p156, %p157
      %p159 = scmp.ne.s32.totalorder %s147, %s148
      %p160 = scmp.eq.s32.totalorder %s33, 1
      %p161 = por %p159, %p160
      %p163 = scmp.ne.s32.totalorder %s148, %s162
      %p164 = scmp.eq.s32.totalorder %s33, 0
      %p165 = por %p163, %p164
      %s167 = sadd.s32 %s166, 1
      %p170 = scmp.eq.s32.totalorder %s27, 1
      %p171 = scmp.ne.s32.totalorder %s166, %s168
      %p172 = scmp.eq.s32.totalorder %s27, 0
      %p173 = por %p171, %p172
      %p174 = scmp.ne.s32.totalorder %s166, %s168
      %p175 = scmp.eq.s32.totalorder %s32, 1
      %p176 = por %p174, %p175
      %p177 = scmp.ne.s32.totalorder %s168, %s169
      %p178 = scmp.eq.s32.totalorder %s32, 0
      %p179 = por %p177, %p178
      %p180 = scmp.ne.s32.totalorder %s168, %s169
      %p181 = scmp.eq.s32.totalorder %s33, 1
      %p182 = por %p180, %p181
      %p184 = scmp.ne.s32.totalorder %s169, %s183
      %p185 = scmp.eq.s32.totalorder %s33, 0
      %p186 = por %p184, %p185
      %s188 = sadd.s32 %s187, 1
      %p191 = scmp.eq.s32.totalorder %s27, 1
      %p192 = scmp.ne.s32.totalorder %s187, %s189
      %p193 = scmp.eq.s32.totalorder %s27, 0
      %p194 = por %p192, %p193
      %p195 = scmp.ne.s32.totalorder %s187, %s189
      %p196 = scmp.eq.s32.totalorder %s32, 1
      %p197 = por %p195, %p196
      %p198 = scmp.ne.s32.totalorder %s189, %s190
      %p199 = scmp.eq.s32.totalorder %s32, 0
      %p200 = por %p198, %p199
      %p201 = scmp.ne.s32.totalorder %s189, %s190
      %p202 = scmp.eq.s32.totalorder %s33, 1
      %p203 = por %p201, %p202
      %p205 = scmp.ne.s32.totalorder %s190, %s204
      %p206 = scmp.eq.s32.totalorder %s33, 0
      %p207 = por %p205, %p206
      %s209 = sadd.s32 %s208, 1
      %p212 = scmp.eq.s32.totalorder %s27, 1
      %p213 = scmp.ne.s32.totalorder %s208, %s210
      %p214 = scmp.eq.s32.totalorder %s27, 0
      %p215 = por %p213, %p214
      %p216 = scmp.ne.s32.totalorder %s208, %s210
      %p217 = scmp.eq.s32.totalorder %s32, 1
      %p218 = por %p216, %p217
      %p219 = scmp.ne.s32.totalorder %s210, %s211
      %p220 = scmp.eq.s32.totalorder %s32, 0
      %p221 = por %p219, %p220
      %p222 = scmp.ne.s32.totalorder %s210, %s211
      %p223 = scmp.eq.s32.totalorder %s33, 1
      %p224 = por %p222, %p223
      %p226 = scmp.ne.s32.totalorder %s211, %s225
      %p227 = scmp.eq.s32.totalorder %s33, 0
      %p228 = por %p226, %p227
      %s229 = ssub.s32 %s27, %s34
      %p230 = scmp.eq.s32.totalorder %s229, 0
      %s232 = sadd.s32 %s231, 1
      %s233 = scalar_select %p230, %s231, %s232
      %p236 = pneg %p230
      %p237 = scmp.eq.s32.totalorder %s27, 1
      %p238 = por %p236, %p237
      %p239 = scmp.ne.s32.totalorder %s231, %s234
      %p240 = scmp.eq.s32.totalorder %s27, 0
      %p241 = por %p239, %p240
      %p242 = scmp.ne.s32.totalorder %s231, %s234
      %p243 = scmp.eq.s32.totalorder %s32, 1
      %p244 = por %p242, %p243
      %p245 = scmp.ne.s32.totalorder %s234, %s235
      %p246 = scmp.eq.s32.totalorder %s32, 0
      %p247 = por %p245, %p246
      %p248 = scmp.ne.s32.totalorder %s234, %s235
      %p249 = scmp.eq.s32.totalorder %s33, 1
      %p250 = por %p248, %p249
      %p252 = scmp.ne.s32.totalorder %s235, %s251
      %p253 = scmp.eq.s32.totalorder %s33, 0
      %p254 = por %p252, %p253
      %s255 = ssub.s32 %s27, %s34
      %p256 = scmp.eq.s32.totalorder %s255, 0
      %s258 = sadd.s32 %s257, 1
      %s259 = scalar_select %p256, %s257, %s258
      %p262 = pneg %p256
      %p263 = scmp.eq.s32.totalorder %s27, 1
      %p264 = por %p262, %p263
      %p265 = scmp.ne.s32.totalorder %s257, %s260
      %p266 = scmp.eq.s32.totalorder %s27, 0
      %p267 = por %p265, %p266
      %p268 = scmp.ne.s32.totalorder %s257, %s260
      %p269 = scmp.eq.s32.totalorder %s32, 1
      %p270 = por %p268, %p269
      %p271 = scmp.ne.s32.totalorder %s260, %s261
      %p272 = scmp.eq.s32.totalorder %s32, 0
      %p273 = por %p271, %p272
      %p274 = scmp.ne.s32.totalorder %s260, %s261
      %p275 = scmp.eq.s32.totalorder %s33, 1
      %p276 = por %p274, %p275
      %p278 = scmp.ne.s32.totalorder %s261, %s277
      %p279 = scmp.eq.s32.totalorder %s33, 0
      %p280 = por %p278, %p279
      %s281 = ssub.s32 %s27, %s34
      %p282 = scmp.eq.s32.totalorder %s281, 0
      %s284 = sadd.s32 %s283, 1
      %s285 = scalar_select %p282, %s283, %s284
      %p288 = pneg %p282
      %p289 = scmp.eq.s32.totalorder %s27, 1
      %p290 = por %p288, %p289
      %p291 = scmp.ne.s32.totalorder %s283, %s286
      %p292 = scmp.eq.s32.totalorder %s27, 0
      %p293 = por %p291, %p292
      %p294 = scmp.ne.s32.totalorder %s283, %s286
      %p295 = scmp.eq.s32.totalorder %s32, 1
      %p296 = por %p294, %p295
      %p297 = scmp.ne.s32.totalorder %s286, %s287
      %p298 = scmp.eq.s32.totalorder %s32, 0
      %p299 = por %p297, %p298
      %p300 = scmp.ne.s32.totalorder %s286, %s287
      %p301 = scmp.eq.s32.totalorder %s33, 1
      %p302 = por %p300, %p301
      %p304 = scmp.ne.s32.totalorder %s287, %s303
      %p305 = scmp.eq.s32.totalorder %s33, 0
      %p306 = por %p304, %p305
      %s307 = ssub.s32 %s27, %s34
      %p308 = scmp.eq.s32.totalorder %s307, 0
      %s310 = sadd.s32 %s309, 1
      %s311 = scalar_select %p308, %s309, %s310
      %p314 = pneg %p308
      %p315 = scmp.eq.s32.totalorder %s27, 1
      %p316 = por %p314, %p315
      %p317 = scmp.ne.s32.totalorder %s309, %s312
      %p318 = scmp.eq.s32.totalorder %s27, 0
      %p319 = por %p317, %p318
      %p320 = scmp.ne.s32.totalorder %s309, %s312
      %p321 = scmp.eq.s32.totalorder %s32, 1
      %p322 = por %p320, %p321
      %p323 = scmp.ne.s32.totalorder %s312, %s313
      %p324 = scmp.eq.s32.totalorder %s32, 0
      %p325 = por %p323, %p324
      %p326 = scmp.ne.s32.totalorder %s312, %s313
      %p327 = scmp.eq.s32.totalorder %s33, 1
      %p328 = por %p326, %p327
      %p330 = scmp.ne.s32.totalorder %s313, %s329
      %p331 = scmp.eq.s32.totalorder %s33, 0
      %p332 = por %p330, %p331
      %p333 = scmp.le.s32.totalorder 1, %s27
      %p334 = scmp.lt.s32.totalorder %s27, 3
      %p335 = pnand %p333, %p334
      %p336 = pneg %p335
      // Predicated region
      $region9: #{somtp_forward.2} parent=5 // pred_check
        _
      $region10: #{somtp_forward.2} parent=5 // pred_check_branch
        %338 = sbr.rel (%p335) target = $region12
      $region11: #{somtp_forward.2} parent=5 // pred_region
        %s339 = ssub.s32 %s27, 1
        // Predicated region
        $region13: #{somtp_forward.2} parent=11 // pred_check
          %p340 = pneg %p74
        $region14: #{somtp_forward.2} parent=11 // pred_check_branch
          %342 = sbr.rel (%p340) target = $region16
        $region15: #{somtp_forward.2} parent=11 // pred_region
          %s344 = ssub.s32 256, 256
          %345 = vsyncadd [#allocation7], %s344
          %s347 = sshll.u32 [#allocation6], 4
          %s348 = int_to_ptr.vmem [resolvable:$true] %s347
          %350 = dma.hbm_to_vmem [thread:$0]  %s1, 256, %s348, [#allocation7]
        $region16: #{somtp_forward.2} parent=11 // pred_fallthru
          _
        // Predicated region
        $region17: #{somtp_forward.2} parent=11 // pred_check
          %p351 = pneg %p95
        $region18: #{somtp_forward.2} parent=11 // pred_check_branch
          %353 = sbr.rel (%p351) target = $region20
        $region19: #{somtp_forward.2} parent=11 // pred_region
          %s355 = ssub.s32 32, 32
          %356 = vsyncadd [#allocation10], %s355
          %s358 = sshll.u32 [#allocation9], 4
          %s359 = int_to_ptr.vmem [resolvable:$true] %s358
          %361 = dma.hbm_to_vmem [thread:$0]  %s2, 32, %s359, [#allocation10]
        $region20: #{somtp_forward.2} parent=11 // pred_fallthru
          _
        // Predicated region
        $region21: #{somtp_forward.2} parent=11 // pred_check
          %p362 = pneg %p116
        $region22: #{somtp_forward.2} parent=11 // pred_check_branch
          %364 = sbr.rel (%p362) target = $region24
        $region23: #{somtp_forward.2} parent=11 // pred_region
          %s366 = ssub.s32 16, 16
          %367 = vsyncadd [#allocation10], %s366
          %s369 = sshll.u32 [#allocation11], 4
          %s370 = int_to_ptr.vmem [resolvable:$true] %s369
          %372 = dma.hbm_to_vmem [thread:$0]  %s3, 16, %s370, [#allocation10]
        $region24: #{somtp_forward.2} parent=11 // pred_fallthru
          _
        // Predicated region
        $region25: #{somtp_forward.2} parent=11 // pred_check
          %p373 = pneg %p137
        $region26: #{somtp_forward.2} parent=11 // pred_check_branch
          %375 = sbr.rel (%p373) target = $region28
        $region27: #{somtp_forward.2} parent=11 // pred_region
          %s377 = ssub.s32 64, 64
          %378 = vsyncadd [#allocation13], %s377
          %s380 = sshll.u32 [#allocation12], 4
          %s381 = int_to_ptr.vmem [resolvable:$true] %s380
          %383 = dma.hbm_to_vmem [thread:$0]  %s4, 64, %s381, [#allocation13]
        $region28: #{somtp_forward.2} parent=11 // pred_fallthru
          _
        // Predicated region
        $region29: #{somtp_forward.2} parent=11 // pred_check
          %p384 = pneg %p158
        $region30: #{somtp_forward.2} parent=11 // pred_check_branch
          %386 = sbr.rel (%p384) target = $region32
        $region31: #{somtp_forward.2} parent=11 // pred_region
          _
        $region32: #{somtp_forward.2} parent=11 // pred_fallthru
          _
        // Predicated region
        $region33: #{somtp_forward.2} parent=11 // pred_check
          %p387 = pneg %p179
        $region34: #{somtp_forward.2} parent=11 // pred_check_branch
          %389 = sbr.rel (%p387) target = $region36
        $region35: #{somtp_forward.2} parent=11 // pred_region
          _
        $region36: #{somtp_forward.2} parent=11 // pred_fallthru
          _
        // Predicated region
        $region37: #{somtp_forward.2} parent=11 // pred_check
          %p390 = pneg %p200
        $region38: #{somtp_forward.2} parent=11 // pred_check_branch
          %392 = sbr.rel (%p390) target = $region40
        $region39: #{somtp_forward.2} parent=11 // pred_region
          %s394 = ssub.s32 16, 16
          %395 = vsyncadd [#allocation13], %s394
          %s397 = sshll.u32 [#allocation14], 4
          %s398 = int_to_ptr.vmem [resolvable:$true] %s397
          %400 = dma.hbm_to_vmem [thread:$0]  %s7, 16, %s398, [#allocation13]
        $region40: #{somtp_forward.2} parent=11 // pred_fallthru
          _
        // Predicated region
        $region41: #{somtp_forward.2} parent=11 // pred_check
          %p401 = pneg %p221
        $region42: #{somtp_forward.2} parent=11 // pred_check_branch
          %403 = sbr.rel (%p401) target = $region44
        $region43: #{somtp_forward.2} parent=11 // pred_region
          _
        $region44: #{somtp_forward.2} parent=11 // pred_fallthru
          _
      $region12: #{somtp_forward.2} parent=5 // pred_fallthru
        _
      %p404 = scmp.lt.s32.totalorder %s27, 2
      // Predicated region
      $region45: #{somtp_forward.2} parent=5 // pred_check
        %p405 = pneg %p404
      $region46: #{somtp_forward.2} parent=5 // pred_check_branch
        %407 = sbr.rel (%p405) target = $region48
      $region47: #{somtp_forward.2} parent=5 // pred_region
        // Predicated region
        $region49: #{somtp_forward.2} parent=47 // pred_check
          %p408 = pneg %p47
        $region50: #{somtp_forward.2} parent=47 // pred_check_branch
          %410 = sbr.rel (%p408) target = $region52
        $region51: #{somtp_forward.2} parent=47 // pred_region
          %p411 = scmp.lt.s32.totalorder %s27, 1
          %s412 = scalar_select %p411, %s27, 1
          %s413 = smul.addr %s412, 2
          %s414 = smul.addr %s413, 8
          %s415 = scalar_lea.vmem %s0, %s414
        $region52: #{somtp_forward.2} parent=47 // pred_fallthru
          _
      $region48: #{somtp_forward.2} parent=5 // pred_fallthru
        _
      %p416 = scmp.le.s32.totalorder 1, %s27
      %p417 = scmp.lt.s32.totalorder %s27, 3
      %p418 = pnand %p416, %p417
      %p419 = pneg %p418
      // Predicated region
      $region53: #{somtp_forward.2} parent=5 // pred_check
        _
      $region54: #{somtp_forward.2} parent=5 // pred_check_branch
        %421 = sbr.rel (%p418) target = $region56
      $region55: #{somtp_forward.2} parent=5 // pred_region
        %s422 = ssub.s32 %s27, 1
        // Predicated region
        $region57: #{somtp_forward.2} parent=55 // pred_check
          %p423 = pneg %p74
        $region58: #{somtp_forward.2} parent=55 // pred_check_branch
          %425 = sbr.rel (%p423) target = $region60
        $region59: #{somtp_forward.2} parent=55 // pred_region
          %426 = dma.done [#allocation7], 256
        $region60: #{somtp_forward.2} parent=55 // pred_fallthru
          _
        // Predicated region
        $region61: #{somtp_forward.2} parent=55 // pred_check
          %p427 = pneg %p95
        $region62: #{somtp_forward.2} parent=55 // pred_check_branch
          %429 = sbr.rel (%p427) target = $region64
        $region63: #{somtp_forward.2} parent=55 // pred_region
          %430 = dma.done [#allocation10], 32
        $region64: #{somtp_forward.2} parent=55 // pred_fallthru
          _
        // Predicated region
        $region65: #{somtp_forward.2} parent=55 // pred_check
          %p431 = pneg %p116
        $region66: #{somtp_forward.2} parent=55 // pred_check_branch
          %433 = sbr.rel (%p431) target = $region68
        $region67: #{somtp_forward.2} parent=55 // pred_region
          %434 = dma.done [#allocation10], 16
        $region68: #{somtp_forward.2} parent=55 // pred_fallthru
          _
        // Predicated region
        $region69: #{somtp_forward.2} parent=55 // pred_check
          %p435 = pneg %p137
        $region70: #{somtp_forward.2} parent=55 // pred_check_branch
          %437 = sbr.rel (%p435) target = $region72
        $region71: #{somtp_forward.2} parent=55 // pred_region
          %438 = dma.done [#allocation13], 64
        $region72: #{somtp_forward.2} parent=55 // pred_fallthru
          _
        // Predicated region
        $region73: #{somtp_forward.2} parent=55 // pred_check
          %p439 = pneg %p200
        $region74: #{somtp_forward.2} parent=55 // pred_check_branch
          %441 = sbr.rel (%p439) target = $region76
        $region75: #{somtp_forward.2} parent=55 // pred_region
          %442 = dma.done [#allocation13], 16
        $region76: #{somtp_forward.2} parent=55 // pred_fallthru
          _
        %p443 = scmp.lt.s32.totalorder %s32, 1
        %s444 = scalar_select %p443, %s32, 1
        %s445 = smul.addr %s444, 2
        %s446 = smul.addr %s445, 8
        %s447 = scalar_lea.vmem %s0, %s446
        %p448 = pneg %p53
        %p449 = pneg %p50
        %p450 = pneg %p74
        %p451 = pneg %p71
        %p452 = pneg %p95
        %p453 = pneg %p92
        %p454 = pneg %p116
        %p455 = pneg %p113
        %p456 = pneg %p137
        %p457 = pneg %p134
        %p458 = pneg %p158
        %p459 = pneg %p155
        %p460 = pneg %p179
        %p461 = pneg %p176
        %p462 = pneg %p200
        %p463 = pneg %p197
        %p464 = pneg %p221
        %p465 = pneg %p218
        %p466 = pneg %p247
        %p467 = pneg %p244
        %s468 = sand.u32 %s234, 1
        %s469 = scalar_lea.sflag [#allocation8], %s468
        %s470 = sand.u32 %s234, 1
        %s471 = smul.addr %s470, 32
        %s472 = scalar_lea.vmem [#allocation15], %s471
        %p473 = pneg %p273
        %p474 = pneg %p270
        %p475 = scmp.lt.s32.totalorder %s32, 1
        %s476 = scalar_select %p475, %s32, 1
        %s477 = smul.addr %s476, 4
        %s478 = smul.addr %s477, 8
        %s479 = scalar_lea.vmem %s10, %s478
        %p480 = pneg %p299
        %p481 = pneg %p296
        %p482 = scmp.lt.s32.totalorder %s32, 1
        %s483 = scalar_select %p482, %s32, 1
        %s484 = smul.addr %s483, 2
        %s485 = smul.addr %s484, 8
        %s486 = scalar_lea.vmem %s11, %s485
        %p487 = pneg %p325
        %p488 = pneg %p322
        %p489 = scmp.lt.s32.totalorder %s32, 1
        %s490 = scalar_select %p489, %s32, 1
        %s491 = smul.addr %s490, 4
        %s492 = smul.addr %s491, 8
        %s493 = scalar_lea.vmem %s12, %s492
        %p494 = scmp.lt.s32.totalorder %s32, 1
        %s495 = scalar_select %p494, %s32, 1
        %s496 = smul.addr %s495, 2
        %s497 = smul.addr %s496, 8
        %s498 = scalar_lea.vmem %s0, %s497
        %p499 = scmp.lt.s32.totalorder %s32, 1
        %s500 = scalar_select %p499, %s32, 1
        %s501 = smul.addr %s500, 4
        %s502 = smul.addr %s501, 8
        %s503 = scalar_lea.vmem %s10, %s502
        %p504 = scmp.lt.s32.totalorder %s32, 1
        %s505 = scalar_select %p504, %s32, 1
        %s506 = smul.addr %s505, 2
        %s507 = smul.addr %s506, 8
        %s508 = scalar_lea.vmem %s11, %s507
        %p509 = scmp.lt.s32.totalorder %s32, 1
        %s510 = scalar_select %p509, %s32, 1
        %s511 = smul.addr %s510, 4
        %s512 = smul.addr %s511, 8
        %s513 = scalar_lea.vmem %s12, %s512
        %v514 = vlaneseq
        %v515 = vand.u32 %v514, 127
        %v516 = vld [vmem:[%s498] sm:$0xff]
        %v517 = vld [vmem:[%s498 + $0x8] sm:$0xff]
        %v518 = vld [vmem:[#allocation6] sm:$0xff]
        %v519 = vld [vmem:[#allocation6 + $0x8] sm:$0xff]
        %v520 = vld [vmem:[#allocation9] sm:$0x3]
        %v522 = vlaneseq
        %v523 = vshrl.u32 %v522, 7
        %v524 = vsub.s32 0, %v523
        %v525 = vrot.slane %v520, %v524
        %v526 = vlaneseq
        %v527 = vshrl.u32 %v526, 7
        %v528 = vsub.s32 1, %v527
        %v529 = vrot.slane %v520, %v528
        %vm532 = vcmask 64512
        %v534 = vsel %vm532, %v516, 0
        %v537 = vsel %vm532, %v517, 0
        %539 = vmatprep.subr.mxu0 %v519
        %540 = vmatpush1.msra.mxu0 %v518
        %541 = vmatprep.subr.mxu0 0.0
        %542 = vmatpush1.msra.mxu0 0.0
        %543 = vmatprep.subr.mxu0 0.0
        %544 = vmatpush1.msra.mxu0 0.0
        %545 = vmatprep.subr.mxu0 0.0
        %546 = vmatpush1.msra.mxu0 0.0
        %547 = vmatprep.subr.mxu0 0.0
        %548 = vmatpush1.msra.mxu0 0.0
        %549 = vmatprep.subr.mxu0 0.0
        %550 = vmatpush1.msra.mxu0 0.0
        %551 = vmatprep.subr.mxu0 0.0
        %552 = vmatpush1.msra.mxu0 0.0
        %553 = vmatprep.subr.mxu0 0.0
        %554 = vmatpush1.msra.mxu0 0.0
        %555 = vmatprep.subr.mxu0 0.0
        %556 = vmatpush1.msra.mxu0 0.0
        %557 = vmatprep.subr.mxu0 0.0
        %558 = vmatpush1.msra.mxu0 0.0
        %559 = vmatprep.subr.mxu0 0.0
        %560 = vmatpush1.msra.mxu0 0.0
        %561 = vmatprep.subr.mxu0 0.0
        %562 = vmatpush1.msra.mxu0 0.0
        %563 = vmatprep.subr.mxu0 0.0
        %564 = vmatpush1.msra.mxu0 0.0
        %565 = vmatprep.subr.mxu0 0.0
        %566 = vmatpush1.msra.mxu0 0.0
        %567 = vmatprep.subr.mxu0 0.0
        %568 = vmatpush1.msra.mxu0 0.0
        %569 = vmatprep.subr.mxu0 0.0
        %570 = vmatpush1.msra.mxu0 0.0
        %571 = vmatprep.subr.mxu0 0.0
        %572 = vmatpush1.msra.mxu0 0.0
        %573 = vmatprep.subr.mxu0 0.0
        %574 = vmatpush1.msra.mxu0 0.0
        %575 = vmatprep.subr.mxu0 0.0
        %576 = vmatpush1.msra.mxu0 0.0
        %577 = vmatprep.subr.mxu0 0.0
        %578 = vmatpush1.msra.mxu0 0.0
        %579 = vmatprep.subr.mxu0 0.0
        %580 = vmatpush1.msra.mxu0 0.0
        %581 = vmatprep.subr.mxu0 0.0
        %582 = vmatpush1.msra.mxu0 0.0
        %583 = vmatprep.subr.mxu0 0.0
        %584 = vmatpush1.msra.mxu0 0.0
        %585 = vmatprep.subr.mxu0 0.0
        %586 = vmatpush1.msra.mxu0 0.0
        %587 = vmatprep.subr.mxu0 0.0
        %588 = vmatpush1.msra.mxu0 0.0
        %589 = vmatprep.subr.mxu0 0.0
        %590 = vmatpush1.msra.mxu0 0.0
        %591 = vmatprep.subr.mxu0 0.0
        %592 = vmatpush1.msra.mxu0 0.0
        %593 = vmatprep.subr.mxu0 0.0
        %594 = vmatpush1.msra.mxu0 0.0
        %595 = vmatprep.subr.mxu0 0.0
        %596 = vmatpush1.msra.mxu0 0.0
        %597 = vmatprep.subr.mxu0 0.0
        %598 = vmatpush1.msra.mxu0 0.0
        %599 = vmatprep.subr.mxu0 0.0
        %600 = vmatpush1.msra.mxu0 0.0
        %601 = vmatprep.subr.mxu0 0.0
        %602 = vmatpush1.msra.mxu0 0.0
        %603 = vmatprep.mubr.f32.mxu0 0.0
        %604 = vmatmul.mubr.f32.gmra.mrb[0].mxu0 %v534
        %v605 = vpop.f32.mrb[0].mxu0
        %v606 = vadd.f32 %v525, %v605
        %v607 = vpop.f32.mrb[0].mxu0
        %v608 = vadd.f32 %v529, %v607
        %609 = vmatprep.mubr.f32.mxu0 0.0
        %610 = vmatmul.mubr.f32.gmra.mrb[0].mxu0 %v537
        %v611 = vpop.f32.mrb[0].mxu0
        %v612 = vadd.f32 %v525, %v611
        %v613 = vpop.f32.mrb[0].mxu0
        %v614 = vadd.f32 %v529, %v613
        %615 = vdwg.mxu0
        %v616 = vmax.f32 %v606, 0.0
        %v617 = vmax.f32 %v608, 0.0
        %v618 = vmax.f32 %v612, 0.0
        %v619 = vmax.f32 %v614, 0.0
        %620 = vst [vmem:[%s472] sm:$0xff] %v616
        %621 = vst [vmem:[%s472 + $0x8] sm:$0xff] %v617
        %622 = vst [vmem:[%s472 + $0x10] sm:$0xff] %v618
        %623 = vst [vmem:[%s472 + $0x18] sm:$0xff] %v619
        %v624 = vld [vmem:[#allocation11] sm:$0x1]
        %vm625 = vcmask 130048
        %v627 = vsel %vm625, %v624, 0
        %629 = vmatprep.subr.mxu0 %v617
        %630 = vmatpush1.msra.mxu0 %v616
        %631 = vmatprep.subr.mxu0 %v619
        %632 = vmatpush1.msra.mxu0 %v618
        %633 = vmatprep.subr.mxu0 0.0
        %634 = vmatpush1.msra.mxu0 0.0
        %635 = vmatprep.subr.mxu0 0.0
        %636 = vmatpush1.msra.mxu0 0.0
        %637 = vmatprep.subr.mxu0 0.0
        %638 = vmatpush1.msra.mxu0 0.0
        %639 = vmatprep.subr.mxu0 0.0
        %640 = vmatpush1.msra.mxu0 0.0
        %641 = vmatprep.subr.mxu0 0.0
        %642 = vmatpush1.msra.mxu0 0.0
        %643 = vmatprep.subr.mxu0 0.0
        %644 = vmatpush1.msra.mxu0 0.0
        %645 = vmatprep.subr.mxu0 0.0
        %646 = vmatpush1.msra.mxu0 0.0
        %647 = vmatprep.subr.mxu0 0.0
        %648 = vmatpush1.msra.mxu0 0.0
        %649 = vmatprep.subr.mxu0 0.0
        %650 = vmatpush1.msra.mxu0 0.0
        %651 = vmatprep.subr.mxu0 0.0
        %652 = vmatpush1.msra.mxu0 0.0
        %653 = vmatprep.subr.mxu0 0.0
        %654 = vmatpush1.msra.mxu0 0.0
        %655 = vmatprep.subr.mxu0 0.0
        %656 = vmatpush1.msra.mxu0 0.0
        %657 = vmatprep.subr.mxu0 0.0
        %658 = vmatpush1.msra.mxu0 0.0
        %659 = vmatprep.subr.mxu0 0.0
        %660 = vmatpush1.msra.mxu0 0.0
        %661 = vmatprep.subr.mxu0 0.0
        %662 = vmatpush1.msra.mxu0 0.0
        %663 = vmatprep.subr.mxu0 0.0
        %664 = vmatpush1.msra.mxu0 0.0
        %665 = vmatprep.subr.mxu0 0.0
        %666 = vmatpush1.msra.mxu0 0.0
        %667 = vmatprep.subr.mxu0 0.0
        %668 = vmatpush1.msra.mxu0 0.0
        %669 = vmatprep.subr.mxu0 0.0
        %670 = vmatpush1.msra.mxu0 0.0
        %671 = vmatprep.subr.mxu0 0.0
        %672 = vmatpush1.msra.mxu0 0.0
        %673 = vmatprep.subr.mxu0 0.0
        %674 = vmatpush1.msra.mxu0 0.0
        %675 = vmatprep.subr.mxu0 0.0
        %676 = vmatpush1.msra.mxu0 0.0
        %677 = vmatprep.subr.mxu0 0.0
        %678 = vmatpush1.msra.mxu0 0.0
        %679 = vmatprep.subr.mxu0 0.0
        %680 = vmatpush1.msra.mxu0 0.0
        %681 = vmatprep.subr.mxu0 0.0
        %682 = vmatpush1.msra.mxu0 0.0
        %683 = vmatprep.subr.mxu0 0.0
        %684 = vmatpush1.msra.mxu0 0.0
        %685 = vmatprep.subr.mxu0 0.0
        %686 = vmatpush1.msra.mxu0 0.0
        %687 = vmatprep.subr.mxu0 0.0
        %688 = vmatpush1.msra.mxu0 0.0
        %689 = vmatprep.subr.mxu0 0.0
        %690 = vmatpush1.msra.mxu0 0.0
        %691 = vmatprep.subr.mxu0 0.0
        %692 = vmatpush1.msra.mxu0 0.0
        %693 = vmatprep.mubr.f32.mxu0 0.0
        %694 = vmatmul.mubr.f32.gmra.mrb[0].mxu0 %v627
        %v695 = vpop.f32.mrb[0].mxu0
        %v696 = vadd.f32 0.0, %v695
        %v697 = vpop.f32.mrb[0].mxu0
        %v698 = vadd.f32 0.0, %v697
        %699 = vdwg.mxu0
        %v700 = vld [vmem:[#allocation12] sm:$0xf]
        %v702 = vsel %vm625, %v700, 0
        %704 = vmatprep.subr.mxu0 %v617
        %705 = vmatpush1.msra.mxu0 %v616
        %706 = vmatprep.subr.mxu0 %v619
        %707 = vmatpush1.msra.mxu0 %v618
        %708 = vmatprep.subr.mxu0 0.0
        %709 = vmatpush1.msra.mxu0 0.0
        %710 = vmatprep.subr.mxu0 0.0
        %711 = vmatpush1.msra.mxu0 0.0
        %712 = vmatprep.subr.mxu0 0.0
        %713 = vmatpush1.msra.mxu0 0.0
        %714 = vmatprep.subr.mxu0 0.0
        %715 = vmatpush1.msra.mxu0 0.0
        %716 = vmatprep.subr.mxu0 0.0
        %717 = vmatpush1.msra.mxu0 0.0
        %718 = vmatprep.subr.mxu0 0.0
        %719 = vmatpush1.msra.mxu0 0.0
        %720 = vmatprep.subr.mxu0 0.0
        %721 = vmatpush1.msra.mxu0 0.0
        %722 = vmatprep.subr.mxu0 0.0
        %723 = vmatpush1.msra.mxu0 0.0
        %724 = vmatprep.subr.mxu0 0.0
        %725 = vmatpush1.msra.mxu0 0.0
        %726 = vmatprep.subr.mxu0 0.0
        %727 = vmatpush1.msra.mxu0 0.0
        %728 = vmatprep.subr.mxu0 0.0
        %729 = vmatpush1.msra.mxu0 0.0
        %730 = vmatprep.subr.mxu0 0.0
        %731 = vmatpush1.msra.mxu0 0.0
        %732 = vmatprep.subr.mxu0 0.0
        %733 = vmatpush1.msra.mxu0 0.0
        %734 = vmatprep.subr.mxu0 0.0
        %735 = vmatpush1.msra.mxu0 0.0
        %736 = vmatprep.subr.mxu0 0.0
        %737 = vmatpush1.msra.mxu0 0.0
        %738 = vmatprep.subr.mxu0 0.0
        %739 = vmatpush1.msra.mxu0 0.0
        %740 = vmatprep.subr.mxu0 0.0
        %741 = vmatpush1.msra.mxu0 0.0
        %742 = vmatprep.subr.mxu0 0.0
        %743 = vmatpush1.msra.mxu0 0.0
        %744 = vmatprep.subr.mxu0 0.0
        %745 = vmatpush1.msra.mxu0 0.0
        %746 = vmatprep.subr.mxu0 0.0
        %747 = vmatpush1.msra.mxu0 0.0
        %748 = vmatprep.subr.mxu0 0.0
        %749 = vmatpush1.msra.mxu0 0.0
        %750 = vmatprep.subr.mxu0 0.0
        %751 = vmatpush1.msra.mxu0 0.0
        %752 = vmatprep.subr.mxu0 0.0
        %753 = vmatpush1.msra.mxu0 0.0
        %754 = vmatprep.subr.mxu0 0.0
        %755 = vmatpush1.msra.mxu0 0.0
        %756 = vmatprep.subr.mxu0 0.0
        %757 = vmatpush1.msra.mxu0 0.0
        %758 = vmatprep.subr.mxu0 0.0
        %759 = vmatpush1.msra.mxu0 0.0
        %760 = vmatprep.subr.mxu0 0.0
        %761 = vmatpush1.msra.mxu0 0.0
        %762 = vmatprep.subr.mxu0 0.0
        %763 = vmatpush1.msra.mxu0 0.0
        %764 = vmatprep.subr.mxu0 0.0
        %765 = vmatpush1.msra.mxu0 0.0
        %766 = vmatprep.subr.mxu0 0.0
        %767 = vmatpush1.msra.mxu0 0.0
        %768 = vmatprep.mubr.f32.mxu0 0.0
        %769 = vmatmul.mubr.f32.gmra.mrb[0].mxu0 %v702
        %v770 = vpop.f32.mrb[0].mxu0
        %v771 = vadd.f32 0.0, %v770
        %v772 = vpop.f32.mrb[0].mxu0
        %v773 = vadd.f32 0.0, %v772
        %774 = vdwg.mxu0
        %v775 = vld [vmem:[%s5] sm:$0xff]
        %v776 = vld [vmem:[%s5 + $0x8] sm:$0xff]
        %v777 = vld [vmem:[%s5 + $0x10] sm:$0xff]
        %v778 = vld [vmem:[%s5 + $0x18] sm:$0xff]
        %v779 = vld [vmem:[%s5 + $0x20] sm:$0xff]
        %v780 = vld [vmem:[%s5 + $0x28] sm:$0xff]
        %v781 = vld [vmem:[%s5 + $0x30] sm:$0xff]
        %v782 = vld [vmem:[%s5 + $0x38] sm:$0xff]
        %v783 = vld [vmem:[%s5 + $0x40] sm:$0xff]
        %v784 = vld [vmem:[%s5 + $0x48] sm:$0xff]
        %v785 = vld [vmem:[%s5 + $0x50] sm:$0xff]
        %v786 = vld [vmem:[%s5 + $0x58] sm:$0xff]
        %v787 = vld [vmem:[%s5 + $0x60] sm:$0xff]
        %v788 = vld [vmem:[%s5 + $0x68] sm:$0xff]
        %v789 = vld [vmem:[%s5 + $0x70] sm:$0xff]
        %v790 = vld [vmem:[%s5 + $0x78] sm:$0xff]
        %v791 = vld [vmem:[%s5 + $0x80] sm:$0xff]
        %v792 = vld [vmem:[%s5 + $0x88] sm:$0xff]
        %v793 = vld [vmem:[%s5 + $0x90] sm:$0xff]
        %v794 = vld [vmem:[%s5 + $0x98] sm:$0xff]
        %v795 = vld [vmem:[%s5 + $0xa0] sm:$0xff]
        %v796 = vld [vmem:[%s5 + $0xa8] sm:$0xff]
        %v797 = vld [vmem:[%s5 + $0xb0] sm:$0xff]
        %v798 = vld [vmem:[%s5 + $0xb8] sm:$0xff]
        %v799 = vld [vmem:[%s5 + $0xc0] sm:$0xff]
        %v800 = vld [vmem:[%s5 + $0xc8] sm:$0xff]
        %v801 = vld [vmem:[%s5 + $0xd0] sm:$0xff]
        %v802 = vld [vmem:[%s5 + $0xd8] sm:$0xff]
        %v803 = vld [vmem:[%s5 + $0xe0] sm:$0xff]
        %v804 = vld [vmem:[%s5 + $0xe8] sm:$0xff]
        %v805 = vld [vmem:[%s5 + $0xf0] sm:$0xff]
        %v806 = vld [vmem:[%s5 + $0xf8] sm:$0xff]
        %807 = vmatprep.subr.mxu0 0.0
        %808 = vmatpush1.msra.mxu0 %v775
        %809 = vmatprep.subr.mxu0 0.0
        %810 = vmatpush1.msra.mxu0 %v776
        %811 = vmatprep.subr.mxu0 0.0
        %812 = vmatpush1.msra.mxu0 %v777
        %813 = vmatprep.subr.mxu0 0.0
        %814 = vmatpush1.msra.mxu0 %v778
        %815 = vmatprep.subr.mxu0 0.0
        %816 = vmatpush1.msra.mxu0 %v779
        %817 = vmatprep.subr.mxu0 0.0
        %818 = vmatpush1.msra.mxu0 %v780
        %819 = vmatprep.subr.mxu0 0.0
        %820 = vmatpush1.msra.mxu0 %v781
        %821 = vmatprep.subr.mxu0 0.0
        %822 = vmatpush1.msra.mxu0 %v782
        %823 = vmatprep.subr.mxu0 0.0
        %824 = vmatpush1.msra.mxu0 %v783
        %825 = vmatprep.subr.mxu0 0.0
        %826 = vmatpush1.msra.mxu0 %v784
        %827 = vmatprep.subr.mxu0 0.0
        %828 = vmatpush1.msra.mxu0 %v785
        %829 = vmatprep.subr.mxu0 0.0
        %830 = vmatpush1.msra.mxu0 %v786
        %831 = vmatprep.subr.mxu0 0.0
        %832 = vmatpush1.msra.mxu0 %v787
        %833 = vmatprep.subr.mxu0 0.0
        %834 = vmatpush1.msra.mxu0 %v788
        %835 = vmatprep.subr.mxu0 0.0
        %836 = vmatpush1.msra.mxu0 %v789
        %837 = vmatprep.subr.mxu0 0.0
        %838 = vmatpush1.msra.mxu0 %v790
        %839 = vmatprep.subr.mxu0 0.0
        %840 = vmatpush1.msra.mxu0 %v791
        %841 = vmatprep.subr.mxu0 0.0
        %842 = vmatpush1.msra.mxu0 %v792
        %843 = vmatprep.subr.mxu0 0.0
        %844 = vmatpush1.msra.mxu0 %v793
        %845 = vmatprep.subr.mxu0 0.0
        %846 = vmatpush1.msra.mxu0 %v794
        %847 = vmatprep.subr.mxu0 0.0
        %848 = vmatpush1.msra.mxu0 %v795
        %849 = vmatprep.subr.mxu0 0.0
        %850 = vmatpush1.msra.mxu0 %v796
        %851 = vmatprep.subr.mxu0 0.0
        %852 = vmatpush1.msra.mxu0 %v797
        %853 = vmatprep.subr.mxu0 0.0
        %854 = vmatpush1.msra.mxu0 %v798
        %855 = vmatprep.subr.mxu0 0.0
        %856 = vmatpush1.msra.mxu0 %v799
        %857 = vmatprep.subr.mxu0 0.0
        %858 = vmatpush1.msra.mxu0 %v800
        %859 = vmatprep.subr.mxu0 0.0
        %860 = vmatpush1.msra.mxu0 %v801
        %861 = vmatprep.subr.mxu0 0.0
        %862 = vmatpush1.msra.mxu0 %v802
        %863 = vmatprep.subr.mxu0 0.0
        %864 = vmatpush1.msra.mxu0 %v803
        %865 = vmatprep.subr.mxu0 0.0
        %866 = vmatpush1.msra.mxu0 %v804
        %867 = vmatprep.subr.mxu0 0.0
        %868 = vmatpush1.msra.mxu0 %v805
        %869 = vmatprep.subr.mxu0 0.0
        %870 = vmatpush1.msra.mxu0 %v806
        %871 = vmatprep.mubr.f32.mxu0 %v617
        %872 = vmatmul.mubr.f32.gmra.mrb[0].mxu0 %v616
        %v873 = vpop.f32.mrb[0].mxu0
        %v874 = vadd.f32 0.0, %v873
        %v875 = vpop.f32.mrb[0].mxu0
        %876 = vmatprep.mubr.f32.mxu0 %v619
        %877 = vmatmul.mubr.f32.gmra.mrb[0].mxu0 %v618
        %v878 = vpop.f32.mrb[0].mxu0
        %v879 = vadd.f32 0.0, %v878
        %v880 = vpop.f32.mrb[0].mxu0
        %881 = vdwg.mxu0
        %v882 = vmul.f32 %v616, %v616
        %v883 = vmul.f32 %v617, %v617
        %v884 = vmul.f32 %v618, %v618
        %v885 = vmul.f32 %v619, %v619
        %v886 = vadd.f32 %v882, %v883
        %887 = vadd.xlane.f32.xlu0 %v886
        %v888 = vpop.xlane.xlu0 %887
        %v889 = vadd.f32 %v884, %v885
        %890 = vadd.xlane.f32.xlu0 %v889
        %v891 = vpop.xlane.xlu0 %890
        %v892 = vmul.f32 %v775, %v775
        %v893 = vmul.f32 %v776, %v776
        %v894 = vmul.f32 %v777, %v777
        %v895 = vmul.f32 %v778, %v778
        %v896 = vmul.f32 %v779, %v779
        %v897 = vmul.f32 %v780, %v780
        %v898 = vmul.f32 %v781, %v781
        %v899 = vmul.f32 %v782, %v782
        %v900 = vmul.f32 %v783, %v783
        %v901 = vmul.f32 %v784, %v784
        %v902 = vmul.f32 %v785, %v785
        %v903 = vmul.f32 %v786, %v786
        %v904 = vmul.f32 %v787, %v787
        %v905 = vmul.f32 %v788, %v788
        %v906 = vmul.f32 %v789, %v789
        %v907 = vmul.f32 %v790, %v790
        %v908 = vmul.f32 %v791, %v791
        %v909 = vmul.f32 %v792, %v792
        %v910 = vmul.f32 %v793, %v793
        %v911 = vmul.f32 %v794, %v794
        %v912 = vmul.f32 %v795, %v795
        %v913 = vmul.f32 %v796, %v796
        %v914 = vmul.f32 %v797, %v797
        %v915 = vmul.f32 %v798, %v798
        %v916 = vmul.f32 %v799, %v799
        %v917 = vmul.f32 %v800, %v800
        %v918 = vmul.f32 %v801, %v801
        %v919 = vmul.f32 %v802, %v802
        %v920 = vmul.f32 %v803, %v803
        %v921 = vmul.f32 %v804, %v804
        %v922 = vmul.f32 %v805, %v805
        %v923 = vmul.f32 %v806, %v806
        %vm924 = vcmask 31744
        %v925 = vsel %vm924, %v892, 0.0
        %v926 = vsel %vm924, %v893, 0.0
        %v927 = vadd.f32 %v925, %v926
        %v928 = vsel %vm924, %v894, 0.0
        %v929 = vadd.f32 %v927, %v928
        %v930 = vsel %vm924, %v895, 0.0
        %v931 = vadd.f32 %v929, %v930
        %v932 = vsel %vm924, %v896, 0.0
        %v933 = vadd.f32 %v931, %v932
        %v934 = vsel %vm924, %v897, 0.0
        %v935 = vadd.f32 %v933, %v934
        %v936 = vsel %vm924, %v898, 0.0
        %v937 = vadd.f32 %v935, %v936
        %v938 = vsel %vm924, %v899, 0.0
        %v939 = vadd.f32 %v937, %v938
        %v940 = vsel %vm924, %v900, 0.0
        %v941 = vadd.f32 %v939, %v940
        %v942 = vsel %vm924, %v901, 0.0
        %v943 = vadd.f32 %v941, %v942
        %v944 = vsel %vm924, %v902, 0.0
        %v945 = vadd.f32 %v943, %v944
        %v946 = vsel %vm924, %v903, 0.0
        %v947 = vadd.f32 %v945, %v946
        %v948 = vsel %vm924, %v904, 0.0
        %v949 = vadd.f32 %v947, %v948
        %v950 = vsel %vm924, %v905, 0.0
        %v951 = vadd.f32 %v949, %v950
        %v952 = vsel %vm924, %v906, 0.0
        %v953 = vadd.f32 %v951, %v952
        %v954 = vsel %vm924, %v907, 0.0
        %v955 = vadd.f32 %v953, %v954
        %v956 = vsel %vm924, %v908, 0.0
        %v957 = vadd.f32 %v955, %v956
        %v958 = vsel %vm924, %v909, 0.0
        %v959 = vadd.f32 %v957, %v958
        %v960 = vsel %vm924, %v910, 0.0
        %v961 = vadd.f32 %v959, %v960
        %v962 = vsel %vm924, %v911, 0.0
        %v963 = vadd.f32 %v961, %v962
        %v964 = vsel %vm924, %v912, 0.0
        %v965 = vadd.f32 %v963, %v964
        %v966 = vsel %vm924, %v913, 0.0
        %v967 = vadd.f32 %v965, %v966
        %v968 = vsel %vm924, %v914, 0.0
        %v969 = vadd.f32 %v967, %v968
        %v970 = vsel %vm924, %v915, 0.0
        %v971 = vadd.f32 %v969, %v970
        %v972 = vsel %vm924, %v916, 0.0
        %v973 = vadd.f32 %v971, %v972
        %v974 = vsel %vm924, %v917, 0.0
        %v975 = vadd.f32 %v973, %v974
        %v976 = vsel %vm924, %v918, 0.0
        %v977 = vadd.f32 %v975, %v976
        %v978 = vsel %vm924, %v919, 0.0
        %v979 = vadd.f32 %v977, %v978
        %v980 = vsel %vm924, %v920, 0.0
        %v981 = vadd.f32 %v979, %v980
        %v982 = vsel %vm924, %v921, 0.0
        %v983 = vadd.f32 %v981, %v982
        %v984 = vsel %vm924, %v922, 0.0
        %v985 = vadd.f32 %v983, %v984
        %v986 = vsel %vm924, %v923, 0.0
        %v987 = vadd.f32 %v985, %v986
        %v988 = vrot.slane %v987, 4
        %v989 = vadd.f32 %v987, %v988
        %v990 = vrot.slane %v989, 2
        %v991 = vadd.f32 %v989, %v990
        %v992 = vrot.slane %v991, 1
        %v993 = vadd.f32 %v991, %v992
        %v994 = vadd.f32 %v888, %v993
        %v995 = vadd.f32 %v891, %v993
        %v996 = vmul.f32 %v874, 2.0
        %v997 = vmul.f32 %v879, 2.0
        %v998 = vsub.f32 %v994, %v996
        %v999 = vsub.f32 %v995, %v997
        %v1000 = vmax.f32 %v998, 0.0
        %v1001 = vmax.f32 %v999, 0.0
        %1002 = vst [vmem:[#allocation4] sm:$0xff] 0.0
        %1003 = vst [vmem:[#allocation4 + $0x8] sm:$0xff] 0.0
        %1004 = vst [vmem:[#allocation4 + $0x10] sm:$0x7f] 0.0
        %1007 = vrot.lane.b32.xlu0 %v1000, 1
        %v1008 = vpop.permute.xlu0 %1007
        %1009 = vrot.lane.b32.xlu0 %v1001, 1
        %v1010 = vpop.permute.xlu0 %1009
        %vm1013 = vcmask 15368
        %1014 = vst.msk [vmem:[#allocation4 + $0x2] sm:$0xff] %vm1013, %v1008
        %1015 = vst.msk [vmem:[#allocation4 + $0xa] sm:$0xff] %vm1013, %v1010
        %vm1016 = vcmask 23568
        %1017 = vst.msk [vmem:[#allocation4 + $0x3] sm:$0xff] %vm1016, %v1008
        %1018 = vst.msk [vmem:[#allocation4 + $0xb] sm:$0xff] %vm1016, %v1010
        %vm1019 = vcmask 31768
        %1020 = vst.msk [vmem:[#allocation4 + $0x4] sm:$0xff] %vm1019, %v1008
        %1021 = vst.msk [vmem:[#allocation4 + $0xc] sm:$0xff] %vm1019, %v1010
        %vm1022 = vcmask 39968
        %1023 = vst.msk [vmem:[#allocation4 + $0x5] sm:$0xff] %vm1022, %v1008
        %1024 = vst.msk [vmem:[#allocation4 + $0xd] sm:$0xff] %vm1022, %v1010
        %vm1025 = vcmp.eq.s32.totalorder %v515, 0
        %v1026 = vsel %vm1025, 0.0, 1e+30
        %v1027 = vld [vmem:[#allocation4 + $0x2] sm:$0x1]
        %1029 = vrot.lane.b32.xlu0 %v1026, 1
        %v1030 = vpop.permute.xlu0 %1029
        %vm1032 = vcmask 7168
        %v1033 = vsel %vm1032, %v1026, %v1030
        %v1034 = vsub.f32 0.0, %v1033
        %v1035 = vmax.f32 %v1034, -1e+30
        %v1036 = vmax.f32 %v1035, -1e+30
        %v1037 = vsub.f32 %v1034, %v1036
        %v1038 = vmul.f32 %v1037, 1.442695
        %v1039 = vpow.pop %v1038
        %v1040 = vsub.f32 -1e+30, %v1036
        %v1041 = vmul.f32 %v1040, 1.442695
        %v1042 = vpow.pop %v1041
        %v1043 = vadd.f32 %v1039, %v1042
        %v1044 = vadd.f32 %v1043, %v1042
        %v1045 = vlog2.pop %v1044
        %v1046 = vmul.f32 %v1045, 0.6931472
        %v1047 = vadd.f32 %v1046, %v1036
        %v1048 = vsub.f32 %v1027, %v1047
        %vm1049 = vcmp.eq.s32.totalorder %v515, 5
        %vm1050 = vcmp.le.s32.totalorder %v515, 4294967281
        %vm1051 = vmor %vm1049, %vm1050
        %v1052 = vsel %vm1051, -1e+30, 1e+30
        %vm1053 = vcmp.ge.s32.totalorder %v515, 1
        %vm1054 = vcmp.le.s32.totalorder %v515, 1
        %vm1055 = vmand %vm1053, %vm1054
        %v1056 = vsel %vm1055, %v1048, %v1052
        %1057 = vst [vmem:[#allocation2 + $0x2] sm:$0x1] %v1056
        %v1058 = vld [vmem:[#allocation4 + $0x3] sm:$0x1]
        %1060 = vrot.lane.b32.xlu0 %v1056, 1
        %v1061 = vpop.permute.xlu0 %1060
        %v1063 = vsel %vm1032, %v1056, %v1061
        %v1064 = vsub.f32 0.0, %v1056
        %v1065 = vsub.f32 0.0, %v1063
        %v1066 = vmax.f32 %v1064, -1e+30
        %v1067 = vmax.f32 %v1066, %v1065
        %v1068 = vsub.f32 -1e+30, %v1067
        %v1069 = vmul.f32 %v1068, 1.442695
        %v1070 = vpow.pop %v1069
        %v1071 = vsub.f32 %v1064, %v1067
        %v1072 = vmul.f32 %v1071, 1.442695
        %v1073 = vpow.pop %v1072
        %v1074 = vadd.f32 %v1070, %v1073
        %v1075 = vsub.f32 %v1065, %v1067
        %v1076 = vmul.f32 %v1075, 1.442695
        %v1077 = vpow.pop %v1076
        %v1078 = vadd.f32 %v1074, %v1077
        %v1079 = vlog2.pop %v1078
        %v1080 = vmul.f32 %v1079, 0.6931472
        %v1081 = vadd.f32 %v1080, %v1067
        %v1082 = vsub.f32 %v1058, %v1081
        %vm1083 = vcmp.le.s32.totalorder %v515, 4294967282
        %vm1084 = vmor %vm1049, %vm1083
        %v1085 = vsel %vm1084, -1e+30, 1e+30
        %vm1086 = vcmp.le.s32.totalorder %v515, 2
        %vm1087 = vmand %vm1053, %vm1086
        %v1088 = vsel %vm1087, %v1082, %v1085
        %1089 = vst [vmem:[#allocation2 + $0x3] sm:$0x1] %v1088
        %v1090 = vld [vmem:[#allocation4 + $0x4] sm:$0x1]
        %1092 = vrot.lane.b32.xlu0 %v1088, 1
        %v1093 = vpop.permute.xlu0 %1092
        %v1095 = vsel %vm1032, %v1088, %v1093
        %v1096 = vsub.f32 0.0, %v1088
        %v1097 = vsub.f32 0.0, %v1095
        %v1098 = vmax.f32 %v1065, %v1096
        %v1099 = vmax.f32 %v1098, %v1097
        %v1100 = vsub.f32 %v1065, %v1099
        %v1101 = vmul.f32 %v1100, 1.442695
        %v1102 = vpow.pop %v1101
        %v1103 = vsub.f32 %v1096, %v1099
        %v1104 = vmul.f32 %v1103, 1.442695
        %v1105 = vpow.pop %v1104
        %v1106 = vadd.f32 %v1102, %v1105
        %v1107 = vsub.f32 %v1097, %v1099
        %v1108 = vmul.f32 %v1107, 1.442695
        %v1109 = vpow.pop %v1108
        %v1110 = vadd.f32 %v1106, %v1109
        %v1111 = vlog2.pop %v1110
        %v1112 = vmul.f32 %v1111, 0.6931472
        %v1113 = vadd.f32 %v1112, %v1099
        %v1114 = vsub.f32 %v1090, %v1113
        %vm1115 = vcmp.le.s32.totalorder %v515, 4294967283
        %vm1116 = vmor %vm1049, %vm1115
        %v1117 = vsel %vm1116, -1e+30, 1e+30
        %vm1118 = vcmp.le.s32.totalorder %v515, 3
        %vm1119 = vmand %vm1053, %vm1118
        %v1120 = vsel %vm1119, %v1114, %v1117
        %1121 = vst [vmem:[#allocation2 + $0x4] sm:$0x1] %v1120
        %v1122 = vld [vmem:[#allocation4 + $0x5] sm:$0x1]
        %1124 = vrot.lane.b32.xlu0 %v1120, 1
        %v1125 = vpop.permute.xlu0 %1124
        %v1127 = vsel %vm1032, %v1120, %v1125
        %v1128 = vsub.f32 0.0, %v1120
        %v1129 = vsub.f32 0.0, %v1127
        %v1130 = vmax.f32 %v1097, %v1128
        %v1131 = vmax.f32 %v1130, %v1129
        %v1132 = vsub.f32 %v1097, %v1131
        %v1133 = vmul.f32 %v1132, 1.442695
        %v1134 = vpow.pop %v1133
        %v1135 = vsub.f32 %v1128, %v1131
        %v1136 = vmul.f32 %v1135, 1.442695
        %v1137 = vpow.pop %v1136
        %v1138 = vadd.f32 %v1134, %v1137
        %v1139 = vsub.f32 %v1129, %v1131
        %v1140 = vmul.f32 %v1139, 1.442695
        %v1141 = vpow.pop %v1140
        %v1142 = vadd.f32 %v1138, %v1141
        %v1143 = vlog2.pop %v1142
        %v1144 = vmul.f32 %v1143, 0.6931472
        %v1145 = vadd.f32 %v1144, %v1131
        %v1146 = vsub.f32 %v1122, %v1145
        %vm1147 = vcmp.le.s32.totalorder %v515, 4294967284
        %vm1148 = vmor %vm1049, %vm1147
        %v1149 = vsel %vm1148, -1e+30, 1e+30
        %vm1150 = vcmp.le.s32.totalorder %v515, 4
        %vm1151 = vmand %vm1053, %vm1150
        %v1152 = vsel %vm1151, %v1146, %v1149
        %1153 = vst [vmem:[#allocation2 + $0x5] sm:$0x1] %v1152
        %v1154 = vld [vmem:[#allocation4 + $0x6] sm:$0x1]
        %1156 = vrot.lane.b32.xlu0 %v1152, 1
        %v1157 = vpop.permute.xlu0 %1156
        %v1159 = vsel %vm1032, %v1152, %v1157
        %v1160 = vsub.f32 0.0, %v1152
        %v1161 = vsub.f32 0.0, %v1159
        %v1162 = vmax.f32 %v1129, %v1160
        %v1163 = vmax.f32 %v1162, %v1161
        %v1164 = vsub.f32 %v1129, %v1163
        %v1165 = vmul.f32 %v1164, 1.442695
        %v1166 = vpow.pop %v1165
        %v1167 = vsub.f32 %v1160, %v1163
        %v1168 = vmul.f32 %v1167, 1.442695
        %v1169 = vpow.pop %v1168
        %v1170 = vadd.f32 %v1166, %v1169
        %v1171 = vsub.f32 %v1161, %v1163
        %v1172 = vmul.f32 %v1171, 1.442695
        %v1173 = vpow.pop %v1172
        %v1174 = vadd.f32 %v1170, %v1173
        %v1175 = vlog2.pop %v1174
        %v1176 = vmul.f32 %v1175, 0.6931472
        %v1177 = vadd.f32 %v1176, %v1163
        %v1178 = vsub.f32 %v1154, %v1177
        %vm1179 = vcmp.le.s32.totalorder %v515, 4294967285
        %vm1180 = vmor %vm1049, %vm1179
        %v1181 = vsel %vm1180, -1e+30, 1e+30
        %v1182 = vsel %vm1151, %v1178, %v1181
        %1183 = vst [vmem:[#allocation2 + $0x6] sm:$0x1] %v1182
        %v1184 = vld [vmem:[#allocation4 + $0x7] sm:$0x1]
        %1186 = vrot.lane.b32.xlu0 %v1182, 1
        %v1187 = vpop.permute.xlu0 %1186
        %v1189 = vsel %vm1032, %v1182, %v1187
        %v1190 = vsub.f32 0.0, %v1182
        %v1191 = vsub.f32 0.0, %v1189
        %v1192 = vmax.f32 %v1161, %v1190
        %v1193 = vmax.f32 %v1192, %v1191
        %v1194 = vsub.f32 %v1161, %v1193
        %v1195 = vmul.f32 %v1194, 1.442695
        %v1196 = vpow.pop %v1195
        %v1197 = vsub.f32 %v1190, %v1193
        %v1198 = vmul.f32 %v1197, 1.442695
        %v1199 = vpow.pop %v1198
        %v1200 = vadd.f32 %v1196, %v1199
        %v1201 = vsub.f32 %v1191, %v1193
        %v1202 = vmul.f32 %v1201, 1.442695
        %v1203 = vpow.pop %v1202
        %v1204 = vadd.f32 %v1200, %v1203
        %v1205 = vlog2.pop %v1204
        %v1206 = vmul.f32 %v1205, 0.6931472
        %v1207 = vadd.f32 %v1206, %v1193
        %v1208 = vsub.f32 %v1184, %v1207
        %vm1209 = vcmp.le.s32.totalorder %v515, 4294967286
        %vm1210 = vmor %vm1049, %vm1209
        %v1211 = vsel %vm1210, -1e+30, 1e+30
        %v1212 = vsel %vm1151, %v1208, %v1211
        %1213 = vst [vmem:[#allocation2 + $0x7] sm:$0x1] %v1212
        %v1214 = vld [vmem:[#allocation4 + $0x8] sm:$0x1]
        %1216 = vrot.lane.b32.xlu0 %v1212, 1
        %v1217 = vpop.permute.xlu0 %1216
        %v1219 = vsel %vm1032, %v1212, %v1217
        %v1220 = vsub.f32 0.0, %v1212
        %v1221 = vsub.f32 0.0, %v1219
        %v1222 = vmax.f32 %v1191, %v1220
        %v1223 = vmax.f32 %v1222, %v1221
        %v1224 = vsub.f32 %v1191, %v1223
        %v1225 = vmul.f32 %v1224, 1.442695
        %v1226 = vpow.pop %v1225
        %v1227 = vsub.f32 %v1220, %v1223
        %v1228 = vmul.f32 %v1227, 1.442695
        %v1229 = vpow.pop %v1228
        %v1230 = vadd.f32 %v1226, %v1229
        %v1231 = vsub.f32 %v1221, %v1223
        %v1232 = vmul.f32 %v1231, 1.442695
        %v1233 = vpow.pop %v1232
        %v1234 = vadd.f32 %v1230, %v1233
        %v1235 = vlog2.pop %v1234
        %v1236 = vmul.f32 %v1235, 0.6931472
        %v1237 = vadd.f32 %v1236, %v1223
        %v1238 = vsub.f32 %v1214, %v1237
        %vm1239 = vcmp.le.s32.totalorder %v515, 4294967287
        %vm1240 = vmor %vm1049, %vm1239
        %v1241 = vsel %vm1240, -1e+30, 1e+30
        %v1242 = vsel %vm1151, %v1238, %v1241
        %1243 = vst [vmem:[#allocation2 + $0x8] sm:$0x1] %v1242
        %v1244 = vld [vmem:[#allocation4 + $0x9] sm:$0x1]
        %1246 = vrot.lane.b32.xlu0 %v1242, 1
        %v1247 = vpop.permute.xlu0 %1246
        %v1249 = vsel %vm1032, %v1242, %v1247
        %v1250 = vsub.f32 0.0, %v1242
        %v1251 = vsub.f32 0.0, %v1249
        %v1252 = vmax.f32 %v1221, %v1250
        %v1253 = vmax.f32 %v1252, %v1251
        %v1254 = vsub.f32 %v1221, %v1253
        %v1255 = vmul.f32 %v1254, 1.442695
        %v1256 = vpow.pop %v1255
        %v1257 = vsub.f32 %v1250, %v1253
        %v1258 = vmul.f32 %v1257, 1.442695
        %v1259 = vpow.pop %v1258
        %v1260 = vadd.f32 %v1256, %v1259
        %v1261 = vsub.f32 %v1251, %v1253
        %v1262 = vmul.f32 %v1261, 1.442695
        %v1263 = vpow.pop %v1262
        %v1264 = vadd.f32 %v1260, %v1263
        %v1265 = vlog2.pop %v1264
        %v1266 = vmul.f32 %v1265, 0.6931472
        %v1267 = vadd.f32 %v1266, %v1253
        %v1268 = vsub.f32 %v1244, %v1267
        %vm1269 = vcmp.le.s32.totalorder %v515, 4294967288
        %vm1270 = vmor %vm1049, %vm1269
        %v1271 = vsel %vm1270, -1e+30, 1e+30
        %v1272 = vsel %vm1151, %v1268, %v1271
        %1273 = vst [vmem:[#allocation2 + $0x9] sm:$0x1] %v1272
        %v1274 = vld [vmem:[#allocation4 + $0xa] sm:$0x1]
        %1276 = vrot.lane.b32.xlu0 %v1272, 1
        %v1277 = vpop.permute.xlu0 %1276
        %v1279 = vsel %vm1032, %v1272, %v1277
        %v1280 = vsub.f32 0.0, %v1272
        %v1281 = vsub.f32 0.0, %v1279
        %v1282 = vmax.f32 %v1251, %v1280
        %v1283 = vmax.f32 %v1282, %v1281
        %v1284 = vsub.f32 %v1251, %v1283
        %v1285 = vmul.f32 %v1284, 1.442695
        %v1286 = vpow.pop %v1285
        %v1287 = vsub.f32 %v1280, %v1283
        %v1288 = vmul.f32 %v1287, 1.442695
        %v1289 = vpow.pop %v1288
        %v1290 = vadd.f32 %v1286, %v1289
        %v1291 = vsub.f32 %v1281, %v1283
        %v1292 = vmul.f32 %v1291, 1.442695
        %v1293 = vpow.pop %v1292
        %v1294 = vadd.f32 %v1290, %v1293
        %v1295 = vlog2.pop %v1294
        %v1296 = vmul.f32 %v1295, 0.6931472
        %v1297 = vadd.f32 %v1296, %v1283
        %v1298 = vsub.f32 %v1274, %v1297
        %vm1299 = vcmp.le.s32.totalorder %v515, 4294967289
        %vm1300 = vmor %vm1049, %vm1299
        %v1301 = vsel %vm1300, -1e+30, 1e+30
        %v1302 = vsel %vm1151, %v1298, %v1301
        %1303 = vst [vmem:[#allocation2 + $0xa] sm:$0x1] %v1302
        %v1304 = vld [vmem:[#allocation4 + $0xb] sm:$0x1]
        %1306 = vrot.lane.b32.xlu0 %v1302, 1
        %v1307 = vpop.permute.xlu0 %1306
        %v1309 = vsel %vm1032, %v1302, %v1307
        %v1310 = vsub.f32 0.0, %v1302
        %v1311 = vsub.f32 0.0, %v1309
        %v1312 = vmax.f32 %v1281, %v1310
        %v1313 = vmax.f32 %v1312, %v1311
        %v1314 = vsub.f32 %v1281, %v1313
        %v1315 = vmul.f32 %v1314, 1.442695
        %v1316 = vpow.pop %v1315
        %v1317 = vsub.f32 %v1310, %v1313
        %v1318 = vmul.f32 %v1317, 1.442695
        %v1319 = vpow.pop %v1318
        %v1320 = vadd.f32 %v1316, %v1319
        %v1321 = vsub.f32 %v1311, %v1313
        %v1322 = vmul.f32 %v1321, 1.442695
        %v1323 = vpow.pop %v1322
        %v1324 = vadd.f32 %v1320, %v1323
        %v1325 = vlog2.pop %v1324
        %v1326 = vmul.f32 %v1325, 0.6931472
        %v1327 = vadd.f32 %v1326, %v1313
        %v1328 = vsub.f32 %v1304, %v1327
        %vm1329 = vcmp.le.s32.totalorder %v515, 4294967290
        %vm1330 = vmor %vm1049, %vm1329
        %v1331 = vsel %vm1330, -1e+30, 1e+30
        %v1332 = vsel %vm1151, %v1328, %v1331
        %1333 = vst [vmem:[#allocation2 + $0xb] sm:$0x1] %v1332
        %v1334 = vld [vmem:[#allocation4 + $0xc] sm:$0x1]
        %1336 = vrot.lane.b32.xlu0 %v1332, 1
        %v1337 = vpop.permute.xlu0 %1336
        %v1339 = vsel %vm1032, %v1332, %v1337
        %v1340 = vsub.f32 0.0, %v1332
        %v1341 = vsub.f32 0.0, %v1339
        %v1342 = vmax.f32 %v1311, %v1340
        %v1343 = vmax.f32 %v1342, %v1341
        %v1344 = vsub.f32 %v1311, %v1343
        %v1345 = vmul.f32 %v1344, 1.442695
        %v1346 = vpow.pop %v1345
        %v1347 = vsub.f32 %v1340, %v1343
        %v1348 = vmul.f32 %v1347, 1.442695
        %v1349 = vpow.pop %v1348
        %v1350 = vadd.f32 %v1346, %v1349
        %v1351 = vsub.f32 %v1341, %v1343
        %v1352 = vmul.f32 %v1351, 1.442695
        %v1353 = vpow.pop %v1352
        %v1354 = vadd.f32 %v1350, %v1353
        %v1355 = vlog2.pop %v1354
        %v1356 = vmul.f32 %v1355, 0.6931472
        %v1357 = vadd.f32 %v1356, %v1343
        %v1358 = vsub.f32 %v1334, %v1357
        %vm1359 = vcmp.le.s32.totalorder %v515, 4294967291
        %vm1360 = vmor %vm1049, %vm1359
        %v1361 = vsel %vm1360, -1e+30, 1e+30
        %v1362 = vsel %vm1151, %v1358, %v1361
        %1363 = vst [vmem:[#allocation2 + $0xc] sm:$0x1] %v1362
        %v1364 = vld [vmem:[#allocation4 + $0xd] sm:$0x1]
        %1366 = vrot.lane.b32.xlu0 %v1362, 1
        %v1367 = vpop.permute.xlu0 %1366
        %v1369 = vsel %vm1032, %v1362, %v1367
        %v1370 = vsub.f32 0.0, %v1362
        %v1371 = vsub.f32 0.0, %v1369
        %v1372 = vmax.f32 %v1341, %v1370
        %v1373 = vmax.f32 %v1372, %v1371
        %v1374 = vsub.f32 %v1341, %v1373
        %v1375 = vmul.f32 %v1374, 1.442695
        %v1376 = vpow.pop %v1375
        %v1377 = vsub.f32 %v1370, %v1373
        %v1378 = vmul.f32 %v1377, 1.442695
        %v1379 = vpow.pop %v1378
        %v1380 = vadd.f32 %v1376, %v1379
        %v1381 = vsub.f32 %v1371, %v1373
        %v1382 = vmul.f32 %v1381, 1.442695
        %v1383 = vpow.pop %v1382
        %v1384 = vadd.f32 %v1380, %v1383
        %v1385 = vlog2.pop %v1384
        %v1386 = vmul.f32 %v1385, 0.6931472
        %v1387 = vadd.f32 %v1386, %v1373
        %v1388 = vsub.f32 %v1364, %v1387
        %vm1389 = vcmp.le.s32.totalorder %v515, 4294967292
        %vm1390 = vmor %vm1049, %vm1389
        %v1391 = vsel %vm1390, -1e+30, 1e+30
        %v1392 = vsel %vm1151, %v1388, %v1391
        %1393 = vst [vmem:[#allocation2 + $0xd] sm:$0x1] %v1392
        %v1394 = vld [vmem:[#allocation4 + $0xe] sm:$0x1]
        %1396 = vrot.lane.b32.xlu0 %v1392, 1
        %v1397 = vpop.permute.xlu0 %1396
        %v1399 = vsel %vm1032, %v1392, %v1397
        %v1400 = vsub.f32 0.0, %v1392
        %v1401 = vsub.f32 0.0, %v1399
        %v1402 = vmax.f32 %v1371, %v1400
        %v1403 = vmax.f32 %v1402, %v1401
        %v1404 = vsub.f32 %v1371, %v1403
        %v1405 = vmul.f32 %v1404, 1.442695
        %v1406 = vpow.pop %v1405
        %v1407 = vsub.f32 %v1400, %v1403
        %v1408 = vmul.f32 %v1407, 1.442695
        %v1409 = vpow.pop %v1408
        %v1410 = vadd.f32 %v1406, %v1409
        %v1411 = vsub.f32 %v1401, %v1403
        %v1412 = vmul.f32 %v1411, 1.442695
        %v1413 = vpow.pop %v1412
        %v1414 = vadd.f32 %v1410, %v1413
        %v1415 = vlog2.pop %v1414
        %v1416 = vmul.f32 %v1415, 0.6931472
        %v1417 = vadd.f32 %v1416, %v1403
        %v1418 = vsub.f32 %v1394, %v1417
        %vm1419 = vcmp.le.s32.totalorder %v515, 4294967293
        %vm1420 = vmor %vm1049, %vm1419
        %v1421 = vsel %vm1420, -1e+30, 1e+30
        %v1422 = vsel %vm1151, %v1418, %v1421
        %1423 = vst [vmem:[#allocation2 + $0xe] sm:$0x1] %v1422
        %v1424 = vld [vmem:[#allocation4 + $0xf] sm:$0x1]
        %1426 = vrot.lane.b32.xlu0 %v1422, 1
        %v1427 = vpop.permute.xlu0 %1426
        %v1429 = vsel %vm1032, %v1422, %v1427
        %v1430 = vsub.f32 0.0, %v1422
        %v1431 = vsub.f32 0.0, %v1429
        %v1432 = vmax.f32 %v1401, %v1430
        %v1433 = vmax.f32 %v1432, %v1431
        %v1434 = vsub.f32 %v1401, %v1433
        %v1435 = vmul.f32 %v1434, 1.442695
        %v1436 = vpow.pop %v1435
        %v1437 = vsub.f32 %v1430, %v1433
        %v1438 = vmul.f32 %v1437, 1.442695
        %v1439 = vpow.pop %v1438
        %v1440 = vadd.f32 %v1436, %v1439
        %v1441 = vsub.f32 %v1431, %v1433
        %v1442 = vmul.f32 %v1441, 1.442695
        %v1443 = vpow.pop %v1442
        %v1444 = vadd.f32 %v1440, %v1443
        %v1445 = vlog2.pop %v1444
        %v1446 = vmul.f32 %v1445, 0.6931472
        %v1447 = vadd.f32 %v1446, %v1433
        %v1448 = vsub.f32 %v1424, %v1447
        %vm1449 = vcmp.le.s32.totalorder %v515, 4294967294
        %vm1450 = vmor %vm1049, %vm1449
        %v1451 = vsel %vm1450, -1e+30, 1e+30
        %v1452 = vsel %vm1151, %v1448, %v1451
        %1453 = vst [vmem:[#allocation2 + $0xf] sm:$0x1] %v1452
        %v1454 = vld [vmem:[#allocation4 + $0x10] sm:$0x1]
        %1456 = vrot.lane.b32.xlu0 %v1452, 1
        %v1457 = vpop.permute.xlu0 %1456
        %v1459 = vsel %vm1032, %v1452, %v1457
        %v1460 = vsub.f32 0.0, %v1452
        %v1461 = vsub.f32 0.0, %v1459
        %v1462 = vmax.f32 %v1431, %v1460
        %v1463 = vmax.f32 %v1462, %v1461
        %v1464 = vsub.f32 %v1431, %v1463
        %v1465 = vmul.f32 %v1464, 1.442695
        %v1466 = vpow.pop %v1465
        %v1467 = vsub.f32 %v1460, %v1463
        %v1468 = vmul.f32 %v1467, 1.442695
        %v1469 = vpow.pop %v1468
        %v1470 = vadd.f32 %v1466, %v1469
        %v1471 = vsub.f32 %v1461, %v1463
        %v1472 = vmul.f32 %v1471, 1.442695
        %v1473 = vpow.pop %v1472
        %v1474 = vadd.f32 %v1470, %v1473
        %v1475 = vlog2.pop %v1474
        %v1476 = vmul.f32 %v1475, 0.6931472
        %v1477 = vadd.f32 %v1476, %v1463
        %v1478 = vsub.f32 %v1454, %v1477
        %vm1479 = vcmp.le.s32.totalorder %v515, 4294967295
        %vm1480 = vmor %vm1049, %vm1479
        %v1481 = vsel %vm1480, -1e+30, 1e+30
        %v1482 = vsel %vm1151, %v1478, %v1481
        %1483 = vst [vmem:[#allocation2 + $0x10] sm:$0x1] %v1482
        %v1484 = vld [vmem:[#allocation4 + $0x11] sm:$0x1]
        %1486 = vrot.lane.b32.xlu0 %v1482, 1
        %v1487 = vpop.permute.xlu0 %1486
        %v1489 = vsel %vm1032, %v1482, %v1487
        %v1490 = vsub.f32 0.0, %v1482
        %v1491 = vsub.f32 0.0, %v1489
        %v1492 = vmax.f32 %v1461, %v1490
        %v1493 = vmax.f32 %v1492, %v1491
        %v1494 = vsub.f32 %v1461, %v1493
        %v1495 = vmul.f32 %v1494, 1.442695
        %v1496 = vpow.pop %v1495
        %v1497 = vsub.f32 %v1490, %v1493
        %v1498 = vmul.f32 %v1497, 1.442695
        %v1499 = vpow.pop %v1498
        %v1500 = vadd.f32 %v1496, %v1499
        %v1501 = vsub.f32 %v1491, %v1493
        %v1502 = vmul.f32 %v1501, 1.442695
        %v1503 = vpow.pop %v1502
        %v1504 = vadd.f32 %v1500, %v1503
        %v1505 = vlog2.pop %v1504
        %v1506 = vmul.f32 %v1505, 0.6931472
        %v1507 = vadd.f32 %v1506, %v1493
        %v1508 = vsub.f32 %v1484, %v1507
        %vm1509 = vcmp.le.s32.totalorder %v515, 0
        %vm1510 = vmor %vm1049, %vm1509
        %v1511 = vsel %vm1510, -1e+30, 1e+30
        %v1512 = vsel %vm1151, %v1508, %v1511
        %1513 = vst [vmem:[#allocation2 + $0x11] sm:$0x1] %v1512
        %v1514 = vld [vmem:[#allocation4 + $0x12] sm:$0x1]
        %1516 = vrot.lane.b32.xlu0 %v1512, 1
        %v1517 = vpop.permute.xlu0 %1516
        %v1519 = vsel %vm1032, %v1512, %v1517
        %v1520 = vsub.f32 0.0, %v1512
        %v1521 = vsub.f32 0.0, %v1519
        %v1522 = vmax.f32 %v1491, %v1520
        %v1523 = vmax.f32 %v1522, %v1521
        %v1524 = vsub.f32 %v1491, %v1523
        %v1525 = vmul.f32 %v1524, 1.442695
        %v1526 = vpow.pop %v1525
        %v1527 = vsub.f32 %v1520, %v1523
        %v1528 = vmul.f32 %v1527, 1.442695
        %v1529 = vpow.pop %v1528
        %v1530 = vadd.f32 %v1526, %v1529
        %v1531 = vsub.f32 %v1521, %v1523
        %v1532 = vmul.f32 %v1531, 1.442695
        %v1533 = vpow.pop %v1532
        %v1534 = vadd.f32 %v1530, %v1533
        %v1535 = vlog2.pop %v1534
        %v1536 = vmul.f32 %v1535, 0.6931472
        %v1537 = vadd.f32 %v1536, %v1523
        %v1538 = vsub.f32 %v1514, %v1537
        %vm1539 = vmor %vm1049, %vm1054
        %v1540 = vsel %vm1539, -1e+30, 1e+30
        %vm1541 = vcmp.ge.s32.totalorder %v515, 2
        %vm1542 = vmand %vm1541, %vm1150
        %v1543 = vsel %vm1542, %v1538, %v1540
        %1544 = vst [vmem:[#allocation2 + $0x12] sm:$0x1] %v1543
        %v1545 = vld [vmem:[#allocation4 + $0x13] sm:$0x1]
        %1547 = vrot.lane.b32.xlu0 %v1543, 1
        %v1548 = vpop.permute.xlu0 %1547
        %v1550 = vsel %vm1032, %v1543, %v1548
        %v1551 = vsub.f32 0.0, %v1543
        %v1552 = vsub.f32 0.0, %v1550
        %v1553 = vmax.f32 %v1521, %v1551
        %v1554 = vmax.f32 %v1553, %v1552
        %v1555 = vsub.f32 %v1521, %v1554
        %v1556 = vmul.f32 %v1555, 1.442695
        %v1557 = vpow.pop %v1556
        %v1558 = vsub.f32 %v1551, %v1554
        %v1559 = vmul.f32 %v1558, 1.442695
        %v1560 = vpow.pop %v1559
        %v1561 = vadd.f32 %v1557, %v1560
        %v1562 = vsub.f32 %v1552, %v1554
        %v1563 = vmul.f32 %v1562, 1.442695
        %v1564 = vpow.pop %v1563
        %v1565 = vadd.f32 %v1561, %v1564
        %v1566 = vlog2.pop %v1565
        %v1567 = vmul.f32 %v1566, 0.6931472
        %v1568 = vadd.f32 %v1567, %v1554
        %v1569 = vsub.f32 %v1545, %v1568
        %vm1570 = vmor %vm1049, %vm1086
        %v1571 = vsel %vm1570, -1e+30, 1e+30
        %vm1572 = vcmp.ge.s32.totalorder %v515, 3
        %vm1573 = vmand %vm1572, %vm1150
        %v1574 = vsel %vm1573, %v1569, %v1571
        %1575 = vst [vmem:[#allocation2 + $0x13] sm:$0x1] %v1574
        %v1576 = vld [vmem:[#allocation4 + $0x14] sm:$0x1]
        %1578 = vrot.lane.b32.xlu0 %v1574, 1
        %v1579 = vpop.permute.xlu0 %1578
        %v1581 = vsel %vm1032, %v1574, %v1579
        %v1582 = vsub.f32 0.0, %v1574
        %v1583 = vsub.f32 0.0, %v1581
        %v1584 = vmax.f32 %v1552, %v1582
        %v1585 = vmax.f32 %v1584, %v1583
        %v1586 = vsub.f32 %v1552, %v1585
        %v1587 = vmul.f32 %v1586, 1.442695
        %v1588 = vpow.pop %v1587
        %v1589 = vsub.f32 %v1582, %v1585
        %v1590 = vmul.f32 %v1589, 1.442695
        %v1591 = vpow.pop %v1590
        %v1592 = vadd.f32 %v1588, %v1591
        %v1593 = vsub.f32 %v1583, %v1585
        %v1594 = vmul.f32 %v1593, 1.442695
        %v1595 = vpow.pop %v1594
        %v1596 = vadd.f32 %v1592, %v1595
        %v1597 = vlog2.pop %v1596
        %v1598 = vmul.f32 %v1597, 0.6931472
        %v1599 = vadd.f32 %v1598, %v1585
        %v1600 = vsub.f32 %v1576, %v1599
        %vm1601 = vmor %vm1049, %vm1118
        %v1602 = vsel %vm1601, -1e+30, 1e+30
        %vm1603 = vcmp.ge.s32.totalorder %v515, 4
        %vm1604 = vmand %vm1603, %vm1150
        %v1605 = vsel %vm1604, %v1600, %v1602
        %1606 = vst [vmem:[#allocation2 + $0x14] sm:$0x1] %v1605
        %1607 = vst [vmem:[#allocation2 + $0x15] sm:$0x1] -1e+30
        %1609 = vset.pattern.permute.xlu0 4
        %1610 = vperm.xlu0 %1609, %v1605
        %v1611 = vpop.permute.xlu0 %1610
        %v1613 = vsel %vm1049, %v1611, -1e+30
        %1614 = vst [vmem:[#allocation2 + $0x16] sm:$0x1] %v1613
        %v1615 = vld [vmem:[#allocation2 + $0x2] sm:$0xff]
        %v1616 = vld [vmem:[#allocation2 + $0xa] sm:$0xff]
        %v1617 = vld [vmem:[#allocation2 + $0x12] sm:$0x7]
        %v1618 = vld [vmem:[#allocation2 + $0x3] sm:$0xff]
        %v1619 = vld [vmem:[#allocation2 + $0xb] sm:$0xff]
        %v1620 = vld [vmem:[#allocation2 + $0x13] sm:$0x7]
        %v1621 = vld [vmem:[#allocation2 + $0x4] sm:$0xff]
        %v1622 = vld [vmem:[#allocation2 + $0xc] sm:$0xff]
        %v1623 = vld [vmem:[#allocation2 + $0x14] sm:$0x7]
        %v1624 = vld [vmem:[#allocation4 + $0x3] sm:$0xff]
        %v1625 = vld [vmem:[#allocation4 + $0xb] sm:$0xff]
        %v1626 = vld [vmem:[#allocation4 + $0x13] sm:$0x7]
        %v1627 = vld [vmem:[#allocation4 + $0x4] sm:$0xff]
        %v1628 = vld [vmem:[#allocation4 + $0xc] sm:$0xff]
        %v1629 = vld [vmem:[#allocation4 + $0x14] sm:$0x7]
        %v1630 = vsub.f32 %v1618, %v1624
        %v1631 = vsub.f32 %v1619, %v1625
        %v1632 = vsub.f32 %v1620, %v1626
        %1636 = vrot.lane.b32.xlu0 %v1630, 127
        %v1637 = vpop.permute.xlu0 %1636
        %1638 = vrot.lane.b32.xlu0 %v1631, 127
        %v1639 = vpop.permute.xlu0 %1638
        %1640 = vrot.lane.b32.xlu0 %v1632, 127
        %v1641 = vpop.permute.xlu0 %1640
        %vm1645 = vcmask 1039360
        %v1646 = vsel %vm1645, %v1637, %v1630
        %v1647 = vsel %vm1645, %v1639, %v1631
        %v1648 = vsel %vm1645, %v1641, %v1632
        %v1649 = vsub.f32 %v1646, %v1615
        %v1650 = vsub.f32 %v1647, %v1616
        %v1651 = vsub.f32 %v1648, %v1617
        %v1652 = vsub.f32 %v1630, %v1615
        %v1653 = vsub.f32 %v1631, %v1616
        %v1654 = vsub.f32 %v1632, %v1617
        %v1655 = vsub.f32 %v1621, %v1627
        %v1656 = vsub.f32 %v1622, %v1628
        %v1657 = vsub.f32 %v1623, %v1629
        %1661 = vrot.lane.b32.xlu0 %v1655, 127
        %v1662 = vpop.permute.xlu0 %1661
        %1663 = vrot.lane.b32.xlu0 %v1656, 127
        %v1664 = vpop.permute.xlu0 %1663
        %1665 = vrot.lane.b32.xlu0 %v1657, 127
        %v1666 = vpop.permute.xlu0 %1665
        %v1670 = vsel %vm1645, %v1662, %v1655
        %v1671 = vsel %vm1645, %v1664, %v1656
        %v1672 = vsel %vm1645, %v1666, %v1657
        %v1673 = vsub.f32 %v1670, %v1615
        %v1674 = vsub.f32 %v1671, %v1616
        %v1675 = vsub.f32 %v1672, %v1617
        %v1676 = vmin.f32 %v1649, 30.0
        %v1677 = vmin.f32 %v1650, 30.0
        %v1678 = vmin.f32 %v1651, 30.0
        %v1679 = vmul.f32 %v1676, 1.442695
        %v1680 = vpow.pop %v1679
        %v1681 = vmul.f32 %v1677, 1.442695
        %v1682 = vpow.pop %v1681
        %v1683 = vmul.f32 %v1678, 1.442695
        %v1684 = vpow.pop %v1683
        %v1685 = vmin.f32 %v1652, 30.0
        %v1686 = vmin.f32 %v1653, 30.0
        %v1687 = vmin.f32 %v1654, 30.0
        %v1688 = vmul.f32 %v1685, 1.442695
        %v1689 = vpow.pop %v1688
        %v1690 = vmul.f32 %v1686, 1.442695
        %v1691 = vpow.pop %v1690
        %v1692 = vmul.f32 %v1687, 1.442695
        %v1693 = vpow.pop %v1692
        %v1694 = vmin.f32 %v1673, 30.0
        %v1695 = vmin.f32 %v1674, 30.0
        %v1696 = vmin.f32 %v1675, 30.0
        %v1697 = vmul.f32 %v1694, 1.442695
        %v1698 = vpow.pop %v1697
        %v1699 = vmul.f32 %v1695, 1.442695
        %v1700 = vpow.pop %v1699
        %v1701 = vmul.f32 %v1696, 1.442695
        %v1702 = vpow.pop %v1701
        %v1703 = vsel %vm1049, 1.0, 0.0
        %v1705 = vrot.slane %v1684, 2
        %v1707 = vmul.f32 %v1705, 0.0
        %v1708 = vmul.f32 %v1693, 0.0
        %v1710 = vrot.slane %v1708, 2
        %v1712 = vadd.f32 %v1707, %v1710
        %1714 = vrot.lane.b32.xlu0 %v1703, 127
        %v1715 = vpop.permute.xlu0 %1714
        %v1717 = vsel %vm1645, %v1715, %v1703
        %v1719 = vrot.slane %v1702, 2
        %v1721 = vmul.f32 %v1717, %v1719
        %v1722 = vadd.f32 %v1712, %v1721
        %v1723 = vsel %vm1604, %v1722, 0.0
        %1724 = vst [vmem:[#allocation3 + $0x14] sm:$0x1] %v1723
        %1726 = vrot.lane.b32.xlu0 %v1723, 127
        %v1727 = vpop.permute.xlu0 %1726
        %v1729 = vsel %vm1645, %v1727, %v1723
        %v1730 = vrot.slane %v1684, 1
        %v1732 = vmul.f32 %v1729, %v1730
        %v1734 = vrot.slane %v1693, 1
        %v1736 = vmul.f32 %v1723, %v1734
        %v1737 = vadd.f32 %v1732, %v1736
        %v1738 = vrot.slane %v1702, 1
        %v1740 = vmul.f32 %v1738, 0.0
        %v1741 = vadd.f32 %v1737, %v1740
        %v1742 = vsel %vm1573, %v1741, 0.0
        %1743 = vst [vmem:[#allocation3 + $0x13] sm:$0x1] %v1742
        %1745 = vrot.lane.b32.xlu0 %v1742, 127
        %v1746 = vpop.permute.xlu0 %1745
        %v1748 = vsel %vm1645, %v1746, %v1742
        %v1749 = vmul.f32 %v1748, %v1684
        %v1750 = vmul.f32 %v1742, %v1693
        %v1751 = vadd.f32 %v1749, %v1750
        %v1752 = vmul.f32 %v1729, %v1702
        %v1753 = vadd.f32 %v1751, %v1752
        %v1754 = vsel %vm1542, %v1753, 0.0
        %1755 = vst [vmem:[#allocation3 + $0x12] sm:$0x1] %v1754
        %1757 = vrot.lane.b32.xlu0 %v1754, 127
        %v1758 = vpop.permute.xlu0 %1757
        %v1760 = vsel %vm1645, %v1758, %v1754
        %v1762 = vrot.slane %v1682, 7
        %v1764 = vmul.f32 %v1760, %v1762
        %v1766 = vrot.slane %v1691, 7
        %v1768 = vmul.f32 %v1754, %v1766
        %v1769 = vadd.f32 %v1764, %v1768
        %v1771 = vrot.slane %v1700, 7
        %v1773 = vmul.f32 %v1748, %v1771
        %v1774 = vadd.f32 %v1769, %v1773
        %v1775 = vsel %vm1151, %v1774, 0.0
        %1776 = vst [vmem:[#allocation3 + $0x11] sm:$0x1] %v1775
        %1778 = vrot.lane.b32.xlu0 %v1775, 127
        %v1779 = vpop.permute.xlu0 %1778
        %v1781 = vsel %vm1645, %v1779, %v1775
        %v1782 = vrot.slane %v1682, 6
        %v1784 = vmul.f32 %v1781, %v1782
        %v1785 = vrot.slane %v1691, 6
        %v1787 = vmul.f32 %v1775, %v1785
        %v1788 = vadd.f32 %v1784, %v1787
        %v1789 = vrot.slane %v1700, 6
        %v1791 = vmul.f32 %v1760, %v1789
        %v1792 = vadd.f32 %v1788, %v1791
        %v1793 = vsel %vm1151, %v1792, 0.0
        %1794 = vst [vmem:[#allocation3 + $0x10] sm:$0x1] %v1793
        %1796 = vrot.lane.b32.xlu0 %v1793, 127
        %v1797 = vpop.permute.xlu0 %1796
        %v1799 = vsel %vm1645, %v1797, %v1793
        %v1800 = vrot.slane %v1682, 5
        %v1802 = vmul.f32 %v1799, %v1800
        %v1803 = vrot.slane %v1691, 5
        %v1805 = vmul.f32 %v1793, %v1803
        %v1806 = vadd.f32 %v1802, %v1805
        %v1807 = vrot.slane %v1700, 5
        %v1809 = vmul.f32 %v1781, %v1807
        %v1810 = vadd.f32 %v1806, %v1809
        %v1811 = vsel %vm1151, %v1810, 0.0
        %1812 = vst [vmem:[#allocation3 + $0xf] sm:$0x1] %v1811
        %1814 = vrot.lane.b32.xlu0 %v1811, 127
        %v1815 = vpop.permute.xlu0 %1814
        %v1817 = vsel %vm1645, %v1815, %v1811
        %v1818 = vrot.slane %v1682, 4
        %v1820 = vmul.f32 %v1817, %v1818
        %v1821 = vrot.slane %v1691, 4
        %v1823 = vmul.f32 %v1811, %v1821
        %v1824 = vadd.f32 %v1820, %v1823
        %v1825 = vrot.slane %v1700, 4
        %v1827 = vmul.f32 %v1799, %v1825
        %v1828 = vadd.f32 %v1824, %v1827
        %v1829 = vsel %vm1151, %v1828, 0.0
        %1830 = vst [vmem:[#allocation3 + $0xe] sm:$0x1] %v1829
        %1832 = vrot.lane.b32.xlu0 %v1829, 127
        %v1833 = vpop.permute.xlu0 %1832
        %v1835 = vsel %vm1645, %v1833, %v1829
        %v1836 = vrot.slane %v1682, 3
        %v1838 = vmul.f32 %v1835, %v1836
        %v1839 = vrot.slane %v1691, 3
        %v1841 = vmul.f32 %v1829, %v1839
        %v1842 = vadd.f32 %v1838, %v1841
        %v1843 = vrot.slane %v1700, 3
        %v1845 = vmul.f32 %v1817, %v1843
        %v1846 = vadd.f32 %v1842, %v1845
        %v1847 = vsel %vm1151, %v1846, 0.0
        %1848 = vst [vmem:[#allocation3 + $0xd] sm:$0x1] %v1847
        %1850 = vrot.lane.b32.xlu0 %v1847, 127
        %v1851 = vpop.permute.xlu0 %1850
        %v1853 = vsel %vm1645, %v1851, %v1847
        %v1854 = vrot.slane %v1682, 2
        %v1856 = vmul.f32 %v1853, %v1854
        %v1857 = vrot.slane %v1691, 2
        %v1859 = vmul.f32 %v1847, %v1857
        %v1860 = vadd.f32 %v1856, %v1859
        %v1861 = vrot.slane %v1700, 2
        %v1863 = vmul.f32 %v1835, %v1861
        %v1864 = vadd.f32 %v1860, %v1863
        %v1865 = vsel %vm1151, %v1864, 0.0
        %1866 = vst [vmem:[#allocation3 + $0xc] sm:$0x1] %v1865
        %1868 = vrot.lane.b32.xlu0 %v1865, 127
        %v1869 = vpop.permute.xlu0 %1868
        %v1871 = vsel %vm1645, %v1869, %v1865
        %v1872 = vrot.slane %v1682, 1
        %v1874 = vmul.f32 %v1871, %v1872
        %v1875 = vrot.slane %v1691, 1
        %v1877 = vmul.f32 %v1865, %v1875
        %v1878 = vadd.f32 %v1874, %v1877
        %v1879 = vrot.slane %v1700, 1
        %v1881 = vmul.f32 %v1853, %v1879
        %v1882 = vadd.f32 %v1878, %v1881
        %v1883 = vsel %vm1151, %v1882, 0.0
        %1884 = vst [vmem:[#allocation3 + $0xb] sm:$0x1] %v1883
        %1886 = vrot.lane.b32.xlu0 %v1883, 127
        %v1887 = vpop.permute.xlu0 %1886
        %v1889 = vsel %vm1645, %v1887, %v1883
        %v1890 = vmul.f32 %v1889, %v1682
        %v1891 = vmul.f32 %v1883, %v1691
        %v1892 = vadd.f32 %v1890, %v1891
        %v1893 = vmul.f32 %v1871, %v1700
        %v1894 = vadd.f32 %v1892, %v1893
        %v1895 = vsel %vm1151, %v1894, 0.0
        %1896 = vst [vmem:[#allocation3 + $0xa] sm:$0x1] %v1895
        %1898 = vrot.lane.b32.xlu0 %v1895, 127
        %v1899 = vpop.permute.xlu0 %1898
        %v1901 = vsel %vm1645, %v1899, %v1895
        %v1903 = vrot.slane %v1680, 7
        %v1905 = vmul.f32 %v1901, %v1903
        %v1907 = vrot.slane %v1689, 7
        %v1909 = vmul.f32 %v1895, %v1907
        %v1910 = vadd.f32 %v1905, %v1909
        %v1912 = vrot.slane %v1698, 7
        %v1914 = vmul.f32 %v1889, %v1912
        %v1915 = vadd.f32 %v1910, %v1914
        %v1916 = vsel %vm1151, %v1915, 0.0
        %1917 = vst [vmem:[#allocation3 + $0x9] sm:$0x1] %v1916
        %1919 = vrot.lane.b32.xlu0 %v1916, 127
        %v1920 = vpop.permute.xlu0 %1919
        %v1922 = vsel %vm1645, %v1920, %v1916
        %v1923 = vrot.slane %v1680, 6
        %v1925 = vmul.f32 %v1922, %v1923
        %v1926 = vrot.slane %v1689, 6
        %v1928 = vmul.f32 %v1916, %v1926
        %v1929 = vadd.f32 %v1925, %v1928
        %v1930 = vrot.slane %v1698, 6
        %v1932 = vmul.f32 %v1901, %v1930
        %v1933 = vadd.f32 %v1929, %v1932
        %v1934 = vsel %vm1151, %v1933, 0.0
        %1935 = vst [vmem:[#allocation3 + $0x8] sm:$0x1] %v1934
        %1937 = vrot.lane.b32.xlu0 %v1934, 127
        %v1938 = vpop.permute.xlu0 %1937
        %v1940 = vsel %vm1645, %v1938, %v1934
        %v1941 = vrot.slane %v1680, 5
        %v1943 = vmul.f32 %v1940, %v1941
        %v1944 = vrot.slane %v1689, 5
        %v1946 = vmul.f32 %v1934, %v1944
        %v1947 = vadd.f32 %v1943, %v1946
        %v1948 = vrot.slane %v1698, 5
        %v1950 = vmul.f32 %v1922, %v1948
        %v1951 = vadd.f32 %v1947, %v1950
        %v1952 = vsel %vm1151, %v1951, 0.0
        %1953 = vst [vmem:[#allocation3 + $0x7] sm:$0x1] %v1952
        %1955 = vrot.lane.b32.xlu0 %v1952, 127
        %v1956 = vpop.permute.xlu0 %1955
        %v1958 = vsel %vm1645, %v1956, %v1952
        %v1959 = vrot.slane %v1680, 4
        %v1961 = vmul.f32 %v1958, %v1959
        %v1962 = vrot.slane %v1689, 4
        %v1964 = vmul.f32 %v1952, %v1962
        %v1965 = vadd.f32 %v1961, %v1964
        %v1966 = vrot.slane %v1698, 4
        %v1968 = vmul.f32 %v1940, %v1966
        %v1969 = vadd.f32 %v1965, %v1968
        %v1970 = vsel %vm1151, %v1969, 0.0
        %1971 = vst [vmem:[#allocation3 + $0x6] sm:$0x1] %v1970
        %1973 = vrot.lane.b32.xlu0 %v1970, 127
        %v1974 = vpop.permute.xlu0 %1973
        %v1976 = vsel %vm1645, %v1974, %v1970
        %v1977 = vrot.slane %v1680, 3
        %v1979 = vmul.f32 %v1976, %v1977
        %v1980 = vrot.slane %v1689, 3
        %v1982 = vmul.f32 %v1970, %v1980
        %v1983 = vadd.f32 %v1979, %v1982
        %v1984 = vrot.slane %v1698, 3
        %v1986 = vmul.f32 %v1958, %v1984
        %v1987 = vadd.f32 %v1983, %v1986
        %v1988 = vsel %vm1151, %v1987, 0.0
        %1989 = vst [vmem:[#allocation3 + $0x5] sm:$0x1] %v1988
        %1991 = vrot.lane.b32.xlu0 %v1988, 127
        %v1992 = vpop.permute.xlu0 %1991
        %v1994 = vsel %vm1645, %v1992, %v1988
        %v1995 = vrot.slane %v1680, 2
        %v1997 = vmul.f32 %v1994, %v1995
        %v1998 = vrot.slane %v1689, 2
        %v2000 = vmul.f32 %v1988, %v1998
        %v2001 = vadd.f32 %v1997, %v2000
        %v2002 = vrot.slane %v1698, 2
        %v2004 = vmul.f32 %v1976, %v2002
        %v2005 = vadd.f32 %v2001, %v2004
        %v2006 = vsel %vm1119, %v2005, 0.0
        %2007 = vst [vmem:[#allocation3 + $0x4] sm:$0x1] %v2006
        %2009 = vrot.lane.b32.xlu0 %v2006, 127
        %v2010 = vpop.permute.xlu0 %2009
        %v2012 = vsel %vm1645, %v2010, %v2006
        %v2013 = vrot.slane %v1680, 1
        %v2015 = vmul.f32 %v2012, %v2013
        %v2016 = vrot.slane %v1689, 1
        %v2018 = vmul.f32 %v2006, %v2016
        %v2019 = vadd.f32 %v2015, %v2018
        %v2020 = vrot.slane %v1698, 1
        %v2022 = vmul.f32 %v1994, %v2020
        %v2023 = vadd.f32 %v2019, %v2022
        %v2024 = vsel %vm1087, %v2023, 0.0
        %2025 = vst [vmem:[#allocation3 + $0x3] sm:$0x1] %v2024
        %2027 = vrot.lane.b32.xlu0 %v2024, 127
        %v2028 = vpop.permute.xlu0 %2027
        %v2030 = vsel %vm1645, %v2028, %v2024
        %v2031 = vmul.f32 %v2030, %v1680
        %v2032 = vmul.f32 %v2024, %v1689
        %v2033 = vadd.f32 %v2031, %v2032
        %v2034 = vmul.f32 %v2012, %v1698
        %v2035 = vadd.f32 %v2033, %v2034
        %v2036 = vsel %vm1055, %v2035, 0.0
        %2037 = vst [vmem:[#allocation3 + $0x2] sm:$0x1] %v2036
        %v2038 = vld [vmem:[#allocation3 + $0x2] sm:$0xff]
        %v2039 = vld [vmem:[#allocation3 + $0xa] sm:$0xff]
        %v2040 = vld [vmem:[#allocation3 + $0x3] sm:$0xff]
        %v2041 = vld [vmem:[#allocation3 + $0xb] sm:$0xff]
        %v2042 = vld [vmem:[#allocation3 + $0x4] sm:$0xff]
        %v2043 = vld [vmem:[#allocation3 + $0xc] sm:$0xff]
        %v2044 = vld [vmem:[#allocation3 + $0x5] sm:$0xff]
        %v2045 = vld [vmem:[#allocation3 + $0xd] sm:$0xff]
        %2048 = vrot.lane.b32.xlu0 %v2038, 127
        %v2049 = vpop.permute.xlu0 %2048
        %2050 = vrot.lane.b32.xlu0 %v2039, 127
        %v2051 = vpop.permute.xlu0 %2050
        %2056 = vrot.lane.b32.xlu0 %v2040, 127
        %v2057 = vpop.permute.xlu0 %2056
        %2058 = vrot.lane.b32.xlu0 %v2041, 127
        %v2059 = vpop.permute.xlu0 %2058
        %2064 = vrot.lane.b32.xlu0 %v2042, 127
        %v2065 = vpop.permute.xlu0 %2064
        %2066 = vrot.lane.b32.xlu0 %v2043, 127
        %v2067 = vpop.permute.xlu0 %2066
        %2072 = vrot.lane.b32.xlu0 %v2044, 127
        %v2073 = vpop.permute.xlu0 %2072
        %2074 = vrot.lane.b32.xlu0 %v2045, 127
        %v2075 = vpop.permute.xlu0 %2074
        %v2078 = vsel %vm1032, %v2049, %v2057
        %v2079 = vsel %vm1032, %v2051, %v2059
        %vm2080 = vcmask 15360
        %v2081 = vsel %vm2080, %v2078, %v2065
        %v2082 = vsel %vm2080, %v2079, %v2067
        %vm2083 = vcmask 23552
        %v2084 = vsel %vm2083, %v2081, %v2073
        %v2085 = vsel %vm2083, %v2082, %v2075
        %2086 = vxpose.xlu0.b32.start [1/16] %v2084, 128
        %2087 = vxpose.xlu0.b32.cont [2/16] %v2085, 128
        %2088 = vxpose.xlu0.b32.cont [3/16] 0.0, 128
        %2089 = vxpose.xlu0.b32.cont [4/16] 0.0, 128
        %2090 = vxpose.xlu0.b32.cont [5/16] 0.0, 128
        %2091 = vxpose.xlu0.b32.cont [6/16] 0.0, 128
        %2092 = vxpose.xlu0.b32.cont [7/16] 0.0, 128
        %2093 = vxpose.xlu0.b32.cont [8/16] 0.0, 128
        %2094 = vxpose.xlu0.b32.cont [9/16] 0.0, 128
        %2095 = vxpose.xlu0.b32.cont [10/16] 0.0, 128
        %2096 = vxpose.xlu0.b32.cont [11/16] 0.0, 128
        %2097 = vxpose.xlu0.b32.cont [12/16] 0.0, 128
        %2098 = vxpose.xlu0.b32.cont [13/16] 0.0, 128
        %2099 = vxpose.xlu0.b32.cont [14/16] 0.0, 128
        %2100 = vxpose.xlu0.b32.cont [15/16] 0.0, 128
        %2101 = vxpose.xlu0.b32.end [16/16] 0.0, 128
        %v2102 = vpop.trf.xlu0
        %v2103 = vpop.trf.xlu0
        %v2104 = vpop.trf.xlu0
        %v2105 = vpop.trf.xlu0
        %v2106 = vpop.trf.xlu0
        %v2107 = vpop.trf.xlu0
        %v2108 = vpop.trf.xlu0
        %v2109 = vpop.trf.xlu0
        %v2110 = vpop.trf.xlu0
        %v2111 = vpop.trf.xlu0
        %v2112 = vpop.trf.xlu0
        %v2113 = vpop.trf.xlu0
        %v2114 = vpop.trf.xlu0
        %v2115 = vpop.trf.xlu0
        %v2116 = vpop.trf.xlu0
        %v2117 = vpop.trf.xlu0
        %v2119 = vsel %vm625, %v2102, 0
        %2121 = vmatprep.subr.mxu0 %v617
        %2122 = vmatpush1.msra.mxu0 %v616
        %2123 = vmatprep.subr.mxu0 %v619
        %2124 = vmatpush1.msra.mxu0 %v618
        %2125 = vmatprep.subr.mxu0 0.0
        %2126 = vmatpush1.msra.mxu0 0.0
        %2127 = vmatprep.subr.mxu0 0.0
        %2128 = vmatpush1.msra.mxu0 0.0
        %2129 = vmatprep.subr.mxu0 0.0
        %2130 = vmatpush1.msra.mxu0 0.0
        %2131 = vmatprep.subr.mxu0 0.0
        %2132 = vmatpush1.msra.mxu0 0.0
        %2133 = vmatprep.subr.mxu0 0.0
        %2134 = vmatpush1.msra.mxu0 0.0
        %2135 = vmatprep.subr.mxu0 0.0
        %2136 = vmatpush1.msra.mxu0 0.0
        %2137 = vmatprep.subr.mxu0 0.0
        %2138 = vmatpush1.msra.mxu0 0.0
        %2139 = vmatprep.subr.mxu0 0.0
        %2140 = vmatpush1.msra.mxu0 0.0
        %2141 = vmatprep.subr.mxu0 0.0
        %2142 = vmatpush1.msra.mxu0 0.0
        %2143 = vmatprep.subr.mxu0 0.0
        %2144 = vmatpush1.msra.mxu0 0.0
        %2145 = vmatprep.subr.mxu0 0.0
        %2146 = vmatpush1.msra.mxu0 0.0
        %2147 = vmatprep.subr.mxu0 0.0
        %2148 = vmatpush1.msra.mxu0 0.0
        %2149 = vmatprep.subr.mxu0 0.0
        %2150 = vmatpush1.msra.mxu0 0.0
        %2151 = vmatprep.subr.mxu0 0.0
        %2152 = vmatpush1.msra.mxu0 0.0
        %2153 = vmatprep.subr.mxu0 0.0
        %2154 = vmatpush1.msra.mxu0 0.0
        %2155 = vmatprep.subr.mxu0 0.0
        %2156 = vmatpush1.msra.mxu0 0.0
        %2157 = vmatprep.subr.mxu0 0.0
        %2158 = vmatpush1.msra.mxu0 0.0
        %2159 = vmatprep.subr.mxu0 0.0
        %2160 = vmatpush1.msra.mxu0 0.0
        %2161 = vmatprep.subr.mxu0 0.0
        %2162 = vmatpush1.msra.mxu0 0.0
        %2163 = vmatprep.subr.mxu0 0.0
        %2164 = vmatpush1.msra.mxu0 0.0
        %2165 = vmatprep.subr.mxu0 0.0
        %2166 = vmatpush1.msra.mxu0 0.0
        %2167 = vmatprep.subr.mxu0 0.0
        %2168 = vmatpush1.msra.mxu0 0.0
        %2169 = vmatprep.subr.mxu0 0.0
        %2170 = vmatpush1.msra.mxu0 0.0
        %2171 = vmatprep.subr.mxu0 0.0
        %2172 = vmatpush1.msra.mxu0 0.0
        %2173 = vmatprep.subr.mxu0 0.0
        %2174 = vmatpush1.msra.mxu0 0.0
        %2175 = vmatprep.subr.mxu0 0.0
        %2176 = vmatpush1.msra.mxu0 0.0
        %2177 = vmatprep.subr.mxu0 0.0
        %2178 = vmatpush1.msra.mxu0 0.0
        %2179 = vmatprep.subr.mxu0 0.0
        %2180 = vmatpush1.msra.mxu0 0.0
        %2181 = vmatprep.subr.mxu0 0.0
        %2182 = vmatpush1.msra.mxu0 0.0
        %2183 = vmatprep.subr.mxu0 0.0
        %2184 = vmatpush1.msra.mxu0 0.0
        %2185 = vmatprep.mubr.f32.mxu0 0.0
        %2186 = vmatmul.mubr.f32.gmra.mrb[0].mxu0 %v2119
        %v2187 = vpop.f32.mrb[0].mxu0
        %v2188 = vadd.f32 0.0, %v2187
        %v2189 = vpop.f32.mrb[0].mxu0
        %v2190 = vadd.f32 0.0, %v2189
        %2191 = vdwg.mxu0
        %2192 = vmatprep.subr.mxu0 0.0
        %2193 = vmatpush1.msra.mxu0 1.0
        %2194 = vmatprep.subr.mxu0 0.0
        %2195 = vmatpush1.msra.mxu0 1.0
        %2196 = vmatprep.subr.mxu0 0.0
        %2197 = vmatpush1.msra.mxu0 0.0
        %2198 = vmatprep.subr.mxu0 0.0
        %2199 = vmatpush1.msra.mxu0 0.0
        %2200 = vmatprep.subr.mxu0 0.0
        %2201 = vmatpush1.msra.mxu0 0.0
        %2202 = vmatprep.subr.mxu0 0.0
        %2203 = vmatpush1.msra.mxu0 0.0
        %2204 = vmatprep.subr.mxu0 0.0
        %2205 = vmatpush1.msra.mxu0 0.0
        %2206 = vmatprep.subr.mxu0 0.0
        %2207 = vmatpush1.msra.mxu0 0.0
        %2208 = vmatprep.subr.mxu0 0.0
        %2209 = vmatpush1.msra.mxu0 0.0
        %2210 = vmatprep.subr.mxu0 0.0
        %2211 = vmatpush1.msra.mxu0 0.0
        %2212 = vmatprep.subr.mxu0 0.0
        %2213 = vmatpush1.msra.mxu0 0.0
        %2214 = vmatprep.subr.mxu0 0.0
        %2215 = vmatpush1.msra.mxu0 0.0
        %2216 = vmatprep.subr.mxu0 0.0
        %2217 = vmatpush1.msra.mxu0 0.0
        %2218 = vmatprep.subr.mxu0 0.0
        %2219 = vmatpush1.msra.mxu0 0.0
        %2220 = vmatprep.subr.mxu0 0.0
        %2221 = vmatpush1.msra.mxu0 0.0
        %2222 = vmatprep.subr.mxu0 0.0
        %2223 = vmatpush1.msra.mxu0 0.0
        %2224 = vmatprep.subr.mxu0 0.0
        %2225 = vmatpush1.msra.mxu0 0.0
        %2226 = vmatprep.subr.mxu0 0.0
        %2227 = vmatpush1.msra.mxu0 0.0
        %2228 = vmatprep.subr.mxu0 0.0
        %2229 = vmatpush1.msra.mxu0 0.0
        %2230 = vmatprep.subr.mxu0 0.0
        %2231 = vmatpush1.msra.mxu0 0.0
        %2232 = vmatprep.subr.mxu0 0.0
        %2233 = vmatpush1.msra.mxu0 0.0
        %2234 = vmatprep.subr.mxu0 0.0
        %2235 = vmatpush1.msra.mxu0 0.0
        %2236 = vmatprep.subr.mxu0 0.0
        %2237 = vmatpush1.msra.mxu0 0.0
        %2238 = vmatprep.subr.mxu0 0.0
        %2239 = vmatpush1.msra.mxu0 0.0
        %2240 = vmatprep.subr.mxu0 0.0
        %2241 = vmatpush1.msra.mxu0 0.0
        %2242 = vmatprep.subr.mxu0 0.0
        %2243 = vmatpush1.msra.mxu0 0.0
        %2244 = vmatprep.subr.mxu0 0.0
        %2245 = vmatpush1.msra.mxu0 0.0
        %2246 = vmatprep.subr.mxu0 0.0
        %2247 = vmatpush1.msra.mxu0 0.0
        %2248 = vmatprep.subr.mxu0 0.0
        %2249 = vmatpush1.msra.mxu0 0.0
        %2250 = vmatprep.subr.mxu0 0.0
        %2251 = vmatpush1.msra.mxu0 0.0
        %2252 = vmatprep.subr.mxu0 0.0
        %2253 = vmatpush1.msra.mxu0 0.0
        %2254 = vmatprep.subr.mxu0 0.0
        %2255 = vmatpush1.msra.mxu0 0.0
        %2256 = vmatprep.mubr.f32.mxu0 0.0
        %2257 = vmatmul.mubr.f32.gmra.mrb[0].mxu0 %v2119
        %v2258 = vpop.f32.mrb[0].mxu0
        %v2259 = vadd.f32 0.0, %v2258
        %v2260 = vpop.f32.mrb[0].mxu0
        %2261 = vdwg.mxu0
        %v2262 = vrcp.pop %v2259
        %2264 = vset.pattern.permute.xlu0 0
        %2265 = vperm.xlu0 %2264, %v2262
        %v2266 = vpop.permute.xlu0 %2265
        %v2268 = vmul.f32 %v2188, %v2266
        %v2269 = vmul.f32 %v2190, %v2266
        %v2270 = vlaneseq
        %v2271 = vshrl.u32 %v2270, 7
        %v2272 = vsub.s32 0, %v2271
        %v2273 = vrot.slane %v696, %v2272
        %v2274 = vlaneseq
        %v2275 = vshrl.u32 %v2274, 7
        %v2276 = vsub.s32 0, %v2275
        %v2277 = vrot.slane %v698, %v2276
        %v2280 = vrot.slane %v771, 4
        %v2281 = vrot.slane %v773, 4
        %vm2284 = vcmask 1043456
        %v2285 = vsel %vm2284, %v2273, %v2280
        %v2286 = vsel %vm2284, %v2277, %v2281
        %2287 = vst [vmem:[%s503] sm:$0xff] %v2285
        %2288 = vst [vmem:[%s503 + $0x8] sm:$0xff] %v2286
        %2289 = vst [vmem:[%s503 + $0x10] sm:$0xf] %v2268
        %2290 = vst [vmem:[%s503 + $0x18] sm:$0xf] %v2269
        %v2291 = vld [vmem:[%s6] sm:$0x3]
        %v2293 = vlaneseq
        %v2294 = vshrl.u32 %v2293, 7
        %v2295 = vsub.s32 0, %v2294
        %v2296 = vrot.slane %v2291, %v2295
        %v2297 = vlaneseq
        %v2298 = vshrl.u32 %v2297, 7
        %v2299 = vsub.s32 1, %v2298
        %v2300 = vrot.slane %v2291, %v2299
        %v2303 = vmul.f32 %v2285, %v2296
        %v2304 = vmul.f32 %v2286, %v2300
        %v2305 = vmul.f32 %v2268, %v2296
        %v2306 = vmul.f32 %v2269, %v2300
        %v2307 = vadd.f32 %v2303, %v2304
        %2308 = vadd.xlane.f32.xlu0 %v2307
        %v2309 = vpop.xlane.xlu0 %2308
        %v2310 = vsel %vm2284, %v2305, 0.0
        %v2311 = vsel %vm2284, %v2306, 0.0
        %v2312 = vadd.f32 %v2310, %v2311
        %2313 = vadd.xlane.f32.xlu0 %v2312
        %v2314 = vpop.xlane.xlu0 %2313
        %v2315 = vld [vmem:[#allocation14] sm:$0x1]
        %v2317 = vlaneseq
        %v2318 = vshrl.u32 %v2317, 7
        %v2319 = vsub.s32 0, %v2318
        %v2320 = vrot.slane %v2315, %v2319
        %v2322 = vmul.f32 %v2309, %v2320
        %v2323 = vmul.f32 %v2314, %v2320
        %v2324 = vld [vmem:[#allocation5] sm:$0x1]
        %v2326 = vlaneseq
        %v2327 = vshrl.u32 %v2326, 7
        %v2328 = vsub.s32 0, %v2327
        %v2329 = vrot.slane %v2324, %v2328
        %2330 = vset.pattern.permute.xlu0 0
        %2331 = vperm.xlu0 %2330, %v2329
        %v2332 = vpop.permute.xlu0 %2331
        %v2334 = vadd.f32 %v2322, %v2332
        %v2335 = vadd.f32 %v2323, %v2332
        %vm2336 = vcmask 97280
        %v2337 = vsel %vm2336, %v2334, -inf
        %2338 = vmax.xlane.f32.xlu0 %v2337
        %v2339 = vpop.xlane.xlu0 %2338
        %vm2340 = vcmask 93184
        %v2341 = vsel %vm2340, %v2335, -inf
        %2342 = vmax.xlane.f32.xlu0 %v2341
        %v2343 = vpop.xlane.xlu0 %2342
        %v2344 = vsub.f32 %v2334, %v2339
        %v2345 = vsub.f32 %v2335, %v2343
        %v2346 = vmul.f32 %v2344, 1.442695
        %v2347 = vpow.pop %v2346
        %v2348 = vmul.f32 %v2345, 1.442695
        %v2349 = vpow.pop %v2348
        %v2350 = vsel %vm2336, %v2347, 0.0
        %2351 = vadd.xlane.f32.xlu0 %v2350
        %v2352 = vpop.xlane.xlu0 %2351
        %v2353 = vsel %vm2340, %v2349, 0.0
        %2354 = vadd.xlane.f32.xlu0 %v2353
        %v2355 = vpop.xlane.xlu0 %2354
        %v2356 = vrcp.pop %v2352
        %v2357 = vrcp.pop %v2355
        %v2358 = vmul.f32 %v2347, %v2356
        %v2359 = vmul.f32 %v2349, %v2357
        %2360 = vst.msk [vmem:[%s508] sm:$0xff] %vm2336, %v2358
        %2361 = vst.msk [vmem:[%s508 + $0x8] sm:$0xf] %vm2340, %v2359
        %2362 = vxpose.xlu0.b32.start [1/16] %v2358, 128
        %2363 = vxpose.xlu0.b32.cont [2/16] %v2359, 128
        %2364 = vxpose.xlu0.b32.cont [3/16] 0.0, 128
        %2365 = vxpose.xlu0.b32.cont [4/16] 0.0, 128
        %2366 = vxpose.xlu0.b32.cont [5/16] 0.0, 128
        %2367 = vxpose.xlu0.b32.cont [6/16] 0.0, 128
        %2368 = vxpose.xlu0.b32.cont [7/16] 0.0, 128
        %2369 = vxpose.xlu0.b32.cont [8/16] 0.0, 128
        %2370 = vxpose.xlu0.b32.cont [9/16] 0.0, 128
        %2371 = vxpose.xlu0.b32.cont [10/16] 0.0, 128
        %2372 = vxpose.xlu0.b32.cont [11/16] 0.0, 128
        %2373 = vxpose.xlu0.b32.cont [12/16] 0.0, 128
        %2374 = vxpose.xlu0.b32.cont [13/16] 0.0, 128
        %2375 = vxpose.xlu0.b32.cont [14/16] 0.0, 128
        %2376 = vxpose.xlu0.b32.cont [15/16] 0.0, 128
        %2377 = vxpose.xlu0.b32.end [16/16] 0.0, 128
        %v2378 = vpop.trf.xlu0
        %v2379 = vpop.trf.xlu0
        %v2380 = vpop.trf.xlu0
        %v2381 = vpop.trf.xlu0
        %v2382 = vpop.trf.xlu0
        %v2383 = vpop.trf.xlu0
        %v2384 = vpop.trf.xlu0
        %v2385 = vpop.trf.xlu0
        %v2386 = vpop.trf.xlu0
        %v2387 = vpop.trf.xlu0
        %v2388 = vpop.trf.xlu0
        %v2389 = vpop.trf.xlu0
        %v2390 = vpop.trf.xlu0
        %v2391 = vpop.trf.xlu0
        %v2392 = vpop.trf.xlu0
        %v2393 = vpop.trf.xlu0
        %v2395 = vsel %vm2336, %v2378, 0
        %v2398 = vsel %vm2336, %v2379, 0
        %v2401 = vsel %vm2284, %v2268, 0
        %v2404 = vsel %vm2284, %v2269, 0
        %2406 = vmatprep.subr.mxu0 %v2286
        %2407 = vmatpush1.msra.mxu0 %v2285
        %2408 = vmatprep.subr.mxu0 %v2404
        %2409 = vmatpush1.msra.mxu0 %v2401
        %2410 = vmatprep.subr.mxu0 0.0
        %2411 = vmatpush1.msra.mxu0 0.0
        %2412 = vmatprep.subr.mxu0 0.0
        %2413 = vmatpush1.msra.mxu0 0.0
        %2414 = vmatprep.subr.mxu0 0.0
        %2415 = vmatpush1.msra.mxu0 0.0
        %2416 = vmatprep.subr.mxu0 0.0
        %2417 = vmatpush1.msra.mxu0 0.0
        %2418 = vmatprep.subr.mxu0 0.0
        %2419 = vmatpush1.msra.mxu0 0.0
        %2420 = vmatprep.subr.mxu0 0.0
        %2421 = vmatpush1.msra.mxu0 0.0
        %2422 = vmatprep.subr.mxu0 0.0
        %2423 = vmatpush1.msra.mxu0 0.0
        %2424 = vmatprep.subr.mxu0 0.0
        %2425 = vmatpush1.msra.mxu0 0.0
        %2426 = vmatprep.subr.mxu0 0.0
        %2427 = vmatpush1.msra.mxu0 0.0
        %2428 = vmatprep.subr.mxu0 0.0
        %2429 = vmatpush1.msra.mxu0 0.0
        %2430 = vmatprep.subr.mxu0 0.0
        %2431 = vmatpush1.msra.mxu0 0.0
        %2432 = vmatprep.subr.mxu0 0.0
        %2433 = vmatpush1.msra.mxu0 0.0
        %2434 = vmatprep.subr.mxu0 0.0
        %2435 = vmatpush1.msra.mxu0 0.0
        %2436 = vmatprep.subr.mxu0 0.0
        %2437 = vmatpush1.msra.mxu0 0.0
        %2438 = vmatprep.subr.mxu0 0.0
        %2439 = vmatpush1.msra.mxu0 0.0
        %2440 = vmatprep.subr.mxu0 0.0
        %2441 = vmatpush1.msra.mxu0 0.0
        %2442 = vmatprep.subr.mxu0 0.0
        %2443 = vmatpush1.msra.mxu0 0.0
        %2444 = vmatprep.subr.mxu0 0.0
        %2445 = vmatpush1.msra.mxu0 0.0
        %2446 = vmatprep.subr.mxu0 0.0
        %2447 = vmatpush1.msra.mxu0 0.0
        %2448 = vmatprep.subr.mxu0 0.0
        %2449 = vmatpush1.msra.mxu0 0.0
        %2450 = vmatprep.subr.mxu0 0.0
        %2451 = vmatpush1.msra.mxu0 0.0
        %2452 = vmatprep.subr.mxu0 0.0
        %2453 = vmatpush1.msra.mxu0 0.0
        %2454 = vmatprep.subr.mxu0 0.0
        %2455 = vmatpush1.msra.mxu0 0.0
        %2456 = vmatprep.subr.mxu0 0.0
        %2457 = vmatpush1.msra.mxu0 0.0
        %2458 = vmatprep.subr.mxu0 0.0
        %2459 = vmatpush1.msra.mxu0 0.0
        %2460 = vmatprep.subr.mxu0 0.0
        %2461 = vmatpush1.msra.mxu0 0.0
        %2462 = vmatprep.subr.mxu0 0.0
        %2463 = vmatpush1.msra.mxu0 0.0
        %2464 = vmatprep.subr.mxu0 0.0
        %2465 = vmatpush1.msra.mxu0 0.0
        %2466 = vmatprep.subr.mxu0 0.0
        %2467 = vmatpush1.msra.mxu0 0.0
        %2468 = vmatprep.subr.mxu0 0.0
        %2469 = vmatpush1.msra.mxu0 0.0
        %2470 = vmatprep.mubr.f32.mxu0 0.0
        %2471 = vmatmul.mubr.f32.gmra.mrb[0].mxu0 %v2395
        %v2472 = vpop.f32.mrb[0].mxu0
        %v2473 = vadd.f32 0.0, %v2472
        %v2474 = vpop.f32.mrb[0].mxu0
        %v2475 = vadd.f32 0.0, %v2474
        %2476 = vmatprep.mubr.f32.mxu0 0.0
        %2477 = vmatmul.mubr.f32.gmra.mrb[0].mxu0 %v2398
        %v2478 = vpop.f32.mrb[0].mxu0
        %v2479 = vadd.f32 0.0, %v2478
        %v2480 = vpop.f32.mrb[0].mxu0
        %v2481 = vadd.f32 0.0, %v2480
        %2482 = vdwg.mxu0
        %2483 = vst [vmem:[%s513] sm:$0xff] %v2473
        %2484 = vst [vmem:[%s513 + $0x8] sm:$0xff] %v2475
        %2485 = vst [vmem:[%s513 + $0x10] sm:$0xf] %v2479
        %2486 = vst [vmem:[%s513 + $0x18] sm:$0xf] %v2481
        %s2487 = sand.u32 %s234, 1
        %s2488 = scalar_lea.sflag [#allocation8], %s2487
        %s2489 = sand.u32 %s234, 1
        %s2490 = smul.addr %s2489, 32
        %s2491 = scalar_lea.vmem [#allocation15], %s2490
        %p2492 = scmp.lt.s32.totalorder %s32, 1
        %s2493 = scalar_select %p2492, %s32, 1
        %s2494 = smul.addr %s2493, 4
        %s2495 = smul.addr %s2494, 8
        %s2496 = scalar_lea.vmem %s10, %s2495
        %p2497 = scmp.lt.s32.totalorder %s32, 1
        %s2498 = scalar_select %p2497, %s32, 1
        %s2499 = smul.addr %s2498, 2
        %s2500 = smul.addr %s2499, 8
        %s2501 = scalar_lea.vmem %s11, %s2500
        %p2502 = scmp.lt.s32.totalorder %s32, 1
        %s2503 = scalar_select %p2502, %s32, 1
        %s2504 = smul.addr %s2503, 4
        %s2505 = smul.addr %s2504, 8
        %s2506 = scalar_lea.vmem %s12, %s2505
        // Predicated region
        $region77: #{somtp_forward.2} parent=55 // pred_check
          %p2507 = pneg %p244
        $region78: #{somtp_forward.2} parent=55 // pred_check_branch
          %2509 = sbr.rel (%p2507) target = $region80
        $region79: #{somtp_forward.2} parent=55 // pred_region
          %s2511 = ssub.s32 512, 512
          %2512 = vsyncadd %s2488, %s2511
          %s2513 = smul.addr %s32, 4
          %s2514 = smul.addr %s2513, 128
          %s2515 = scalar_lea.hbm %s9, %s2514
          %s2516 = sshll.u32 %s2491, 4
          %s2517 = int_to_ptr.vmem [resolvable:$true] %s2516
          %2522 = dma.vmem_to_hbm [thread:$0]  %s2517, 512, %s2515, %s2488, 256, 256, 16
        $region80: #{somtp_forward.2} parent=55 // pred_fallthru
          _
        // Predicated region
        $region81: #{somtp_forward.2} parent=55 // pred_check
          %p2523 = pneg %p270
        $region82: #{somtp_forward.2} parent=55 // pred_check_branch
          %2525 = sbr.rel (%p2523) target = $region84
        $region83: #{somtp_forward.2} parent=55 // pred_region
          _
        $region84: #{somtp_forward.2} parent=55 // pred_fallthru
          _
        // Predicated region
        $region85: #{somtp_forward.2} parent=55 // pred_check
          %p2526 = pneg %p296
        $region86: #{somtp_forward.2} parent=55 // pred_check_branch
          %2528 = sbr.rel (%p2526) target = $region88
        $region87: #{somtp_forward.2} parent=55 // pred_region
          _
        $region88: #{somtp_forward.2} parent=55 // pred_fallthru
          _
        // Predicated region
        $region89: #{somtp_forward.2} parent=55 // pred_check
          %p2529 = pneg %p322
        $region90: #{somtp_forward.2} parent=55 // pred_check_branch
          %2531 = sbr.rel (%p2529) target = $region92
        $region91: #{somtp_forward.2} parent=55 // pred_region
          _
        $region92: #{somtp_forward.2} parent=55 // pred_fallthru
          _
      $region56: #{somtp_forward.2} parent=5 // pred_fallthru
        _
      %p2532 = scmp.le.s32.totalorder 2, %s27
      // Predicated region
      $region93: #{somtp_forward.2} parent=5 // pred_check
        %p2533 = pneg %p2532
      $region94: #{somtp_forward.2} parent=5 // pred_check_branch
        %2535 = sbr.rel (%p2533) target = $region96
      $region95: #{somtp_forward.2} parent=5 // pred_region
        %s2536 = ssub.s32 %s27, 2
        // Predicated region
        $region97: #{somtp_forward.2} parent=95 // pred_check
          %p2537 = pneg %p250
        $region98: #{somtp_forward.2} parent=95 // pred_check_branch
          %2539 = sbr.rel (%p2537) target = $region100
        $region99: #{somtp_forward.2} parent=95 // pred_region
          %s2540 = sand.u32 %s235, 1
          %s2541 = scalar_lea.sflag [#allocation8], %s2540
          %s2542 = sand.u32 %s235, 1
          %s2543 = smul.addr %s2542, 32
          %s2544 = scalar_lea.vmem [#allocation15], %s2543
          %2545 = dma.done %s2541, 512
        $region100: #{somtp_forward.2} parent=95 // pred_fallthru
          _
        // Predicated region
        $region101: #{somtp_forward.2} parent=95 // pred_check
          %p2546 = pneg %p276
        $region102: #{somtp_forward.2} parent=95 // pred_check_branch
          %2548 = sbr.rel (%p2546) target = $region104
        $region103: #{somtp_forward.2} parent=95 // pred_region
          %p2549 = scmp.lt.s32.totalorder %s33, 1
          %s2550 = scalar_select %p2549, %s33, 1
          %s2551 = smul.addr %s2550, 4
          %s2552 = smul.addr %s2551, 8
          %s2553 = scalar_lea.vmem %s10, %s2552
        $region104: #{somtp_forward.2} parent=95 // pred_fallthru
          _
        // Predicated region
        $region105: #{somtp_forward.2} parent=95 // pred_check
          %p2554 = pneg %p302
        $region106: #{somtp_forward.2} parent=95 // pred_check_branch
          %2556 = sbr.rel (%p2554) target = $region108
        $region107: #{somtp_forward.2} parent=95 // pred_region
          %p2557 = scmp.lt.s32.totalorder %s33, 1
          %s2558 = scalar_select %p2557, %s33, 1
          %s2559 = smul.addr %s2558, 2
          %s2560 = smul.addr %s2559, 8
          %s2561 = scalar_lea.vmem %s11, %s2560
        $region108: #{somtp_forward.2} parent=95 // pred_fallthru
          _
        // Predicated region
        $region109: #{somtp_forward.2} parent=95 // pred_check
          %p2562 = pneg %p328
        $region110: #{somtp_forward.2} parent=95 // pred_check_branch
          %2564 = sbr.rel (%p2562) target = $region112
        $region111: #{somtp_forward.2} parent=95 // pred_region
          %p2565 = scmp.lt.s32.totalorder %s33, 1
          %s2566 = scalar_select %p2565, %s33, 1
          %s2567 = smul.addr %s2566, 4
          %s2568 = smul.addr %s2567, 8
          %s2569 = scalar_lea.vmem %s12, %s2568
        $region112: #{somtp_forward.2} parent=95 // pred_fallthru
          _
      $region96: #{somtp_forward.2} parent=5 // pred_fallthru
        _
    $region6: #{somtp_forward.2} parent=1 // loop_footer
      %s31 = sadd.s32 1, %s27
    $region7: #{somtp_forward.2} parent=1 // loop_footer_branch
      %26 = sbr.rel target = $region3
    $region8: #{somtp_forward.2} parent=1 // loop_exit
      _
    %2570 = vsyncpa [#allocation7], 1
    %s2571 = scalar_lea.sflag [#allocation7], 1
    %2572 = vsyncpa %s2571, 1
    %2573 = vsyncpa [#allocation10], 1
    %2574 = vsyncpa [#allocation13], 1
    %2575 = vsyncpa [#allocation8], 1
    %s2576 = scalar_lea.sflag [#allocation8], 1
    %2577 = vsyncpa %s2576, 1

// kernel: somtp_forward.3
$region0: #{somtp_forward.3}
  #allocation0 [shape = 'u32[]', space=smem, size = 0x4, offset = 0x4, fixed_abs, tag = 'smem constant byte address 0x4 - core index']
  #allocation1 [shape = 'u32[144,128]{1,0:T(1,128)}', space=vmem, size = 0x12000, scoped, tag = 'internal scratch']
  %s0 = inlined_call_operand.vmem [shape: f32[2,1024], index: 0, kind: input, shape index: {}]
  %s1 = inlined_call_operand.vmem [shape: bf16[1024,512], index: 1, kind: input, shape index: {}]
  %s2 = inlined_call_operand.vmem [shape: f32[1,512], index: 2, kind: input, shape index: {}]
  %s3 = inlined_call_operand.hbm [shape: bf16[512,1024], index: 3, kind: input, shape index: {}]
  %s4 = inlined_call_operand.vmem [shape: f32[1,1024], index: 4, kind: input, shape index: {}]
  %s5 = inlined_call_operand.vmem [shape: bf16[1024,4], index: 5, kind: input, shape index: {}]
  %s6 = inlined_call_operand.vmem [shape: f32[1,4], index: 6, kind: input, shape index: {}]
  %s7 = inlined_call_operand.hbm [shape: f32[2,4], index: 7, kind: output, shape index: {}]
  %s8 = sld [smem:[#allocation0]]
  $region42: #{somtp_forward.3} parent=0
    _
  %s10 = ssub.s32 1, %s8
  %s11 = scalar_select 0, %s10, %s8
  $region1: #{somtp_forward.3} parent=0
    #allocation2 [shape = 'u8[1048576]{0}', space=vmem, size = 0x100000, scoped, tag = 'input window, operand 3, single buffered']
    #allocation3 [shape = 's32[1]{0}', space=sflag, size = 0x4, scoped, tag = 'scoped memory for somtp_forward.3']
    #allocation4 [shape = 's32[1]{0}', space=sflag, size = 0x4, scoped, tag = 'scoped memory for somtp_forward.3']
    #allocation5 [shape = 'u8[1024]{0}', space=vmem, size = 0x400, scoped, tag = 'output window, operand 0, single buffered']
    %12 = vsyncpa [#allocation3], 0
    %13 = vsyncpa [#allocation4], 0
    // Predicated region
    $region2: #{somtp_forward.3} parent=1 // pred_check
      _
    $region3: #{somtp_forward.3} parent=1 // pred_check_branch
      %15 = sbr.rel (0) target = $region5
    $region4: #{somtp_forward.3} parent=1 // pred_region
      _
    $region5: #{somtp_forward.3} parent=1 // pred_fallthru
      _
    // Predicated region
    $region6: #{somtp_forward.3} parent=1 // pred_check
      _
    $region7: #{somtp_forward.3} parent=1 // pred_check_branch
      %17 = sbr.rel (0) target = $region9
    $region8: #{somtp_forward.3} parent=1 // pred_region
      _
    $region9: #{somtp_forward.3} parent=1 // pred_fallthru
      _
    // Predicated region
    $region10: #{somtp_forward.3} parent=1 // pred_check
      _
    $region11: #{somtp_forward.3} parent=1 // pred_check_branch
      %19 = sbr.rel (0) target = $region13
    $region12: #{somtp_forward.3} parent=1 // pred_region
      _
    $region13: #{somtp_forward.3} parent=1 // pred_fallthru
      _
    // Predicated region
    $region14: #{somtp_forward.3} parent=1 // pred_check
      _
    $region15: #{somtp_forward.3} parent=1 // pred_check_branch
      %21 = sbr.rel (0) target = $region17
    $region16: #{somtp_forward.3} parent=1 // pred_region
      %s23 = ssub.s32 32768, 32768
      %24 = vsyncadd [#allocation3], %s23
      %s25 = sshll.u32 [#allocation2], 4
      %s26 = int_to_ptr.vmem [resolvable:$true] %s25
      %31 = dma.hbm_to_vmem [thread:$0]  %s3, 32768, %s26, [#allocation3], 512, 512, 32
    $region17: #{somtp_forward.3} parent=1 // pred_fallthru
      _
    // Predicated region
    $region18: #{somtp_forward.3} parent=1 // pred_check
      _
    $region19: #{somtp_forward.3} parent=1 // pred_check_branch
      %33 = sbr.rel (0) target = $region21
    $region20: #{somtp_forward.3} parent=1 // pred_region
      _
    $region21: #{somtp_forward.3} parent=1 // pred_fallthru
      _
    // Predicated region
    $region22: #{somtp_forward.3} parent=1 // pred_check
      _
    $region23: #{somtp_forward.3} parent=1 // pred_check_branch
      %35 = sbr.rel (0) target = $region25
    $region24: #{somtp_forward.3} parent=1 // pred_region
      _
    $region25: #{somtp_forward.3} parent=1 // pred_fallthru
      _
    // Predicated region
    $region26: #{somtp_forward.3} parent=1 // pred_check
      _
    $region27: #{somtp_forward.3} parent=1 // pred_check_branch
      %37 = sbr.rel (0) target = $region29
    $region28: #{somtp_forward.3} parent=1 // pred_region
      _
    $region29: #{somtp_forward.3} parent=1 // pred_fallthru
      _
    // Predicated region
    $region30: #{somtp_forward.3} parent=1 // pred_check
      _
    $region31: #{somtp_forward.3} parent=1 // pred_check_branch
      %39 = sbr.rel (0) target = $region33
    $region32: #{somtp_forward.3} parent=1 // pred_region
      %40 = dma.done [#allocation3], 32768
    $region33: #{somtp_forward.3} parent=1 // pred_fallthru
      _
    %v42 = vld [vmem:[%s0] sm:$0xff]
    %v43 = vld [vmem:[%s0 + $0x8] sm:$0xff]
    %v46 = vcombine.high %v42, %v42
    %v48 = vunpack.c.l.s4 1983009808
    %v49 = vunpack.c.0.s8 %v48
    %v50 = vlaneseq
    %v51 = vshrl.u32 %v50, 7
    %v52 = vsub.s32 %v49, %v51
    %v53 = vrot.slane %v42, %v52
    %v55 = vunpack.c.l.s4 1983009808
    %v56 = vunpack.c.0.s8 %v55
    %v57 = vlaneseq
    %v58 = vshrl.u32 %v57, 7
    %v59 = vsub.s32 %v56, %v58
    %v60 = vrot.slane %v46, %v59
    %v61 = vcombine.high %v53, %v53
    %v62 = vcombine.high %v60, %v60
    %v63 = vcombine.high %v43, %v43
    %v65 = vunpack.c.l.s4 1983009808
    %v66 = vunpack.c.0.s8 %v65
    %v67 = vlaneseq
    %v68 = vshrl.u32 %v67, 7
    %v69 = vsub.s32 %v66, %v68
    %v70 = vrot.slane %v43, %v69
    %v72 = vunpack.c.l.s4 1983009808
    %v73 = vunpack.c.0.s8 %v72
    %v74 = vlaneseq
    %v75 = vshrl.u32 %v74, 7
    %v76 = vsub.s32 %v73, %v75
    %v77 = vrot.slane %v63, %v76
    %v78 = vcombine.high %v70, %v70
    %v79 = vcombine.high %v77, %v77
    %v88 = vpack.c.bf16 %v53, %v53
    %v89 = vpack.c.bf16 %v61, %v61
    %v90 = vpack.c.bf16 %v60, %v60
    %v91 = vpack.c.bf16 %v62, %v62
    %v92 = vpack.c.bf16 %v70, %v70
    %v93 = vpack.c.bf16 %v78, %v78
    %v94 = vpack.c.bf16 %v77, %v77
    %v95 = vpack.c.bf16 %v79, %v79
    %v96 = vld [vmem:[%s1] sm:$0xff]
    %v97 = vld [vmem:[%s1 + $0x8] sm:$0xff]
    %v98 = vld [vmem:[%s1 + $0x10] sm:$0xff]
    %v99 = vld [vmem:[%s1 + $0x18] sm:$0xff]
    %v100 = vld [vmem:[%s1 + $0x20] sm:$0xff]
    %v101 = vld [vmem:[%s1 + $0x28] sm:$0xff]
    %v102 = vld [vmem:[%s1 + $0x30] sm:$0xff]
    %v103 = vld [vmem:[%s1 + $0x38] sm:$0xff]
    %v104 = vld [vmem:[%s1 + $0x40] sm:$0xff]
    %v105 = vld [vmem:[%s1 + $0x48] sm:$0xff]
    %v106 = vld [vmem:[%s1 + $0x50] sm:$0xff]
    %v107 = vld [vmem:[%s1 + $0x58] sm:$0xff]
    %v108 = vld [vmem:[%s1 + $0x60] sm:$0xff]
    %v109 = vld [vmem:[%s1 + $0x68] sm:$0xff]
    %v110 = vld [vmem:[%s1 + $0x70] sm:$0xff]
    %v111 = vld [vmem:[%s1 + $0x78] sm:$0xff]
    %v112 = vld [vmem:[%s1 + $0x80] sm:$0xff]
    %v113 = vld [vmem:[%s1 + $0x88] sm:$0xff]
    %v114 = vld [vmem:[%s1 + $0x90] sm:$0xff]
    %v115 = vld [vmem:[%s1 + $0x98] sm:$0xff]
    %v116 = vld [vmem:[%s1 + $0xa0] sm:$0xff]
    %v117 = vld [vmem:[%s1 + $0xa8] sm:$0xff]
    %v118 = vld [vmem:[%s1 + $0xb0] sm:$0xff]
    %v119 = vld [vmem:[%s1 + $0xb8] sm:$0xff]
    %v120 = vld [vmem:[%s1 + $0xc0] sm:$0xff]
    %v121 = vld [vmem:[%s1 + $0xc8] sm:$0xff]
    %v122 = vld [vmem:[%s1 + $0xd0] sm:$0xff]
    %v123 = vld [vmem:[%s1 + $0xd8] sm:$0xff]
    %v124 = vld [vmem:[%s1 + $0xe0] sm:$0xff]
    %v125 = vld [vmem:[%s1 + $0xe8] sm:$0xff]
    %v126 = vld [vmem:[%s1 + $0xf0] sm:$0xff]
    %v127 = vld [vmem:[%s1 + $0xf8] sm:$0xff]
    %v128 = vld [vmem:[%s1 + $0x100] sm:$0xff]
    %v129 = vld [vmem:[%s1 + $0x108] sm:$0xff]
    %v130 = vld [vmem:[%s1 + $0x110] sm:$0xff]
    %v131 = vld [vmem:[%s1 + $0x118] sm:$0xff]
    %v132 = vld [vmem:[%s1 + $0x120] sm:$0xff]
    %v133 = vld [vmem:[%s1 + $0x128] sm:$0xff]
    %v134 = vld [vmem:[%s1 + $0x130] sm:$0xff]
    %v135 = vld [vmem:[%s1 + $0x138] sm:$0xff]
    %v136 = vld [vmem:[%s1 + $0x140] sm:$0xff]
    %v137 = vld [vmem:[%s1 + $0x148] sm:$0xff]
    %v138 = vld [vmem:[%s1 + $0x150] sm:$0xff]
    %v139 = vld [vmem:[%s1 + $0x158] sm:$0xff]
    %v140 = vld [vmem:[%s1 + $0x160] sm:$0xff]
    %v141 = vld [vmem:[%s1 + $0x168] sm:$0xff]
    %v142 = vld [vmem:[%s1 + $0x170] sm:$0xff]
    %v143 = vld [vmem:[%s1 + $0x178] sm:$0xff]
    %v144 = vld [vmem:[%s1 + $0x180] sm:$0xff]
    %v145 = vld [vmem:[%s1 + $0x188] sm:$0xff]
    %v146 = vld [vmem:[%s1 + $0x190] sm:$0xff]
    %v147 = vld [vmem:[%s1 + $0x198] sm:$0xff]
    %v148 = vld [vmem:[%s1 + $0x1a0] sm:$0xff]
    %v149 = vld [vmem:[%s1 + $0x1a8] sm:$0xff]
    %v150 = vld [vmem:[%s1 + $0x1b0] sm:$0xff]
    %v151 = vld [vmem:[%s1 + $0x1b8] sm:$0xff]
    %v152 = vld [vmem:[%s1 + $0x1c0] sm:$0xff]
    %v153 = vld [vmem:[%s1 + $0x1c8] sm:$0xff]
    %v154 = vld [vmem:[%s1 + $0x1d0] sm:$0xff]
    %v155 = vld [vmem:[%s1 + $0x1d8] sm:$0xff]
    %v156 = vld [vmem:[%s1 + $0x1e0] sm:$0xff]
    %v157 = vld [vmem:[%s1 + $0x1e8] sm:$0xff]
    %v158 = vld [vmem:[%s1 + $0x1f0] sm:$0xff]
    %v159 = vld [vmem:[%s1 + $0x1f8] sm:$0xff]
    %v160 = vld [vmem:[%s1 + $0x200] sm:$0xff]
    %v161 = vld [vmem:[%s1 + $0x208] sm:$0xff]
    %v162 = vld [vmem:[%s1 + $0x210] sm:$0xff]
    %v163 = vld [vmem:[%s1 + $0x218] sm:$0xff]
    %v164 = vld [vmem:[%s1 + $0x220] sm:$0xff]
    %v165 = vld [vmem:[%s1 + $0x228] sm:$0xff]
    %v166 = vld [vmem:[%s1 + $0x230] sm:$0xff]
    %v167 = vld [vmem:[%s1 + $0x238] sm:$0xff]
    %v168 = vld [vmem:[%s1 + $0x240] sm:$0xff]
    %v169 = vld [vmem:[%s1 + $0x248] sm:$0xff]
    %v170 = vld [vmem:[%s1 + $0x250] sm:$0xff]
    %v171 = vld [vmem:[%s1 + $0x258] sm:$0xff]
    %v172 = vld [vmem:[%s1 + $0x260] sm:$0xff]
    %v173 = vld [vmem:[%s1 + $0x268] sm:$0xff]
    %v174 = vld [vmem:[%s1 + $0x270] sm:$0xff]
    %v175 = vld [vmem:[%s1 + $0x278] sm:$0xff]
    %v176 = vld [vmem:[%s1 + $0x280] sm:$0xff]
    %v177 = vld [vmem:[%s1 + $0x288] sm:$0xff]
    %v178 = vld [vmem:[%s1 + $0x290] sm:$0xff]
    %v179 = vld [vmem:[%s1 + $0x298] sm:$0xff]
    %v180 = vld [vmem:[%s1 + $0x2a0] sm:$0xff]
    %v181 = vld [vmem:[%s1 + $0x2a8] sm:$0xff]
    %v182 = vld [vmem:[%s1 + $0x2b0] sm:$0xff]
    %v183 = vld [vmem:[%s1 + $0x2b8] sm:$0xff]
    %v184 = vld [vmem:[%s1 + $0x2c0] sm:$0xff]
    %v185 = vld [vmem:[%s1 + $0x2c8] sm:$0xff]
    %v186 = vld [vmem:[%s1 + $0x2d0] sm:$0xff]
    %v187 = vld [vmem:[%s1 + $0x2d8] sm:$0xff]
    %v188 = vld [vmem:[%s1 + $0x2e0] sm:$0xff]
    %v189 = vld [vmem:[%s1 + $0x2e8] sm:$0xff]
    %v190 = vld [vmem:[%s1 + $0x2f0] sm:$0xff]
    %v191 = vld [vmem:[%s1 + $0x2f8] sm:$0xff]
    %v192 = vld [vmem:[%s1 + $0x300] sm:$0xff]
    %v193 = vld [vmem:[%s1 + $0x308] sm:$0xff]
    %v194 = vld [vmem:[%s1 + $0x310] sm:$0xff]
    %v195 = vld [vmem:[%s1 + $0x318] sm:$0xff]
    %v196 = vld [vmem:[%s1 + $0x320] sm:$0xff]
    %v197 = vld [vmem:[%s1 + $0x328] sm:$0xff]
    %v198 = vld [vmem:[%s1 + $0x330] sm:$0xff]
    %v199 = vld [vmem:[%s1 + $0x338] sm:$0xff]
    %v200 = vld [vmem:[%s1 + $0x340] sm:$0xff]
    %v201 = vld [vmem:[%s1 + $0x348] sm:$0xff]
    %v202 = vld [vmem:[%s1 + $0x350] sm:$0xff]
    %v203 = vld [vmem:[%s1 + $0x358] sm:$0xff]
    %v204 = vld [vmem:[%s1 + $0x360] sm:$0xff]
    %v205 = vld [vmem:[%s1 + $0x368] sm:$0xff]
    %v206 = vld [vmem:[%s1 + $0x370] sm:$0xff]
    %v207 = vld [vmem:[%s1 + $0x378] sm:$0xff]
    %v208 = vld [vmem:[%s1 + $0x380] sm:$0xff]
    %v209 = vld [vmem:[%s1 + $0x388] sm:$0xff]
    %v210 = vld [vmem:[%s1 + $0x390] sm:$0xff]
    %v211 = vld [vmem:[%s1 + $0x398] sm:$0xff]
    %v212 = vld [vmem:[%s1 + $0x3a0] sm:$0xff]
    %v213 = vld [vmem:[%s1 + $0x3a8] sm:$0xff]
    %v214 = vld [vmem:[%s1 + $0x3b0] sm:$0xff]
    %v215 = vld [vmem:[%s1 + $0x3b8] sm:$0xff]
    %v216 = vld [vmem:[%s1 + $0x3c0] sm:$0xff]
    %v217 = vld [vmem:[%s1 + $0x3c8] sm:$0xff]
    %v218 = vld [vmem:[%s1 + $0x3d0] sm:$0xff]
    %v219 = vld [vmem:[%s1 + $0x3d8] sm:$0xff]
    %v220 = vld [vmem:[%s1 + $0x3e0] sm:$0xff]
    %v221 = vld [vmem:[%s1 + $0x3e8] sm:$0xff]
    %v222 = vld [vmem:[%s1 + $0x3f0] sm:$0xff]
    %v223 = vld [vmem:[%s1 + $0x3f8] sm:$0xff]
    %v224 = vld [vmem:[%s1 + $0x400] sm:$0xff]
    %v225 = vld [vmem:[%s1 + $0x408] sm:$0xff]
    %v226 = vld [vmem:[%s1 + $0x410] sm:$0xff]
    %v227 = vld [vmem:[%s1 + $0x418] sm:$0xff]
    %v228 = vld [vmem:[%s1 + $0x420] sm:$0xff]
    %v229 = vld [vmem:[%s1 + $0x428] sm:$0xff]
    %v230 = vld [vmem:[%s1 + $0x430] sm:$0xff]
    %v231 = vld [vmem:[%s1 + $0x438] sm:$0xff]
    %v232 = vld [vmem:[%s1 + $0x440] sm:$0xff]
    %v233 = vld [vmem:[%s1 + $0x448] sm:$0xff]
    %v234 = vld [vmem:[%s1 + $0x450] sm:$0xff]
    %v235 = vld [vmem:[%s1 + $0x458] sm:$0xff]
    %v236 = vld [vmem:[%s1 + $0x460] sm:$0xff]
    %v237 = vld [vmem:[%s1 + $0x468] sm:$0xff]
    %v238 = vld [vmem:[%s1 + $0x470] sm:$0xff]
    %v239 = vld [vmem:[%s1 + $0x478] sm:$0xff]
    %v240 = vld [vmem:[%s1 + $0x480] sm:$0xff]
    %v241 = vld [vmem:[%s1 + $0x488] sm:$0xff]
    %v242 = vld [vmem:[%s1 + $0x490] sm:$0xff]
    %v243 = vld [vmem:[%s1 + $0x498] sm:$0xff]
    %v244 = vld [vmem:[%s1 + $0x4a0] sm:$0xff]
    %v245 = vld [vmem:[%s1 + $0x4a8] sm:$0xff]
    %v246 = vld [vmem:[%s1 + $0x4b0] sm:$0xff]
    %v247 = vld [vmem:[%s1 + $0x4b8] sm:$0xff]
    %v248 = vld [vmem:[%s1 + $0x4c0] sm:$0xff]
    %v249 = vld [vmem:[%s1 + $0x4c8] sm:$0xff]
    %v250 = vld [vmem:[%s1 + $0x4d0] sm:$0xff]
    %v251 = vld [vmem:[%s1 + $0x4d8] sm:$0xff]
    %v252 = vld [vmem:[%s1 + $0x4e0] sm:$0xff]
    %v253 = vld [vmem:[%s1 + $0x4e8] sm:$0xff]
    %v254 = vld [vmem:[%s1 + $0x4f0] sm:$0xff]
    %v255 = vld [vmem:[%s1 + $0x4f8] sm:$0xff]
    %v256 = vld [vmem:[%s1 + $0x500] sm:$0xff]
    %v257 = vld [vmem:[%s1 + $0x508] sm:$0xff]
    %v258 = vld [vmem:[%s1 + $0x510] sm:$0xff]
    %v259 = vld [vmem:[%s1 + $0x518] sm:$0xff]
    %v260 = vld [vmem:[%s1 + $0x520] sm:$0xff]
    %v261 = vld [vmem:[%s1 + $0x528] sm:$0xff]
    %v262 = vld [vmem:[%s1 + $0x530] sm:$0xff]
    %v263 = vld [vmem:[%s1 + $0x538] sm:$0xff]
    %v264 = vld [vmem:[%s1 + $0x540] sm:$0xff]
    %v265 = vld [vmem:[%s1 + $0x548] sm:$0xff]
    %v266 = vld [vmem:[%s1 + $0x550] sm:$0xff]
    %v267 = vld [vmem:[%s1 + $0x558] sm:$0xff]
    %v268 = vld [vmem:[%s1 + $0x560] sm:$0xff]
    %v269 = vld [vmem:[%s1 + $0x568] sm:$0xff]
    %v270 = vld [vmem:[%s1 + $0x570] sm:$0xff]
    %v271 = vld [vmem:[%s1 + $0x578] sm:$0xff]
    %v272 = vld [vmem:[%s1 + $0x580] sm:$0xff]
    %v273 = vld [vmem:[%s1 + $0x588] sm:$0xff]
    %v274 = vld [vmem:[%s1 + $0x590] sm:$0xff]
    %v275 = vld [vmem:[%s1 + $0x598] sm:$0xff]
    %v276 = vld [vmem:[%s1 + $0x5a0] sm:$0xff]
    %v277 = vld [vmem:[%s1 + $0x5a8] sm:$0xff]
    %v278 = vld [vmem:[%s1 + $0x5b0] sm:$0xff]
    %v279 = vld [vmem:[%s1 + $0x5b8] sm:$0xff]
    %v280 = vld [vmem:[%s1 + $0x5c0] sm:$0xff]
    %v281 = vld [vmem:[%s1 + $0x5c8] sm:$0xff]
    %v282 = vld [vmem:[%s1 + $0x5d0] sm:$0xff]
    %v283 = vld [vmem:[%s1 + $0x5d8] sm:$0xff]
    %v284 = vld [vmem:[%s1 + $0x5e0] sm:$0xff]
    %v285 = vld [vmem:[%s1 + $0x5e8] sm:$0xff]
    %v286 = vld [vmem:[%s1 + $0x5f0] sm:$0xff]
    %v287 = vld [vmem:[%s1 + $0x5f8] sm:$0xff]
    %v288 = vld [vmem:[%s1 + $0x600] sm:$0xff]
    %v289 = vld [vmem:[%s1 + $0x608] sm:$0xff]
    %v290 = vld [vmem:[%s1 + $0x610] sm:$0xff]
    %v291 = vld [vmem:[%s1 + $0x618] sm:$0xff]
    %v292 = vld [vmem:[%s1 + $0x620] sm:$0xff]
    %v293 = vld [vmem:[%s1 + $0x628] sm:$0xff]
    %v294 = vld [vmem:[%s1 + $0x630] sm:$0xff]
    %v295 = vld [vmem:[%s1 + $0x638] sm:$0xff]
    %v296 = vld [vmem:[%s1 + $0x640] sm:$0xff]
    %v297 = vld [vmem:[%s1 + $0x648] sm:$0xff]
    %v298 = vld [vmem:[%s1 + $0x650] sm:$0xff]
    %v299 = vld [vmem:[%s1 + $0x658] sm:$0xff]
    %v300 = vld [vmem:[%s1 + $0x660] sm:$0xff]
    %v301 = vld [vmem:[%s1 + $0x668] sm:$0xff]
    %v302 = vld [vmem:[%s1 + $0x670] sm:$0xff]
    %v303 = vld [vmem:[%s1 + $0x678] sm:$0xff]
    %v304 = vld [vmem:[%s1 + $0x680] sm:$0xff]
    %v305 = vld [vmem:[%s1 + $0x688] sm:$0xff]
    %v306 = vld [vmem:[%s1 + $0x690] sm:$0xff]
    %v307 = vld [vmem:[%s1 + $0x698] sm:$0xff]
    %v308 = vld [vmem:[%s1 + $0x6a0] sm:$0xff]
    %v309 = vld [vmem:[%s1 + $0x6a8] sm:$0xff]
    %v310 = vld [vmem:[%s1 + $0x6b0] sm:$0xff]
    %v311 = vld [vmem:[%s1 + $0x6b8] sm:$0xff]
    %v312 = vld [vmem:[%s1 + $0x6c0] sm:$0xff]
    %v313 = vld [vmem:[%s1 + $0x6c8] sm:$0xff]
    %v314 = vld [vmem:[%s1 + $0x6d0] sm:$0xff]
    %v315 = vld [vmem:[%s1 + $0x6d8] sm:$0xff]
    %v316 = vld [vmem:[%s1 + $0x6e0] sm:$0xff]
    %v317 = vld [vmem:[%s1 + $0x6e8] sm:$0xff]
    %v318 = vld [vmem:[%s1 + $0x6f0] sm:$0xff]
    %v319 = vld [vmem:[%s1 + $0x6f8] sm:$0xff]
    %v320 = vld [vmem:[%s1 + $0x700] sm:$0xff]
    %v321 = vld [vmem:[%s1 + $0x708] sm:$0xff]
    %v322 = vld [vmem:[%s1 + $0x710] sm:$0xff]
    %v323 = vld [vmem:[%s1 + $0x718] sm:$0xff]
    %v324 = vld [vmem:[%s1 + $0x720] sm:$0xff]
    %v325 = vld [vmem:[%s1 + $0x728] sm:$0xff]
    %v326 = vld [vmem:[%s1 + $0x730] sm:$0xff]
    %v327 = vld [vmem:[%s1 + $0x738] sm:$0xff]
    %v328 = vld [vmem:[%s1 + $0x740] sm:$0xff]
    %v329 = vld [vmem:[%s1 + $0x748] sm:$0xff]
    %v330 = vld [vmem:[%s1 + $0x750] sm:$0xff]
    %v331 = vld [vmem:[%s1 + $0x758] sm:$0xff]
    %v332 = vld [vmem:[%s1 + $0x760] sm:$0xff]
    %v333 = vld [vmem:[%s1 + $0x768] sm:$0xff]
    %v334 = vld [vmem:[%s1 + $0x770] sm:$0xff]
    %v335 = vld [vmem:[%s1 + $0x778] sm:$0xff]
    %v336 = vld [vmem:[%s1 + $0x780] sm:$0xff]
    %v337 = vld [vmem:[%s1 + $0x788] sm:$0xff]
    %v338 = vld [vmem:[%s1 + $0x790] sm:$0xff]
    %v339 = vld [vmem:[%s1 + $0x798] sm:$0xff]
    %v340 = vld [vmem:[%s1 + $0x7a0] sm:$0xff]
    %v341 = vld [vmem:[%s1 + $0x7a8] sm:$0xff]
    %v342 = vld [vmem:[%s1 + $0x7b0] sm:$0xff]
    %v343 = vld [vmem:[%s1 + $0x7b8] sm:$0xff]
    %v344 = vld [vmem:[%s1 + $0x7c0] sm:$0xff]
    %v345 = vld [vmem:[%s1 + $0x7c8] sm:$0xff]
    %v346 = vld [vmem:[%s1 + $0x7d0] sm:$0xff]
    %v347 = vld [vmem:[%s1 + $0x7d8] sm:$0xff]
    %v348 = vld [vmem:[%s1 + $0x7e0] sm:$0xff]
    %v349 = vld [vmem:[%s1 + $0x7e8] sm:$0xff]
    %v350 = vld [vmem:[%s1 + $0x7f0] sm:$0xff]
    %v351 = vld [vmem:[%s1 + $0x7f8] sm:$0xff]
    %v352 = vld [vmem:[%s2] sm:$0xf]
    %v354 = vlaneseq
    %v355 = vshrl.u32 %v354, 7
    %v356 = vsub.s32 0, %v355
    %v357 = vrot.slane %v352, %v356
    %v358 = vlaneseq
    %v359 = vshrl.u32 %v358, 7
    %v360 = vsub.s32 1, %v359
    %v361 = vrot.slane %v352, %v360
    %v362 = vlaneseq
    %v363 = vshrl.u32 %v362, 7
    %v364 = vsub.s32 2, %v363
    %v365 = vrot.slane %v352, %v364
    %v366 = vlaneseq
    %v367 = vshrl.u32 %v366, 7
    %v368 = vsub.s32 3, %v367
    %v369 = vrot.slane %v352, %v368
    %v630 = vunpack.c.l.b16 %v96
    %v631 = vunpack.c.h.b16 %v96
    %v632 = vunpack.c.l.b16 %v97
    %v633 = vunpack.c.h.b16 %v97
    %v634 = vunpack.c.l.b16 %v98
    %v635 = vunpack.c.h.b16 %v98
    %v636 = vunpack.c.l.b16 %v99
    %v637 = vunpack.c.h.b16 %v99
    %v638 = vunpack.c.l.b16 %v100
    %v639 = vunpack.c.h.b16 %v100
    %v640 = vunpack.c.l.b16 %v101
    %v641 = vunpack.c.h.b16 %v101
    %v642 = vunpack.c.l.b16 %v102
    %v643 = vunpack.c.h.b16 %v102
    %v644 = vunpack.c.l.b16 %v103
    %v645 = vunpack.c.h.b16 %v103
    %v646 = vunpack.c.l.b16 %v104
    %v647 = vunpack.c.h.b16 %v104
    %v648 = vunpack.c.l.b16 %v105
    %v649 = vunpack.c.h.b16 %v105
    %v650 = vunpack.c.l.b16 %v106
    %v651 = vunpack.c.h.b16 %v106
    %v652 = vunpack.c.l.b16 %v107
    %v653 = vunpack.c.h.b16 %v107
    %v654 = vunpack.c.l.b16 %v108
    %v655 = vunpack.c.h.b16 %v108
    %v656 = vunpack.c.l.b16 %v109
    %v657 = vunpack.c.h.b16 %v109
    %v658 = vunpack.c.l.b16 %v110
    %v659 = vunpack.c.h.b16 %v110
    %v660 = vunpack.c.l.b16 %v111
    %v661 = vunpack.c.h.b16 %v111
    %v662 = vunpack.c.l.b16 %v112
    %v663 = vunpack.c.h.b16 %v112
    %v664 = vunpack.c.l.b16 %v113
    %v665 = vunpack.c.h.b16 %v113
    %v666 = vunpack.c.l.b16 %v114
    %v667 = vunpack.c.h.b16 %v114
    %v668 = vunpack.c.l.b16 %v115
    %v669 = vunpack.c.h.b16 %v115
    %v670 = vunpack.c.l.b16 %v116
    %v671 = vunpack.c.h.b16 %v116
    %v672 = vunpack.c.l.b16 %v117
    %v673 = vunpack.c.h.b16 %v117
    %v674 = vunpack.c.l.b16 %v118
    %v675 = vunpack.c.h.b16 %v118
    %v676 = vunpack.c.l.b16 %v119
    %v677 = vunpack.c.h.b16 %v119
    %v678 = vunpack.c.l.b16 %v120
    %v679 = vunpack.c.h.b16 %v120
    %v680 = vunpack.c.l.b16 %v121
    %v681 = vunpack.c.h.b16 %v121
    %v682 = vunpack.c.l.b16 %v122
    %v683 = vunpack.c.h.b16 %v122
    %v684 = vunpack.c.l.b16 %v123
    %v685 = vunpack.c.h.b16 %v123
    %v686 = vunpack.c.l.b16 %v124
    %v687 = vunpack.c.h.b16 %v124
    %v688 = vunpack.c.l.b16 %v125
    %v689 = vunpack.c.h.b16 %v125
    %v690 = vunpack.c.l.b16 %v126
    %v691 = vunpack.c.h.b16 %v126
    %v692 = vunpack.c.l.b16 %v127
    %v693 = vunpack.c.h.b16 %v127
    %v694 = vunpack.c.l.b16 %v128
    %v695 = vunpack.c.h.b16 %v128
    %v696 = vunpack.c.l.b16 %v129
    %v697 = vunpack.c.h.b16 %v129
    %v698 = vunpack.c.l.b16 %v130
    %v699 = vunpack.c.h.b16 %v130
    %v700 = vunpack.c.l.b16 %v131
    %v701 = vunpack.c.h.b16 %v131
    %v702 = vunpack.c.l.b16 %v132
    %v703 = vunpack.c.h.b16 %v132
    %v704 = vunpack.c.l.b16 %v133
    %v705 = vunpack.c.h.b16 %v133
    %v706 = vunpack.c.l.b16 %v134
    %v707 = vunpack.c.h.b16 %v134
    %v708 = vunpack.c.l.b16 %v135
    %v709 = vunpack.c.h.b16 %v135
    %v710 = vunpack.c.l.b16 %v136
    %v711 = vunpack.c.h.b16 %v136
    %v712 = vunpack.c.l.b16 %v137
    %v713 = vunpack.c.h.b16 %v137
    %v714 = vunpack.c.l.b16 %v138
    %v715 = vunpack.c.h.b16 %v138
    %v716 = vunpack.c.l.b16 %v139
    %v717 = vunpack.c.h.b16 %v139
    %v718 = vunpack.c.l.b16 %v140
    %v719 = vunpack.c.h.b16 %v140
    %v720 = vunpack.c.l.b16 %v141
    %v721 = vunpack.c.h.b16 %v141
    %v722 = vunpack.c.l.b16 %v142
    %v723 = vunpack.c.h.b16 %v142
    %v724 = vunpack.c.l.b16 %v143
    %v725 = vunpack.c.h.b16 %v143
    %v726 = vunpack.c.l.b16 %v144
    %v727 = vunpack.c.h.b16 %v144
    %v728 = vunpack.c.l.b16 %v145
    %v729 = vunpack.c.h.b16 %v145
    %v730 = vunpack.c.l.b16 %v146
    %v731 = vunpack.c.h.b16 %v146
    %v732 = vunpack.c.l.b16 %v147
    %v733 = vunpack.c.h.b16 %v147
    %v734 = vunpack.c.l.b16 %v148
    %v735 = vunpack.c.h.b16 %v148
    %v736 = vunpack.c.l.b16 %v149
    %v737 = vunpack.c.h.b16 %v149
    %v738 = vunpack.c.l.b16 %v150
    %v739 = vunpack.c.h.b16 %v150
    %v740 = vunpack.c.l.b16 %v151
    %v741 = vunpack.c.h.b16 %v151
    %v742 = vunpack.c.l.b16 %v152
    %v743 = vunpack.c.h.b16 %v152
    %v744 = vunpack.c.l.b16 %v153
    %v745 = vunpack.c.h.b16 %v153
    %v746 = vunpack.c.l.b16 %v154
    %v747 = vunpack.c.h.b16 %v154
    %v748 = vunpack.c.l.b16 %v155
    %v749 = vunpack.c.h.b16 %v155
    %v750 = vunpack.c.l.b16 %v156
    %v751 = vunpack.c.h.b16 %v156
    %v752 = vunpack.c.l.b16 %v157
    %v753 = vunpack.c.h.b16 %v157
    %v754 = vunpack.c.l.b16 %v158
    %v755 = vunpack.c.h.b16 %v158
    %v756 = vunpack.c.l.b16 %v159
    %v757 = vunpack.c.h.b16 %v159
    %v758 = vunpack.c.l.b16 %v160
    %v759 = vunpack.c.h.b16 %v160
    %v760 = vunpack.c.l.b16 %v161
    %v761 = vunpack.c.h.b16 %v161
    %v762 = vunpack.c.l.b16 %v162
    %v763 = vunpack.c.h.b16 %v162
    %v764 = vunpack.c.l.b16 %v163
    %v765 = vunpack.c.h.b16 %v163
    %v766 = vunpack.c.l.b16 %v164
    %v767 = vunpack.c.h.b16 %v164
    %v768 = vunpack.c.l.b16 %v165
    %v769 = vunpack.c.h.b16 %v165
    %v770 = vunpack.c.l.b16 %v166
    %v771 = vunpack.c.h.b16 %v166
    %v772 = vunpack.c.l.b16 %v167
    %v773 = vunpack.c.h.b16 %v167
    %v774 = vunpack.c.l.b16 %v168
    %v775 = vunpack.c.h.b16 %v168
    %v776 = vunpack.c.l.b16 %v169
    %v777 = vunpack.c.h.b16 %v169
    %v778 = vunpack.c.l.b16 %v170
    %v779 = vunpack.c.h.b16 %v170
    %v780 = vunpack.c.l.b16 %v171
    %v781 = vunpack.c.h.b16 %v171
    %v782 = vunpack.c.l.b16 %v172
    %v783 = vunpack.c.h.b16 %v172
    %v784 = vunpack.c.l.b16 %v173
    %v785 = vunpack.c.h.b16 %v173
    %v786 = vunpack.c.l.b16 %v174
    %v787 = vunpack.c.h.b16 %v174
    %v788 = vunpack.c.l.b16 %v175
    %v789 = vunpack.c.h.b16 %v175
    %v790 = vunpack.c.l.b16 %v176
    %v791 = vunpack.c.h.b16 %v176
    %v792 = vunpack.c.l.b16 %v177
    %v793 = vunpack.c.h.b16 %v177
    %v794 = vunpack.c.l.b16 %v178
    %v795 = vunpack.c.h.b16 %v178
    %v796 = vunpack.c.l.b16 %v179
    %v797 = vunpack.c.h.b16 %v179
    %v798 = vunpack.c.l.b16 %v180
    %v799 = vunpack.c.h.b16 %v180
    %v800 = vunpack.c.l.b16 %v181
    %v801 = vunpack.c.h.b16 %v181
    %v802 = vunpack.c.l.b16 %v182
    %v803 = vunpack.c.h.b16 %v182
    %v804 = vunpack.c.l.b16 %v183
    %v805 = vunpack.c.h.b16 %v183
    %v806 = vunpack.c.l.b16 %v184
    %v807 = vunpack.c.h.b16 %v184
    %v808 = vunpack.c.l.b16 %v185
    %v809 = vunpack.c.h.b16 %v185
    %v810 = vunpack.c.l.b16 %v186
    %v811 = vunpack.c.h.b16 %v186
    %v812 = vunpack.c.l.b16 %v187
    %v813 = vunpack.c.h.b16 %v187
    %v814 = vunpack.c.l.b16 %v188
    %v815 = vunpack.c.h.b16 %v188
    %v816 = vunpack.c.l.b16 %v189
    %v817 = vunpack.c.h.b16 %v189
    %v818 = vunpack.c.l.b16 %v190
    %v819 = vunpack.c.h.b16 %v190
    %v820 = vunpack.c.l.b16 %v191
    %v821 = vunpack.c.h.b16 %v191
    %v822 = vunpack.c.l.b16 %v192
    %v823 = vunpack.c.h.b16 %v192
    %v824 = vunpack.c.l.b16 %v193
    %v825 = vunpack.c.h.b16 %v193
    %v826 = vunpack.c.l.b16 %v194
    %v827 = vunpack.c.h.b16 %v194
    %v828 = vunpack.c.l.b16 %v195
    %v829 = vunpack.c.h.b16 %v195
    %v830 = vunpack.c.l.b16 %v196
    %v831 = vunpack.c.h.b16 %v196
    %v832 = vunpack.c.l.b16 %v197
    %v833 = vunpack.c.h.b16 %v197
    %v834 = vunpack.c.l.b16 %v198
    %v835 = vunpack.c.h.b16 %v198
    %v836 = vunpack.c.l.b16 %v199
    %v837 = vunpack.c.h.b16 %v199
    %v838 = vunpack.c.l.b16 %v200
    %v839 = vunpack.c.h.b16 %v200
    %v840 = vunpack.c.l.b16 %v201
    %v841 = vunpack.c.h.b16 %v201
    %v842 = vunpack.c.l.b16 %v202
    %v843 = vunpack.c.h.b16 %v202
    %v844 = vunpack.c.l.b16 %v203
    %v845 = vunpack.c.h.b16 %v203
    %v846 = vunpack.c.l.b16 %v204
    %v847 = vunpack.c.h.b16 %v204
    %v848 = vunpack.c.l.b16 %v205
    %v849 = vunpack.c.h.b16 %v205
    %v850 = vunpack.c.l.b16 %v206
    %v851 = vunpack.c.h.b16 %v206
    %v852 = vunpack.c.l.b16 %v207
    %v853 = vunpack.c.h.b16 %v207
    %v854 = vunpack.c.l.b16 %v208
    %v855 = vunpack.c.h.b16 %v208
    %v856 = vunpack.c.l.b16 %v209
    %v857 = vunpack.c.h.b16 %v209
    %v858 = vunpack.c.l.b16 %v210
    %v859 = vunpack.c.h.b16 %v210
    %v860 = vunpack.c.l.b16 %v211
    %v861 = vunpack.c.h.b16 %v211
    %v862 = vunpack.c.l.b16 %v212
    %v863 = vunpack.c.h.b16 %v212
    %v864 = vunpack.c.l.b16 %v213
    %v865 = vunpack.c.h.b16 %v213
    %v866 = vunpack.c.l.b16 %v214
    %v867 = vunpack.c.h.b16 %v214
    %v868 = vunpack.c.l.b16 %v215
    %v869 = vunpack.c.h.b16 %v215
    %v870 = vunpack.c.l.b16 %v216
    %v871 = vunpack.c.h.b16 %v216
    %v872 = vunpack.c.l.b16 %v217
    %v873 = vunpack.c.h.b16 %v217
    %v874 = vunpack.c.l.b16 %v218
    %v875 = vunpack.c.h.b16 %v218
    %v876 = vunpack.c.l.b16 %v219
    %v877 = vunpack.c.h.b16 %v219
    %v878 = vunpack.c.l.b16 %v220
    %v879 = vunpack.c.h.b16 %v220
    %v880 = vunpack.c.l.b16 %v221
    %v881 = vunpack.c.h.b16 %v221
    %v882 = vunpack.c.l.b16 %v222
    %v883 = vunpack.c.h.b16 %v222
    %v884 = vunpack.c.l.b16 %v223
    %v885 = vunpack.c.h.b16 %v223
    %v886 = vunpack.c.l.b16 %v224
    %v887 = vunpack.c.h.b16 %v224
    %v888 = vunpack.c.l.b16 %v225
    %v889 = vunpack.c.h.b16 %v225
    %v890 = vunpack.c.l.b16 %v226
    %v891 = vunpack.c.h.b16 %v226
    %v892 = vunpack.c.l.b16 %v227
    %v893 = vunpack.c.h.b16 %v227
    %v894 = vunpack.c.l.b16 %v228
    %v895 = vunpack.c.h.b16 %v228
    %v896 = vunpack.c.l.b16 %v229
    %v897 = vunpack.c.h.b16 %v229
    %v898 = vunpack.c.l.b16 %v230
    %v899 = vunpack.c.h.b16 %v230
    %v900 = vunpack.c.l.b16 %v231
    %v901 = vunpack.c.h.b16 %v231
    %v902 = vunpack.c.l.b16 %v232
    %v903 = vunpack.c.h.b16 %v232
    %v904 = vunpack.c.l.b16 %v233
    %v905 = vunpack.c.h.b16 %v233
    %v906 = vunpack.c.l.b16 %v234
    %v907 = vunpack.c.h.b16 %v234
    %v908 = vunpack.c.l.b16 %v235
    %v909 = vunpack.c.h.b16 %v235
    %v910 = vunpack.c.l.b16 %v236
    %v911 = vunpack.c.h.b16 %v236
    %v912 = vunpack.c.l.b16 %v237
    %v913 = vunpack.c.h.b16 %v237
    %v914 = vunpack.c.l.b16 %v238
    %v915 = vunpack.c.h.b16 %v238
    %v916 = vunpack.c.l.b16 %v239
    %v917 = vunpack.c.h.b16 %v239
    %v918 = vunpack.c.l.b16 %v240
    %v919 = vunpack.c.h.b16 %v240
    %v920 = vunpack.c.l.b16 %v241
    %v921 = vunpack.c.h.b16 %v241
    %v922 = vunpack.c.l.b16 %v242
    %v923 = vunpack.c.h.b16 %v242
    %v924 = vunpack.c.l.b16 %v243
    %v925 = vunpack.c.h.b16 %v243
    %v926 = vunpack.c.l.b16 %v244
    %v927 = vunpack.c.h.b16 %v244
    %v928 = vunpack.c.l.b16 %v245
    %v929 = vunpack.c.h.b16 %v245
    %v930 = vunpack.c.l.b16 %v246
    %v931 = vunpack.c.h.b16 %v246
    %v932 = vunpack.c.l.b16 %v247
    %v933 = vunpack.c.h.b16 %v247
    %v934 = vunpack.c.l.b16 %v248
    %v935 = vunpack.c.h.b16 %v248
    %v936 = vunpack.c.l.b16 %v249
    %v937 = vunpack.c.h.b16 %v249
    %v938 = vunpack.c.l.b16 %v250
    %v939 = vunpack.c.h.b16 %v250
    %v940 = vunpack.c.l.b16 %v251
    %v941 = vunpack.c.h.b16 %v251
    %v942 = vunpack.c.l.b16 %v252
    %v943 = vunpack.c.h.b16 %v252
    %v944 = vunpack.c.l.b16 %v253
    %v945 = vunpack.c.h.b16 %v253
    %v946 = vunpack.c.l.b16 %v254
    %v947 = vunpack.c.h.b16 %v254
    %v948 = vunpack.c.l.b16 %v255
    %v949 = vunpack.c.h.b16 %v255
    %v950 = vunpack.c.l.b16 %v256
    %v951 = vunpack.c.h.b16 %v256
    %v952 = vunpack.c.l.b16 %v257
    %v953 = vunpack.c.h.b16 %v257
    %v954 = vunpack.c.l.b16 %v258
    %v955 = vunpack.c.h.b16 %v258
    %v956 = vunpack.c.l.b16 %v259
    %v957 = vunpack.c.h.b16 %v259
    %v958 = vunpack.c.l.b16 %v260
    %v959 = vunpack.c.h.b16 %v260
    %v960 = vunpack.c.l.b16 %v261
    %v961 = vunpack.c.h.b16 %v261
    %v962 = vunpack.c.l.b16 %v262
    %v963 = vunpack.c.h.b16 %v262
    %v964 = vunpack.c.l.b16 %v263
    %v965 = vunpack.c.h.b16 %v263
    %v966 = vunpack.c.l.b16 %v264
    %v967 = vunpack.c.h.b16 %v264
    %v968 = vunpack.c.l.b16 %v265
    %v969 = vunpack.c.h.b16 %v265
    %v970 = vunpack.c.l.b16 %v266
    %v971 = vunpack.c.h.b16 %v266
    %v972 = vunpack.c.l.b16 %v267
    %v973 = vunpack.c.h.b16 %v267
    %v974 = vunpack.c.l.b16 %v268
    %v975 = vunpack.c.h.b16 %v268
    %v976 = vunpack.c.l.b16 %v269
    %v977 = vunpack.c.h.b16 %v269
    %v978 = vunpack.c.l.b16 %v270
    %v979 = vunpack.c.h.b16 %v270
    %v980 = vunpack.c.l.b16 %v271
    %v981 = vunpack.c.h.b16 %v271
    %v982 = vunpack.c.l.b16 %v272
    %v983 = vunpack.c.h.b16 %v272
    %v984 = vunpack.c.l.b16 %v273
    %v985 = vunpack.c.h.b16 %v273
    %v986 = vunpack.c.l.b16 %v274
    %v987 = vunpack.c.h.b16 %v274
    %v988 = vunpack.c.l.b16 %v275
    %v989 = vunpack.c.h.b16 %v275
    %v990 = vunpack.c.l.b16 %v276
    %v991 = vunpack.c.h.b16 %v276
    %v992 = vunpack.c.l.b16 %v277
    %v993 = vunpack.c.h.b16 %v277
    %v994 = vunpack.c.l.b16 %v278
    %v995 = vunpack.c.h.b16 %v278
    %v996 = vunpack.c.l.b16 %v279
    %v997 = vunpack.c.h.b16 %v279
    %v998 = vunpack.c.l.b16 %v280
    %v999 = vunpack.c.h.b16 %v280
    %v1000 = vunpack.c.l.b16 %v281
    %v1001 = vunpack.c.h.b16 %v281
    %v1002 = vunpack.c.l.b16 %v282
    %v1003 = vunpack.c.h.b16 %v282
    %v1004 = vunpack.c.l.b16 %v283
    %v1005 = vunpack.c.h.b16 %v283
    %v1006 = vunpack.c.l.b16 %v284
    %v1007 = vunpack.c.h.b16 %v284
    %v1008 = vunpack.c.l.b16 %v285
    %v1009 = vunpack.c.h.b16 %v285
    %v1010 = vunpack.c.l.b16 %v286
    %v1011 = vunpack.c.h.b16 %v286
    %v1012 = vunpack.c.l.b16 %v287
    %v1013 = vunpack.c.h.b16 %v287
    %v1014 = vunpack.c.l.b16 %v288
    %v1015 = vunpack.c.h.b16 %v288
    %v1016 = vunpack.c.l.b16 %v289
    %v1017 = vunpack.c.h.b16 %v289
    %v1018 = vunpack.c.l.b16 %v290
    %v1019 = vunpack.c.h.b16 %v290
    %v1020 = vunpack.c.l.b16 %v291
    %v1021 = vunpack.c.h.b16 %v291
    %v1022 = vunpack.c.l.b16 %v292
    %v1023 = vunpack.c.h.b16 %v292
    %v1024 = vunpack.c.l.b16 %v293
    %v1025 = vunpack.c.h.b16 %v293
    %v1026 = vunpack.c.l.b16 %v294
    %v1027 = vunpack.c.h.b16 %v294
    %v1028 = vunpack.c.l.b16 %v295
    %v1029 = vunpack.c.h.b16 %v295
    %v1030 = vunpack.c.l.b16 %v296
    %v1031 = vunpack.c.h.b16 %v296
    %v1032 = vunpack.c.l.b16 %v297
    %v1033 = vunpack.c.h.b16 %v297
    %v1034 = vunpack.c.l.b16 %v298
    %v1035 = vunpack.c.h.b16 %v298
    %v1036 = vunpack.c.l.b16 %v299
    %v1037 = vunpack.c.h.b16 %v299
    %v1038 = vunpack.c.l.b16 %v300
    %v1039 = vunpack.c.h.b16 %v300
    %v1040 = vunpack.c.l.b16 %v301
    %v1041 = vunpack.c.h.b16 %v301
    %v1042 = vunpack.c.l.b16 %v302
    %v1043 = vunpack.c.h.b16 %v302
    %v1044 = vunpack.c.l.b16 %v303
    %v1045 = vunpack.c.h.b16 %v303
    %v1046 = vunpack.c.l.b16 %v304
    %v1047 = vunpack.c.h.b16 %v304
    %v1048 = vunpack.c.l.b16 %v305
    %v1049 = vunpack.c.h.b16 %v305
    %v1050 = vunpack.c.l.b16 %v306
    %v1051 = vunpack.c.h.b16 %v306
    %v1052 = vunpack.c.l.b16 %v307
    %v1053 = vunpack.c.h.b16 %v307
    %v1054 = vunpack.c.l.b16 %v308
    %v1055 = vunpack.c.h.b16 %v308
    %v1056 = vunpack.c.l.b16 %v309
    %v1057 = vunpack.c.h.b16 %v309
    %v1058 = vunpack.c.l.b16 %v310
    %v1059 = vunpack.c.h.b16 %v310
    %v1060 = vunpack.c.l.b16 %v311
    %v1061 = vunpack.c.h.b16 %v311
    %v1062 = vunpack.c.l.b16 %v312
    %v1063 = vunpack.c.h.b16 %v312
    %v1064 = vunpack.c.l.b16 %v313
    %v1065 = vunpack.c.h.b16 %v313
    %v1066 = vunpack.c.l.b16 %v314
    %v1067 = vunpack.c.h.b16 %v314
    %v1068 = vunpack.c.l.b16 %v315
    %v1069 = vunpack.c.h.b16 %v315
    %v1070 = vunpack.c.l.b16 %v316
    %v1071 = vunpack.c.h.b16 %v316
    %v1072 = vunpack.c.l.b16 %v317
    %v1073 = vunpack.c.h.b16 %v317
    %v1074 = vunpack.c.l.b16 %v318
    %v1075 = vunpack.c.h.b16 %v318
    %v1076 = vunpack.c.l.b16 %v319
    %v1077 = vunpack.c.h.b16 %v319
    %v1078 = vunpack.c.l.b16 %v320
    %v1079 = vunpack.c.h.b16 %v320
    %v1080 = vunpack.c.l.b16 %v321
    %v1081 = vunpack.c.h.b16 %v321
    %v1082 = vunpack.c.l.b16 %v322
    %v1083 = vunpack.c.h.b16 %v322
    %v1084 = vunpack.c.l.b16 %v323
    %v1085 = vunpack.c.h.b16 %v323
    %v1086 = vunpack.c.l.b16 %v324
    %v1087 = vunpack.c.h.b16 %v324
    %v1088 = vunpack.c.l.b16 %v325
    %v1089 = vunpack.c.h.b16 %v325
    %v1090 = vunpack.c.l.b16 %v326
    %v1091 = vunpack.c.h.b16 %v326
    %v1092 = vunpack.c.l.b16 %v327
    %v1093 = vunpack.c.h.b16 %v327
    %v1094 = vunpack.c.l.b16 %v328
    %v1095 = vunpack.c.h.b16 %v328
    %v1096 = vunpack.c.l.b16 %v329
    %v1097 = vunpack.c.h.b16 %v329
    %v1098 = vunpack.c.l.b16 %v330
    %v1099 = vunpack.c.h.b16 %v330
    %v1100 = vunpack.c.l.b16 %v331
    %v1101 = vunpack.c.h.b16 %v331
    %v1102 = vunpack.c.l.b16 %v332
    %v1103 = vunpack.c.h.b16 %v332
    %v1104 = vunpack.c.l.b16 %v333
    %v1105 = vunpack.c.h.b16 %v333
    %v1106 = vunpack.c.l.b16 %v334
    %v1107 = vunpack.c.h.b16 %v334
    %v1108 = vunpack.c.l.b16 %v335
    %v1109 = vunpack.c.h.b16 %v335
    %v1110 = vunpack.c.l.b16 %v336
    %v1111 = vunpack.c.h.b16 %v336
    %v1112 = vunpack.c.l.b16 %v337
    %v1113 = vunpack.c.h.b16 %v337
    %v1114 = vunpack.c.l.b16 %v338
    %v1115 = vunpack.c.h.b16 %v338
    %v1116 = vunpack.c.l.b16 %v339
    %v1117 = vunpack.c.h.b16 %v339
    %v1118 = vunpack.c.l.b16 %v340
    %v1119 = vunpack.c.h.b16 %v340
    %v1120 = vunpack.c.l.b16 %v341
    %v1121 = vunpack.c.h.b16 %v341
    %v1122 = vunpack.c.l.b16 %v342
    %v1123 = vunpack.c.h.b16 %v342
    %v1124 = vunpack.c.l.b16 %v343
    %v1125 = vunpack.c.h.b16 %v343
    %v1126 = vunpack.c.l.b16 %v344
    %v1127 = vunpack.c.h.b16 %v344
    %v1128 = vunpack.c.l.b16 %v345
    %v1129 = vunpack.c.h.b16 %v345
    %v1130 = vunpack.c.l.b16 %v346
    %v1131 = vunpack.c.h.b16 %v346
    %v1132 = vunpack.c.l.b16 %v347
    %v1133 = vunpack.c.h.b16 %v347
    %v1134 = vunpack.c.l.b16 %v348
    %v1135 = vunpack.c.h.b16 %v348
    %v1136 = vunpack.c.l.b16 %v349
    %v1137 = vunpack.c.h.b16 %v349
    %v1138 = vunpack.c.l.b16 %v350
    %v1139 = vunpack.c.h.b16 %v350
    %v1140 = vunpack.c.l.b16 %v351
    %v1141 = vunpack.c.h.b16 %v351
    %v1142 = vpack.c.b16 %v634, %v630
    %v1143 = vpack.c.b16 %v635, %v631
    %v1144 = vpack.c.b16 %v636, %v632
    %v1145 = vpack.c.b16 %v637, %v633
    %v1146 = vpack.c.b16 %v642, %v638
    %v1147 = vpack.c.b16 %v643, %v639
    %v1148 = vpack.c.b16 %v644, %v640
    %v1149 = vpack.c.b16 %v645, %v641
    %v1150 = vpack.c.b16 %v650, %v646
    %v1151 = vpack.c.b16 %v651, %v647
    %v1152 = vpack.c.b16 %v652, %v648
    %v1153 = vpack.c.b16 %v653, %v649
    %v1154 = vpack.c.b16 %v658, %v654
    %v1155 = vpack.c.b16 %v659, %v655
    %v1156 = vpack.c.b16 %v660, %v656
    %v1157 = vpack.c.b16 %v661, %v657
    %v1158 = vpack.c.b16 %v666, %v662
    %v1159 = vpack.c.b16 %v667, %v663
    %v1160 = vpack.c.b16 %v668, %v664
    %v1161 = vpack.c.b16 %v669, %v665
    %v1162 = vpack.c.b16 %v674, %v670
    %v1163 = vpack.c.b16 %v675, %v671
    %v1164 = vpack.c.b16 %v676, %v672
    %v1165 = vpack.c.b16 %v677, %v673
    %v1166 = vpack.c.b16 %v682, %v678
    %v1167 = vpack.c.b16 %v683, %v679
    %v1168 = vpack.c.b16 %v684, %v680
    %v1169 = vpack.c.b16 %v685, %v681
    %v1170 = vpack.c.b16 %v690, %v686
    %v1171 = vpack.c.b16 %v691, %v687
    %v1172 = vpack.c.b16 %v692, %v688
    %v1173 = vpack.c.b16 %v693, %v689
    %v1174 = vpack.c.b16 %v698, %v694
    %v1175 = vpack.c.b16 %v699, %v695
    %v1176 = vpack.c.b16 %v700, %v696
    %v1177 = vpack.c.b16 %v701, %v697
    %v1178 = vpack.c.b16 %v706, %v702
    %v1179 = vpack.c.b16 %v707, %v703
    %v1180 = vpack.c.b16 %v708, %v704
    %v1181 = vpack.c.b16 %v709, %v705
    %v1182 = vpack.c.b16 %v714, %v710
    %v1183 = vpack.c.b16 %v715, %v711
    %v1184 = vpack.c.b16 %v716, %v712
    %v1185 = vpack.c.b16 %v717, %v713
    %v1186 = vpack.c.b16 %v722, %v718
    %v1187 = vpack.c.b16 %v723, %v719
    %v1188 = vpack.c.b16 %v724, %v720
    %v1189 = vpack.c.b16 %v725, %v721
    %v1190 = vpack.c.b16 %v730, %v726
    %v1191 = vpack.c.b16 %v731, %v727
    %v1192 = vpack.c.b16 %v732, %v728
    %v1193 = vpack.c.b16 %v733, %v729
    %v1194 = vpack.c.b16 %v738, %v734
    %v1195 = vpack.c.b16 %v739, %v735
    %v1196 = vpack.c.b16 %v740, %v736
    %v1197 = vpack.c.b16 %v741, %v737
    %v1198 = vpack.c.b16 %v746, %v742
    %v1199 = vpack.c.b16 %v747, %v743
    %v1200 = vpack.c.b16 %v748, %v744
    %v1201 = vpack.c.b16 %v749, %v745
    %v1202 = vpack.c.b16 %v754, %v750
    %v1203 = vpack.c.b16 %v755, %v751
    %v1204 = vpack.c.b16 %v756, %v752
    %v1205 = vpack.c.b16 %v757, %v753
    %v1206 = vpack.c.b16 %v762, %v758
    %v1207 = vpack.c.b16 %v763, %v759
    %v1208 = vpack.c.b16 %v764, %v760
    %v1209 = vpack.c.b16 %v765, %v761
    %v1210 = vpack.c.b16 %v770, %v766
    %v1211 = vpack.c.b16 %v771, %v767
    %v1212 = vpack.c.b16 %v772, %v768
    %v1213 = vpack.c.b16 %v773, %v769
    %v1214 = vpack.c.b16 %v778, %v774
    %v1215 = vpack.c.b16 %v779, %v775
    %v1216 = vpack.c.b16 %v780, %v776
    %v1217 = vpack.c.b16 %v781, %v777
    %v1218 = vpack.c.b16 %v786, %v782
    %v1219 = vpack.c.b16 %v787, %v783
    %v1220 = vpack.c.b16 %v788, %v784
    %v1221 = vpack.c.b16 %v789, %v785
    %v1222 = vpack.c.b16 %v794, %v790
    %v1223 = vpack.c.b16 %v795, %v791
    %v1224 = vpack.c.b16 %v796, %v792
    %v1225 = vpack.c.b16 %v797, %v793
    %v1226 = vpack.c.b16 %v802, %v798
    %v1227 = vpack.c.b16 %v803, %v799
    %v1228 = vpack.c.b16 %v804, %v800
    %v1229 = vpack.c.b16 %v805, %v801
    %v1230 = vpack.c.b16 %v810, %v806
    %v1231 = vpack.c.b16 %v811, %v807
    %v1232 = vpack.c.b16 %v812, %v808
    %v1233 = vpack.c.b16 %v813, %v809
    %v1234 = vpack.c.b16 %v818, %v814
    %v1235 = vpack.c.b16 %v819, %v815
    %v1236 = vpack.c.b16 %v820, %v816
    %v1237 = vpack.c.b16 %v821, %v817
    %v1238 = vpack.c.b16 %v826, %v822
    %v1239 = vpack.c.b16 %v827, %v823
    %v1240 = vpack.c.b16 %v828, %v824
    %v1241 = vpack.c.b16 %v829, %v825
    %v1242 = vpack.c.b16 %v834, %v830
    %v1243 = vpack.c.b16 %v835, %v831
    %v1244 = vpack.c.b16 %v836, %v832
    %v1245 = vpack.c.b16 %v837, %v833
    %v1246 = vpack.c.b16 %v842, %v838
    %v1247 = vpack.c.b16 %v843, %v839
    %v1248 = vpack.c.b16 %v844, %v840
    %v1249 = vpack.c.b16 %v845, %v841
    %v1250 = vpack.c.b16 %v850, %v846
    %v1251 = vpack.c.b16 %v851, %v847
    %v1252 = vpack.c.b16 %v852, %v848
    %v1253 = vpack.c.b16 %v853, %v849
    %v1254 = vpack.c.b16 %v858, %v854
    %v1255 = vpack.c.b16 %v859, %v855
    %v1256 = vpack.c.b16 %v860, %v856
    %v1257 = vpack.c.b16 %v861, %v857
    %v1258 = vpack.c.b16 %v866, %v862
    %v1259 = vpack.c.b16 %v867, %v863
    %v1260 = vpack.c.b16 %v868, %v864
    %v1261 = vpack.c.b16 %v869, %v865
    %v1262 = vpack.c.b16 %v874, %v870
    %v1263 = vpack.c.b16 %v875, %v871
    %v1264 = vpack.c.b16 %v876, %v872
    %v1265 = vpack.c.b16 %v877, %v873
    %v1266 = vpack.c.b16 %v882, %v878
    %v1267 = vpack.c.b16 %v883, %v879
    %v1268 = vpack.c.b16 %v884, %v880
    %v1269 = vpack.c.b16 %v885, %v881
    %v1270 = vpack.c.b16 %v890, %v886
    %v1271 = vpack.c.b16 %v891, %v887
    %v1272 = vpack.c.b16 %v892, %v888
    %v1273 = vpack.c.b16 %v893, %v889
    %v1274 = vpack.c.b16 %v898, %v894
    %v1275 = vpack.c.b16 %v899, %v895
    %v1276 = vpack.c.b16 %v900, %v896
    %v1277 = vpack.c.b16 %v901, %v897
    %v1278 = vpack.c.b16 %v906, %v902
    %v1279 = vpack.c.b16 %v907, %v903
    %v1280 = vpack.c.b16 %v908, %v904
    %v1281 = vpack.c.b16 %v909, %v905
    %v1282 = vpack.c.b16 %v914, %v910
    %v1283 = vpack.c.b16 %v915, %v911
    %v1284 = vpack.c.b16 %v916, %v912
    %v1285 = vpack.c.b16 %v917, %v913
    %v1286 = vpack.c.b16 %v922, %v918
    %v1287 = vpack.c.b16 %v923, %v919
    %v1288 = vpack.c.b16 %v924, %v920
    %v1289 = vpack.c.b16 %v925, %v921
    %v1290 = vpack.c.b16 %v930, %v926
    %v1291 = vpack.c.b16 %v931, %v927
    %v1292 = vpack.c.b16 %v932, %v928
    %v1293 = vpack.c.b16 %v933, %v929
    %v1294 = vpack.c.b16 %v938, %v934
    %v1295 = vpack.c.b16 %v939, %v935
    %v1296 = vpack.c.b16 %v940, %v936
    %v1297 = vpack.c.b16 %v941, %v937
    %v1298 = vpack.c.b16 %v946, %v942
    %v1299 = vpack.c.b16 %v947, %v943
    %v1300 = vpack.c.b16 %v948, %v944
    %v1301 = vpack.c.b16 %v949, %v945
    %v1302 = vpack.c.b16 %v954, %v950
    %v1303 = vpack.c.b16 %v955, %v951
    %v1304 = vpack.c.b16 %v956, %v952
    %v1305 = vpack.c.b16 %v957, %v953
    %v1306 = vpack.c.b16 %v962, %v958
    %v1307 = vpack.c.b16 %v963, %v959
    %v1308 = vpack.c.b16 %v964, %v960
    %v1309 = vpack.c.b16 %v965, %v961
    %v1310 = vpack.c.b16 %v970, %v966
    %v1311 = vpack.c.b16 %v971, %v967
    %v1312 = vpack.c.b16 %v972, %v968
    %v1313 = vpack.c.b16 %v973, %v969
    %v1314 = vpack.c.b16 %v978, %v974
    %v1315 = vpack.c.b16 %v979, %v975
    %v1316 = vpack.c.b16 %v980, %v976
    %v1317 = vpack.c.b16 %v981, %v977
    %v1318 = vpack.c.b16 %v986, %v982
    %v1319 = vpack.c.b16 %v987, %v983
    %v1320 = vpack.c.b16 %v988, %v984
    %v1321 = vpack.c.b16 %v989, %v985
    %v1322 = vpack.c.b16 %v994, %v990
    %v1323 = vpack.c.b16 %v995, %v991
    %v1324 = vpack.c.b16 %v996, %v992
    %v1325 = vpack.c.b16 %v997, %v993
    %v1326 = vpack.c.b16 %v1002, %v998
    %v1327 = vpack.c.b16 %v1003, %v999
    %v1328 = vpack.c.b16 %v1004, %v1000
    %v1329 = vpack.c.b16 %v1005, %v1001
    %v1330 = vpack.c.b16 %v1010, %v1006
    %v1331 = vpack.c.b16 %v1011, %v1007
    %v1332 = vpack.c.b16 %v1012, %v1008
    %v1333 = vpack.c.b16 %v1013, %v1009
    %v1334 = vpack.c.b16 %v1018, %v1014
    %v1335 = vpack.c.b16 %v1019, %v1015
    %v1336 = vpack.c.b16 %v1020, %v1016
    %v1337 = vpack.c.b16 %v1021, %v1017
    %v1338 = vpack.c.b16 %v1026, %v1022
    %v1339 = vpack.c.b16 %v1027, %v1023
    %v1340 = vpack.c.b16 %v1028, %v1024
    %v1341 = vpack.c.b16 %v1029, %v1025
    %v1342 = vpack.c.b16 %v1034, %v1030
    %v1343 = vpack.c.b16 %v1035, %v1031
    %v1344 = vpack.c.b16 %v1036, %v1032
    %v1345 = vpack.c.b16 %v1037, %v1033
    %v1346 = vpack.c.b16 %v1042, %v1038
    %v1347 = vpack.c.b16 %v1043, %v1039
    %v1348 = vpack.c.b16 %v1044, %v1040
    %v1349 = vpack.c.b16 %v1045, %v1041
    %v1350 = vpack.c.b16 %v1050, %v1046
    %v1351 = vpack.c.b16 %v1051, %v1047
    %v1352 = vpack.c.b16 %v1052, %v1048
    %v1353 = vpack.c.b16 %v1053, %v1049
    %v1354 = vpack.c.b16 %v1058, %v1054
    %v1355 = vpack.c.b16 %v1059, %v1055
    %v1356 = vpack.c.b16 %v1060, %v1056
    %v1357 = vpack.c.b16 %v1061, %v1057
    %v1358 = vpack.c.b16 %v1066, %v1062
    %v1359 = vpack.c.b16 %v1067, %v1063
    %v1360 = vpack.c.b16 %v1068, %v1064
    %v1361 = vpack.c.b16 %v1069, %v1065
    %v1362 = vpack.c.b16 %v1074, %v1070
    %v1363 = vpack.c.b16 %v1075, %v1071
    %v1364 = vpack.c.b16 %v1076, %v1072
    %v1365 = vpack.c.b16 %v1077, %v1073
    %v1366 = vpack.c.b16 %v1082, %v1078
    %v1367 = vpack.c.b16 %v1083, %v1079
    %v1368 = vpack.c.b16 %v1084, %v1080
    %v1369 = vpack.c.b16 %v1085, %v1081
    %v1370 = vpack.c.b16 %v1090, %v1086
    %v1371 = vpack.c.b16 %v1091, %v1087
    %v1372 = vpack.c.b16 %v1092, %v1088
    %v1373 = vpack.c.b16 %v1093, %v1089
    %v1374 = vpack.c.b16 %v1098, %v1094
    %v1375 = vpack.c.b16 %v1099, %v1095
    %v1376 = vpack.c.b16 %v1100, %v1096
    %v1377 = vpack.c.b16 %v1101, %v1097
    %v1378 = vpack.c.b16 %v1106, %v1102
    %v1379 = vpack.c.b16 %v1107, %v1103
    %v1380 = vpack.c.b16 %v1108, %v1104
    %v1381 = vpack.c.b16 %v1109, %v1105
    %v1382 = vpack.c.b16 %v1114, %v1110
    %v1383 = vpack.c.b16 %v1115, %v1111
    %v1384 = vpack.c.b16 %v1116, %v1112
    %v1385 = vpack.c.b16 %v1117, %v1113
    %v1386 = vpack.c.b16 %v1122, %v1118
    %v1387 = vpack.c.b16 %v1123, %v1119
    %v1388 = vpack.c.b16 %v1124, %v1120
    %v1389 = vpack.c.b16 %v1125, %v1121
    %v1390 = vpack.c.b16 %v1130, %v1126
    %v1391 = vpack.c.b16 %v1131, %v1127
    %v1392 = vpack.c.b16 %v1132, %v1128
    %v1393 = vpack.c.b16 %v1133, %v1129
    %v1394 = vpack.c.b16 %v1138, %v1134
    %v1395 = vpack.c.b16 %v1139, %v1135
    %v1396 = vpack.c.b16 %v1140, %v1136
    %v1397 = vpack.c.b16 %v1141, %v1137
    %1654 = vmatprep.subr.bf16.mxu0 %v1143
    %1655 = vmatpush1.bf16.msra.mxu0 %v1142
    %1656 = vmatprep.subr.bf16.mxu0 %v1147
    %1657 = vmatpush1.bf16.msra.mxu0 %v1146
    %1658 = vmatprep.subr.bf16.mxu0 %v1151
    %1659 = vmatpush1.bf16.msra.mxu0 %v1150
    %1660 = vmatprep.subr.bf16.mxu0 %v1155
    %1661 = vmatpush1.bf16.msra.mxu0 %v1154
    %1662 = vmatprep.subr.bf16.mxu0 %v1159
    %1663 = vmatpush1.bf16.msra.mxu0 %v1158
    %1664 = vmatprep.subr.bf16.mxu0 %v1163
    %1665 = vmatpush1.bf16.msra.mxu0 %v1162
    %1666 = vmatprep.subr.bf16.mxu0 %v1167
    %1667 = vmatpush1.bf16.msra.mxu0 %v1166
    %1668 = vmatprep.subr.bf16.mxu0 %v1171
    %1669 = vmatpush1.bf16.msra.mxu0 %v1170
    %1670 = vmatprep.subr.bf16.mxu0 %v1175
    %1671 = vmatpush1.bf16.msra.mxu0 %v1174
    %1672 = vmatprep.subr.bf16.mxu0 %v1179
    %1673 = vmatpush1.bf16.msra.mxu0 %v1178
    %1674 = vmatprep.subr.bf16.mxu0 %v1183
    %1675 = vmatpush1.bf16.msra.mxu0 %v1182
    %1676 = vmatprep.subr.bf16.mxu0 %v1187
    %1677 = vmatpush1.bf16.msra.mxu0 %v1186
    %1678 = vmatprep.subr.bf16.mxu0 %v1191
    %1679 = vmatpush1.bf16.msra.mxu0 %v1190
    %1680 = vmatprep.subr.bf16.mxu0 %v1195
    %1681 = vmatpush1.bf16.msra.mxu0 %v1194
    %1682 = vmatprep.subr.bf16.mxu0 %v1199
    %1683 = vmatpush1.bf16.msra.mxu0 %v1198
    %1684 = vmatprep.subr.bf16.mxu0 %v1203
    %1685 = vmatpush1.bf16.msra.mxu0 %v1202
    %1686 = vmatprep.mubr.bf16.mxu0 %v89
    %1687 = vmatmul.mubr.bf16.gmra.mrb[0].mxu0 %v88
    %v1688 = vpop.f32.mrb[0].mxu0
    %v1689 = vadd.f32 %v357, %v1688
    %v1690 = vpop.f32.mrb[0].mxu0
    %v1691 = vadd.f32 %v361, %v1690
    %v1692 = vpop.f32.mrb[0].mxu0
    %v1693 = vpop.f32.mrb[0].mxu0
    %1694 = vdwg.mxu0
    %1695 = vmatprep.subr.bf16.mxu0 %v1207
    %1696 = vmatpush1.bf16.msra.mxu0 %v1206
    %1697 = vmatprep.subr.bf16.mxu0 %v1211
    %1698 = vmatpush1.bf16.msra.mxu0 %v1210
    %1699 = vmatprep.subr.bf16.mxu0 %v1215
    %1700 = vmatpush1.bf16.msra.mxu0 %v1214
    %1701 = vmatprep.subr.bf16.mxu0 %v1219
    %1702 = vmatpush1.bf16.msra.mxu0 %v1218
    %1703 = vmatprep.subr.bf16.mxu0 %v1223
    %1704 = vmatpush1.bf16.msra.mxu0 %v1222
    %1705 = vmatprep.subr.bf16.mxu0 %v1227
    %1706 = vmatpush1.bf16.msra.mxu0 %v1226
    %1707 = vmatprep.subr.bf16.mxu0 %v1231
    %1708 = vmatpush1.bf16.msra.mxu0 %v1230
    %1709 = vmatprep.subr.bf16.mxu0 %v1235
    %1710 = vmatpush1.bf16.msra.mxu0 %v1234
    %1711 = vmatprep.subr.bf16.mxu0 %v1239
    %1712 = vmatpush1.bf16.msra.mxu0 %v1238
    %1713 = vmatprep.subr.bf16.mxu0 %v1243
    %1714 = vmatpush1.bf16.msra.mxu0 %v1242
    %1715 = vmatprep.subr.bf16.mxu0 %v1247
    %1716 = vmatpush1.bf16.msra.mxu0 %v1246
    %1717 = vmatprep.subr.bf16.mxu0 %v1251
    %1718 = vmatpush1.bf16.msra.mxu0 %v1250
    %1719 = vmatprep.subr.bf16.mxu0 %v1255
    %1720 = vmatpush1.bf16.msra.mxu0 %v1254
    %1721 = vmatprep.subr.bf16.mxu0 %v1259
    %1722 = vmatpush1.bf16.msra.mxu0 %v1258
    %1723 = vmatprep.subr.bf16.mxu0 %v1263
    %1724 = vmatpush1.bf16.msra.mxu0 %v1262
    %1725 = vmatprep.subr.bf16.mxu0 %v1267
    %1726 = vmatpush1.bf16.msra.mxu0 %v1266
    %1727 = vmatprep.mubr.bf16.mxu0 %v91
    %1728 = vmatmul.mubr.bf16.gmra.mrb[0].mxu0 %v90
    %v1729 = vpop.f32.mrb[0].mxu0
    %v1730 = vadd.f32 %v1689, %v1729
    %v1731 = vpop.f32.mrb[0].mxu0
    %v1732 = vadd.f32 %v1691, %v1731
    %v1733 = vpop.f32.mrb[0].mxu0
    %v1734 = vpop.f32.mrb[0].mxu0
    %1735 = vdwg.mxu0
    %1736 = vmatprep.subr.bf16.mxu0 %v1271
    %1737 = vmatpush1.bf16.msra.mxu0 %v1270
    %1738 = vmatprep.subr.bf16.mxu0 %v1275
    %1739 = vmatpush1.bf16.msra.mxu0 %v1274
    %1740 = vmatprep.subr.bf16.mxu0 %v1279
    %1741 = vmatpush1.bf16.msra.mxu0 %v1278
    %1742 = vmatprep.subr.bf16.mxu0 %v1283
    %1743 = vmatpush1.bf16.msra.mxu0 %v1282
    %1744 = vmatprep.subr.bf16.mxu0 %v1287
    %1745 = vmatpush1.bf16.msra.mxu0 %v1286
    %1746 = vmatprep.subr.bf16.mxu0 %v1291
    %1747 = vmatpush1.bf16.msra.mxu0 %v1290
    %1748 = vmatprep.subr.bf16.mxu0 %v1295
    %1749 = vmatpush1.bf16.msra.mxu0 %v1294
    %1750 = vmatprep.subr.bf16.mxu0 %v1299
    %1751 = vmatpush1.bf16.msra.mxu0 %v1298
    %1752 = vmatprep.subr.bf16.mxu0 %v1303
    %1753 = vmatpush1.bf16.msra.mxu0 %v1302
    %1754 = vmatprep.subr.bf16.mxu0 %v1307
    %1755 = vmatpush1.bf16.msra.mxu0 %v1306
    %1756 = vmatprep.subr.bf16.mxu0 %v1311
    %1757 = vmatpush1.bf16.msra.mxu0 %v1310
    %1758 = vmatprep.subr.bf16.mxu0 %v1315
    %1759 = vmatpush1.bf16.msra.mxu0 %v1314
    %1760 = vmatprep.subr.bf16.mxu0 %v1319
    %1761 = vmatpush1.bf16.msra.mxu0 %v1318
    %1762 = vmatprep.subr.bf16.mxu0 %v1323
    %1763 = vmatpush1.bf16.msra.mxu0 %v1322
    %1764 = vmatprep.subr.bf16.mxu0 %v1327
    %1765 = vmatpush1.bf16.msra.mxu0 %v1326
    %1766 = vmatprep.subr.bf16.mxu0 %v1331
    %1767 = vmatpush1.bf16.msra.mxu0 %v1330
    %1768 = vmatprep.mubr.bf16.mxu0 %v93
    %1769 = vmatmul.mubr.bf16.gmra.mrb[0].mxu0 %v92
    %v1770 = vpop.f32.mrb[0].mxu0
    %v1771 = vadd.f32 %v1730, %v1770
    %v1772 = vpop.f32.mrb[0].mxu0
    %v1773 = vadd.f32 %v1732, %v1772
    %v1774 = vpop.f32.mrb[0].mxu0
    %v1775 = vpop.f32.mrb[0].mxu0
    %1776 = vdwg.mxu0
    %1777 = vmatprep.subr.bf16.mxu0 %v1335
    %1778 = vmatpush1.bf16.msra.mxu0 %v1334
    %1779 = vmatprep.subr.bf16.mxu0 %v1339
    %1780 = vmatpush1.bf16.msra.mxu0 %v1338
    %1781 = vmatprep.subr.bf16.mxu0 %v1343
    %1782 = vmatpush1.bf16.msra.mxu0 %v1342
    %1783 = vmatprep.subr.bf16.mxu0 %v1347
    %1784 = vmatpush1.bf16.msra.mxu0 %v1346
    %1785 = vmatprep.subr.bf16.mxu0 %v1351
    %1786 = vmatpush1.bf16.msra.mxu0 %v1350
    %1787 = vmatprep.subr.bf16.mxu0 %v1355
    %1788 = vmatpush1.bf16.msra.mxu0 %v1354
    %1789 = vmatprep.subr.bf16.mxu0 %v1359
    %1790 = vmatpush1.bf16.msra.mxu0 %v1358
    %1791 = vmatprep.subr.bf16.mxu0 %v1363
    %1792 = vmatpush1.bf16.msra.mxu0 %v1362
    %1793 = vmatprep.subr.bf16.mxu0 %v1367
    %1794 = vmatpush1.bf16.msra.mxu0 %v1366
    %1795 = vmatprep.subr.bf16.mxu0 %v1371
    %1796 = vmatpush1.bf16.msra.mxu0 %v1370
    %1797 = vmatprep.subr.bf16.mxu0 %v1375
    %1798 = vmatpush1.bf16.msra.mxu0 %v1374
    %1799 = vmatprep.subr.bf16.mxu0 %v1379
    %1800 = vmatpush1.bf16.msra.mxu0 %v1378
    %1801 = vmatprep.subr.bf16.mxu0 %v1383
    %1802 = vmatpush1.bf16.msra.mxu0 %v1382
    %1803 = vmatprep.subr.bf16.mxu0 %v1387
    %1804 = vmatpush1.bf16.msra.mxu0 %v1386
    %1805 = vmatprep.subr.bf16.mxu0 %v1391
    %1806 = vmatpush1.bf16.msra.mxu0 %v1390
    %1807 = vmatprep.subr.bf16.mxu0 %v1395
    %1808 = vmatpush1.bf16.msra.mxu0 %v1394
    %1809 = vmatprep.mubr.bf16.mxu0 %v95
    %1810 = vmatmul.mubr.bf16.gmra.mrb[0].mxu0 %v94
    %v1811 = vpop.f32.mrb[0].mxu0
    %v1812 = vadd.f32 %v1771, %v1811
    %v1813 = vpop.f32.mrb[0].mxu0
    %v1814 = vadd.f32 %v1773, %v1813
    %v1815 = vpop.f32.mrb[0].mxu0
    %v1816 = vpop.f32.mrb[0].mxu0
    %1817 = vdwg.mxu0
    %1818 = vmatprep.subr.bf16.mxu0 %v1145
    %1819 = vmatpush1.bf16.msra.mxu0 %v1144
    %1820 = vmatprep.subr.bf16.mxu0 %v1149
    %1821 = vmatpush1.bf16.msra.mxu0 %v1148
    %1822 = vmatprep.subr.bf16.mxu0 %v1153
    %1823 = vmatpush1.bf16.msra.mxu0 %v1152
    %1824 = vmatprep.subr.bf16.mxu0 %v1157
    %1825 = vmatpush1.bf16.msra.mxu0 %v1156
    %1826 = vmatprep.subr.bf16.mxu0 %v1161
    %1827 = vmatpush1.bf16.msra.mxu0 %v1160
    %1828 = vmatprep.subr.bf16.mxu0 %v1165
    %1829 = vmatpush1.bf16.msra.mxu0 %v1164
    %1830 = vmatprep.subr.bf16.mxu0 %v1169
    %1831 = vmatpush1.bf16.msra.mxu0 %v1168
    %1832 = vmatprep.subr.bf16.mxu0 %v1173
    %1833 = vmatpush1.bf16.msra.mxu0 %v1172
    %1834 = vmatprep.subr.bf16.mxu0 %v1177
    %1835 = vmatpush1.bf16.msra.mxu0 %v1176
    %1836 = vmatprep.subr.bf16.mxu0 %v1181
    %1837 = vmatpush1.bf16.msra.mxu0 %v1180
    %1838 = vmatprep.subr.bf16.mxu0 %v1185
    %1839 = vmatpush1.bf16.msra.mxu0 %v1184
    %1840 = vmatprep.subr.bf16.mxu0 %v1189
    %1841 = vmatpush1.bf16.msra.mxu0 %v1188
    %1842 = vmatprep.subr.bf16.mxu0 %v1193
    %1843 = vmatpush1.bf16.msra.mxu0 %v1192
    %1844 = vmatprep.subr.bf16.mxu0 %v1197
    %1845 = vmatpush1.bf16.msra.mxu0 %v1196
    %1846 = vmatprep.subr.bf16.mxu0 %v1201
    %1847 = vmatpush1.bf16.msra.mxu0 %v1200
    %1848 = vmatprep.subr.bf16.mxu0 %v1205
    %1849 = vmatpush1.bf16.msra.mxu0 %v1204
    %1850 = vmatprep.mubr.bf16.mxu0 %v89
    %1851 = vmatmul.mubr.bf16.gmra.mrb[0].mxu0 %v88
    %v1852 = vpop.f32.mrb[0].mxu0
    %v1853 = vadd.f32 %v365, %v1852
    %v1854 = vpop.f32.mrb[0].mxu0
    %v1855 = vadd.f32 %v369, %v1854
    %v1856 = vpop.f32.mrb[0].mxu0
    %v1857 = vpop.f32.mrb[0].mxu0
    %1858 = vdwg.mxu0
    %1859 = vmatprep.subr.bf16.mxu0 %v1209
    %1860 = vmatpush1.bf16.msra.mxu0 %v1208
    %1861 = vmatprep.subr.bf16.mxu0 %v1213
    %1862 = vmatpush1.bf16.msra.mxu0 %v1212
    %1863 = vmatprep.subr.bf16.mxu0 %v1217
    %1864 = vmatpush1.bf16.msra.mxu0 %v1216
    %1865 = vmatprep.subr.bf16.mxu0 %v1221
    %1866 = vmatpush1.bf16.msra.mxu0 %v1220
    %1867 = vmatprep.subr.bf16.mxu0 %v1225
    %1868 = vmatpush1.bf16.msra.mxu0 %v1224
    %1869 = vmatprep.subr.bf16.mxu0 %v1229
    %1870 = vmatpush1.bf16.msra.mxu0 %v1228
    %1871 = vmatprep.subr.bf16.mxu0 %v1233
    %1872 = vmatpush1.bf16.msra.mxu0 %v1232
    %1873 = vmatprep.subr.bf16.mxu0 %v1237
    %1874 = vmatpush1.bf16.msra.mxu0 %v1236
    %1875 = vmatprep.subr.bf16.mxu0 %v1241
    %1876 = vmatpush1.bf16.msra.mxu0 %v1240
    %1877 = vmatprep.subr.bf16.mxu0 %v1245
    %1878 = vmatpush1.bf16.msra.mxu0 %v1244
    %1879 = vmatprep.subr.bf16.mxu0 %v1249
    %1880 = vmatpush1.bf16.msra.mxu0 %v1248
    %1881 = vmatprep.subr.bf16.mxu0 %v1253
    %1882 = vmatpush1.bf16.msra.mxu0 %v1252
    %1883 = vmatprep.subr.bf16.mxu0 %v1257
    %1884 = vmatpush1.bf16.msra.mxu0 %v1256
    %1885 = vmatprep.subr.bf16.mxu0 %v1261
    %1886 = vmatpush1.bf16.msra.mxu0 %v1260
    %1887 = vmatprep.subr.bf16.mxu0 %v1265
    %1888 = vmatpush1.bf16.msra.mxu0 %v1264
    %1889 = vmatprep.subr.bf16.mxu0 %v1269
    %1890 = vmatpush1.bf16.msra.mxu0 %v1268
    %1891 = vmatprep.mubr.bf16.mxu0 %v91
    %1892 = vmatmul.mubr.bf16.gmra.mrb[0].mxu0 %v90
    %v1893 = vpop.f32.mrb[0].mxu0
    %v1894 = vadd.f32 %v1853, %v1893
    %v1895 = vpop.f32.mrb[0].mxu0
    %v1896 = vadd.f32 %v1855, %v1895
    %v1897 = vpop.f32.mrb[0].mxu0
    %v1898 = vpop.f32.mrb[0].mxu0
    %1899 = vdwg.mxu0
    %1900 = vmatprep.subr.bf16.mxu0 %v1273
    %1901 = vmatpush1.bf16.msra.mxu0 %v1272
    %1902 = vmatprep.subr.bf16.mxu0 %v1277
    %1903 = vmatpush1.bf16.msra.mxu0 %v1276
    %1904 = vmatprep.subr.bf16.mxu0 %v1281
    %1905 = vmatpush1.bf16.msra.mxu0 %v1280
    %1906 = vmatprep.subr.bf16.mxu0 %v1285
    %1907 = vmatpush1.bf16.msra.mxu0 %v1284
    %1908 = vmatprep.subr.bf16.mxu0 %v1289
    %1909 = vmatpush1.bf16.msra.mxu0 %v1288
    %1910 = vmatprep.subr.bf16.mxu0 %v1293
    %1911 = vmatpush1.bf16.msra.mxu0 %v1292
    %1912 = vmatprep.subr.bf16.mxu0 %v1297
    %1913 = vmatpush1.bf16.msra.mxu0 %v1296
    %1914 = vmatprep.subr.bf16.mxu0 %v1301
    %1915 = vmatpush1.bf16.msra.mxu0 %v1300
    %1916 = vmatprep.subr.bf16.mxu0 %v1305
    %1917 = vmatpush1.bf16.msra.mxu0 %v1304
    %1918 = vmatprep.subr.bf16.mxu0 %v1309
    %1919 = vmatpush1.bf16.msra.mxu0 %v1308
    %1920 = vmatprep.subr.bf16.mxu0 %v1313
    %1921 = vmatpush1.bf16.msra.mxu0 %v1312
    %1922 = vmatprep.subr.bf16.mxu0 %v1317
    %1923 = vmatpush1.bf16.msra.mxu0 %v1316
    %1924 = vmatprep.subr.bf16.mxu0 %v1321
    %1925 = vmatpush1.bf16.msra.mxu0 %v1320
    %1926 = vmatprep.subr.bf16.mxu0 %v1325
    %1927 = vmatpush1.bf16.msra.mxu0 %v1324
    %1928 = vmatprep.subr.bf16.mxu0 %v1329
    %1929 = vmatpush1.bf16.msra.mxu0 %v1328
    %1930 = vmatprep.subr.bf16.mxu0 %v1333
    %1931 = vmatpush1.bf16.msra.mxu0 %v1332
    %1932 = vmatprep.mubr.bf16.mxu0 %v93
    %1933 = vmatmul.mubr.bf16.gmra.mrb[0].mxu0 %v92
    %v1934 = vpop.f32.mrb[0].mxu0
    %v1935 = vadd.f32 %v1894, %v1934
    %v1936 = vpop.f32.mrb[0].mxu0
    %v1937 = vadd.f32 %v1896, %v1936
    %v1938 = vpop.f32.mrb[0].mxu0
    %v1939 = vpop.f32.mrb[0].mxu0
    %1940 = vdwg.mxu0
    %1941 = vmatprep.subr.bf16.mxu0 %v1337
    %1942 = vmatpush1.bf16.msra.mxu0 %v1336
    %1943 = vmatprep.subr.bf16.mxu0 %v1341
    %1944 = vmatpush1.bf16.msra.mxu0 %v1340
    %1945 = vmatprep.subr.bf16.mxu0 %v1345
    %1946 = vmatpush1.bf16.msra.mxu0 %v1344
    %1947 = vmatprep.subr.bf16.mxu0 %v1349
    %1948 = vmatpush1.bf16.msra.mxu0 %v1348
    %1949 = vmatprep.subr.bf16.mxu0 %v1353
    %1950 = vmatpush1.bf16.msra.mxu0 %v1352
    %1951 = vmatprep.subr.bf16.mxu0 %v1357
    %1952 = vmatpush1.bf16.msra.mxu0 %v1356
    %1953 = vmatprep.subr.bf16.mxu0 %v1361
    %1954 = vmatpush1.bf16.msra.mxu0 %v1360
    %1955 = vmatprep.subr.bf16.mxu0 %v1365
    %1956 = vmatpush1.bf16.msra.mxu0 %v1364
    %1957 = vmatprep.subr.bf16.mxu0 %v1369
    %1958 = vmatpush1.bf16.msra.mxu0 %v1368
    %1959 = vmatprep.subr.bf16.mxu0 %v1373
    %1960 = vmatpush1.bf16.msra.mxu0 %v1372
    %1961 = vmatprep.subr.bf16.mxu0 %v1377
    %1962 = vmatpush1.bf16.msra.mxu0 %v1376
    %1963 = vmatprep.subr.bf16.mxu0 %v1381
    %1964 = vmatpush1.bf16.msra.mxu0 %v1380
    %1965 = vmatprep.subr.bf16.mxu0 %v1385
    %1966 = vmatpush1.bf16.msra.mxu0 %v1384
    %1967 = vmatprep.subr.bf16.mxu0 %v1389
    %1968 = vmatpush1.bf16.msra.mxu0 %v1388
    %1969 = vmatprep.subr.bf16.mxu0 %v1393
    %1970 = vmatpush1.bf16.msra.mxu0 %v1392
    %1971 = vmatprep.subr.bf16.mxu0 %v1397
    %1972 = vmatpush1.bf16.msra.mxu0 %v1396
    %1973 = vmatprep.mubr.bf16.mxu0 %v95
    %1974 = vmatmul.mubr.bf16.gmra.mrb[0].mxu0 %v94
    %v1975 = vpop.f32.mrb[0].mxu0
    %v1976 = vadd.f32 %v1935, %v1975
    %v1977 = vpop.f32.mrb[0].mxu0
    %v1978 = vadd.f32 %v1937, %v1977
    %v1979 = vpop.f32.mrb[0].mxu0
    %v1980 = vpop.f32.mrb[0].mxu0
    %1981 = vdwg.mxu0
    %v1982 = vmax.f32 %v1812, 0.0
    %v1983 = vmax.f32 %v1814, 0.0
    %v1984 = vmax.f32 %v1976, 0.0
    %v1985 = vmax.f32 %v1978, 0.0
    %v1986 = vpack.c.bf16 %v1982, %v1982
    %v1987 = vpack.c.bf16 %v1983, %v1983
    %v1988 = vpack.c.bf16 %v1984, %v1984
    %v1989 = vpack.c.bf16 %v1985, %v1985
    %v1990 = vld [vmem:[#allocation2] sm:$0xff]
    %v1991 = vld [vmem:[#allocation2 + $0x8] sm:$0xff]
    %v1992 = vld [vmem:[#allocation2 + $0x10] sm:$0xff]
    %v1993 = vld [vmem:[#allocation2 + $0x18] sm:$0xff]
    %v1994 = vld [vmem:[#allocation2 + $0x20] sm:$0xff]
    %v1995 = vld [vmem:[#allocation2 + $0x28] sm:$0xff]
    %v1996 = vld [vmem:[#allocation2 + $0x30] sm:$0xff]
    %v1997 = vld [vmem:[#allocation2 + $0x38] sm:$0xff]
    %v1998 = vld [vmem:[#allocation2 + $0x40] sm:$0xff]
    %v1999 = vld [vmem:[#allocation2 + $0x48] sm:$0xff]
    %v2000 = vld [vmem:[#allocation2 + $0x50] sm:$0xff]
    %v2001 = vld [vmem:[#allocation2 + $0x58] sm:$0xff]
    %v2002 = vld [vmem:[#allocation2 + $0x60] sm:$0xff]
    %v2003 = vld [vmem:[#allocation2 + $0x68] sm:$0xff]
    %v2004 = vld [vmem:[#allocation2 + $0x70] sm:$0xff]
    %v2005 = vld [vmem:[#allocation2 + $0x78] sm:$0xff]
    %v2006 = vld [vmem:[#allocation2 + $0x80] sm:$0xff]
    %v2007 = vld [vmem:[#allocation2 + $0x88] sm:$0xff]
    %v2008 = vld [vmem:[#allocation2 + $0x90] sm:$0xff]
    %v2009 = vld [vmem:[#allocation2 + $0x98] sm:$0xff]
    %v2010 = vld [vmem:[#allocation2 + $0xa0] sm:$0xff]
    %v2011 = vld [vmem:[#allocation2 + $0xa8] sm:$0xff]
    %v2012 = vld [vmem:[#allocation2 + $0xb0] sm:$0xff]
    %v2013 = vld [vmem:[#allocation2 + $0xb8] sm:$0xff]
    %v2014 = vld [vmem:[#allocation2 + $0xc0] sm:$0xff]
    %v2015 = vld [vmem:[#allocation2 + $0xc8] sm:$0xff]
    %v2016 = vld [vmem:[#allocation2 + $0xd0] sm:$0xff]
    %v2017 = vld [vmem:[#allocation2 + $0xd8] sm:$0xff]
    %v2018 = vld [vmem:[#allocation2 + $0xe0] sm:$0xff]
    %v2019 = vld [vmem:[#allocation2 + $0xe8] sm:$0xff]
    %v2020 = vld [vmem:[#allocation2 + $0xf0] sm:$0xff]
    %v2021 = vld [vmem:[#allocation2 + $0xf8] sm:$0xff]
    %v2022 = vld [vmem:[#allocation2 + $0x100] sm:$0xff]
    %v2023 = vld [vmem:[#allocation2 + $0x108] sm:$0xff]
    %v2024 = vld [vmem:[#allocation2 + $0x110] sm:$0xff]
    %v2025 = vld [vmem:[#allocation2 + $0x118] sm:$0xff]
    %v2026 = vld [vmem:[#allocation2 + $0x120] sm:$0xff]
    %v2027 = vld [vmem:[#allocation2 + $0x128] sm:$0xff]
    %v2028 = vld [vmem:[#allocation2 + $0x130] sm:$0xff]
    %v2029 = vld [vmem:[#allocation2 + $0x138] sm:$0xff]
    %v2030 = vld [vmem:[#allocation2 + $0x140] sm:$0xff]
    %v2031 = vld [vmem:[#allocation2 + $0x148] sm:$0xff]
    %v2032 = vld [vmem:[#allocation2 + $0x150] sm:$0xff]
    %v2033 = vld [vmem:[#allocation2 + $0x158] sm:$0xff]
    %v2034 = vld [vmem:[#allocation2 + $0x160] sm:$0xff]
    %v2035 = vld [vmem:[#allocation2 + $0x168] sm:$0xff]
    %v2036 = vld [vmem:[#allocation2 + $0x170] sm:$0xff]
    %v2037 = vld [vmem:[#allocation2 + $0x178] sm:$0xff]
    %v2038 = vld [vmem:[#allocation2 + $0x180] sm:$0xff]
    %v2039 = vld [vmem:[#allocation2 + $0x188] sm:$0xff]
    %v2040 = vld [vmem:[#allocation2 + $0x190] sm:$0xff]
    %v2041 = vld [vmem:[#allocation2 + $0x198] sm:$0xff]
    %v2042 = vld [vmem:[#allocation2 + $0x1a0] sm:$0xff]
    %v2043 = vld [vmem:[#allocation2 + $0x1a8] sm:$0xff]
    %v2044 = vld [vmem:[#allocation2 + $0x1b0] sm:$0xff]
    %v2045 = vld [vmem:[#allocation2 + $0x1b8] sm:$0xff]
    %v2046 = vld [vmem:[#allocation2 + $0x1c0] sm:$0xff]
    %v2047 = vld [vmem:[#allocation2 + $0x1c8] sm:$0xff]
    %v2048 = vld [vmem:[#allocation2 + $0x1d0] sm:$0xff]
    %v2049 = vld [vmem:[#allocation2 + $0x1d8] sm:$0xff]
    %v2050 = vld [vmem:[#allocation2 + $0x1e0] sm:$0xff]
    %v2051 = vld [vmem:[#allocation2 + $0x1e8] sm:$0xff]
    %v2052 = vld [vmem:[#allocation2 + $0x1f0] sm:$0xff]
    %v2053 = vld [vmem:[#allocation2 + $0x1f8] sm:$0xff]
    %v2054 = vld [vmem:[#allocation2 + $0x200] sm:$0xff]
    %v2055 = vld [vmem:[#allocation2 + $0x208] sm:$0xff]
    %v2056 = vld [vmem:[#allocation2 + $0x210] sm:$0xff]
    %v2057 = vld [vmem:[#allocation2 + $0x218] sm:$0xff]
    %v2058 = vld [vmem:[#allocation2 + $0x220] sm:$0xff]
    %v2059 = vld [vmem:[#allocation2 + $0x228] sm:$0xff]
    %v2060 = vld [vmem:[#allocation2 + $0x230] sm:$0xff]
    %v2061 = vld [vmem:[#allocation2 + $0x238] sm:$0xff]
    %v2062 = vld [vmem:[#allocation2 + $0x240] sm:$0xff]
    %v2063 = vld [vmem:[#allocation2 + $0x248] sm:$0xff]
    %v2064 = vld [vmem:[#allocation2 + $0x250] sm:$0xff]
    %v2065 = vld [vmem:[#allocation2 + $0x258] sm:$0xff]
    %v2066 = vld [vmem:[#allocation2 + $0x260] sm:$0xff]
    %v2067 = vld [vmem:[#allocation2 + $0x268] sm:$0xff]
    %v2068 = vld [vmem:[#allocation2 + $0x270] sm:$0xff]
    %v2069 = vld [vmem:[#allocation2 + $0x278] sm:$0xff]
    %v2070 = vld [vmem:[#allocation2 + $0x280] sm:$0xff]
    %v2071 = vld [vmem:[#allocation2 + $0x288] sm:$0xff]
    %v2072 = vld [vmem:[#allocation2 + $0x290] sm:$0xff]
    %v2073 = vld [vmem:[#allocation2 + $0x298] sm:$0xff]
    %v2074 = vld [vmem:[#allocation2 + $0x2a0] sm:$0xff]
    %v2075 = vld [vmem:[#allocation2 + $0x2a8] sm:$0xff]
    %v2076 = vld [vmem:[#allocation2 + $0x2b0] sm:$0xff]
    %v2077 = vld [vmem:[#allocation2 + $0x2b8] sm:$0xff]
    %v2078 = vld [vmem:[#allocation2 + $0x2c0] sm:$0xff]
    %v2079 = vld [vmem:[#allocation2 + $0x2c8] sm:$0xff]
    %v2080 = vld [vmem:[#allocation2 + $0x2d0] sm:$0xff]
    %v2081 = vld [vmem:[#allocation2 + $0x2d8] sm:$0xff]
    %v2082 = vld [vmem:[#allocation2 + $0x2e0] sm:$0xff]
    %v2083 = vld [vmem:[#allocation2 + $0x2e8] sm:$0xff]
    %v2084 = vld [vmem:[#allocation2 + $0x2f0] sm:$0xff]
    %v2085 = vld [vmem:[#allocation2 + $0x2f8] sm:$0xff]
    %v2086 = vld [vmem:[#allocation2 + $0x300] sm:$0xff]
    %v2087 = vld [vmem:[#allocation2 + $0x308] sm:$0xff]
    %v2088 = vld [vmem:[#allocation2 + $0x310] sm:$0xff]
    %v2089 = vld [vmem:[#allocation2 + $0x318] sm:$0xff]
    %v2090 = vld [vmem:[#allocation2 + $0x320] sm:$0xff]
    %v2091 = vld [vmem:[#allocation2 + $0x328] sm:$0xff]
    %v2092 = vld [vmem:[#allocation2 + $0x330] sm:$0xff]
    %v2093 = vld [vmem:[#allocation2 + $0x338] sm:$0xff]
    %v2094 = vld [vmem:[#allocation2 + $0x340] sm:$0xff]
    %v2095 = vld [vmem:[#allocation2 + $0x348] sm:$0xff]
    %v2096 = vld [vmem:[#allocation2 + $0x350] sm:$0xff]
    %v2097 = vld [vmem:[#allocation2 + $0x358] sm:$0xff]
    %v2098 = vld [vmem:[#allocation2 + $0x360] sm:$0xff]
    %v2099 = vld [vmem:[#allocation2 + $0x368] sm:$0xff]
    %v2100 = vld [vmem:[#allocation2 + $0x370] sm:$0xff]
    %v2101 = vld [vmem:[#allocation2 + $0x378] sm:$0xff]
    %v2102 = vld [vmem:[#allocation2 + $0x380] sm:$0xff]
    %v2103 = vld [vmem:[#allocation2 + $0x388] sm:$0xff]
    %v2104 = vld [vmem:[#allocation2 + $0x390] sm:$0xff]
    %v2105 = vld [vmem:[#allocation2 + $0x398] sm:$0xff]
    %v2106 = vld [vmem:[#allocation2 + $0x3a0] sm:$0xff]
    %v2107 = vld [vmem:[#allocation2 + $0x3a8] sm:$0xff]
    %v2108 = vld [vmem:[#allocation2 + $0x3b0] sm:$0xff]
    %v2109 = vld [vmem:[#allocation2 + $0x3b8] sm:$0xff]
    %v2110 = vld [vmem:[#allocation2 + $0x3c0] sm:$0xff]
    %v2111 = vld [vmem:[#allocation2 + $0x3c8] sm:$0xff]
    %v2112 = vld [vmem:[#allocation2 + $0x3d0] sm:$0xff]
    %v2113 = vld [vmem:[#allocation2 + $0x3d8] sm:$0xff]
    %v2114 = vld [vmem:[#allocation2 + $0x3e0] sm:$0xff]
    %v2115 = vld [vmem:[#allocation2 + $0x3e8] sm:$0xff]
    %v2116 = vld [vmem:[#allocation2 + $0x3f0] sm:$0xff]
    %v2117 = vld [vmem:[#allocation2 + $0x3f8] sm:$0xff]
    %v2118 = vld [vmem:[#allocation2 + $0x400] sm:$0xff]
    %v2119 = vld [vmem:[#allocation2 + $0x408] sm:$0xff]
    %v2120 = vld [vmem:[#allocation2 + $0x410] sm:$0xff]
    %v2121 = vld [vmem:[#allocation2 + $0x418] sm:$0xff]
    %v2122 = vld [vmem:[#allocation2 + $0x420] sm:$0xff]
    %v2123 = vld [vmem:[#allocation2 + $0x428] sm:$0xff]
    %v2124 = vld [vmem:[#allocation2 + $0x430] sm:$0xff]
    %v2125 = vld [vmem:[#allocation2 + $0x438] sm:$0xff]
    %v2126 = vld [vmem:[#allocation2 + $0x440] sm:$0xff]
    %v2127 = vld [vmem:[#allocation2 + $0x448] sm:$0xff]
    %v2128 = vld [vmem:[#allocation2 + $0x450] sm:$0xff]
    %v2129 = vld [vmem:[#allocation2 + $0x458] sm:$0xff]
    %v2130 = vld [vmem:[#allocation2 + $0x460] sm:$0xff]
    %v2131 = vld [vmem:[#allocation2 + $0x468] sm:$0xff]
    %v2132 = vld [vmem:[#allocation2 + $0x470] sm:$0xff]
    %v2133 = vld [vmem:[#allocation2 + $0x478] sm:$0xff]
    %v2134 = vld [vmem:[#allocation2 + $0x480] sm:$0xff]
    %v2135 = vld [vmem:[#allocation2 + $0x488] sm:$0xff]
    %v2136 = vld [vmem:[#allocation2 + $0x490] sm:$0xff]
    %v2137 = vld [vmem:[#allocation2 + $0x498] sm:$0xff]
    %v2138 = vld [vmem:[#allocation2 + $0x4a0] sm:$0xff]
    %v2139 = vld [vmem:[#allocation2 + $0x4a8] sm:$0xff]
    %v2140 = vld [vmem:[#allocation2 + $0x4b0] sm:$0xff]
    %v2141 = vld [vmem:[#allocation2 + $0x4b8] sm:$0xff]
    %v2142 = vld [vmem:[#allocation2 + $0x4c0] sm:$0xff]
    %v2143 = vld [vmem:[#allocation2 + $0x4c8] sm:$0xff]
    %v2144 = vld [vmem:[#allocation2 + $0x4d0] sm:$0xff]
    %v2145 = vld [vmem:[#allocation2 + $0x4d8] sm:$0xff]
    %v2146 = vld [vmem:[#allocation2 + $0x4e0] sm:$0xff]
    %v2147 = vld [vmem:[#allocation2 + $0x4e8] sm:$0xff]
    %v2148 = vld [vmem:[#allocation2 + $0x4f0] sm:$0xff]
    %v2149 = vld [vmem:[#allocation2 + $0x4f8] sm:$0xff]
    %v2150 = vld [vmem:[#allocation2 + $0x500] sm:$0xff]
    %v2151 = vld [vmem:[#allocation2 + $0x508] sm:$0xff]
    %v2152 = vld [vmem:[#allocation2 + $0x510] sm:$0xff]
    %v2153 = vld [vmem:[#allocation2 + $0x518] sm:$0xff]
    %v2154 = vld [vmem:[#allocation2 + $0x520] sm:$0xff]
    %v2155 = vld [vmem:[#allocation2 + $0x528] sm:$0xff]
    %v2156 = vld [vmem:[#allocation2 + $0x530] sm:$0xff]
    %v2157 = vld [vmem:[#allocation2 + $0x538] sm:$0xff]
    %v2158 = vld [vmem:[#allocation2 + $0x540] sm:$0xff]
    %v2159 = vld [vmem:[#allocation2 + $0x548] sm:$0xff]
    %v2160 = vld [vmem:[#allocation2 + $0x550] sm:$0xff]
    %v2161 = vld [vmem:[#allocation2 + $0x558] sm:$0xff]
    %v2162 = vld [vmem:[#allocation2 + $0x560] sm:$0xff]
    %v2163 = vld [vmem:[#allocation2 + $0x568] sm:$0xff]
    %v2164 = vld [vmem:[#allocation2 + $0x570] sm:$0xff]
    %v2165 = vld [vmem:[#allocation2 + $0x578] sm:$0xff]
    %v2166 = vld [vmem:[#allocation2 + $0x580] sm:$0xff]
    %v2167 = vld [vmem:[#allocation2 + $0x588] sm:$0xff]
    %v2168 = vld [vmem:[#allocation2 + $0x590] sm:$0xff]
    %v2169 = vld [vmem:[#allocation2 + $0x598] sm:$0xff]
    %v2170 = vld [vmem:[#allocation2 + $0x5a0] sm:$0xff]
    %v2171 = vld [vmem:[#allocation2 + $0x5a8] sm:$0xff]
    %v2172 = vld [vmem:[#allocation2 + $0x5b0] sm:$0xff]
    %v2173 = vld [vmem:[#allocation2 + $0x5b8] sm:$0xff]
    %v2174 = vld [vmem:[#allocation2 + $0x5c0] sm:$0xff]
    %v2175 = vld [vmem:[#allocation2 + $0x5c8] sm:$0xff]
    %v2176 = vld [vmem:[#allocation2 + $0x5d0] sm:$0xff]
    %v2177 = vld [vmem:[#allocation2 + $0x5d8] sm:$0xff]
    %v2178 = vld [vmem:[#allocation2 + $0x5e0] sm:$0xff]
    %v2179 = vld [vmem:[#allocation2 + $0x5e8] sm:$0xff]
    %v2180 = vld [vmem:[#allocation2 + $0x5f0] sm:$0xff]
    %v2181 = vld [vmem:[#allocation2 + $0x5f8] sm:$0xff]
    %v2182 = vld [vmem:[#allocation2 + $0x600] sm:$0xff]
    %v2183 = vld [vmem:[#allocation2 + $0x608] sm:$0xff]
    %v2184 = vld [vmem:[#allocation2 + $0x610] sm:$0xff]
    %v2185 = vld [vmem:[#allocation2 + $0x618] sm:$0xff]
    %v2186 = vld [vmem:[#allocation2 + $0x620] sm:$0xff]
    %v2187 = vld [vmem:[#allocation2 + $0x628] sm:$0xff]
    %v2188 = vld [vmem:[#allocation2 + $0x630] sm:$0xff]
    %v2189 = vld [vmem:[#allocation2 + $0x638] sm:$0xff]
    %v2190 = vld [vmem:[#allocation2 + $0x640] sm:$0xff]
    %v2191 = vld [vmem:[#allocation2 + $0x648] sm:$0xff]
    %v2192 = vld [vmem:[#allocation2 + $0x650] sm:$0xff]
    %v2193 = vld [vmem:[#allocation2 + $0x658] sm:$0xff]
    %v2194 = vld [vmem:[#allocation2 + $0x660] sm:$0xff]
    %v2195 = vld [vmem:[#allocation2 + $0x668] sm:$0xff]
    %v2196 = vld [vmem:[#allocation2 + $0x670] sm:$0xff]
    %v2197 = vld [vmem:[#allocation2 + $0x678] sm:$0xff]
    %v2198 = vld [vmem:[#allocation2 + $0x680] sm:$0xff]
    %v2199 = vld [vmem:[#allocation2 + $0x688] sm:$0xff]
    %v2200 = vld [vmem:[#allocation2 + $0x690] sm:$0xff]
    %v2201 = vld [vmem:[#allocation2 + $0x698] sm:$0xff]
    %v2202 = vld [vmem:[#allocation2 + $0x6a0] sm:$0xff]
    %v2203 = vld [vmem:[#allocation2 + $0x6a8] sm:$0xff]
    %v2204 = vld [vmem:[#allocation2 + $0x6b0] sm:$0xff]
    %v2205 = vld [vmem:[#allocation2 + $0x6b8] sm:$0xff]
    %v2206 = vld [vmem:[#allocation2 + $0x6c0] sm:$0xff]
    %v2207 = vld [vmem:[#allocation2 + $0x6c8] sm:$0xff]
    %v2208 = vld [vmem:[#allocation2 + $0x6d0] sm:$0xff]
    %v2209 = vld [vmem:[#allocation2 + $0x6d8] sm:$0xff]
    %v2210 = vld [vmem:[#allocation2 + $0x6e0] sm:$0xff]
    %v2211 = vld [vmem:[#allocation2 + $0x6e8] sm:$0xff]
    %v2212 = vld [vmem:[#allocation2 + $0x6f0] sm:$0xff]
    %v2213 = vld [vmem:[#allocation2 + $0x6f8] sm:$0xff]
    %v2214 = vld [vmem:[#allocation2 + $0x700] sm:$0xff]
    %v2215 = vld [vmem:[#allocation2 + $0x708] sm:$0xff]
    %v2216 = vld [vmem:[#allocation2 + $0x710] sm:$0xff]
    %v2217 = vld [vmem:[#allocation2 + $0x718] sm:$0xff]
    %v2218 = vld [vmem:[#allocation2 + $0x720] sm:$0xff]
    %v2219 = vld [vmem:[#allocation2 + $0x728] sm:$0xff]
    %v2220 = vld [vmem:[#allocation2 + $0x730] sm:$0xff]
    %v2221 = vld [vmem:[#allocation2 + $0x738] sm:$0xff]
    %v2222 = vld [vmem:[#allocation2 + $0x740] sm:$0xff]
    %v2223 = vld [vmem:[#allocation2 + $0x748] sm:$0xff]
    %v2224 = vld [vmem:[#allocation2 + $0x750] sm:$0xff]
    %v2225 = vld [vmem:[#allocation2 + $0x758] sm:$0xff]
    %v2226 = vld [vmem:[#allocation2 + $0x760] sm:$0xff]
    %v2227 = vld [vmem:[#allocation2 + $0x768] sm:$0xff]
    %v2228 = vld [vmem:[#allocation2 + $0x770] sm:$0xff]
    %v2229 = vld [vmem:[#allocation2 + $0x778] sm:$0xff]
    %v2230 = vld [vmem:[#allocation2 + $0x780] sm:$0xff]
    %v2231 = vld [vmem:[#allocation2 + $0x788] sm:$0xff]
    %v2232 = vld [vmem:[#allocation2 + $0x790] sm:$0xff]
    %v2233 = vld [vmem:[#allocation2 + $0x798] sm:$0xff]
    %v2234 = vld [vmem:[#allocation2 + $0x7a0] sm:$0xff]
    %v2235 = vld [vmem:[#allocation2 + $0x7a8] sm:$0xff]
    %v2236 = vld [vmem:[#allocation2 + $0x7b0] sm:$0xff]
    %v2237 = vld [vmem:[#allocation2 + $0x7b8] sm:$0xff]
    %v2238 = vld [vmem:[#allocation2 + $0x7c0] sm:$0xff]
    %v2239 = vld [vmem:[#allocation2 + $0x7c8] sm:$0xff]
    %v2240 = vld [vmem:[#allocation2 + $0x7d0] sm:$0xff]
    %v2241 = vld [vmem:[#allocation2 + $0x7d8] sm:$0xff]
    %v2242 = vld [vmem:[#allocation2 + $0x7e0] sm:$0xff]
    %v2243 = vld [vmem:[#allocation2 + $0x7e8] sm:$0xff]
    %v2244 = vld [vmem:[#allocation2 + $0x7f0] sm:$0xff]
    %v2245 = vld [vmem:[#allocation2 + $0x7f8] sm:$0xff]
    %v2246 = vld [vmem:[%s4] sm:$0xff]
    %v2248 = vlaneseq
    %v2249 = vshrl.u32 %v2248, 7
    %v2250 = vsub.s32 0, %v2249
    %v2251 = vrot.slane %v2246, %v2250
    %v2252 = vlaneseq
    %v2253 = vshrl.u32 %v2252, 7
    %v2254 = vsub.s32 1, %v2253
    %v2255 = vrot.slane %v2246, %v2254
    %v2256 = vlaneseq
    %v2257 = vshrl.u32 %v2256, 7
    %v2258 = vsub.s32 2, %v2257
    %v2259 = vrot.slane %v2246, %v2258
    %v2260 = vlaneseq
    %v2261 = vshrl.u32 %v2260, 7
    %v2262 = vsub.s32 3, %v2261
    %v2263 = vrot.slane %v2246, %v2262
    %v2264 = vlaneseq
    %v2265 = vshrl.u32 %v2264, 7
    %v2266 = vsub.s32 4, %v2265
    %v2267 = vrot.slane %v2246, %v2266
    %v2268 = vlaneseq
    %v2269 = vshrl.u32 %v2268, 7
    %v2270 = vsub.s32 5, %v2269
    %v2271 = vrot.slane %v2246, %v2270
    %v2272 = vlaneseq
    %v2273 = vshrl.u32 %v2272, 7
    %v2274 = vsub.s32 6, %v2273
    %v2275 = vrot.slane %v2246, %v2274
    %v2276 = vlaneseq
    %v2277 = vshrl.u32 %v2276, 7
    %v2278 = vsub.s32 7, %v2277
    %v2279 = vrot.slane %v2246, %v2278
    %v2544 = vunpack.c.l.b16 %v1990
    %v2545 = vunpack.c.h.b16 %v1990
    %v2546 = vunpack.c.l.b16 %v1991
    %v2547 = vunpack.c.h.b16 %v1991
    %v2548 = vunpack.c.l.b16 %v1992
    %v2549 = vunpack.c.h.b16 %v1992
    %v2550 = vunpack.c.l.b16 %v1993
    %v2551 = vunpack.c.h.b16 %v1993
    %v2552 = vunpack.c.l.b16 %v1994
    %v2553 = vunpack.c.h.b16 %v1994
    %v2554 = vunpack.c.l.b16 %v1995
    %v2555 = vunpack.c.h.b16 %v1995
    %v2556 = vunpack.c.l.b16 %v1996
    %v2557 = vunpack.c.h.b16 %v1996
    %v2558 = vunpack.c.l.b16 %v1997
    %v2559 = vunpack.c.h.b16 %v1997
    %v2560 = vunpack.c.l.b16 %v1998
    %v2561 = vunpack.c.h.b16 %v1998
    %v2562 = vunpack.c.l.b16 %v1999
    %v2563 = vunpack.c.h.b16 %v1999
    %v2564 = vunpack.c.l.b16 %v2000
    %v2565 = vunpack.c.h.b16 %v2000
    %v2566 = vunpack.c.l.b16 %v2001
    %v2567 = vunpack.c.h.b16 %v2001
    %v2568 = vunpack.c.l.b16 %v2002
    %v2569 = vunpack.c.h.b16 %v2002
    %v2570 = vunpack.c.l.b16 %v2003
    %v2571 = vunpack.c.h.b16 %v2003
    %v2572 = vunpack.c.l.b16 %v2004
    %v2573 = vunpack.c.h.b16 %v2004
    %v2574 = vunpack.c.l.b16 %v2005
    %v2575 = vunpack.c.h.b16 %v2005
    %v2576 = vunpack.c.l.b16 %v2006
    %v2577 = vunpack.c.h.b16 %v2006
    %v2578 = vunpack.c.l.b16 %v2007
    %v2579 = vunpack.c.h.b16 %v2007
    %v2580 = vunpack.c.l.b16 %v2008
    %v2581 = vunpack.c.h.b16 %v2008
    %v2582 = vunpack.c.l.b16 %v2009
    %v2583 = vunpack.c.h.b16 %v2009
    %v2584 = vunpack.c.l.b16 %v2010
    %v2585 = vunpack.c.h.b16 %v2010
    %v2586 = vunpack.c.l.b16 %v2011
    %v2587 = vunpack.c.h.b16 %v2011
    %v2588 = vunpack.c.l.b16 %v2012
    %v2589 = vunpack.c.h.b16 %v2012
    %v2590 = vunpack.c.l.b16 %v2013
    %v2591 = vunpack.c.h.b16 %v2013
    %v2592 = vunpack.c.l.b16 %v2014
    %v2593 = vunpack.c.h.b16 %v2014
    %v2594 = vunpack.c.l.b16 %v2015
    %v2595 = vunpack.c.h.b16 %v2015
    %v2596 = vunpack.c.l.b16 %v2016
    %v2597 = vunpack.c.h.b16 %v2016
    %v2598 = vunpack.c.l.b16 %v2017
    %v2599 = vunpack.c.h.b16 %v2017
    %v2600 = vunpack.c.l.b16 %v2018
    %v2601 = vunpack.c.h.b16 %v2018
    %v2602 = vunpack.c.l.b16 %v2019
    %v2603 = vunpack.c.h.b16 %v2019
    %v2604 = vunpack.c.l.b16 %v2020
    %v2605 = vunpack.c.h.b16 %v2020
    %v2606 = vunpack.c.l.b16 %v2021
    %v2607 = vunpack.c.h.b16 %v2021
    %v2608 = vunpack.c.l.b16 %v2022
    %v2609 = vunpack.c.h.b16 %v2022
    %v2610 = vunpack.c.l.b16 %v2023
    %v2611 = vunpack.c.h.b16 %v2023
    %v2612 = vunpack.c.l.b16 %v2024
    %v2613 = vunpack.c.h.b16 %v2024
    %v2614 = vunpack.c.l.b16 %v2025
    %v2615 = vunpack.c.h.b16 %v2025
    %v2616 = vunpack.c.l.b16 %v2026
    %v2617 = vunpack.c.h.b16 %v2026
    %v2618 = vunpack.c.l.b16 %v2027
    %v2619 = vunpack.c.h.b16 %v2027
    %v2620 = vunpack.c.l.b16 %v2028
    %v2621 = vunpack.c.h.b16 %v2028
    %v2622 = vunpack.c.l.b16 %v2029
    %v2623 = vunpack.c.h.b16 %v2029
    %v2624 = vunpack.c.l.b16 %v2030
    %v2625 = vunpack.c.h.b16 %v2030
    %v2626 = vunpack.c.l.b16 %v2031
    %v2627 = vunpack.c.h.b16 %v2031
    %v2628 = vunpack.c.l.b16 %v2032
    %v2629 = vunpack.c.h.b16 %v2032
    %v2630 = vunpack.c.l.b16 %v2033
    %v2631 = vunpack.c.h.b16 %v2033
    %v2632 = vunpack.c.l.b16 %v2034
    %v2633 = vunpack.c.h.b16 %v2034
    %v2634 = vunpack.c.l.b16 %v2035
    %v2635 = vunpack.c.h.b16 %v2035
    %v2636 = vunpack.c.l.b16 %v2036
    %v2637 = vunpack.c.h.b16 %v2036
    %v2638 = vunpack.c.l.b16 %v2037
    %v2639 = vunpack.c.h.b16 %v2037
    %v2640 = vunpack.c.l.b16 %v2038
    %v2641 = vunpack.c.h.b16 %v2038
    %v2642 = vunpack.c.l.b16 %v2039
    %v2643 = vunpack.c.h.b16 %v2039
    %v2644 = vunpack.c.l.b16 %v2040
    %v2645 = vunpack.c.h.b16 %v2040
    %v2646 = vunpack.c.l.b16 %v2041
    %v2647 = vunpack.c.h.b16 %v2041
    %v2648 = vunpack.c.l.b16 %v2042
    %v2649 = vunpack.c.h.b16 %v2042
    %v2650 = vunpack.c.l.b16 %v2043
    %v2651 = vunpack.c.h.b16 %v2043
    %v2652 = vunpack.c.l.b16 %v2044
    %v2653 = vunpack.c.h.b16 %v2044
    %v2654 = vunpack.c.l.b16 %v2045
    %v2655 = vunpack.c.h.b16 %v2045
    %v2656 = vunpack.c.l.b16 %v2046
    %v2657 = vunpack.c.h.b16 %v2046
    %v2658 = vunpack.c.l.b16 %v2047
    %v2659 = vunpack.c.h.b16 %v2047
    %v2660 = vunpack.c.l.b16 %v2048
    %v2661 = vunpack.c.h.b16 %v2048
    %v2662 = vunpack.c.l.b16 %v2049
    %v2663 = vunpack.c.h.b16 %v2049
    %v2664 = vunpack.c.l.b16 %v2050
    %v2665 = vunpack.c.h.b16 %v2050
    %v2666 = vunpack.c.l.b16 %v2051
    %v2667 = vunpack.c.h.b16 %v2051
    %v2668 = vunpack.c.l.b16 %v2052
    %v2669 = vunpack.c.h.b16 %v2052
    %v2670 = vunpack.c.l.b16 %v2053
    %v2671 = vunpack.c.h.b16 %v2053
    %v2672 = vunpack.c.l.b16 %v2054
    %v2673 = vunpack.c.h.b16 %v2054
    %v2674 = vunpack.c.l.b16 %v2055
    %v2675 = vunpack.c.h.b16 %v2055
    %v2676 = vunpack.c.l.b16 %v2056
    %v2677 = vunpack.c.h.b16 %v2056
    %v2678 = vunpack.c.l.b16 %v2057
    %v2679 = vunpack.c.h.b16 %v2057
    %v2680 = vunpack.c.l.b16 %v2058
    %v2681 = vunpack.c.h.b16 %v2058
    %v2682 = vunpack.c.l.b16 %v2059
    %v2683 = vunpack.c.h.b16 %v2059
    %v2684 = vunpack.c.l.b16 %v2060
    %v2685 = vunpack.c.h.b16 %v2060
    %v2686 = vunpack.c.l.b16 %v2061
    %v2687 = vunpack.c.h.b16 %v2061
    %v2688 = vunpack.c.l.b16 %v2062
    %v2689 = vunpack.c.h.b16 %v2062
    %v2690 = vunpack.c.l.b16 %v2063
    %v2691 = vunpack.c.h.b16 %v2063
    %v2692 = vunpack.c.l.b16 %v2064
    %v2693 = vunpack.c.h.b16 %v2064
    %v2694 = vunpack.c.l.b16 %v2065
    %v2695 = vunpack.c.h.b16 %v2065
    %v2696 = vunpack.c.l.b16 %v2066
    %v2697 = vunpack.c.h.b16 %v2066
    %v2698 = vunpack.c.l.b16 %v2067
    %v2699 = vunpack.c.h.b16 %v2067
    %v2700 = vunpack.c.l.b16 %v2068
    %v2701 = vunpack.c.h.b16 %v2068
    %v2702 = vunpack.c.l.b16 %v2069
    %v2703 = vunpack.c.h.b16 %v2069
    %v2704 = vunpack.c.l.b16 %v2070
    %v2705 = vunpack.c.h.b16 %v2070
    %v2706 = vunpack.c.l.b16 %v2071
    %v2707 = vunpack.c.h.b16 %v2071
    %v2708 = vunpack.c.l.b16 %v2072
    %v2709 = vunpack.c.h.b16 %v2072
    %v2710 = vunpack.c.l.b16 %v2073
    %v2711 = vunpack.c.h.b16 %v2073
    %v2712 = vunpack.c.l.b16 %v2074
    %v2713 = vunpack.c.h.b16 %v2074
    %v2714 = vunpack.c.l.b16 %v2075
    %v2715 = vunpack.c.h.b16 %v2075
    %v2716 = vunpack.c.l.b16 %v2076
    %v2717 = vunpack.c.h.b16 %v2076
    %v2718 = vunpack.c.l.b16 %v2077
    %v2719 = vunpack.c.h.b16 %v2077
    %v2720 = vunpack.c.l.b16 %v2078
    %v2721 = vunpack.c.h.b16 %v2078
    %v2722 = vunpack.c.l.b16 %v2079
    %v2723 = vunpack.c.h.b16 %v2079
    %v2724 = vunpack.c.l.b16 %v2080
    %v2725 = vunpack.c.h.b16 %v2080
    %v2726 = vunpack.c.l.b16 %v2081
    %v2727 = vunpack.c.h.b16 %v2081
    %v2728 = vunpack.c.l.b16 %v2082
    %v2729 = vunpack.c.h.b16 %v2082
    %v2730 = vunpack.c.l.b16 %v2083
    %v2731 = vunpack.c.h.b16 %v2083
    %v2732 = vunpack.c.l.b16 %v2084
    %v2733 = vunpack.c.h.b16 %v2084
    %v2734 = vunpack.c.l.b16 %v2085
    %v2735 = vunpack.c.h.b16 %v2085
    %v2736 = vunpack.c.l.b16 %v2086
    %v2737 = vunpack.c.h.b16 %v2086
    %v2738 = vunpack.c.l.b16 %v2087
    %v2739 = vunpack.c.h.b16 %v2087
    %v2740 = vunpack.c.l.b16 %v2088
    %v2741 = vunpack.c.h.b16 %v2088
    %v2742 = vunpack.c.l.b16 %v2089
    %v2743 = vunpack.c.h.b16 %v2089
    %v2744 = vunpack.c.l.b16 %v2090
    %v2745 = vunpack.c.h.b16 %v2090
    %v2746 = vunpack.c.l.b16 %v2091
    %v2747 = vunpack.c.h.b16 %v2091
    %v2748 = vunpack.c.l.b16 %v2092
    %v2749 = vunpack.c.h.b16 %v2092
    %v2750 = vunpack.c.l.b16 %v2093
    %v2751 = vunpack.c.h.b16 %v2093
    %v2752 = vunpack.c.l.b16 %v2094
    %v2753 = vunpack.c.h.b16 %v2094
    %v2754 = vunpack.c.l.b16 %v2095
    %v2755 = vunpack.c.h.b16 %v2095
    %v2756 = vunpack.c.l.b16 %v2096
    %v2757 = vunpack.c.h.b16 %v2096
    %v2758 = vunpack.c.l.b16 %v2097
    %v2759 = vunpack.c.h.b16 %v2097
    %v2760 = vunpack.c.l.b16 %v2098
    %v2761 = vunpack.c.h.b16 %v2098
    %v2762 = vunpack.c.l.b16 %v2099
    %v2763 = vunpack.c.h.b16 %v2099
    %v2764 = vunpack.c.l.b16 %v2100
    %v2765 = vunpack.c.h.b16 %v2100
    %v2766 = vunpack.c.l.b16 %v2101
    %v2767 = vunpack.c.h.b16 %v2101
    %v2768 = vunpack.c.l.b16 %v2102
    %v2769 = vunpack.c.h.b16 %v2102
    %v2770 = vunpack.c.l.b16 %v2103
    %v2771 = vunpack.c.h.b16 %v2103
    %v2772 = vunpack.c.l.b16 %v2104
    %v2773 = vunpack.c.h.b16 %v2104
    %v2774 = vunpack.c.l.b16 %v2105
    %v2775 = vunpack.c.h.b16 %v2105
    %v2776 = vunpack.c.l.b16 %v2106
    %v2777 = vunpack.c.h.b16 %v2106
    %v2778 = vunpack.c.l.b16 %v2107
    %v2779 = vunpack.c.h.b16 %v2107
    %v2780 = vunpack.c.l.b16 %v2108
    %v2781 = vunpack.c.h.b16 %v2108
    %v2782 = vunpack.c.l.b16 %v2109
    %v2783 = vunpack.c.h.b16 %v2109
    %v2784 = vunpack.c.l.b16 %v2110
    %v2785 = vunpack.c.h.b16 %v2110
    %v2786 = vunpack.c.l.b16 %v2111
    %v2787 = vunpack.c.h.b16 %v2111
    %v2788 = vunpack.c.l.b16 %v2112
    %v2789 = vunpack.c.h.b16 %v2112
    %v2790 = vunpack.c.l.b16 %v2113
    %v2791 = vunpack.c.h.b16 %v2113
    %v2792 = vunpack.c.l.b16 %v2114
    %v2793 = vunpack.c.h.b16 %v2114
    %v2794 = vunpack.c.l.b16 %v2115
    %v2795 = vunpack.c.h.b16 %v2115
    %v2796 = vunpack.c.l.b16 %v2116
    %v2797 = vunpack.c.h.b16 %v2116
    %v2798 = vunpack.c.l.b16 %v2117
    %v2799 = vunpack.c.h.b16 %v2117
    %v2800 = vunpack.c.l.b16 %v2118
    %v2801 = vunpack.c.h.b16 %v2118
    %v2802 = vunpack.c.l.b16 %v2119
    %v2803 = vunpack.c.h.b16 %v2119
    %v2804 = vunpack.c.l.b16 %v2120
    %v2805 = vunpack.c.h.b16 %v2120
    %v2806 = vunpack.c.l.b16 %v2121
    %v2807 = vunpack.c.h.b16 %v2121
    %v2808 = vunpack.c.l.b16 %v2122
    %v2809 = vunpack.c.h.b16 %v2122
    %v2810 = vunpack.c.l.b16 %v2123
    %v2811 = vunpack.c.h.b16 %v2123
    %v2812 = vunpack.c.l.b16 %v2124
    %v2813 = vunpack.c.h.b16 %v2124
    %v2814 = vunpack.c.l.b16 %v2125
    %v2815 = vunpack.c.h.b16 %v2125
    %v2816 = vunpack.c.l.b16 %v2126
    %v2817 = vunpack.c.h.b16 %v2126
    %v2818 = vunpack.c.l.b16 %v2127
    %v2819 = vunpack.c.h.b16 %v2127
    %v2820 = vunpack.c.l.b16 %v2128
    %v2821 = vunpack.c.h.b16 %v2128
    %v2822 = vunpack.c.l.b16 %v2129
    %v2823 = vunpack.c.h.b16 %v2129
    %v2824 = vunpack.c.l.b16 %v2130
    %v2825 = vunpack.c.h.b16 %v2130
    %v2826 = vunpack.c.l.b16 %v2131
    %v2827 = vunpack.c.h.b16 %v2131
    %v2828 = vunpack.c.l.b16 %v2132
    %v2829 = vunpack.c.h.b16 %v2132
    %v2830 = vunpack.c.l.b16 %v2133
    %v2831 = vunpack.c.h.b16 %v2133
    %v2832 = vunpack.c.l.b16 %v2134
    %v2833 = vunpack.c.h.b16 %v2134
    %v2834 = vunpack.c.l.b16 %v2135
    %v2835 = vunpack.c.h.b16 %v2135
    %v2836 = vunpack.c.l.b16 %v2136
    %v2837 = vunpack.c.h.b16 %v2136
    %v2838 = vunpack.c.l.b16 %v2137
    %v2839 = vunpack.c.h.b16 %v2137
    %v2840 = vunpack.c.l.b16 %v2138
    %v2841 = vunpack.c.h.b16 %v2138
    %v2842 = vunpack.c.l.b16 %v2139
    %v2843 = vunpack.c.h.b16 %v2139
    %v2844 = vunpack.c.l.b16 %v2140
    %v2845 = vunpack.c.h.b16 %v2140
    %v2846 = vunpack.c.l.b16 %v2141
    %v2847 = vunpack.c.h.b16 %v2141
    %v2848 = vunpack.c.l.b16 %v2142
    %v2849 = vunpack.c.h.b16 %v2142
    %v2850 = vunpack.c.l.b16 %v2143
    %v2851 = vunpack.c.h.b16 %v2143
    %v2852 = vunpack.c.l.b16 %v2144
    %v2853 = vunpack.c.h.b16 %v2144
    %v2854 = vunpack.c.l.b16 %v2145
    %v2855 = vunpack.c.h.b16 %v2145
    %v2856 = vunpack.c.l.b16 %v2146
    %v2857 = vunpack.c.h.b16 %v2146
    %v2858 = vunpack.c.l.b16 %v2147
    %v2859 = vunpack.c.h.b16 %v2147
    %v2860 = vunpack.c.l.b16 %v2148
    %v2861 = vunpack.c.h.b16 %v2148
    %v2862 = vunpack.c.l.b16 %v2149
    %v2863 = vunpack.c.h.b16 %v2149
    %v2864 = vunpack.c.l.b16 %v2150
    %v2865 = vunpack.c.h.b16 %v2150
    %v2866 = vunpack.c.l.b16 %v2151
    %v2867 = vunpack.c.h.b16 %v2151
    %v2868 = vunpack.c.l.b16 %v2152
    %v2869 = vunpack.c.h.b16 %v2152
    %v2870 = vunpack.c.l.b16 %v2153
    %v2871 = vunpack.c.h.b16 %v2153
    %v2872 = vunpack.c.l.b16 %v2154
    %v2873 = vunpack.c.h.b16 %v2154
    %v2874 = vunpack.c.l.b16 %v2155
    %v2875 = vunpack.c.h.b16 %v2155
    %v2876 = vunpack.c.l.b16 %v2156
    %v2877 = vunpack.c.h.b16 %v2156
    %v2878 = vunpack.c.l.b16 %v2157
    %v2879 = vunpack.c.h.b16 %v2157
    %v2880 = vunpack.c.l.b16 %v2158
    %v2881 = vunpack.c.h.b16 %v2158
    %v2882 = vunpack.c.l.b16 %v2159
    %v2883 = vunpack.c.h.b16 %v2159
    %v2884 = vunpack.c.l.b16 %v2160
    %v2885 = vunpack.c.h.b16 %v2160
    %v2886 = vunpack.c.l.b16 %v2161
    %v2887 = vunpack.c.h.b16 %v2161
    %v2888 = vunpack.c.l.b16 %v2162
    %v2889 = vunpack.c.h.b16 %v2162
    %v2890 = vunpack.c.l.b16 %v2163
    %v2891 = vunpack.c.h.b16 %v2163
    %v2892 = vunpack.c.l.b16 %v2164
    %v2893 = vunpack.c.h.b16 %v2164
    %v2894 = vunpack.c.l.b16 %v2165
    %v2895 = vunpack.c.h.b16 %v2165
    %v2896 = vunpack.c.l.b16 %v2166
    %v2897 = vunpack.c.h.b16 %v2166
    %v2898 = vunpack.c.l.b16 %v2167
    %v2899 = vunpack.c.h.b16 %v2167
    %v2900 = vunpack.c.l.b16 %v2168
    %v2901 = vunpack.c.h.b16 %v2168
    %v2902 = vunpack.c.l.b16 %v2169
    %v2903 = vunpack.c.h.b16 %v2169
    %v2904 = vunpack.c.l.b16 %v2170
    %v2905 = vunpack.c.h.b16 %v2170
    %v2906 = vunpack.c.l.b16 %v2171
    %v2907 = vunpack.c.h.b16 %v2171
    %v2908 = vunpack.c.l.b16 %v2172
    %v2909 = vunpack.c.h.b16 %v2172
    %v2910 = vunpack.c.l.b16 %v2173
    %v2911 = vunpack.c.h.b16 %v2173
    %v2912 = vunpack.c.l.b16 %v2174
    %v2913 = vunpack.c.h.b16 %v2174
    %v2914 = vunpack.c.l.b16 %v2175
    %v2915 = vunpack.c.h.b16 %v2175
    %v2916 = vunpack.c.l.b16 %v2176
    %v2917 = vunpack.c.h.b16 %v2176
    %v2918 = vunpack.c.l.b16 %v2177
    %v2919 = vunpack.c.h.b16 %v2177
    %v2920 = vunpack.c.l.b16 %v2178
    %v2921 = vunpack.c.h.b16 %v2178
    %v2922 = vunpack.c.l.b16 %v2179
    %v2923 = vunpack.c.h.b16 %v2179
    %v2924 = vunpack.c.l.b16 %v2180
    %v2925 = vunpack.c.h.b16 %v2180
    %v2926 = vunpack.c.l.b16 %v2181
    %v2927 = vunpack.c.h.b16 %v2181
    %v2928 = vunpack.c.l.b16 %v2182
    %v2929 = vunpack.c.h.b16 %v2182
    %v2930 = vunpack.c.l.b16 %v2183
    %v2931 = vunpack.c.h.b16 %v2183
    %v2932 = vunpack.c.l.b16 %v2184
    %v2933 = vunpack.c.h.b16 %v2184
    %v2934 = vunpack.c.l.b16 %v2185
    %v2935 = vunpack.c.h.b16 %v2185
    %v2936 = vunpack.c.l.b16 %v2186
    %v2937 = vunpack.c.h.b16 %v2186
    %v2938 = vunpack.c.l.b16 %v2187
    %v2939 = vunpack.c.h.b16 %v2187
    %v2940 = vunpack.c.l.b16 %v2188
    %v2941 = vunpack.c.h.b16 %v2188
    %v2942 = vunpack.c.l.b16 %v2189
    %v2943 = vunpack.c.h.b16 %v2189
    %v2944 = vunpack.c.l.b16 %v2190
    %v2945 = vunpack.c.h.b16 %v2190
    %v2946 = vunpack.c.l.b16 %v2191
    %v2947 = vunpack.c.h.b16 %v2191
    %v2948 = vunpack.c.l.b16 %v2192
    %v2949 = vunpack.c.h.b16 %v2192
    %v2950 = vunpack.c.l.b16 %v2193
    %v2951 = vunpack.c.h.b16 %v2193
    %v2952 = vunpack.c.l.b16 %v2194
    %v2953 = vunpack.c.h.b16 %v2194
    %v2954 = vunpack.c.l.b16 %v2195
    %v2955 = vunpack.c.h.b16 %v2195
    %v2956 = vunpack.c.l.b16 %v2196
    %v2957 = vunpack.c.h.b16 %v2196
    %v2958 = vunpack.c.l.b16 %v2197
    %v2959 = vunpack.c.h.b16 %v2197
    %v2960 = vunpack.c.l.b16 %v2198
    %v2961 = vunpack.c.h.b16 %v2198
    %v2962 = vunpack.c.l.b16 %v2199
    %v2963 = vunpack.c.h.b16 %v2199
    %v2964 = vunpack.c.l.b16 %v2200
    %v2965 = vunpack.c.h.b16 %v2200
    %v2966 = vunpack.c.l.b16 %v2201
    %v2967 = vunpack.c.h.b16 %v2201
    %v2968 = vunpack.c.l.b16 %v2202
    %v2969 = vunpack.c.h.b16 %v2202
    %v2970 = vunpack.c.l.b16 %v2203
    %v2971 = vunpack.c.h.b16 %v2203
    %v2972 = vunpack.c.l.b16 %v2204
    %v2973 = vunpack.c.h.b16 %v2204
    %v2974 = vunpack.c.l.b16 %v2205
    %v2975 = vunpack.c.h.b16 %v2205
    %v2976 = vunpack.c.l.b16 %v2206
    %v2977 = vunpack.c.h.b16 %v2206
    %v2978 = vunpack.c.l.b16 %v2207
    %v2979 = vunpack.c.h.b16 %v2207
    %v2980 = vunpack.c.l.b16 %v2208
    %v2981 = vunpack.c.h.b16 %v2208
    %v2982 = vunpack.c.l.b16 %v2209
    %v2983 = vunpack.c.h.b16 %v2209
    %v2984 = vunpack.c.l.b16 %v2210
    %v2985 = vunpack.c.h.b16 %v2210
    %v2986 = vunpack.c.l.b16 %v2211
    %v2987 = vunpack.c.h.b16 %v2211
    %v2988 = vunpack.c.l.b16 %v2212
    %v2989 = vunpack.c.h.b16 %v2212
    %v2990 = vunpack.c.l.b16 %v2213
    %v2991 = vunpack.c.h.b16 %v2213
    %v2992 = vunpack.c.l.b16 %v2214
    %v2993 = vunpack.c.h.b16 %v2214
    %v2994 = vunpack.c.l.b16 %v2215
    %v2995 = vunpack.c.h.b16 %v2215
    %v2996 = vunpack.c.l.b16 %v2216
    %v2997 = vunpack.c.h.b16 %v2216
    %v2998 = vunpack.c.l.b16 %v2217
    %v2999 = vunpack.c.h.b16 %v2217
    %v3000 = vunpack.c.l.b16 %v2218
    %v3001 = vunpack.c.h.b16 %v2218
    %v3002 = vunpack.c.l.b16 %v2219
    %v3003 = vunpack.c.h.b16 %v2219
    %v3004 = vunpack.c.l.b16 %v2220
    %v3005 = vunpack.c.h.b16 %v2220
    %v3006 = vunpack.c.l.b16 %v2221
    %v3007 = vunpack.c.h.b16 %v2221
    %v3008 = vunpack.c.l.b16 %v2222
    %v3009 = vunpack.c.h.b16 %v2222
    %v3010 = vunpack.c.l.b16 %v2223
    %v3011 = vunpack.c.h.b16 %v2223
    %v3012 = vunpack.c.l.b16 %v2224
    %v3013 = vunpack.c.h.b16 %v2224
    %v3014 = vunpack.c.l.b16 %v2225
    %v3015 = vunpack.c.h.b16 %v2225
    %v3016 = vunpack.c.l.b16 %v2226
    %v3017 = vunpack.c.h.b16 %v2226
    %v3018 = vunpack.c.l.b16 %v2227
    %v3019 = vunpack.c.h.b16 %v2227
    %v3020 = vunpack.c.l.b16 %v2228
    %v3021 = vunpack.c.h.b16 %v2228
    %v3022 = vunpack.c.l.b16 %v2229
    %v3023 = vunpack.c.h.b16 %v2229
    %v3024 = vunpack.c.l.b16 %v2230
    %v3025 = vunpack.c.h.b16 %v2230
    %v3026 = vunpack.c.l.b16 %v2231
    %v3027 = vunpack.c.h.b16 %v2231
    %v3028 = vunpack.c.l.b16 %v2232
    %v3029 = vunpack.c.h.b16 %v2232
    %v3030 = vunpack.c.l.b16 %v2233
    %v3031 = vunpack.c.h.b16 %v2233
    %v3032 = vunpack.c.l.b16 %v2234
    %v3033 = vunpack.c.h.b16 %v2234
    %v3034 = vunpack.c.l.b16 %v2235
    %v3035 = vunpack.c.h.b16 %v2235
    %v3036 = vunpack.c.l.b16 %v2236
    %v3037 = vunpack.c.h.b16 %v2236
    %v3038 = vunpack.c.l.b16 %v2237
    %v3039 = vunpack.c.h.b16 %v2237
    %v3040 = vunpack.c.l.b16 %v2238
    %v3041 = vunpack.c.h.b16 %v2238
    %v3042 = vunpack.c.l.b16 %v2239
    %v3043 = vunpack.c.h.b16 %v2239
    %v3044 = vunpack.c.l.b16 %v2240
    %v3045 = vunpack.c.h.b16 %v2240
    %v3046 = vunpack.c.l.b16 %v2241
    %v3047 = vunpack.c.h.b16 %v2241
    %v3048 = vunpack.c.l.b16 %v2242
    %v3049 = vunpack.c.h.b16 %v2242
    %v3050 = vunpack.c.l.b16 %v2243
    %v3051 = vunpack.c.h.b16 %v2243
    %v3052 = vunpack.c.l.b16 %v2244
    %v3053 = vunpack.c.h.b16 %v2244
    %v3054 = vunpack.c.l.b16 %v2245
    %v3055 = vunpack.c.h.b16 %v2245
    %v3056 = vpack.c.b16 %v2552, %v2544
    %v3057 = vpack.c.b16 %v2553, %v2545
    %v3058 = vpack.c.b16 %v2554, %v2546
    %v3059 = vpack.c.b16 %v2555, %v2547
    %v3060 = vpack.c.b16 %v2556, %v2548
    %v3061 = vpack.c.b16 %v2557, %v2549
    %v3062 = vpack.c.b16 %v2558, %v2550
    %v3063 = vpack.c.b16 %v2559, %v2551
    %v3064 = vpack.c.b16 %v2568, %v2560
    %v3065 = vpack.c.b16 %v2569, %v2561
    %v3066 = vpack.c.b16 %v2570, %v2562
    %v3067 = vpack.c.b16 %v2571, %v2563
    %v3068 = vpack.c.b16 %v2572, %v2564
    %v3069 = vpack.c.b16 %v2573, %v2565
    %v3070 = vpack.c.b16 %v2574, %v2566
    %v3071 = vpack.c.b16 %v2575, %v2567
    %v3072 = vpack.c.b16 %v2584, %v2576
    %v3073 = vpack.c.b16 %v2585, %v2577
    %v3074 = vpack.c.b16 %v2586, %v2578
    %v3075 = vpack.c.b16 %v2587, %v2579
    %v3076 = vpack.c.b16 %v2588, %v2580
    %v3077 = vpack.c.b16 %v2589, %v2581
    %v3078 = vpack.c.b16 %v2590, %v2582
    %v3079 = vpack.c.b16 %v2591, %v2583
    %v3080 = vpack.c.b16 %v2600, %v2592
    %v3081 = vpack.c.b16 %v2601, %v2593
    %v3082 = vpack.c.b16 %v2602, %v2594
    %v3083 = vpack.c.b16 %v2603, %v2595
    %v3084 = vpack.c.b16 %v2604, %v2596
    %v3085 = vpack.c.b16 %v2605, %v2597
    %v3086 = vpack.c.b16 %v2606, %v2598
    %v3087 = vpack.c.b16 %v2607, %v2599
    %v3088 = vpack.c.b16 %v2616, %v2608
    %v3089 = vpack.c.b16 %v2617, %v2609
    %v3090 = vpack.c.b16 %v2618, %v2610
    %v3091 = vpack.c.b16 %v2619, %v2611
    %v3092 = vpack.c.b16 %v2620, %v2612
    %v3093 = vpack.c.b16 %v2621, %v2613
    %v3094 = vpack.c.b16 %v2622, %v2614
    %v3095 = vpack.c.b16 %v2623, %v2615
    %v3096 = vpack.c.b16 %v2632, %v2624
    %v3097 = vpack.c.b16 %v2633, %v2625
    %v3098 = vpack.c.b16 %v2634, %v2626
    %v3099 = vpack.c.b16 %v2635, %v2627
    %v3100 = vpack.c.b16 %v2636, %v2628
    %v3101 = vpack.c.b16 %v2637, %v2629
    %v3102 = vpack.c.b16 %v2638, %v2630
    %v3103 = vpack.c.b16 %v2639, %v2631
    %v3104 = vpack.c.b16 %v2648, %v2640
    %v3105 = vpack.c.b16 %v2649, %v2641
    %v3106 = vpack.c.b16 %v2650, %v2642
    %v3107 = vpack.c.b16 %v2651, %v2643
    %v3108 = vpack.c.b16 %v2652, %v2644
    %v3109 = vpack.c.b16 %v2653, %v2645
    %v3110 = vpack.c.b16 %v2654, %v2646
    %v3111 = vpack.c.b16 %v2655, %v2647
    %v3112 = vpack.c.b16 %v2664, %v2656
    %v3113 = vpack.c.b16 %v2665, %v2657
    %v3114 = vpack.c.b16 %v2666, %v2658
    %v3115 = vpack.c.b16 %v2667, %v2659
    %v3116 = vpack.c.b16 %v2668, %v2660
    %v3117 = vpack.c.b16 %v2669, %v2661
    %v3118 = vpack.c.b16 %v2670, %v2662
    %v3119 = vpack.c.b16 %v2671, %v2663
    %v3120 = vpack.c.b16 %v2680, %v2672
    %v3121 = vpack.c.b16 %v2681, %v2673
    %v3122 = vpack.c.b16 %v2682, %v2674
    %v3123 = vpack.c.b16 %v2683, %v2675
    %v3124 = vpack.c.b16 %v2684, %v2676
    %v3125 = vpack.c.b16 %v2685, %v2677
    %v3126 = vpack.c.b16 %v2686, %v2678
    %v3127 = vpack.c.b16 %v2687, %v2679
    %v3128 = vpack.c.b16 %v2696, %v2688
    %v3129 = vpack.c.b16 %v2697, %v2689
    %v3130 = vpack.c.b16 %v2698, %v2690
    %v3131 = vpack.c.b16 %v2699, %v2691
    %v3132 = vpack.c.b16 %v2700, %v2692
    %v3133 = vpack.c.b16 %v2701, %v2693
    %v3134 = vpack.c.b16 %v2702, %v2694
    %v3135 = vpack.c.b16 %v2703, %v2695
    %v3136 = vpack.c.b16 %v2712, %v2704
    %v3137 = vpack.c.b16 %v2713, %v2705
    %v3138 = vpack.c.b16 %v2714, %v2706
    %v3139 = vpack.c.b16 %v2715, %v2707
    %v3140 = vpack.c.b16 %v2716, %v2708
    %v3141 = vpack.c.b16 %v2717, %v2709
    %v3142 = vpack.c.b16 %v2718, %v2710
    %v3143 = vpack.c.b16 %v2719, %v2711
    %v3144 = vpack.c.b16 %v2728, %v2720
    %v3145 = vpack.c.b16 %v2729, %v2721
    %v3146 = vpack.c.b16 %v2730, %v2722
    %v3147 = vpack.c.b16 %v2731, %v2723
    %v3148 = vpack.c.b16 %v2732, %v2724
    %v3149 = vpack.c.b16 %v2733, %v2725
    %v3150 = vpack.c.b16 %v2734, %v2726
    %v3151 = vpack.c.b16 %v2735, %v2727
    %v3152 = vpack.c.b16 %v2744, %v2736
    %v3153 = vpack.c.b16 %v2745, %v2737
    %v3154 = vpack.c.b16 %v2746, %v2738
    %v3155 = vpack.c.b16 %v2747, %v2739
    %v3156 = vpack.c.b16 %v2748, %v2740
    %v3157 = vpack.c.b16 %v2749, %v2741
    %v3158 = vpack.c.b16 %v2750, %v2742
    %v3159 = vpack.c.b16 %v2751, %v2743
    %v3160 = vpack.c.b16 %v2760, %v2752
    %v3161 = vpack.c.b16 %v2761, %v2753
    %v3162 = vpack.c.b16 %v2762, %v2754
    %v3163 = vpack.c.b16 %v2763, %v2755
    %v3164 = vpack.c.b16 %v2764, %v2756
    %v3165 = vpack.c.b16 %v2765, %v2757
    %v3166 = vpack.c.b16 %v2766, %v2758
    %v3167 = vpack.c.b16 %v2767, %v2759
    %v3168 = vpack.c.b16 %v2776, %v2768
    %v3169 = vpack.c.b16 %v2777, %v2769
    %v3170 = vpack.c.b16 %v2778, %v2770
    %v3171 = vpack.c.b16 %v2779, %v2771
    %v3172 = vpack.c.b16 %v2780, %v2772
    %v3173 = vpack.c.b16 %v2781, %v2773
    %v3174 = vpack.c.b16 %v2782, %v2774
    %v3175 = vpack.c.b16 %v2783, %v2775
    %v3176 = vpack.c.b16 %v2792, %v2784
    %v3177 = vpack.c.b16 %v2793, %v2785
    %v3178 = vpack.c.b16 %v2794, %v2786
    %v3179 = vpack.c.b16 %v2795, %v2787
    %v3180 = vpack.c.b16 %v2796, %v2788
    %v3181 = vpack.c.b16 %v2797, %v2789
    %v3182 = vpack.c.b16 %v2798, %v2790
    %v3183 = vpack.c.b16 %v2799, %v2791
    %v3184 = vpack.c.b16 %v2808, %v2800
    %v3185 = vpack.c.b16 %v2809, %v2801
    %v3186 = vpack.c.b16 %v2810, %v2802
    %v3187 = vpack.c.b16 %v2811, %v2803
    %v3188 = vpack.c.b16 %v2812, %v2804
    %v3189 = vpack.c.b16 %v2813, %v2805
    %v3190 = vpack.c.b16 %v2814, %v2806
    %v3191 = vpack.c.b16 %v2815, %v2807
    %v3192 = vpack.c.b16 %v2824, %v2816
    %v3193 = vpack.c.b16 %v2825, %v2817
    %v3194 = vpack.c.b16 %v2826, %v2818
    %v3195 = vpack.c.b16 %v2827, %v2819
    %v3196 = vpack.c.b16 %v2828, %v2820
    %v3197 = vpack.c.b16 %v2829, %v2821
    %v3198 = vpack.c.b16 %v2830, %v2822
    %v3199 = vpack.c.b16 %v2831, %v2823
    %v3200 = vpack.c.b16 %v2840, %v2832
    %v3201 = vpack.c.b16 %v2841, %v2833
    %v3202 = vpack.c.b16 %v2842, %v2834
    %v3203 = vpack.c.b16 %v2843, %v2835
    %v3204 = vpack.c.b16 %v2844, %v2836
    %v3205 = vpack.c.b16 %v2845, %v2837
    %v3206 = vpack.c.b16 %v2846, %v2838
    %v3207 = vpack.c.b16 %v2847, %v2839
    %v3208 = vpack.c.b16 %v2856, %v2848
    %v3209 = vpack.c.b16 %v2857, %v2849
    %v3210 = vpack.c.b16 %v2858, %v2850
    %v3211 = vpack.c.b16 %v2859, %v2851
    %v3212 = vpack.c.b16 %v2860, %v2852
    %v3213 = vpack.c.b16 %v2861, %v2853
    %v3214 = vpack.c.b16 %v2862, %v2854
    %v3215 = vpack.c.b16 %v2863, %v2855
    %v3216 = vpack.c.b16 %v2872, %v2864
    %v3217 = vpack.c.b16 %v2873, %v2865
    %v3218 = vpack.c.b16 %v2874, %v2866
    %v3219 = vpack.c.b16 %v2875, %v2867
    %v3220 = vpack.c.b16 %v2876, %v2868
    %v3221 = vpack.c.b16 %v2877, %v2869
    %v3222 = vpack.c.b16 %v2878, %v2870
    %v3223 = vpack.c.b16 %v2879, %v2871
    %v3224 = vpack.c.b16 %v2888, %v2880
    %v3225 = vpack.c.b16 %v2889, %v2881
    %v3226 = vpack.c.b16 %v2890, %v2882
    %v3227 = vpack.c.b16 %v2891, %v2883
    %v3228 = vpack.c.b16 %v2892, %v2884
    %v3229 = vpack.c.b16 %v2893, %v2885
    %v3230 = vpack.c.b16 %v2894, %v2886
    %v3231 = vpack.c.b16 %v2895, %v2887
    %v3232 = vpack.c.b16 %v2904, %v2896
    %v3233 = vpack.c.b16 %v2905, %v2897
    %v3234 = vpack.c.b16 %v2906, %v2898
    %v3235 = vpack.c.b16 %v2907, %v2899
    %v3236 = vpack.c.b16 %v2908, %v2900
    %v3237 = vpack.c.b16 %v2909, %v2901
    %v3238 = vpack.c.b16 %v2910, %v2902
    %v3239 = vpack.c.b16 %v2911, %v2903
    %v3240 = vpack.c.b16 %v2920, %v2912
    %v3241 = vpack.c.b16 %v2921, %v2913
    %v3242 = vpack.c.b16 %v2922, %v2914
    %v3243 = vpack.c.b16 %v2923, %v2915
    %v3244 = vpack.c.b16 %v2924, %v2916
    %v3245 = vpack.c.b16 %v2925, %v2917
    %v3246 = vpack.c.b16 %v2926, %v2918
    %v3247 = vpack.c.b16 %v2927, %v2919
    %v3248 = vpack.c.b16 %v2936, %v2928
    %v3249 = vpack.c.b16 %v2937, %v2929
    %v3250 = vpack.c.b16 %v2938, %v2930
    %v3251 = vpack.c.b16 %v2939, %v2931
    %v3252 = vpack.c.b16 %v2940, %v2932
    %v3253 = vpack.c.b16 %v2941, %v2933
    %v3254 = vpack.c.b16 %v2942, %v2934
    %v3255 = vpack.c.b16 %v2943, %v2935
    %v3256 = vpack.c.b16 %v2952, %v2944
    %v3257 = vpack.c.b16 %v2953, %v2945
    %v3258 = vpack.c.b16 %v2954, %v2946
    %v3259 = vpack.c.b16 %v2955, %v2947
    %v3260 = vpack.c.b16 %v2956, %v2948
    %v3261 = vpack.c.b16 %v2957, %v2949
    %v3262 = vpack.c.b16 %v2958, %v2950
    %v3263 = vpack.c.b16 %v2959, %v2951
    %v3264 = vpack.c.b16 %v2968, %v2960
    %v3265 = vpack.c.b16 %v2969, %v2961
    %v3266 = vpack.c.b16 %v2970, %v2962
    %v3267 = vpack.c.b16 %v2971, %v2963
    %v3268 = vpack.c.b16 %v2972, %v2964
    %v3269 = vpack.c.b16 %v2973, %v2965
    %v3270 = vpack.c.b16 %v2974, %v2966
    %v3271 = vpack.c.b16 %v2975, %v2967
    %v3272 = vpack.c.b16 %v2984, %v2976
    %v3273 = vpack.c.b16 %v2985, %v2977
    %v3274 = vpack.c.b16 %v2986, %v2978
    %v3275 = vpack.c.b16 %v2987, %v2979
    %v3276 = vpack.c.b16 %v2988, %v2980
    %v3277 = vpack.c.b16 %v2989, %v2981
    %v3278 = vpack.c.b16 %v2990, %v2982
    %v3279 = vpack.c.b16 %v2991, %v2983
    %v3280 = vpack.c.b16 %v3000, %v2992
    %v3281 = vpack.c.b16 %v3001, %v2993
    %v3282 = vpack.c.b16 %v3002, %v2994
    %v3283 = vpack.c.b16 %v3003, %v2995
    %v3284 = vpack.c.b16 %v3004, %v2996
    %v3285 = vpack.c.b16 %v3005, %v2997
    %v3286 = vpack.c.b16 %v3006, %v2998
    %v3287 = vpack.c.b16 %v3007, %v2999
    %v3288 = vpack.c.b16 %v3016, %v3008
    %v3289 = vpack.c.b16 %v3017, %v3009
    %v3290 = vpack.c.b16 %v3018, %v3010
    %v3291 = vpack.c.b16 %v3019, %v3011
    %v3292 = vpack.c.b16 %v3020, %v3012
    %v3293 = vpack.c.b16 %v3021, %v3013
    %v3294 = vpack.c.b16 %v3022, %v3014
    %v3295 = vpack.c.b16 %v3023, %v3015
    %v3296 = vpack.c.b16 %v3032, %v3024
    %v3297 = vpack.c.b16 %v3033, %v3025
    %v3298 = vpack.c.b16 %v3034, %v3026
    %v3299 = vpack.c.b16 %v3035, %v3027
    %v3300 = vpack.c.b16 %v3036, %v3028
    %v3301 = vpack.c.b16 %v3037, %v3029
    %v3302 = vpack.c.b16 %v3038, %v3030
    %v3303 = vpack.c.b16 %v3039, %v3031
    %v3304 = vpack.c.b16 %v3048, %v3040
    %v3305 = vpack.c.b16 %v3049, %v3041
    %v3306 = vpack.c.b16 %v3050, %v3042
    %v3307 = vpack.c.b16 %v3051, %v3043
    %v3308 = vpack.c.b16 %v3052, %v3044
    %v3309 = vpack.c.b16 %v3053, %v3045
    %v3310 = vpack.c.b16 %v3054, %v3046
    %v3311 = vpack.c.b16 %v3055, %v3047
    %3568 = vmatprep.subr.bf16.mxu0 %v3057
    %3569 = vmatpush1.bf16.msra.mxu0 %v3056
    %3570 = vmatprep.subr.bf16.mxu0 %v3065
    %3571 = vmatpush1.bf16.msra.mxu0 %v3064
    %3572 = vmatprep.subr.bf16.mxu0 %v3073
    %3573 = vmatpush1.bf16.msra.mxu0 %v3072
    %3574 = vmatprep.subr.bf16.mxu0 %v3081
    %3575 = vmatpush1.bf16.msra.mxu0 %v3080
    %3576 = vmatprep.subr.bf16.mxu0 %v3089
    %3577 = vmatpush1.bf16.msra.mxu0 %v3088
    %3578 = vmatprep.subr.bf16.mxu0 %v3097
    %3579 = vmatpush1.bf16.msra.mxu0 %v3096
    %3580 = vmatprep.subr.bf16.mxu0 %v3105
    %3581 = vmatpush1.bf16.msra.mxu0 %v3104
    %3582 = vmatprep.subr.bf16.mxu0 %v3113
    %3583 = vmatpush1.bf16.msra.mxu0 %v3112
    %3584 = vmatprep.subr.bf16.mxu0 %v3121
    %3585 = vmatpush1.bf16.msra.mxu0 %v3120
    %3586 = vmatprep.subr.bf16.mxu0 %v3129
    %3587 = vmatpush1.bf16.msra.mxu0 %v3128
    %3588 = vmatprep.subr.bf16.mxu0 %v3137
    %3589 = vmatpush1.bf16.msra.mxu0 %v3136
    %3590 = vmatprep.subr.bf16.mxu0 %v3145
    %3591 = vmatpush1.bf16.msra.mxu0 %v3144
    %3592 = vmatprep.subr.bf16.mxu0 %v3153
    %3593 = vmatpush1.bf16.msra.mxu0 %v3152
    %3594 = vmatprep.subr.bf16.mxu0 %v3161
    %3595 = vmatpush1.bf16.msra.mxu0 %v3160
    %3596 = vmatprep.subr.bf16.mxu0 %v3169
    %3597 = vmatpush1.bf16.msra.mxu0 %v3168
    %3598 = vmatprep.subr.bf16.mxu0 %v3177
    %3599 = vmatpush1.bf16.msra.mxu0 %v3176
    %3600 = vmatprep.mubr.bf16.mxu0 %v1987
    %3601 = vmatmul.mubr.bf16.gmra.mrb[0].mxu0 %v1986
    %v3602 = vpop.f32.mrb[0].mxu0
    %v3603 = vadd.f32 %v2251, %v3602
    %v3604 = vpop.f32.mrb[0].mxu0
    %v3605 = vadd.f32 %v2255, %v3604
    %v3606 = vpop.f32.mrb[0].mxu0
    %v3607 = vpop.f32.mrb[0].mxu0
    %3608 = vdwg.mxu0
    %3609 = vmatprep.subr.bf16.mxu0 %v3185
    %3610 = vmatpush1.bf16.msra.mxu0 %v3184
    %3611 = vmatprep.subr.bf16.mxu0 %v3193
    %3612 = vmatpush1.bf16.msra.mxu0 %v3192
    %3613 = vmatprep.subr.bf16.mxu0 %v3201
    %3614 = vmatpush1.bf16.msra.mxu0 %v3200
    %3615 = vmatprep.subr.bf16.mxu0 %v3209
    %3616 = vmatpush1.bf16.msra.mxu0 %v3208
    %3617 = vmatprep.subr.bf16.mxu0 %v3217
    %3618 = vmatpush1.bf16.msra.mxu0 %v3216
    %3619 = vmatprep.subr.bf16.mxu0 %v3225
    %3620 = vmatpush1.bf16.msra.mxu0 %v3224
    %3621 = vmatprep.subr.bf16.mxu0 %v3233
    %3622 = vmatpush1.bf16.msra.mxu0 %v3232
    %3623 = vmatprep.subr.bf16.mxu0 %v3241
    %3624 = vmatpush1.bf16.msra.mxu0 %v3240
    %3625 = vmatprep.subr.bf16.mxu0 %v3249
    %3626 = vmatpush1.bf16.msra.mxu0 %v3248
    %3627 = vmatprep.subr.bf16.mxu0 %v3257
    %3628 = vmatpush1.bf16.msra.mxu0 %v3256
    %3629 = vmatprep.subr.bf16.mxu0 %v3265
    %3630 = vmatpush1.bf16.msra.mxu0 %v3264
    %3631 = vmatprep.subr.bf16.mxu0 %v3273
    %3632 = vmatpush1.bf16.msra.mxu0 %v3272
    %3633 = vmatprep.subr.bf16.mxu0 %v3281
    %3634 = vmatpush1.bf16.msra.mxu0 %v3280
    %3635 = vmatprep.subr.bf16.mxu0 %v3289
    %3636 = vmatpush1.bf16.msra.mxu0 %v3288
    %3637 = vmatprep.subr.bf16.mxu0 %v3297
    %3638 = vmatpush1.bf16.msra.mxu0 %v3296
    %3639 = vmatprep.subr.bf16.mxu0 %v3305
    %3640 = vmatpush1.bf16.msra.mxu0 %v3304
    %3641 = vmatprep.mubr.bf16.mxu0 %v1989
    %3642 = vmatmul.mubr.bf16.gmra.mrb[0].mxu0 %v1988
    %v3643 = vpop.f32.mrb[0].mxu0
    %v3644 = vadd.f32 %v3603, %v3643
    %v3645 = vpop.f32.mrb[0].mxu0
    %v3646 = vadd.f32 %v3605, %v3645
    %v3647 = vpop.f32.mrb[0].mxu0
    %v3648 = vpop.f32.mrb[0].mxu0
    %3649 = vdwg.mxu0
    %3650 = vmatprep.subr.bf16.mxu0 %v3059
    %3651 = vmatpush1.bf16.msra.mxu0 %v3058
    %3652 = vmatprep.subr.bf16.mxu0 %v3067
    %3653 = vmatpush1.bf16.msra.mxu0 %v3066
    %3654 = vmatprep.subr.bf16.mxu0 %v3075
    %3655 = vmatpush1.bf16.msra.mxu0 %v3074
    %3656 = vmatprep.subr.bf16.mxu0 %v3083
    %3657 = vmatpush1.bf16.msra.mxu0 %v3082
    %3658 = vmatprep.subr.bf16.mxu0 %v3091
    %3659 = vmatpush1.bf16.msra.mxu0 %v3090
    %3660 = vmatprep.subr.bf16.mxu0 %v3099
    %3661 = vmatpush1.bf16.msra.mxu0 %v3098
    %3662 = vmatprep.subr.bf16.mxu0 %v3107
    %3663 = vmatpush1.bf16.msra.mxu0 %v3106
    %3664 = vmatprep.subr.bf16.mxu0 %v3115
    %3665 = vmatpush1.bf16.msra.mxu0 %v3114
    %3666 = vmatprep.subr.bf16.mxu0 %v3123
    %3667 = vmatpush1.bf16.msra.mxu0 %v3122
    %3668 = vmatprep.subr.bf16.mxu0 %v3131
    %3669 = vmatpush1.bf16.msra.mxu0 %v3130
    %3670 = vmatprep.subr.bf16.mxu0 %v3139
    %3671 = vmatpush1.bf16.msra.mxu0 %v3138
    %3672 = vmatprep.subr.bf16.mxu0 %v3147
    %3673 = vmatpush1.bf16.msra.mxu0 %v3146
    %3674 = vmatprep.subr.bf16.mxu0 %v3155
    %3675 = vmatpush1.bf16.msra.mxu0 %v3154
    %3676 = vmatprep.subr.bf16.mxu0 %v3163
    %3677 = vmatpush1.bf16.msra.mxu0 %v3162
    %3678 = vmatprep.subr.bf16.mxu0 %v3171
    %3679 = vmatpush1.bf16.msra.mxu0 %v3170
    %3680 = vmatprep.subr.bf16.mxu0 %v3179
    %3681 = vmatpush1.bf16.msra.mxu0 %v3178
    %3682 = vmatprep.mubr.bf16.mxu0 %v1987
    %3683 = vmatmul.mubr.bf16.gmra.mrb[0].mxu0 %v1986
    %v3684 = vpop.f32.mrb[0].mxu0
    %v3685 = vadd.f32 %v2259, %v3684
    %v3686 = vpop.f32.mrb[0].mxu0
    %v3687 = vadd.f32 %v2263, %v3686
    %v3688 = vpop.f32.mrb[0].mxu0
    %v3689 = vpop.f32.mrb[0].mxu0
    %3690 = vdwg.mxu0
    %3691 = vmatprep.subr.bf16.mxu0 %v3187
    %3692 = vmatpush1.bf16.msra.mxu0 %v3186
    %3693 = vmatprep.subr.bf16.mxu0 %v3195
    %3694 = vmatpush1.bf16.msra.mxu0 %v3194
    %3695 = vmatprep.subr.bf16.mxu0 %v3203
    %3696 = vmatpush1.bf16.msra.mxu0 %v3202
    %3697 = vmatprep.subr.bf16.mxu0 %v3211
    %3698 = vmatpush1.bf16.msra.mxu0 %v3210
    %3699 = vmatprep.subr.bf16.mxu0 %v3219
    %3700 = vmatpush1.bf16.msra.mxu0 %v3218
    %3701 = vmatprep.subr.bf16.mxu0 %v3227
    %3702 = vmatpush1.bf16.msra.mxu0 %v3226
    %3703 = vmatprep.subr.bf16.mxu0 %v3235
    %3704 = vmatpush1.bf16.msra.mxu0 %v3234
    %3705 = vmatprep.subr.bf16.mxu0 %v3243
    %3706 = vmatpush1.bf16.msra.mxu0 %v3242
    %3707 = vmatprep.subr.bf16.mxu0 %v3251
    %3708 = vmatpush1.bf16.msra.mxu0 %v3250
    %3709 = vmatprep.subr.bf16.mxu0 %v3259
    %3710 = vmatpush1.bf16.msra.mxu0 %v3258
    %3711 = vmatprep.subr.bf16.mxu0 %v3267
    %3712 = vmatpush1.bf16.msra.mxu0 %v3266
    %3713 = vmatprep.subr.bf16.mxu0 %v3275
    %3714 = vmatpush1.bf16.msra.mxu0 %v3274
    %3715 = vmatprep.subr.bf16.mxu0 %v3283
    %3716 = vmatpush1.bf16.msra.mxu0 %v3282
    %3717 = vmatprep.subr.bf16.mxu0 %v3291
    %3718 = vmatpush1.bf16.msra.mxu0 %v3290
    %3719 = vmatprep.subr.bf16.mxu0 %v3299
    %3720 = vmatpush1.bf16.msra.mxu0 %v3298
    %3721 = vmatprep.subr.bf16.mxu0 %v3307
    %3722 = vmatpush1.bf16.msra.mxu0 %v3306
    %3723 = vmatprep.mubr.bf16.mxu0 %v1989
    %3724 = vmatmul.mubr.bf16.gmra.mrb[0].mxu0 %v1988
    %v3725 = vpop.f32.mrb[0].mxu0
    %v3726 = vadd.f32 %v3685, %v3725
    %v3727 = vpop.f32.mrb[0].mxu0
    %v3728 = vadd.f32 %v3687, %v3727
    %v3729 = vpop.f32.mrb[0].mxu0
    %v3730 = vpop.f32.mrb[0].mxu0
    %3731 = vdwg.mxu0
    %3732 = vmatprep.subr.bf16.mxu0 %v3061
    %3733 = vmatpush1.bf16.msra.mxu0 %v3060
    %3734 = vmatprep.subr.bf16.mxu0 %v3069
    %3735 = vmatpush1.bf16.msra.mxu0 %v3068
    %3736 = vmatprep.subr.bf16.mxu0 %v3077
    %3737 = vmatpush1.bf16.msra.mxu0 %v3076
    %3738 = vmatprep.subr.bf16.mxu0 %v3085
    %3739 = vmatpush1.bf16.msra.mxu0 %v3084
    %3740 = vmatprep.subr.bf16.mxu0 %v3093
    %3741 = vmatpush1.bf16.msra.mxu0 %v3092
    %3742 = vmatprep.subr.bf16.mxu0 %v3101
    %3743 = vmatpush1.bf16.msra.mxu0 %v3100
    %3744 = vmatprep.subr.bf16.mxu0 %v3109
    %3745 = vmatpush1.bf16.msra.mxu0 %v3108
    %3746 = vmatprep.subr.bf16.mxu0 %v3117
    %3747 = vmatpush1.bf16.msra.mxu0 %v3116
    %3748 = vmatprep.subr.bf16.mxu0 %v3125
    %3749 = vmatpush1.bf16.msra.mxu0 %v3124
    %3750 = vmatprep.subr.bf16.mxu0 %v3133
    %3751 = vmatpush1.bf16.msra.mxu0 %v3132
    %3752 = vmatprep.subr.bf16.mxu0 %v3141
    %3753 = vmatpush1.bf16.msra.mxu0 %v3140
    %3754 = vmatprep.subr.bf16.mxu0 %v3149
    %3755 = vmatpush1.bf16.msra.mxu0 %v3148
    %3756 = vmatprep.subr.bf16.mxu0 %v3157
    %3757 = vmatpush1.bf16.msra.mxu0 %v3156
    %3758 = vmatprep.subr.bf16.mxu0 %v3165
    %3759 = vmatpush1.bf16.msra.mxu0 %v3164
    %3760 = vmatprep.subr.bf16.mxu0 %v3173
    %3761 = vmatpush1.bf16.msra.mxu0 %v3172
    %3762 = vmatprep.subr.bf16.mxu0 %v3181
    %3763 = vmatpush1.bf16.msra.mxu0 %v3180
    %3764 = vmatprep.mubr.bf16.mxu0 %v1987
    %3765 = vmatmul.mubr.bf16.gmra.mrb[0].mxu0 %v1986
    %v3766 = vpop.f32.mrb[0].mxu0
    %v3767 = vadd.f32 %v2267, %v3766
    %v3768 = vpop.f32.mrb[0].mxu0
    %v3769 = vadd.f32 %v2271, %v3768
    %v3770 = vpop.f32.mrb[0].mxu0
    %v3771 = vpop.f32.mrb[0].mxu0
    %3772 = vdwg.mxu0
    %3773 = vmatprep.subr.bf16.mxu0 %v3189
    %3774 = vmatpush1.bf16.msra.mxu0 %v3188
    %3775 = vmatprep.subr.bf16.mxu0 %v3197
    %3776 = vmatpush1.bf16.msra.mxu0 %v3196
    %3777 = vmatprep.subr.bf16.mxu0 %v3205
    %3778 = vmatpush1.bf16.msra.mxu0 %v3204
    %3779 = vmatprep.subr.bf16.mxu0 %v3213
    %3780 = vmatpush1.bf16.msra.mxu0 %v3212
    %3781 = vmatprep.subr.bf16.mxu0 %v3221
    %3782 = vmatpush1.bf16.msra.mxu0 %v3220
    %3783 = vmatprep.subr.bf16.mxu0 %v3229
    %3784 = vmatpush1.bf16.msra.mxu0 %v3228
    %3785 = vmatprep.subr.bf16.mxu0 %v3237
    %3786 = vmatpush1.bf16.msra.mxu0 %v3236
    %3787 = vmatprep.subr.bf16.mxu0 %v3245
    %3788 = vmatpush1.bf16.msra.mxu0 %v3244
    %3789 = vmatprep.subr.bf16.mxu0 %v3253
    %3790 = vmatpush1.bf16.msra.mxu0 %v3252
    %3791 = vmatprep.subr.bf16.mxu0 %v3261
    %3792 = vmatpush1.bf16.msra.mxu0 %v3260
    %3793 = vmatprep.subr.bf16.mxu0 %v3269
    %3794 = vmatpush1.bf16.msra.mxu0 %v3268
    %3795 = vmatprep.subr.bf16.mxu0 %v3277
    %3796 = vmatpush1.bf16.msra.mxu0 %v3276
    %3797 = vmatprep.subr.bf16.mxu0 %v3285
    %3798 = vmatpush1.bf16.msra.mxu0 %v3284
    %3799 = vmatprep.subr.bf16.mxu0 %v3293
    %3800 = vmatpush1.bf16.msra.mxu0 %v3292
    %3801 = vmatprep.subr.bf16.mxu0 %v3301
    %3802 = vmatpush1.bf16.msra.mxu0 %v3300
    %3803 = vmatprep.subr.bf16.mxu0 %v3309
    %3804 = vmatpush1.bf16.msra.mxu0 %v3308
    %3805 = vmatprep.mubr.bf16.mxu0 %v1989
    %3806 = vmatmul.mubr.bf16.gmra.mrb[0].mxu0 %v1988
    %v3807 = vpop.f32.mrb[0].mxu0
    %v3808 = vadd.f32 %v3767, %v3807
    %v3809 = vpop.f32.mrb[0].mxu0
    %v3810 = vadd.f32 %v3769, %v3809
    %v3811 = vpop.f32.mrb[0].mxu0
    %v3812 = vpop.f32.mrb[0].mxu0
    %3813 = vdwg.mxu0
    %3814 = vmatprep.subr.bf16.mxu0 %v3063
    %3815 = vmatpush1.bf16.msra.mxu0 %v3062
    %3816 = vmatprep.subr.bf16.mxu0 %v3071
    %3817 = vmatpush1.bf16.msra.mxu0 %v3070
    %3818 = vmatprep.subr.bf16.mxu0 %v3079
    %3819 = vmatpush1.bf16.msra.mxu0 %v3078
    %3820 = vmatprep.subr.bf16.mxu0 %v3087
    %3821 = vmatpush1.bf16.msra.mxu0 %v3086
    %3822 = vmatprep.subr.bf16.mxu0 %v3095
    %3823 = vmatpush1.bf16.msra.mxu0 %v3094
    %3824 = vmatprep.subr.bf16.mxu0 %v3103
    %3825 = vmatpush1.bf16.msra.mxu0 %v3102
    %3826 = vmatprep.subr.bf16.mxu0 %v3111
    %3827 = vmatpush1.bf16.msra.mxu0 %v3110
    %3828 = vmatprep.subr.bf16.mxu0 %v3119
    %3829 = vmatpush1.bf16.msra.mxu0 %v3118
    %3830 = vmatprep.subr.bf16.mxu0 %v3127
    %3831 = vmatpush1.bf16.msra.mxu0 %v3126
    %3832 = vmatprep.subr.bf16.mxu0 %v3135
    %3833 = vmatpush1.bf16.msra.mxu0 %v3134
    %3834 = vmatprep.subr.bf16.mxu0 %v3143
    %3835 = vmatpush1.bf16.msra.mxu0 %v3142
    %3836 = vmatprep.subr.bf16.mxu0 %v3151
    %3837 = vmatpush1.bf16.msra.mxu0 %v3150
    %3838 = vmatprep.subr.bf16.mxu0 %v3159
    %3839 = vmatpush1.bf16.msra.mxu0 %v3158
    %3840 = vmatprep.subr.bf16.mxu0 %v3167
    %3841 = vmatpush1.bf16.msra.mxu0 %v3166
    %3842 = vmatprep.subr.bf16.mxu0 %v3175
    %3843 = vmatpush1.bf16.msra.mxu0 %v3174
    %3844 = vmatprep.subr.bf16.mxu0 %v3183
    %3845 = vmatpush1.bf16.msra.mxu0 %v3182
    %3846 = vmatprep.mubr.bf16.mxu0 %v1987
    %3847 = vmatmul.mubr.bf16.gmra.mrb[0].mxu0 %v1986
    %v3848 = vpop.f32.mrb[0].mxu0
    %v3849 = vadd.f32 %v2275, %v3848
    %v3850 = vpop.f32.mrb[0].mxu0
    %v3851 = vadd.f32 %v2279, %v3850
    %v3852 = vpop.f32.mrb[0].mxu0
    %v3853 = vpop.f32.mrb[0].mxu0
    %3854 = vdwg.mxu0
    %3855 = vmatprep.subr.bf16.mxu0 %v3191
    %3856 = vmatpush1.bf16.msra.mxu0 %v3190
    %3857 = vmatprep.subr.bf16.mxu0 %v3199
    %3858 = vmatpush1.bf16.msra.mxu0 %v3198
    %3859 = vmatprep.subr.bf16.mxu0 %v3207
    %3860 = vmatpush1.bf16.msra.mxu0 %v3206
    %3861 = vmatprep.subr.bf16.mxu0 %v3215
    %3862 = vmatpush1.bf16.msra.mxu0 %v3214
    %3863 = vmatprep.subr.bf16.mxu0 %v3223
    %3864 = vmatpush1.bf16.msra.mxu0 %v3222
    %3865 = vmatprep.subr.bf16.mxu0 %v3231
    %3866 = vmatpush1.bf16.msra.mxu0 %v3230
    %3867 = vmatprep.subr.bf16.mxu0 %v3239
    %3868 = vmatpush1.bf16.msra.mxu0 %v3238
    %3869 = vmatprep.subr.bf16.mxu0 %v3247
    %3870 = vmatpush1.bf16.msra.mxu0 %v3246
    %3871 = vmatprep.subr.bf16.mxu0 %v3255
    %3872 = vmatpush1.bf16.msra.mxu0 %v3254
    %3873 = vmatprep.subr.bf16.mxu0 %v3263
    %3874 = vmatpush1.bf16.msra.mxu0 %v3262
    %3875 = vmatprep.subr.bf16.mxu0 %v3271
    %3876 = vmatpush1.bf16.msra.mxu0 %v3270
    %3877 = vmatprep.subr.bf16.mxu0 %v3279
    %3878 = vmatpush1.bf16.msra.mxu0 %v3278
    %3879 = vmatprep.subr.bf16.mxu0 %v3287
    %3880 = vmatpush1.bf16.msra.mxu0 %v3286
    %3881 = vmatprep.subr.bf16.mxu0 %v3295
    %3882 = vmatpush1.bf16.msra.mxu0 %v3294
    %3883 = vmatprep.subr.bf16.mxu0 %v3303
    %3884 = vmatpush1.bf16.msra.mxu0 %v3302
    %3885 = vmatprep.subr.bf16.mxu0 %v3311
    %3886 = vmatpush1.bf16.msra.mxu0 %v3310
    %3887 = vmatprep.mubr.bf16.mxu0 %v1989
    %3888 = vmatmul.mubr.bf16.gmra.mrb[0].mxu0 %v1988
    %v3889 = vpop.f32.mrb[0].mxu0
    %v3890 = vadd.f32 %v3849, %v3889
    %v3891 = vpop.f32.mrb[0].mxu0
    %v3892 = vadd.f32 %v3851, %v3891
    %v3893 = vpop.f32.mrb[0].mxu0
    %v3894 = vpop.f32.mrb[0].mxu0
    %3895 = vdwg.mxu0
    %v3896 = vmax.f32 %v3644, 0.0
    %v3897 = vmax.f32 %v3646, 0.0
    %v3898 = vmax.f32 %v3726, 0.0
    %v3899 = vmax.f32 %v3728, 0.0
    %v3900 = vmax.f32 %v3808, 0.0
    %v3901 = vmax.f32 %v3810, 0.0
    %v3902 = vmax.f32 %v3890, 0.0
    %v3903 = vmax.f32 %v3892, 0.0
    %v3904 = vpack.c.bf16 %v3896, %v3896
    %v3905 = vpack.c.bf16 %v3897, %v3897
    %v3906 = vpack.c.bf16 %v3898, %v3898
    %v3907 = vpack.c.bf16 %v3899, %v3899
    %v3908 = vpack.c.bf16 %v3900, %v3900
    %v3909 = vpack.c.bf16 %v3901, %v3901
    %v3910 = vpack.c.bf16 %v3902, %v3902
    %v3911 = vpack.c.bf16 %v3903, %v3903
    %v3912 = vld [vmem:[%s5] sm:$0xf]
    %v3913 = vld [vmem:[%s5 + $0x4] sm:$0xf]
    %v3914 = vld [vmem:[%s5 + $0x8] sm:$0xf]
    %v3915 = vld [vmem:[%s5 + $0xc] sm:$0xf]
    %v3916 = vld [vmem:[%s5 + $0x10] sm:$0xf]
    %v3917 = vld [vmem:[%s5 + $0x14] sm:$0xf]
    %v3918 = vld [vmem:[%s5 + $0x18] sm:$0xf]
    %v3919 = vld [vmem:[%s5 + $0x1c] sm:$0xf]
    %v3920 = vld [vmem:[%s5 + $0x20] sm:$0xf]
    %v3921 = vld [vmem:[%s5 + $0x24] sm:$0xf]
    %v3922 = vld [vmem:[%s5 + $0x28] sm:$0xf]
    %v3923 = vld [vmem:[%s5 + $0x2c] sm:$0xf]
    %v3924 = vld [vmem:[%s5 + $0x30] sm:$0xf]
    %v3925 = vld [vmem:[%s5 + $0x34] sm:$0xf]
    %v3926 = vld [vmem:[%s5 + $0x38] sm:$0xf]
    %v3927 = vld [vmem:[%s5 + $0x3c] sm:$0xf]
    %v3928 = vld [vmem:[%s5 + $0x40] sm:$0xf]
    %v3929 = vld [vmem:[%s5 + $0x44] sm:$0xf]
    %v3930 = vld [vmem:[%s5 + $0x48] sm:$0xf]
    %v3931 = vld [vmem:[%s5 + $0x4c] sm:$0xf]
    %v3932 = vld [vmem:[%s5 + $0x50] sm:$0xf]
    %v3933 = vld [vmem:[%s5 + $0x54] sm:$0xf]
    %v3934 = vld [vmem:[%s5 + $0x58] sm:$0xf]
    %v3935 = vld [vmem:[%s5 + $0x5c] sm:$0xf]
    %v3936 = vld [vmem:[%s5 + $0x60] sm:$0xf]
    %v3937 = vld [vmem:[%s5 + $0x64] sm:$0xf]
    %v3938 = vld [vmem:[%s5 + $0x68] sm:$0xf]
    %v3939 = vld [vmem:[%s5 + $0x6c] sm:$0xf]
    %v3940 = vld [vmem:[%s5 + $0x70] sm:$0xf]
    %v3941 = vld [vmem:[%s5 + $0x74] sm:$0xf]
    %v3942 = vld [vmem:[%s5 + $0x78] sm:$0xf]
    %v3943 = vld [vmem:[%s5 + $0x7c] sm:$0xf]
    %v3944 = vld [vmem:[%s5 + $0x80] sm:$0xf]
    %v3945 = vld [vmem:[%s5 + $0x84] sm:$0xf]
    %v3946 = vld [vmem:[%s5 + $0x88] sm:$0xf]
    %v3947 = vld [vmem:[%s5 + $0x8c] sm:$0xf]
    %v3948 = vld [vmem:[%s5 + $0x90] sm:$0xf]
    %v3949 = vld [vmem:[%s5 + $0x94] sm:$0xf]
    %v3950 = vld [vmem:[%s5 + $0x98] sm:$0xf]
    %v3951 = vld [vmem:[%s5 + $0x9c] sm:$0xf]
    %v3952 = vld [vmem:[%s5 + $0xa0] sm:$0xf]
    %v3953 = vld [vmem:[%s5 + $0xa4] sm:$0xf]
    %v3954 = vld [vmem:[%s5 + $0xa8] sm:$0xf]
    %v3955 = vld [vmem:[%s5 + $0xac] sm:$0xf]
    %v3956 = vld [vmem:[%s5 + $0xb0] sm:$0xf]
    %v3957 = vld [vmem:[%s5 + $0xb4] sm:$0xf]
    %v3958 = vld [vmem:[%s5 + $0xb8] sm:$0xf]
    %v3959 = vld [vmem:[%s5 + $0xbc] sm:$0xf]
    %v3960 = vld [vmem:[%s5 + $0xc0] sm:$0xf]
    %v3961 = vld [vmem:[%s5 + $0xc4] sm:$0xf]
    %v3962 = vld [vmem:[%s5 + $0xc8] sm:$0xf]
    %v3963 = vld [vmem:[%s5 + $0xcc] sm:$0xf]
    %v3964 = vld [vmem:[%s5 + $0xd0] sm:$0xf]
    %v3965 = vld [vmem:[%s5 + $0xd4] sm:$0xf]
    %v3966 = vld [vmem:[%s5 + $0xd8] sm:$0xf]
    %v3967 = vld [vmem:[%s5 + $0xdc] sm:$0xf]
    %v3968 = vld [vmem:[%s5 + $0xe0] sm:$0xf]
    %v3969 = vld [vmem:[%s5 + $0xe4] sm:$0xf]
    %v3970 = vld [vmem:[%s5 + $0xe8] sm:$0xf]
    %v3971 = vld [vmem:[%s5 + $0xec] sm:$0xf]
    %v3972 = vld [vmem:[%s5 + $0xf0] sm:$0xf]
    %v3973 = vld [vmem:[%s5 + $0xf4] sm:$0xf]
    %v3974 = vld [vmem:[%s5 + $0xf8] sm:$0xf]
    %v3975 = vld [vmem:[%s5 + $0xfc] sm:$0xf]
    %v3976 = vld [vmem:[%s5 + $0x100] sm:$0xf]
    %v3977 = vld [vmem:[%s5 + $0x104] sm:$0xf]
    %v3978 = vld [vmem:[%s5 + $0x108] sm:$0xf]
    %v3979 = vld [vmem:[%s5 + $0x10c] sm:$0xf]
    %v3980 = vld [vmem:[%s5 + $0x110] sm:$0xf]
    %v3981 = vld [vmem:[%s5 + $0x114] sm:$0xf]
    %v3982 = vld [vmem:[%s5 + $0x118] sm:$0xf]
    %v3983 = vld [vmem:[%s5 + $0x11c] sm:$0xf]
    %v3984 = vld [vmem:[%s5 + $0x120] sm:$0xf]
    %v3985 = vld [vmem:[%s5 + $0x124] sm:$0xf]
    %v3986 = vld [vmem:[%s5 + $0x128] sm:$0xf]
    %v3987 = vld [vmem:[%s5 + $0x12c] sm:$0xf]
    %v3988 = vld [vmem:[%s5 + $0x130] sm:$0xf]
    %v3989 = vld [vmem:[%s5 + $0x134] sm:$0xf]
    %v3990 = vld [vmem:[%s5 + $0x138] sm:$0xf]
    %v3991 = vld [vmem:[%s5 + $0x13c] sm:$0xf]
    %v3992 = vld [vmem:[%s5 + $0x140] sm:$0xf]
    %v3993 = vld [vmem:[%s5 + $0x144] sm:$0xf]
    %v3994 = vld [vmem:[%s5 + $0x148] sm:$0xf]
    %v3995 = vld [vmem:[%s5 + $0x14c] sm:$0xf]
    %v3996 = vld [vmem:[%s5 + $0x150] sm:$0xf]
    %v3997 = vld [vmem:[%s5 + $0x154] sm:$0xf]
    %v3998 = vld [vmem:[%s5 + $0x158] sm:$0xf]
    %v3999 = vld [vmem:[%s5 + $0x15c] sm:$0xf]
    %v4000 = vld [vmem:[%s5 + $0x160] sm:$0xf]
    %v4001 = vld [vmem:[%s5 + $0x164] sm:$0xf]
    %v4002 = vld [vmem:[%s5 + $0x168] sm:$0xf]
    %v4003 = vld [vmem:[%s5 + $0x16c] sm:$0xf]
    %v4004 = vld [vmem:[%s5 + $0x170] sm:$0xf]
    %v4005 = vld [vmem:[%s5 + $0x174] sm:$0xf]
    %v4006 = vld [vmem:[%s5 + $0x178] sm:$0xf]
    %v4007 = vld [vmem:[%s5 + $0x17c] sm:$0xf]
    %v4008 = vld [vmem:[%s5 + $0x180] sm:$0xf]
    %v4009 = vld [vmem:[%s5 + $0x184] sm:$0xf]
    %v4010 = vld [vmem:[%s5 + $0x188] sm:$0xf]
    %v4011 = vld [vmem:[%s5 + $0x18c] sm:$0xf]
    %v4012 = vld [vmem:[%s5 + $0x190] sm:$0xf]
    %v4013 = vld [vmem:[%s5 + $0x194] sm:$0xf]
    %v4014 = vld [vmem:[%s5 + $0x198] sm:$0xf]
    %v4015 = vld [vmem:[%s5 + $0x19c] sm:$0xf]
    %v4016 = vld [vmem:[%s5 + $0x1a0] sm:$0xf]
    %v4017 = vld [vmem:[%s5 + $0x1a4] sm:$0xf]
    %v4018 = vld [vmem:[%s5 + $0x1a8] sm:$0xf]
    %v4019 = vld [vmem:[%s5 + $0x1ac] sm:$0xf]
    %v4020 = vld [vmem:[%s5 + $0x1b0] sm:$0xf]
    %v4021 = vld [vmem:[%s5 + $0x1b4] sm:$0xf]
    %v4022 = vld [vmem:[%s5 + $0x1b8] sm:$0xf]
    %v4023 = vld [vmem:[%s5 + $0x1bc] sm:$0xf]
    %v4024 = vld [vmem:[%s5 + $0x1c0] sm:$0xf]
    %v4025 = vld [vmem:[%s5 + $0x1c4] sm:$0xf]
    %v4026 = vld [vmem:[%s5 + $0x1c8] sm:$0xf]
    %v4027 = vld [vmem:[%s5 + $0x1cc] sm:$0xf]
    %v4028 = vld [vmem:[%s5 + $0x1d0] sm:$0xf]
    %v4029 = vld [vmem:[%s5 + $0x1d4] sm:$0xf]
    %v4030 = vld [vmem:[%s5 + $0x1d8] sm:$0xf]
    %v4031 = vld [vmem:[%s5 + $0x1dc] sm:$0xf]
    %v4032 = vld [vmem:[%s5 + $0x1e0] sm:$0xf]
    %v4033 = vld [vmem:[%s5 + $0x1e4] sm:$0xf]
    %v4034 = vld [vmem:[%s5 + $0x1e8] sm:$0xf]
    %v4035 = vld [vmem:[%s5 + $0x1ec] sm:$0xf]
    %v4036 = vld [vmem:[%s5 + $0x1f0] sm:$0xf]
    %v4037 = vld [vmem:[%s5 + $0x1f4] sm:$0xf]
    %v4038 = vld [vmem:[%s5 + $0x1f8] sm:$0xf]
    %v4039 = vld [vmem:[%s5 + $0x1fc] sm:$0xf]
    %v4040 = vld [vmem:[%s6] sm:$0x1]
    %v4042 = vlaneseq
    %v4043 = vshrl.u32 %v4042, 7
    %v4044 = vsub.s32 0, %v4043
    %v4045 = vrot.slane %v4040, %v4044
    %v4175 = vunpack.c.l.b16 %v3912
    %v4176 = vunpack.c.l.b16 %v3913
    %v4177 = vunpack.c.l.b16 %v3914
    %v4178 = vunpack.c.l.b16 %v3915
    %v4179 = vunpack.c.l.b16 %v3916
    %v4180 = vunpack.c.l.b16 %v3917
    %v4181 = vunpack.c.l.b16 %v3918
    %v4182 = vunpack.c.l.b16 %v3919
    %v4183 = vunpack.c.l.b16 %v3920
    %v4184 = vunpack.c.l.b16 %v3921
    %v4185 = vunpack.c.l.b16 %v3922
    %v4186 = vunpack.c.l.b16 %v3923
    %v4187 = vunpack.c.l.b16 %v3924
    %v4188 = vunpack.c.l.b16 %v3925
    %v4189 = vunpack.c.l.b16 %v3926
    %v4190 = vunpack.c.l.b16 %v3927
    %v4191 = vunpack.c.l.b16 %v3928
    %v4192 = vunpack.c.l.b16 %v3929
    %v4193 = vunpack.c.l.b16 %v3930
    %v4194 = vunpack.c.l.b16 %v3931
    %v4195 = vunpack.c.l.b16 %v3932
    %v4196 = vunpack.c.l.b16 %v3933
    %v4197 = vunpack.c.l.b16 %v3934
    %v4198 = vunpack.c.l.b16 %v3935
    %v4199 = vunpack.c.l.b16 %v3936
    %v4200 = vunpack.c.l.b16 %v3937
    %v4201 = vunpack.c.l.b16 %v3938
    %v4202 = vunpack.c.l.b16 %v3939
    %v4203 = vunpack.c.l.b16 %v3940
    %v4204 = vunpack.c.l.b16 %v3941
    %v4205 = vunpack.c.l.b16 %v3942
    %v4206 = vunpack.c.l.b16 %v3943
    %v4207 = vunpack.c.l.b16 %v3944
    %v4208 = vunpack.c.l.b16 %v3945
    %v4209 = vunpack.c.l.b16 %v3946
    %v4210 = vunpack.c.l.b16 %v3947
    %v4211 = vunpack.c.l.b16 %v3948
    %v4212 = vunpack.c.l.b16 %v3949
    %v4213 = vunpack.c.l.b16 %v3950
    %v4214 = vunpack.c.l.b16 %v3951
    %v4215 = vunpack.c.l.b16 %v3952
    %v4216 = vunpack.c.l.b16 %v3953
    %v4217 = vunpack.c.l.b16 %v3954
    %v4218 = vunpack.c.l.b16 %v3955
    %v4219 = vunpack.c.l.b16 %v3956
    %v4220 = vunpack.c.l.b16 %v3957
    %v4221 = vunpack.c.l.b16 %v3958
    %v4222 = vunpack.c.l.b16 %v3959
    %v4223 = vunpack.c.l.b16 %v3960
    %v4224 = vunpack.c.l.b16 %v3961
    %v4225 = vunpack.c.l.b16 %v3962
    %v4226 = vunpack.c.l.b16 %v3963
    %v4227 = vunpack.c.l.b16 %v3964
    %v4228 = vunpack.c.l.b16 %v3965
    %v4229 = vunpack.c.l.b16 %v3966
    %v4230 = vunpack.c.l.b16 %v3967
    %v4231 = vunpack.c.l.b16 %v3968
    %v4232 = vunpack.c.l.b16 %v3969
    %v4233 = vunpack.c.l.b16 %v3970
    %v4234 = vunpack.c.l.b16 %v3971
    %v4235 = vunpack.c.l.b16 %v3972
    %v4236 = vunpack.c.l.b16 %v3973
    %v4237 = vunpack.c.l.b16 %v3974
    %v4238 = vunpack.c.l.b16 %v3975
    %v4239 = vunpack.c.l.b16 %v3976
    %v4240 = vunpack.c.l.b16 %v3977
    %v4241 = vunpack.c.l.b16 %v3978
    %v4242 = vunpack.c.l.b16 %v3979
    %v4243 = vunpack.c.l.b16 %v3980
    %v4244 = vunpack.c.l.b16 %v3981
    %v4245 = vunpack.c.l.b16 %v3982
    %v4246 = vunpack.c.l.b16 %v3983
    %v4247 = vunpack.c.l.b16 %v3984
    %v4248 = vunpack.c.l.b16 %v3985
    %v4249 = vunpack.c.l.b16 %v3986
    %v4250 = vunpack.c.l.b16 %v3987
    %v4251 = vunpack.c.l.b16 %v3988
    %v4252 = vunpack.c.l.b16 %v3989
    %v4253 = vunpack.c.l.b16 %v3990
    %v4254 = vunpack.c.l.b16 %v3991
    %v4255 = vunpack.c.l.b16 %v3992
    %v4256 = vunpack.c.l.b16 %v3993
    %v4257 = vunpack.c.l.b16 %v3994
    %v4258 = vunpack.c.l.b16 %v3995
    %v4259 = vunpack.c.l.b16 %v3996
    %v4260 = vunpack.c.l.b16 %v3997
    %v4261 = vunpack.c.l.b16 %v3998
    %v4262 = vunpack.c.l.b16 %v3999
    %v4263 = vunpack.c.l.b16 %v4000
    %v4264 = vunpack.c.l.b16 %v4001
    %v4265 = vunpack.c.l.b16 %v4002
    %v4266 = vunpack.c.l.b16 %v4003
    %v4267 = vunpack.c.l.b16 %v4004
    %v4268 = vunpack.c.l.b16 %v4005
    %v4269 = vunpack.c.l.b16 %v4006
    %v4270 = vunpack.c.l.b16 %v4007
    %v4271 = vunpack.c.l.b16 %v4008
    %v4272 = vunpack.c.l.b16 %v4009
    %v4273 = vunpack.c.l.b16 %v4010
    %v4274 = vunpack.c.l.b16 %v4011
    %v4275 = vunpack.c.l.b16 %v4012
    %v4276 = vunpack.c.l.b16 %v4013
    %v4277 = vunpack.c.l.b16 %v4014
    %v4278 = vunpack.c.l.b16 %v4015
    %v4279 = vunpack.c.l.b16 %v4016
    %v4280 = vunpack.c.l.b16 %v4017
    %v4281 = vunpack.c.l.b16 %v4018
    %v4282 = vunpack.c.l.b16 %v4019
    %v4283 = vunpack.c.l.b16 %v4020
    %v4284 = vunpack.c.l.b16 %v4021
    %v4285 = vunpack.c.l.b16 %v4022
    %v4286 = vunpack.c.l.b16 %v4023
    %v4287 = vunpack.c.l.b16 %v4024
    %v4288 = vunpack.c.l.b16 %v4025
    %v4289 = vunpack.c.l.b16 %v4026
    %v4290 = vunpack.c.l.b16 %v4027
    %v4291 = vunpack.c.l.b16 %v4028
    %v4292 = vunpack.c.l.b16 %v4029
    %v4293 = vunpack.c.l.b16 %v4030
    %v4294 = vunpack.c.l.b16 %v4031
    %v4295 = vunpack.c.l.b16 %v4032
    %v4296 = vunpack.c.l.b16 %v4033
    %v4297 = vunpack.c.l.b16 %v4034
    %v4298 = vunpack.c.l.b16 %v4035
    %v4299 = vunpack.c.l.b16 %v4036
    %v4300 = vunpack.c.l.b16 %v4037
    %v4301 = vunpack.c.l.b16 %v4038
    %v4302 = vunpack.c.l.b16 %v4039
    %v4303 = vpack.c.b16 %v4176, %v4175
    %v4304 = vpack.c.b16 %v4178, %v4177
    %v4305 = vpack.c.b16 %v4180, %v4179
    %v4306 = vpack.c.b16 %v4182, %v4181
    %v4307 = vpack.c.b16 %v4184, %v4183
    %v4308 = vpack.c.b16 %v4186, %v4185
    %v4309 = vpack.c.b16 %v4188, %v4187
    %v4310 = vpack.c.b16 %v4190, %v4189
    %v4311 = vpack.c.b16 %v4192, %v4191
    %v4312 = vpack.c.b16 %v4194, %v4193
    %v4313 = vpack.c.b16 %v4196, %v4195
    %v4314 = vpack.c.b16 %v4198, %v4197
    %v4315 = vpack.c.b16 %v4200, %v4199
    %v4316 = vpack.c.b16 %v4202, %v4201
    %v4317 = vpack.c.b16 %v4204, %v4203
    %v4318 = vpack.c.b16 %v4206, %v4205
    %v4319 = vpack.c.b16 %v4208, %v4207
    %v4320 = vpack.c.b16 %v4210, %v4209
    %v4321 = vpack.c.b16 %v4212, %v4211
    %v4322 = vpack.c.b16 %v4214, %v4213
    %v4323 = vpack.c.b16 %v4216, %v4215
    %v4324 = vpack.c.b16 %v4218, %v4217
    %v4325 = vpack.c.b16 %v4220, %v4219
    %v4326 = vpack.c.b16 %v4222, %v4221
    %v4327 = vpack.c.b16 %v4224, %v4223
    %v4328 = vpack.c.b16 %v4226, %v4225
    %v4329 = vpack.c.b16 %v4228, %v4227
    %v4330 = vpack.c.b16 %v4230, %v4229
    %v4331 = vpack.c.b16 %v4232, %v4231
    %v4332 = vpack.c.b16 %v4234, %v4233
    %v4333 = vpack.c.b16 %v4236, %v4235
    %v4334 = vpack.c.b16 %v4238, %v4237
    %v4335 = vpack.c.b16 %v4240, %v4239
    %v4336 = vpack.c.b16 %v4242, %v4241
    %v4337 = vpack.c.b16 %v4244, %v4243
    %v4338 = vpack.c.b16 %v4246, %v4245
    %v4339 = vpack.c.b16 %v4248, %v4247
    %v4340 = vpack.c.b16 %v4250, %v4249
    %v4341 = vpack.c.b16 %v4252, %v4251
    %v4342 = vpack.c.b16 %v4254, %v4253
    %v4343 = vpack.c.b16 %v4256, %v4255
    %v4344 = vpack.c.b16 %v4258, %v4257
    %v4345 = vpack.c.b16 %v4260, %v4259
    %v4346 = vpack.c.b16 %v4262, %v4261
    %v4347 = vpack.c.b16 %v4264, %v4263
    %v4348 = vpack.c.b16 %v4266, %v4265
    %v4349 = vpack.c.b16 %v4268, %v4267
    %v4350 = vpack.c.b16 %v4270, %v4269
    %v4351 = vpack.c.b16 %v4272, %v4271
    %v4352 = vpack.c.b16 %v4274, %v4273
    %v4353 = vpack.c.b16 %v4276, %v4275
    %v4354 = vpack.c.b16 %v4278, %v4277
    %v4355 = vpack.c.b16 %v4280, %v4279
    %v4356 = vpack.c.b16 %v4282, %v4281
    %v4357 = vpack.c.b16 %v4284, %v4283
    %v4358 = vpack.c.b16 %v4286, %v4285
    %v4359 = vpack.c.b16 %v4288, %v4287
    %v4360 = vpack.c.b16 %v4290, %v4289
    %v4361 = vpack.c.b16 %v4292, %v4291
    %v4362 = vpack.c.b16 %v4294, %v4293
    %v4363 = vpack.c.b16 %v4296, %v4295
    %v4364 = vpack.c.b16 %v4298, %v4297
    %v4365 = vpack.c.b16 %v4300, %v4299
    %v4366 = vpack.c.b16 %v4302, %v4301
    %4431 = vmatprep.subr.bf16.mxu0 0
    %4432 = vmatpush1.bf16.msra.mxu0 %v4303
    %4433 = vmatprep.subr.bf16.mxu0 0
    %4434 = vmatpush1.bf16.msra.mxu0 %v4304
    %4435 = vmatprep.subr.bf16.mxu0 0
    %4436 = vmatpush1.bf16.msra.mxu0 %v4305
    %4437 = vmatprep.subr.bf16.mxu0 0
    %4438 = vmatpush1.bf16.msra.mxu0 %v4306
    %4439 = vmatprep.subr.bf16.mxu0 0
    %4440 = vmatpush1.bf16.msra.mxu0 %v4307
    %4441 = vmatprep.subr.bf16.mxu0 0
    %4442 = vmatpush1.bf16.msra.mxu0 %v4308
    %4443 = vmatprep.subr.bf16.mxu0 0
    %4444 = vmatpush1.bf16.msra.mxu0 %v4309
    %4445 = vmatprep.subr.bf16.mxu0 0
    %4446 = vmatpush1.bf16.msra.mxu0 %v4310
    %4447 = vmatprep.subr.bf16.mxu0 0
    %4448 = vmatpush1.bf16.msra.mxu0 %v4311
    %4449 = vmatprep.subr.bf16.mxu0 0
    %4450 = vmatpush1.bf16.msra.mxu0 %v4312
    %4451 = vmatprep.subr.bf16.mxu0 0
    %4452 = vmatpush1.bf16.msra.mxu0 %v4313
    %4453 = vmatprep.subr.bf16.mxu0 0
    %4454 = vmatpush1.bf16.msra.mxu0 %v4314
    %4455 = vmatprep.subr.bf16.mxu0 0
    %4456 = vmatpush1.bf16.msra.mxu0 %v4315
    %4457 = vmatprep.subr.bf16.mxu0 0
    %4458 = vmatpush1.bf16.msra.mxu0 %v4316
    %4459 = vmatprep.subr.bf16.mxu0 0
    %4460 = vmatpush1.bf16.msra.mxu0 %v4317
    %4461 = vmatprep.subr.bf16.mxu0 0
    %4462 = vmatpush1.bf16.msra.mxu0 %v4318
    %4463 = vmatprep.mubr.bf16.mxu0 %v3905
    %4464 = vmatmul.mubr.bf16.gmra.mrb[0].mxu0 %v3904
    %v4465 = vpop.f32.mrb[0].mxu0
    %v4466 = vadd.f32 %v4045, %v4465
    %v4467 = vpop.f32.mrb[0].mxu0
    %v4468 = vpop.f32.mrb[0].mxu0
    %v4469 = vpop.f32.mrb[0].mxu0
    %4470 = vdwg.mxu0
    %4471 = vmatprep.subr.bf16.mxu0 0
    %4472 = vmatpush1.bf16.msra.mxu0 %v4319
    %4473 = vmatprep.subr.bf16.mxu0 0
    %4474 = vmatpush1.bf16.msra.mxu0 %v4320
    %4475 = vmatprep.subr.bf16.mxu0 0
    %4476 = vmatpush1.bf16.msra.mxu0 %v4321
    %4477 = vmatprep.subr.bf16.mxu0 0
    %4478 = vmatpush1.bf16.msra.mxu0 %v4322
    %4479 = vmatprep.subr.bf16.mxu0 0
    %4480 = vmatpush1.bf16.msra.mxu0 %v4323
    %4481 = vmatprep.subr.bf16.mxu0 0
    %4482 = vmatpush1.bf16.msra.mxu0 %v4324
    %4483 = vmatprep.subr.bf16.mxu0 0
    %4484 = vmatpush1.bf16.msra.mxu0 %v4325
    %4485 = vmatprep.subr.bf16.mxu0 0
    %4486 = vmatpush1.bf16.msra.mxu0 %v4326
    %4487 = vmatprep.subr.bf16.mxu0 0
    %4488 = vmatpush1.bf16.msra.mxu0 %v4327
    %4489 = vmatprep.subr.bf16.mxu0 0
    %4490 = vmatpush1.bf16.msra.mxu0 %v4328
    %4491 = vmatprep.subr.bf16.mxu0 0
    %4492 = vmatpush1.bf16.msra.mxu0 %v4329
    %4493 = vmatprep.subr.bf16.mxu0 0
    %4494 = vmatpush1.bf16.msra.mxu0 %v4330
    %4495 = vmatprep.subr.bf16.mxu0 0
    %4496 = vmatpush1.bf16.msra.mxu0 %v4331
    %4497 = vmatprep.subr.bf16.mxu0 0
    %4498 = vmatpush1.bf16.msra.mxu0 %v4332
    %4499 = vmatprep.subr.bf16.mxu0 0
    %4500 = vmatpush1.bf16.msra.mxu0 %v4333
    %4501 = vmatprep.subr.bf16.mxu0 0
    %4502 = vmatpush1.bf16.msra.mxu0 %v4334
    %4503 = vmatprep.mubr.bf16.mxu0 %v3907
    %4504 = vmatmul.mubr.bf16.gmra.mrb[0].mxu0 %v3906
    %v4505 = vpop.f32.mrb[0].mxu0
    %v4506 = vadd.f32 %v4466, %v4505
    %v4507 = vpop.f32.mrb[0].mxu0
    %v4508 = vpop.f32.mrb[0].mxu0
    %v4509 = vpop.f32.mrb[0].mxu0
    %4510 = vdwg.mxu0
    %4511 = vmatprep.subr.bf16.mxu0 0
    %4512 = vmatpush1.bf16.msra.mxu0 %v4335
    %4513 = vmatprep.subr.bf16.mxu0 0
    %4514 = vmatpush1.bf16.msra.mxu0 %v4336
    %4515 = vmatprep.subr.bf16.mxu0 0
    %4516 = vmatpush1.bf16.msra.mxu0 %v4337
    %4517 = vmatprep.subr.bf16.mxu0 0
    %4518 = vmatpush1.bf16.msra.mxu0 %v4338
    %4519 = vmatprep.subr.bf16.mxu0 0
    %4520 = vmatpush1.bf16.msra.mxu0 %v4339
    %4521 = vmatprep.subr.bf16.mxu0 0
    %4522 = vmatpush1.bf16.msra.mxu0 %v4340
    %4523 = vmatprep.subr.bf16.mxu0 0
    %4524 = vmatpush1.bf16.msra.mxu0 %v4341
    %4525 = vmatprep.subr.bf16.mxu0 0
    %4526 = vmatpush1.bf16.msra.mxu0 %v4342
    %4527 = vmatprep.subr.bf16.mxu0 0
    %4528 = vmatpush1.bf16.msra.mxu0 %v4343
    %4529 = vmatprep.subr.bf16.mxu0 0
    %4530 = vmatpush1.bf16.msra.mxu0 %v4344
    %4531 = vmatprep.subr.bf16.mxu0 0
    %4532 = vmatpush1.bf16.msra.mxu0 %v4345
    %4533 = vmatprep.subr.bf16.mxu0 0
    %4534 = vmatpush1.bf16.msra.mxu0 %v4346
    %4535 = vmatprep.subr.bf16.mxu0 0
    %4536 = vmatpush1.bf16.msra.mxu0 %v4347
    %4537 = vmatprep.subr.bf16.mxu0 0
    %4538 = vmatpush1.bf16.msra.mxu0 %v4348
    %4539 = vmatprep.subr.bf16.mxu0 0
    %4540 = vmatpush1.bf16.msra.mxu0 %v4349
    %4541 = vmatprep.subr.bf16.mxu0 0
    %4542 = vmatpush1.bf16.msra.mxu0 %v4350
    %4543 = vmatprep.mubr.bf16.mxu0 %v3909
    %4544 = vmatmul.mubr.bf16.gmra.mrb[0].mxu0 %v3908
    %v4545 = vpop.f32.mrb[0].mxu0
    %v4546 = vadd.f32 %v4506, %v4545
    %v4547 = vpop.f32.mrb[0].mxu0
    %v4548 = vpop.f32.mrb[0].mxu0
    %v4549 = vpop.f32.mrb[0].mxu0
    %4550 = vdwg.mxu0
    %4551 = vmatprep.subr.bf16.mxu0 0
    %4552 = vmatpush1.bf16.msra.mxu0 %v4351
    %4553 = vmatprep.subr.bf16.mxu0 0
    %4554 = vmatpush1.bf16.msra.mxu0 %v4352
    %4555 = vmatprep.subr.bf16.mxu0 0
    %4556 = vmatpush1.bf16.msra.mxu0 %v4353
    %4557 = vmatprep.subr.bf16.mxu0 0
    %4558 = vmatpush1.bf16.msra.mxu0 %v4354
    %4559 = vmatprep.subr.bf16.mxu0 0
    %4560 = vmatpush1.bf16.msra.mxu0 %v4355
    %4561 = vmatprep.subr.bf16.mxu0 0
    %4562 = vmatpush1.bf16.msra.mxu0 %v4356
    %4563 = vmatprep.subr.bf16.mxu0 0
    %4564 = vmatpush1.bf16.msra.mxu0 %v4357
    %4565 = vmatprep.subr.bf16.mxu0 0
    %4566 = vmatpush1.bf16.msra.mxu0 %v4358
    %4567 = vmatprep.subr.bf16.mxu0 0
    %4568 = vmatpush1.bf16.msra.mxu0 %v4359
    %4569 = vmatprep.subr.bf16.mxu0 0
    %4570 = vmatpush1.bf16.msra.mxu0 %v4360
    %4571 = vmatprep.subr.bf16.mxu0 0
    %4572 = vmatpush1.bf16.msra.mxu0 %v4361
    %4573 = vmatprep.subr.bf16.mxu0 0
    %4574 = vmatpush1.bf16.msra.mxu0 %v4362
    %4575 = vmatprep.subr.bf16.mxu0 0
    %4576 = vmatpush1.bf16.msra.mxu0 %v4363
    %4577 = vmatprep.subr.bf16.mxu0 0
    %4578 = vmatpush1.bf16.msra.mxu0 %v4364
    %4579 = vmatprep.subr.bf16.mxu0 0
    %4580 = vmatpush1.bf16.msra.mxu0 %v4365
    %4581 = vmatprep.subr.bf16.mxu0 0
    %4582 = vmatpush1.bf16.msra.mxu0 %v4366
    %4583 = vmatprep.mubr.bf16.mxu0 %v3911
    %4584 = vmatmul.mubr.bf16.gmra.mrb[0].mxu0 %v3910
    %v4585 = vpop.f32.mrb[0].mxu0
    %v4586 = vadd.f32 %v4546, %v4585
    %v4587 = vpop.f32.mrb[0].mxu0
    %v4588 = vpop.f32.mrb[0].mxu0
    %v4589 = vpop.f32.mrb[0].mxu0
    %4590 = vdwg.mxu0
    %vm4591 = vcmask 25600
    %4592 = vst.msk [vmem:[#allocation5] sm:$0x3] %vm4591, %v4586
    // Predicated region
    $region34: #{somtp_forward.3} parent=1 // pred_check
      _
    $region35: #{somtp_forward.3} parent=1 // pred_check_branch
      %4594 = sbr.rel (0) target = $region37
    $region36: #{somtp_forward.3} parent=1 // pred_region
      %s4596 = ssub.s32 32, 32
      %4597 = vsyncadd [#allocation4], %s4596
      %s4599 = sshll.u32 [#allocation5], 4
      %s4600 = int_to_ptr.vmem [resolvable:$true] %s4599
      %4602 = dma.vmem_to_hbm [thread:$0]  %s4600, 32, %s7, [#allocation4]
    $region37: #{somtp_forward.3} parent=1 // pred_fallthru
      _
    // Predicated region
    $region38: #{somtp_forward.3} parent=1 // pred_check
      _
    $region39: #{somtp_forward.3} parent=1 // pred_check_branch
      %4604 = sbr.rel (0) target = $region41
    $region40: #{somtp_forward.3} parent=1 // pred_region
      %4605 = dma.done [#allocation4], 32
    $region41: #{somtp_forward.3} parent=1 // pred_fallthru
      _
    %4606 = vsyncpa [#allocation3], 1
    %4607 = vsyncpa [#allocation4], 1

</llo_original>
